<compile_context>
chip_gen: v7x
topology: tpu7x:2x2x1
jax: 0.10.0
libtpu: 0.0.40
codegen_flags: <defaults>
</compile_context>

<pallas_src>
import jax
import jax.numpy as jnp
import numpy as np
from jax.experimental import pallas as pl
from jax.experimental.pallas import tpu as pltpu


def _round_up(x, m):
    return ((x + m - 1) // m) * m


def critic_kernel(state_ref, action_ref,
                  w1_ref, b1_ref,
                  w2s_ref, w2a_ref, b2_ref,
                  w3_ref, b3_ref,
                  out_ref):
    bf16 = jnp.bfloat16
    state = state_ref[...].astype(bf16)      # (TILE_B, state_dim)
    action = action_ref[...].astype(bf16)    # (TILE_B, action_dim)

    # fc1 + ReLU  (bf16 MXU inputs, f32 accumulation; bias/ReLU kept in f32)
    s1 = jnp.dot(state, w1_ref[...], preferred_element_type=jnp.float32)
    s1 = jnp.maximum(s1 + b1_ref[...], 0.0)                  # (TILE_B, h1p) f32

    # fc2 on cat([s1, action]) + ReLU, in split-weight form (exact same math)
    x = jnp.dot(s1.astype(bf16), w2s_ref[...], preferred_element_type=jnp.float32)
    x = x + jnp.dot(action, w2a_ref[...], preferred_element_type=jnp.float32)
    x = jnp.maximum(x + b2_ref[...], 0.0)                    # (TILE_B, h2p) f32

    # fc3: VPU multiply + lane reduction (avoids a wasteful N=1 MXU matmul),
    # written to a lane-dense (TILE_B//128, 128) output block.
    prod = x * w3_ref[...]                                   # (TILE_B, h2p) f32
    rows, lanes = out_ref.shape                              # (TILE_B//128, 128)
    q = jnp.sum(prod.reshape(rows, lanes, prod.shape[-1]), axis=-1)
    out_ref[...] = (q + b3_ref[0]).astype(out_ref.dtype)


def critic_forward(state, action, params, tile_b=1024):
    """Q(s, a) -> [n, 1] (float32)."""
    assert tile_b % 1024 == 0, "tile_b must be a multiple of 1024 (lane-dense out)"
    n = state.shape[0]
    state_dim = state.shape[1]
    action_dim = action.shape[1]
    w1, b1, w2s, w2a, b2, w3row, b3 = params

    # Pad batch to a multiple of the tile.
    n_pad = max(tile_b, _round_up(n, tile_b))
    if n_pad != n:
        state = jnp.pad(state, ((0, n_pad - n), (0, 0)))
        action = jnp.pad(action, ((0, n_pad - n), (0, 0)))

    num_tiles = n_pad // tile_b
    rows_per_tile = tile_b // 128              # multiple of 8 -> aligned out block

    in_specs = [
        # batch-tiled activations
        pl.BlockSpec((tile_b, state_dim), lambda i: (i, 0)),
        pl.BlockSpec((tile_b, action_dim), lambda i: (i, 0)),
        # weights / biases: constant block index -> resident in VMEM
        pl.BlockSpec(w1.shape, lambda i: (0, 0)),
        pl.BlockSpec(b1.shape, lambda i: (0, 0)),
        pl.BlockSpec(w2s.shape, lambda i: (0, 0)),
        pl.BlockSpec(w2a.shape, lambda i: (0, 0)),
        pl.BlockSpec(b2.shape, lambda i: (0, 0)),
        pl.BlockSpec(w3row.shape, lambda i: (0, 0)),
        # scalar output bias lives in SMEM (no padded VMEM block / DMA)
        pl.BlockSpec(memory_space=pltpu.MemorySpace.SMEM),
    ]
    out_specs = pl.BlockSpec((rows_per_tile, 128), lambda i: (i, 0))
    out_shape = jax.ShapeDtypeStruct((n_pad // 128, 128), jnp.float32)

    out = pl.pallas_call(
        critic_kernel,
        out_shape=out_shape,
        grid_spec=pltpu.PrefetchScalarGridSpec(
            num_scalar_prefetch=0,
            grid=(num_tiles,),
            in_specs=in_specs,
            out_specs=out_specs,
        ),
        compiler_params=pltpu.CompilerParams(
            dimension_semantics=("parallel",),
            vmem_limit_bytes=32 * 1024 * 1024,
        ),
    )(state, action, w1, b1, w2s, w2a, b2, w3row, b3)

    # Lane-dense slab -> [n, 1]
    return out.reshape(-1)[:n].reshape(n, 1)


def init_critic_params(key, state_dim, action_dim, h1=400, h2=300, eps=0.03):
    """Deterministic init mirroring the PyTorch module's __init__.

    Weights are stored transposed ([in, out]), zero-padded to 128-aligned
    hidden dims, and cast to bf16.  Biases stay f32 (zero in padded columns).
    NOTE: fanin_init(size) in the original uses fanin = size[0] = out_features
    of the PyTorch [out, in] weight, i.e. bound = 1/sqrt(h1) for fc1 and
    1/sqrt(h2) for fc2 — reproduced literally here.
    """
    h1p = _round_up(h1, 128)
    h2p = _round_up(h2, 128)
    k1, k2, k3, kb1, kb2, kb3 = jax.random.split(key, 6)

    def uniform(k, shape, bound):
        return jax.random.uniform(k, shape, jnp.float32, -bound, bound)

    # fc1
    w1 = uniform(k1, (state_dim, h1), 1.0 / np.sqrt(h1))               # [in, out]
    b1 = uniform(kb1, (1, h1), 1.0 / np.sqrt(state_dim))               # default Linear bias init
    w1p = jnp.pad(w1, ((0, 0), (0, h1p - h1))).astype(jnp.bfloat16)
    b1p = jnp.pad(b1, ((0, 0), (0, h1p - h1)))

    # fc2 (input = cat([s1, action]))
    w2 = uniform(k2, (h1 + action_dim, h2), 1.0 / np.sqrt(h2))
    b2 = uniform(kb2, (1, h2), 1.0 / np.sqrt(h1 + action_dim))
    w2s = jnp.pad(w2[:h1], ((0, h1p - h1), (0, h2p - h2))).astype(jnp.bfloat16)
    w2a = jnp.pad(w2[h1:], ((0, 0), (0, h2p - h2))).astype(jnp.bfloat16)
    b2p = jnp.pad(b2, ((0, 0), (0, h2p - h2)))

    # fc3
    w3 = uniform(k3, (1, h2), eps)
    b3 = uniform(kb3, (1,), 1.0 / np.sqrt(h2))
    w3row = jnp.pad(w3, ((0, 0), (0, h2p - h2)))                        # (1, h2p) f32

    return (w1p, b1p, w2s, w2a, b2p, w3row, b3)


def critic_reference(state, action, params):
    """Pure-JAX reference with the same numerics (bf16 matmuls, f32 accumulate)."""
    w1, b1, w2s, w2a, b2, w3row, b3 = params
    bf16 = jnp.bfloat16
    s1 = jnp.dot(state.astype(bf16), w1, preferred_element_type=jnp.float32) + b1
    s1 = jax.nn.relu(s1)
    x = (jnp.dot(s1.astype(bf16), w2s, preferred_element_type=jnp.float32)
         + jnp.dot(action.astype(bf16), w2a, preferred_element_type=jnp.float32)
         + b2)
    x = jax.nn.relu(x)
    return jnp.sum(x * w3row, axis=-1, keepdims=True) + b3[0]


if __name__ == "__main__":
    # Small shapes consistent with the module's forward contract
    # (h1/h2 are the module defaults; they get zero-padded to 512/384).
    batch, state_dim, action_dim = 8, 16, 4
    h1, h2 = 400, 300

    key = jax.random.PRNGKey(0)
    kp, ks, ka = jax.random.split(key, 3)
    params = init_critic_params(kp, state_dim, action_dim, h1=h1, h2=h2)

    state = jax.random.normal(ks, (batch, state_dim), jnp.float32)
    action = jax.random.normal(ka, (batch, action_dim), jnp.float32)

    q = critic_forward(state, action, params)
    q = jax.block_until_ready(q)

    q_ref = critic_reference(state, action, params)
    assert q.shape == (batch, 1)
    np.testing.assert_allclose(np.asarray(q), np.asarray(q_ref),
                               rtol=1e-3, atol=1e-3)
    print("KERNEL_OK")
</pallas_src>

<mosaic_0001>
module attributes {stable_mosaic.version = 11 : i64} {
  func.func @critic_kernel(%arg0: i32, %arg1: memref<1024x16xf32, #tpu.memory_space<vmem>>, %arg2: memref<1024x4xf32, #tpu.memory_space<vmem>>, %arg3: memref<16x512xbf16, #tpu.memory_space<vmem>>, %arg4: memref<1x512xf32, #tpu.memory_space<vmem>>, %arg5: memref<512x384xbf16, #tpu.memory_space<vmem>>, %arg6: memref<4x384xbf16, #tpu.memory_space<vmem>>, %arg7: memref<1x384xf32, #tpu.memory_space<vmem>>, %arg8: memref<1x384xf32, #tpu.memory_space<vmem>>, %arg9: memref<1xf32, #tpu.memory_space<smem>>, %arg10: memref<8x128xf32, #tpu.memory_space<vmem>>) attributes {dimension_semantics = [#tpu.dimension_semantics<parallel>], iteration_bounds = array<i64: 1>, scalar_prefetch = 0 : i64, scratch_operands = 0 : i64, tpu.core_type = #tpu.core_type<tc>, window_params = [{transform_indices = @transform_0, window_bounds = array<i64: 1024, 16>}, {transform_indices = @transform_1, window_bounds = array<i64: 1024, 4>}, {pipeline_mode = #tpu.pipeline_mode<synchronous>, transform_indices = @transform_2, window_bounds = array<i64: 16, 512>}, {pipeline_mode = #tpu.pipeline_mode<synchronous>, transform_indices = @transform_3, window_bounds = array<i64: 1, 512>}, {pipeline_mode = #tpu.pipeline_mode<synchronous>, transform_indices = @transform_4, window_bounds = array<i64: 512, 384>}, {pipeline_mode = #tpu.pipeline_mode<synchronous>, transform_indices = @transform_5, window_bounds = array<i64: 4, 384>}, {pipeline_mode = #tpu.pipeline_mode<synchronous>, transform_indices = @transform_6, window_bounds = array<i64: 1, 384>}, {pipeline_mode = #tpu.pipeline_mode<synchronous>, transform_indices = @transform_7, window_bounds = array<i64: 1, 384>}, {transform_indices = @transform_8, window_bounds = array<i64: 1>}, {transform_indices = @transform_9, window_bounds = array<i64: 8, 128>}]} {
    %c0 = arith.constant 0 : index
    %c0_0 = arith.constant 0 : index
    %0 = vector.load %arg1[%c0, %c0_0] : memref<1024x16xf32, #tpu.memory_space<vmem>>, vector<1024x16xf32>
    %1 = arith.truncf %0 : vector<1024x16xf32> to vector<1024x16xbf16>
    %c0_1 = arith.constant 0 : index
    %c0_2 = arith.constant 0 : index
    %2 = vector.load %arg2[%c0_1, %c0_2] : memref<1024x4xf32, #tpu.memory_space<vmem>>, vector<1024x4xf32>
    %3 = arith.truncf %2 : vector<1024x4xf32> to vector<1024x4xbf16>
    %c0_3 = arith.constant 0 : index
    %c0_4 = arith.constant 0 : index
    %4 = vector.load %arg3[%c0_3, %c0_4] : memref<16x512xbf16, #tpu.memory_space<vmem>>, vector<16x512xbf16>
    %cst = arith.constant dense<0.000000e+00> : vector<1024x512xf32>
    %5 = tpu.matmul %1, %4, %cst {dimension_numbers = #tpu.dot_dimension_numbers<[1], [0], [0], [1], [0, 0, 1, 1], [], []>} : vector<1024x16xbf16>, vector<16x512xbf16>, vector<1024x512xf32> -> vector<1024x512xf32>
    %c0_5 = arith.constant 0 : index
    %c0_6 = arith.constant 0 : index
    %6 = vector.load %arg4[%c0_5, %c0_6] : memref<1x512xf32, #tpu.memory_space<vmem>>, vector<1x512xf32>
    %7 = vector.broadcast %6 : vector<1x512xf32> to vector<1024x512xf32>
    %8 = arith.addf %5, %7 : vector<1024x512xf32>
    %cst_7 = arith.constant 0.000000e+00 : f32
    %9 = vector.broadcast %cst_7 : f32 to vector<1024x512xf32>
    %10 = arith.maximumf %8, %9 : vector<1024x512xf32>
    %11 = arith.truncf %10 : vector<1024x512xf32> to vector<1024x512xbf16>
    %c0_8 = arith.constant 0 : index
    %c0_9 = arith.constant 0 : index
    %12 = vector.load %arg5[%c0_8, %c0_9] : memref<512x384xbf16, #tpu.memory_space<vmem>>, vector<512x384xbf16>
    %cst_10 = arith.constant dense<0.000000e+00> : vector<1024x384xf32>
    %13 = tpu.matmul %11, %12, %cst_10 {dimension_numbers = #tpu.dot_dimension_numbers<[1], [0], [0], [1], [0, 0, 1, 1], [], []>} : vector<1024x512xbf16>, vector<512x384xbf16>, vector<1024x384xf32> -> vector<1024x384xf32>
    %c0_11 = arith.constant 0 : index
    %c0_12 = arith.constant 0 : index
    %14 = vector.load %arg6[%c0_11, %c0_12] : memref<4x384xbf16, #tpu.memory_space<vmem>>, vector<4x384xbf16>
    %cst_13 = arith.constant dense<0.000000e+00> : vector<1024x384xf32>
    %15 = tpu.matmul %3, %14, %cst_13 {dimension_numbers = #tpu.dot_dimension_numbers<[1], [0], [0], [1], [0, 0, 1, 1], [], []>} : vector<1024x4xbf16>, vector<4x384xbf16>, vector<1024x384xf32> -> vector<1024x384xf32>
    %16 = arith.addf %13, %15 : vector<1024x384xf32>
    %c0_14 = arith.constant 0 : index
    %c0_15 = arith.constant 0 : index
    %17 = vector.load %arg7[%c0_14, %c0_15] : memref<1x384xf32, #tpu.memory_space<vmem>>, vector<1x384xf32>
    %18 = vector.broadcast %17 : vector<1x384xf32> to vector<1024x384xf32>
    %19 = arith.addf %16, %18 : vector<1024x384xf32>
    %cst_16 = arith.constant 0.000000e+00 : f32
    %20 = vector.broadcast %cst_16 : f32 to vector<1024x384xf32>
    %21 = arith.maximumf %19, %20 : vector<1024x384xf32>
    %c0_17 = arith.constant 0 : index
    %c0_18 = arith.constant 0 : index
    %22 = vector.load %arg8[%c0_17, %c0_18] : memref<1x384xf32, #tpu.memory_space<vmem>>, vector<1x384xf32>
    %23 = vector.broadcast %22 : vector<1x384xf32> to vector<1024x384xf32>
    %24 = arith.mulf %21, %23 : vector<1024x384xf32>
    %25 = vector.shape_cast %24 : vector<1024x384xf32> to vector<8x128x384xf32>
    %cst_19 = arith.constant dense<0.000000e+00> : vector<8x128xf32>
    %26 = vector.multi_reduction <add>, %25, %cst_19 [2] : vector<8x128x384xf32> to vector<8x128xf32>
    %c0_20 = arith.constant 0 : index
    %27 = memref.load %arg9[%c0_20] : memref<1xf32, #tpu.memory_space<smem>>
    %28 = vector.broadcast %27 : f32 to vector<8x128xf32>
    %29 = arith.addf %26, %28 : vector<8x128xf32>
    %c0_21 = arith.constant 0 : index
    %c0_22 = arith.constant 0 : index
    %30 = vector.load %arg10[%c0_21, %c0_22] : memref<8x128xf32, #tpu.memory_space<vmem>>, vector<8x128xf32>
    tpu.vector_store %arg10[%c0_21, %c0_22], %29 {strides = array<i32>} : memref<8x128xf32, #tpu.memory_space<vmem>>, vector<8x128xf32>,
    return
  }
  func.func @transform_0(%arg0: i32) -> (i32, i32) {
    %c0_i32 = arith.constant 0 : i32
    %c0_i32_0 = arith.constant 0 : i32
    return %arg0, %c0_i32 : i32, i32
  }
  func.func @transform_1(%arg0: i32) -> (i32, i32) {
    %c0_i32 = arith.constant 0 : i32
    %c0_i32_0 = arith.constant 0 : i32
    return %arg0, %c0_i32 : i32, i32
  }
  func.func @transform_2(%arg0: i32) -> (i32, i32) {
    %c0_i32 = arith.constant 0 : i32
    %c0_i32_0 = arith.constant 0 : i32
    %c0_i32_1 = arith.constant 0 : i32
    return %c0_i32, %c0_i32_0 : i32, i32
  }
  func.func @transform_3(%arg0: i32) -> (i32, i32) {
    %c0_i32 = arith.constant 0 : i32
    %c0_i32_0 = arith.constant 0 : i32
    %c0_i32_1 = arith.constant 0 : i32
    return %c0_i32, %c0_i32_0 : i32, i32
  }
  func.func @transform_4(%arg0: i32) -> (i32, i32) {
    %c0_i32 = arith.constant 0 : i32
    %c0_i32_0 = arith.constant 0 : i32
    %c0_i32_1 = arith.constant 0 : i32
    return %c0_i32, %c0_i32_0 : i32, i32
  }
  func.func @transform_5(%arg0: i32) -> (i32, i32) {
    %c0_i32 = arith.constant 0 : i32
    %c0_i32_0 = arith.constant 0 : i32
    %c0_i32_1 = arith.constant 0 : i32
    return %c0_i32, %c0_i32_0 : i32, i32
  }
  func.func @transform_6(%arg0: i32) -> (i32, i32) {
    %c0_i32 = arith.constant 0 : i32
    %c0_i32_0 = arith.constant 0 : i32
    %c0_i32_1 = arith.constant 0 : i32
    return %c0_i32, %c0_i32_0 : i32, i32
  }
  func.func @transform_7(%arg0: i32) -> (i32, i32) {
    %c0_i32 = arith.constant 0 : i32
    %c0_i32_0 = arith.constant 0 : i32
    %c0_i32_1 = arith.constant 0 : i32
    return %c0_i32, %c0_i32_0 : i32, i32
  }
  func.func @transform_8(%arg0: i32) -> i32 {
    %c0_i32 = arith.constant 0 : i32
    %c0_i32_0 = arith.constant 0 : i32
    return %c0_i32 : i32
  }
  func.func @transform_9(%arg0: i32) -> (i32, i32) {
    %c0_i32 = arith.constant 0 : i32
    %c0_i32_0 = arith.constant 0 : i32
    return %arg0, %c0_i32 : i32, i32
  }
}

</mosaic_0001>

<llo_original>
// kernel: tpu_custom_call.1
$region0: #{tpu_custom_call.1}
  #allocation0 [shape = 'u32[]', space=smem, size = 0x4, offset = 0x4, fixed_abs, tag = 'smem constant byte address 0x4 - core index']
  #allocation1 [shape = 'u32[144,128]{1,0:T(1,128)}', space=vmem, size = 0x12000, scoped, tag = 'internal scratch']
  #allocation2 [shape = 'f32[1]{0:T(128)S(6)}', space=smem, size = 0x200, scoped, tag = 'scoped memory for tpu_custom_call.1']
  %s0 = inlined_call_operand.vmem [shape: f32[1024,16], index: 0, kind: input, shape index: {}]
  %s1 = inlined_call_operand.vmem [shape: f32[1024,4], index: 1, kind: input, shape index: {}]
  %s2 = inlined_call_operand.vmem [shape: bf16[16,512], index: 2, kind: input, shape index: {}]
  %s3 = inlined_call_operand.vmem [shape: f32[1,512], index: 3, kind: input, shape index: {}]
  %s4 = inlined_call_operand.vmem [shape: bf16[512,384], index: 4, kind: input, shape index: {}]
  %s5 = inlined_call_operand.vmem [shape: bf16[4,384], index: 5, kind: input, shape index: {}]
  %s6 = inlined_call_operand.vmem [shape: f32[1,384], index: 6, kind: input, shape index: {}]
  %s7 = inlined_call_operand.vmem [shape: f32[1,384], index: 7, kind: input, shape index: {}]
  %s8 = inlined_call_operand.<no memory space> [shape: f32[1], index: 8, kind: input, shape index: {}]
  %s9 = inlined_call_operand.hbm [shape: f32[8,128], index: 9, kind: output, shape index: {}]
  %s10 = sld [smem:[#allocation0]]
  $region46: #{tpu_custom_call.1} parent=0
    _
  %s12 = ssub.s32 1, %s10
  %s13 = scalar_select 0, %s12, %s10
  %14 = sst [smem:[#allocation2]] %s8
  $region1: #{tpu_custom_call.1} parent=0
    #allocation3 [shape = 'u8[4096]{0}', space=vmem, size = 0x1000, scoped, tag = 'output window, operand 0, single buffered']
    #allocation4 [shape = 's32[1]{0}', space=sflag, size = 0x4, scoped, tag = 'scoped memory for tpu_custom_call.1']
    %15 = vsyncpa [#allocation4], 0
    // Predicated region
    $region2: #{tpu_custom_call.1} parent=1 // pred_check
      _
    $region3: #{tpu_custom_call.1} parent=1 // pred_check_branch
      %17 = sbr.rel (0) target = $region5
    $region4: #{tpu_custom_call.1} parent=1 // pred_region
      _
    $region5: #{tpu_custom_call.1} parent=1 // pred_fallthru
      _
    // Predicated region
    $region6: #{tpu_custom_call.1} parent=1 // pred_check
      _
    $region7: #{tpu_custom_call.1} parent=1 // pred_check_branch
      %19 = sbr.rel (0) target = $region9
    $region8: #{tpu_custom_call.1} parent=1 // pred_region
      _
    $region9: #{tpu_custom_call.1} parent=1 // pred_fallthru
      _
    // Predicated region
    $region10: #{tpu_custom_call.1} parent=1 // pred_check
      _
    $region11: #{tpu_custom_call.1} parent=1 // pred_check_branch
      %21 = sbr.rel (0) target = $region13
    $region12: #{tpu_custom_call.1} parent=1 // pred_region
      _
    $region13: #{tpu_custom_call.1} parent=1 // pred_fallthru
      _
    // Predicated region
    $region14: #{tpu_custom_call.1} parent=1 // pred_check
      _
    $region15: #{tpu_custom_call.1} parent=1 // pred_check_branch
      %23 = sbr.rel (0) target = $region17
    $region16: #{tpu_custom_call.1} parent=1 // pred_region
      _
    $region17: #{tpu_custom_call.1} parent=1 // pred_fallthru
      _
    // Predicated region
    $region18: #{tpu_custom_call.1} parent=1 // pred_check
      _
    $region19: #{tpu_custom_call.1} parent=1 // pred_check_branch
      %25 = sbr.rel (0) target = $region21
    $region20: #{tpu_custom_call.1} parent=1 // pred_region
      _
    $region21: #{tpu_custom_call.1} parent=1 // pred_fallthru
      _
    // Predicated region
    $region22: #{tpu_custom_call.1} parent=1 // pred_check
      _
    $region23: #{tpu_custom_call.1} parent=1 // pred_check_branch
      %27 = sbr.rel (0) target = $region25
    $region24: #{tpu_custom_call.1} parent=1 // pred_region
      _
    $region25: #{tpu_custom_call.1} parent=1 // pred_fallthru
      _
    // Predicated region
    $region26: #{tpu_custom_call.1} parent=1 // pred_check
      _
    $region27: #{tpu_custom_call.1} parent=1 // pred_check_branch
      %29 = sbr.rel (0) target = $region29
    $region28: #{tpu_custom_call.1} parent=1 // pred_region
      _
    $region29: #{tpu_custom_call.1} parent=1 // pred_fallthru
      _
    // Predicated region
    $region30: #{tpu_custom_call.1} parent=1 // pred_check
      _
    $region31: #{tpu_custom_call.1} parent=1 // pred_check_branch
      %31 = sbr.rel (0) target = $region33
    $region32: #{tpu_custom_call.1} parent=1 // pred_region
      _
    $region33: #{tpu_custom_call.1} parent=1 // pred_fallthru
      _
    // Predicated region
    $region34: #{tpu_custom_call.1} parent=1 // pred_check
      _
    $region35: #{tpu_custom_call.1} parent=1 // pred_check_branch
      %33 = sbr.rel (0) target = $region37
    $region36: #{tpu_custom_call.1} parent=1 // pred_region
      _
    $region37: #{tpu_custom_call.1} parent=1 // pred_fallthru
      _
    %v35 = vld [vmem:[%s0] sm:$0xff]
    %v36 = vld [vmem:[%s0 + $0x8] sm:$0xff]
    %v37 = vld [vmem:[%s0 + $0x10] sm:$0xff]
    %v38 = vld [vmem:[%s0 + $0x18] sm:$0xff]
    %v39 = vld [vmem:[%s0 + $0x20] sm:$0xff]
    %v40 = vld [vmem:[%s0 + $0x28] sm:$0xff]
    %v41 = vld [vmem:[%s0 + $0x30] sm:$0xff]
    %v42 = vld [vmem:[%s0 + $0x38] sm:$0xff]
    %v43 = vld [vmem:[%s0 + $0x40] sm:$0xff]
    %v44 = vld [vmem:[%s0 + $0x48] sm:$0xff]
    %v45 = vld [vmem:[%s0 + $0x50] sm:$0xff]
    %v46 = vld [vmem:[%s0 + $0x58] sm:$0xff]
    %v47 = vld [vmem:[%s0 + $0x60] sm:$0xff]
    %v48 = vld [vmem:[%s0 + $0x68] sm:$0xff]
    %v49 = vld [vmem:[%s0 + $0x70] sm:$0xff]
    %v50 = vld [vmem:[%s0 + $0x78] sm:$0xff]
    %v51 = vld [vmem:[%s0 + $0x80] sm:$0xff]
    %v52 = vld [vmem:[%s0 + $0x88] sm:$0xff]
    %v53 = vld [vmem:[%s0 + $0x90] sm:$0xff]
    %v54 = vld [vmem:[%s0 + $0x98] sm:$0xff]
    %v55 = vld [vmem:[%s0 + $0xa0] sm:$0xff]
    %v56 = vld [vmem:[%s0 + $0xa8] sm:$0xff]
    %v57 = vld [vmem:[%s0 + $0xb0] sm:$0xff]
    %v58 = vld [vmem:[%s0 + $0xb8] sm:$0xff]
    %v59 = vld [vmem:[%s0 + $0xc0] sm:$0xff]
    %v60 = vld [vmem:[%s0 + $0xc8] sm:$0xff]
    %v61 = vld [vmem:[%s0 + $0xd0] sm:$0xff]
    %v62 = vld [vmem:[%s0 + $0xd8] sm:$0xff]
    %v63 = vld [vmem:[%s0 + $0xe0] sm:$0xff]
    %v64 = vld [vmem:[%s0 + $0xe8] sm:$0xff]
    %v65 = vld [vmem:[%s0 + $0xf0] sm:$0xff]
    %v66 = vld [vmem:[%s0 + $0xf8] sm:$0xff]
    %v67 = vld [vmem:[%s0 + $0x100] sm:$0xff]
    %v68 = vld [vmem:[%s0 + $0x108] sm:$0xff]
    %v69 = vld [vmem:[%s0 + $0x110] sm:$0xff]
    %v70 = vld [vmem:[%s0 + $0x118] sm:$0xff]
    %v71 = vld [vmem:[%s0 + $0x120] sm:$0xff]
    %v72 = vld [vmem:[%s0 + $0x128] sm:$0xff]
    %v73 = vld [vmem:[%s0 + $0x130] sm:$0xff]
    %v74 = vld [vmem:[%s0 + $0x138] sm:$0xff]
    %v75 = vld [vmem:[%s0 + $0x140] sm:$0xff]
    %v76 = vld [vmem:[%s0 + $0x148] sm:$0xff]
    %v77 = vld [vmem:[%s0 + $0x150] sm:$0xff]
    %v78 = vld [vmem:[%s0 + $0x158] sm:$0xff]
    %v79 = vld [vmem:[%s0 + $0x160] sm:$0xff]
    %v80 = vld [vmem:[%s0 + $0x168] sm:$0xff]
    %v81 = vld [vmem:[%s0 + $0x170] sm:$0xff]
    %v82 = vld [vmem:[%s0 + $0x178] sm:$0xff]
    %v83 = vld [vmem:[%s0 + $0x180] sm:$0xff]
    %v84 = vld [vmem:[%s0 + $0x188] sm:$0xff]
    %v85 = vld [vmem:[%s0 + $0x190] sm:$0xff]
    %v86 = vld [vmem:[%s0 + $0x198] sm:$0xff]
    %v87 = vld [vmem:[%s0 + $0x1a0] sm:$0xff]
    %v88 = vld [vmem:[%s0 + $0x1a8] sm:$0xff]
    %v89 = vld [vmem:[%s0 + $0x1b0] sm:$0xff]
    %v90 = vld [vmem:[%s0 + $0x1b8] sm:$0xff]
    %v91 = vld [vmem:[%s0 + $0x1c0] sm:$0xff]
    %v92 = vld [vmem:[%s0 + $0x1c8] sm:$0xff]
    %v93 = vld [vmem:[%s0 + $0x1d0] sm:$0xff]
    %v94 = vld [vmem:[%s0 + $0x1d8] sm:$0xff]
    %v95 = vld [vmem:[%s0 + $0x1e0] sm:$0xff]
    %v96 = vld [vmem:[%s0 + $0x1e8] sm:$0xff]
    %v97 = vld [vmem:[%s0 + $0x1f0] sm:$0xff]
    %v98 = vld [vmem:[%s0 + $0x1f8] sm:$0xff]
    %v99 = vld [vmem:[%s0 + $0x200] sm:$0xff]
    %v100 = vld [vmem:[%s0 + $0x208] sm:$0xff]
    %v101 = vld [vmem:[%s0 + $0x210] sm:$0xff]
    %v102 = vld [vmem:[%s0 + $0x218] sm:$0xff]
    %v103 = vld [vmem:[%s0 + $0x220] sm:$0xff]
    %v104 = vld [vmem:[%s0 + $0x228] sm:$0xff]
    %v105 = vld [vmem:[%s0 + $0x230] sm:$0xff]
    %v106 = vld [vmem:[%s0 + $0x238] sm:$0xff]
    %v107 = vld [vmem:[%s0 + $0x240] sm:$0xff]
    %v108 = vld [vmem:[%s0 + $0x248] sm:$0xff]
    %v109 = vld [vmem:[%s0 + $0x250] sm:$0xff]
    %v110 = vld [vmem:[%s0 + $0x258] sm:$0xff]
    %v111 = vld [vmem:[%s0 + $0x260] sm:$0xff]
    %v112 = vld [vmem:[%s0 + $0x268] sm:$0xff]
    %v113 = vld [vmem:[%s0 + $0x270] sm:$0xff]
    %v114 = vld [vmem:[%s0 + $0x278] sm:$0xff]
    %v115 = vld [vmem:[%s0 + $0x280] sm:$0xff]
    %v116 = vld [vmem:[%s0 + $0x288] sm:$0xff]
    %v117 = vld [vmem:[%s0 + $0x290] sm:$0xff]
    %v118 = vld [vmem:[%s0 + $0x298] sm:$0xff]
    %v119 = vld [vmem:[%s0 + $0x2a0] sm:$0xff]
    %v120 = vld [vmem:[%s0 + $0x2a8] sm:$0xff]
    %v121 = vld [vmem:[%s0 + $0x2b0] sm:$0xff]
    %v122 = vld [vmem:[%s0 + $0x2b8] sm:$0xff]
    %v123 = vld [vmem:[%s0 + $0x2c0] sm:$0xff]
    %v124 = vld [vmem:[%s0 + $0x2c8] sm:$0xff]
    %v125 = vld [vmem:[%s0 + $0x2d0] sm:$0xff]
    %v126 = vld [vmem:[%s0 + $0x2d8] sm:$0xff]
    %v127 = vld [vmem:[%s0 + $0x2e0] sm:$0xff]
    %v128 = vld [vmem:[%s0 + $0x2e8] sm:$0xff]
    %v129 = vld [vmem:[%s0 + $0x2f0] sm:$0xff]
    %v130 = vld [vmem:[%s0 + $0x2f8] sm:$0xff]
    %v131 = vld [vmem:[%s0 + $0x300] sm:$0xff]
    %v132 = vld [vmem:[%s0 + $0x308] sm:$0xff]
    %v133 = vld [vmem:[%s0 + $0x310] sm:$0xff]
    %v134 = vld [vmem:[%s0 + $0x318] sm:$0xff]
    %v135 = vld [vmem:[%s0 + $0x320] sm:$0xff]
    %v136 = vld [vmem:[%s0 + $0x328] sm:$0xff]
    %v137 = vld [vmem:[%s0 + $0x330] sm:$0xff]
    %v138 = vld [vmem:[%s0 + $0x338] sm:$0xff]
    %v139 = vld [vmem:[%s0 + $0x340] sm:$0xff]
    %v140 = vld [vmem:[%s0 + $0x348] sm:$0xff]
    %v141 = vld [vmem:[%s0 + $0x350] sm:$0xff]
    %v142 = vld [vmem:[%s0 + $0x358] sm:$0xff]
    %v143 = vld [vmem:[%s0 + $0x360] sm:$0xff]
    %v144 = vld [vmem:[%s0 + $0x368] sm:$0xff]
    %v145 = vld [vmem:[%s0 + $0x370] sm:$0xff]
    %v146 = vld [vmem:[%s0 + $0x378] sm:$0xff]
    %v147 = vld [vmem:[%s0 + $0x380] sm:$0xff]
    %v148 = vld [vmem:[%s0 + $0x388] sm:$0xff]
    %v149 = vld [vmem:[%s0 + $0x390] sm:$0xff]
    %v150 = vld [vmem:[%s0 + $0x398] sm:$0xff]
    %v151 = vld [vmem:[%s0 + $0x3a0] sm:$0xff]
    %v152 = vld [vmem:[%s0 + $0x3a8] sm:$0xff]
    %v153 = vld [vmem:[%s0 + $0x3b0] sm:$0xff]
    %v154 = vld [vmem:[%s0 + $0x3b8] sm:$0xff]
    %v155 = vld [vmem:[%s0 + $0x3c0] sm:$0xff]
    %v156 = vld [vmem:[%s0 + $0x3c8] sm:$0xff]
    %v157 = vld [vmem:[%s0 + $0x3d0] sm:$0xff]
    %v158 = vld [vmem:[%s0 + $0x3d8] sm:$0xff]
    %v159 = vld [vmem:[%s0 + $0x3e0] sm:$0xff]
    %v160 = vld [vmem:[%s0 + $0x3e8] sm:$0xff]
    %v161 = vld [vmem:[%s0 + $0x3f0] sm:$0xff]
    %v162 = vld [vmem:[%s0 + $0x3f8] sm:$0xff]
    %v163 = vpack.c.bf16 %v36, %v35
    %v164 = vpack.c.bf16 %v38, %v37
    %v165 = vpack.c.bf16 %v40, %v39
    %v166 = vpack.c.bf16 %v42, %v41
    %v167 = vpack.c.bf16 %v44, %v43
    %v168 = vpack.c.bf16 %v46, %v45
    %v169 = vpack.c.bf16 %v48, %v47
    %v170 = vpack.c.bf16 %v50, %v49
    %v171 = vpack.c.bf16 %v52, %v51
    %v172 = vpack.c.bf16 %v54, %v53
    %v173 = vpack.c.bf16 %v56, %v55
    %v174 = vpack.c.bf16 %v58, %v57
    %v175 = vpack.c.bf16 %v60, %v59
    %v176 = vpack.c.bf16 %v62, %v61
    %v177 = vpack.c.bf16 %v64, %v63
    %v178 = vpack.c.bf16 %v66, %v65
    %v179 = vpack.c.bf16 %v68, %v67
    %v180 = vpack.c.bf16 %v70, %v69
    %v181 = vpack.c.bf16 %v72, %v71
    %v182 = vpack.c.bf16 %v74, %v73
    %v183 = vpack.c.bf16 %v76, %v75
    %v184 = vpack.c.bf16 %v78, %v77
    %v185 = vpack.c.bf16 %v80, %v79
    %v186 = vpack.c.bf16 %v82, %v81
    %v187 = vpack.c.bf16 %v84, %v83
    %v188 = vpack.c.bf16 %v86, %v85
    %v189 = vpack.c.bf16 %v88, %v87
    %v190 = vpack.c.bf16 %v90, %v89
    %v191 = vpack.c.bf16 %v92, %v91
    %v192 = vpack.c.bf16 %v94, %v93
    %v193 = vpack.c.bf16 %v96, %v95
    %v194 = vpack.c.bf16 %v98, %v97
    %v195 = vpack.c.bf16 %v100, %v99
    %v196 = vpack.c.bf16 %v102, %v101
    %v197 = vpack.c.bf16 %v104, %v103
    %v198 = vpack.c.bf16 %v106, %v105
    %v199 = vpack.c.bf16 %v108, %v107
    %v200 = vpack.c.bf16 %v110, %v109
    %v201 = vpack.c.bf16 %v112, %v111
    %v202 = vpack.c.bf16 %v114, %v113
    %v203 = vpack.c.bf16 %v116, %v115
    %v204 = vpack.c.bf16 %v118, %v117
    %v205 = vpack.c.bf16 %v120, %v119
    %v206 = vpack.c.bf16 %v122, %v121
    %v207 = vpack.c.bf16 %v124, %v123
    %v208 = vpack.c.bf16 %v126, %v125
    %v209 = vpack.c.bf16 %v128, %v127
    %v210 = vpack.c.bf16 %v130, %v129
    %v211 = vpack.c.bf16 %v132, %v131
    %v212 = vpack.c.bf16 %v134, %v133
    %v213 = vpack.c.bf16 %v136, %v135
    %v214 = vpack.c.bf16 %v138, %v137
    %v215 = vpack.c.bf16 %v140, %v139
    %v216 = vpack.c.bf16 %v142, %v141
    %v217 = vpack.c.bf16 %v144, %v143
    %v218 = vpack.c.bf16 %v146, %v145
    %v219 = vpack.c.bf16 %v148, %v147
    %v220 = vpack.c.bf16 %v150, %v149
    %v221 = vpack.c.bf16 %v152, %v151
    %v222 = vpack.c.bf16 %v154, %v153
    %v223 = vpack.c.bf16 %v156, %v155
    %v224 = vpack.c.bf16 %v158, %v157
    %v225 = vpack.c.bf16 %v160, %v159
    %v226 = vpack.c.bf16 %v162, %v161
    %v227 = vld [vmem:[%s1] sm:$0xff]
    %v228 = vld [vmem:[%s1 + $0x8] sm:$0xff]
    %v229 = vld [vmem:[%s1 + $0x10] sm:$0xff]
    %v230 = vld [vmem:[%s1 + $0x18] sm:$0xff]
    %v231 = vld [vmem:[%s1 + $0x20] sm:$0xff]
    %v232 = vld [vmem:[%s1 + $0x28] sm:$0xff]
    %v233 = vld [vmem:[%s1 + $0x30] sm:$0xff]
    %v234 = vld [vmem:[%s1 + $0x38] sm:$0xff]
    %v235 = vld [vmem:[%s1 + $0x40] sm:$0xff]
    %v236 = vld [vmem:[%s1 + $0x48] sm:$0xff]
    %v237 = vld [vmem:[%s1 + $0x50] sm:$0xff]
    %v238 = vld [vmem:[%s1 + $0x58] sm:$0xff]
    %v239 = vld [vmem:[%s1 + $0x60] sm:$0xff]
    %v240 = vld [vmem:[%s1 + $0x68] sm:$0xff]
    %v241 = vld [vmem:[%s1 + $0x70] sm:$0xff]
    %v242 = vld [vmem:[%s1 + $0x78] sm:$0xff]
    %v243 = vld [vmem:[%s1 + $0x80] sm:$0xff]
    %v244 = vld [vmem:[%s1 + $0x88] sm:$0xff]
    %v245 = vld [vmem:[%s1 + $0x90] sm:$0xff]
    %v246 = vld [vmem:[%s1 + $0x98] sm:$0xff]
    %v247 = vld [vmem:[%s1 + $0xa0] sm:$0xff]
    %v248 = vld [vmem:[%s1 + $0xa8] sm:$0xff]
    %v249 = vld [vmem:[%s1 + $0xb0] sm:$0xff]
    %v250 = vld [vmem:[%s1 + $0xb8] sm:$0xff]
    %v251 = vld [vmem:[%s1 + $0xc0] sm:$0xff]
    %v252 = vld [vmem:[%s1 + $0xc8] sm:$0xff]
    %v253 = vld [vmem:[%s1 + $0xd0] sm:$0xff]
    %v254 = vld [vmem:[%s1 + $0xd8] sm:$0xff]
    %v255 = vld [vmem:[%s1 + $0xe0] sm:$0xff]
    %v256 = vld [vmem:[%s1 + $0xe8] sm:$0xff]
    %v257 = vld [vmem:[%s1 + $0xf0] sm:$0xff]
    %v258 = vld [vmem:[%s1 + $0xf8] sm:$0xff]
    %v259 = vld [vmem:[%s1 + $0x100] sm:$0xff]
    %v260 = vld [vmem:[%s1 + $0x108] sm:$0xff]
    %v261 = vld [vmem:[%s1 + $0x110] sm:$0xff]
    %v262 = vld [vmem:[%s1 + $0x118] sm:$0xff]
    %v263 = vld [vmem:[%s1 + $0x120] sm:$0xff]
    %v264 = vld [vmem:[%s1 + $0x128] sm:$0xff]
    %v265 = vld [vmem:[%s1 + $0x130] sm:$0xff]
    %v266 = vld [vmem:[%s1 + $0x138] sm:$0xff]
    %v267 = vld [vmem:[%s1 + $0x140] sm:$0xff]
    %v268 = vld [vmem:[%s1 + $0x148] sm:$0xff]
    %v269 = vld [vmem:[%s1 + $0x150] sm:$0xff]
    %v270 = vld [vmem:[%s1 + $0x158] sm:$0xff]
    %v271 = vld [vmem:[%s1 + $0x160] sm:$0xff]
    %v272 = vld [vmem:[%s1 + $0x168] sm:$0xff]
    %v273 = vld [vmem:[%s1 + $0x170] sm:$0xff]
    %v274 = vld [vmem:[%s1 + $0x178] sm:$0xff]
    %v275 = vld [vmem:[%s1 + $0x180] sm:$0xff]
    %v276 = vld [vmem:[%s1 + $0x188] sm:$0xff]
    %v277 = vld [vmem:[%s1 + $0x190] sm:$0xff]
    %v278 = vld [vmem:[%s1 + $0x198] sm:$0xff]
    %v279 = vld [vmem:[%s1 + $0x1a0] sm:$0xff]
    %v280 = vld [vmem:[%s1 + $0x1a8] sm:$0xff]
    %v281 = vld [vmem:[%s1 + $0x1b0] sm:$0xff]
    %v282 = vld [vmem:[%s1 + $0x1b8] sm:$0xff]
    %v283 = vld [vmem:[%s1 + $0x1c0] sm:$0xff]
    %v284 = vld [vmem:[%s1 + $0x1c8] sm:$0xff]
    %v285 = vld [vmem:[%s1 + $0x1d0] sm:$0xff]
    %v286 = vld [vmem:[%s1 + $0x1d8] sm:$0xff]
    %v287 = vld [vmem:[%s1 + $0x1e0] sm:$0xff]
    %v288 = vld [vmem:[%s1 + $0x1e8] sm:$0xff]
    %v289 = vld [vmem:[%s1 + $0x1f0] sm:$0xff]
    %v290 = vld [vmem:[%s1 + $0x1f8] sm:$0xff]
    %v291 = vld [vmem:[%s1 + $0x200] sm:$0xff]
    %v292 = vld [vmem:[%s1 + $0x208] sm:$0xff]
    %v293 = vld [vmem:[%s1 + $0x210] sm:$0xff]
    %v294 = vld [vmem:[%s1 + $0x218] sm:$0xff]
    %v295 = vld [vmem:[%s1 + $0x220] sm:$0xff]
    %v296 = vld [vmem:[%s1 + $0x228] sm:$0xff]
    %v297 = vld [vmem:[%s1 + $0x230] sm:$0xff]
    %v298 = vld [vmem:[%s1 + $0x238] sm:$0xff]
    %v299 = vld [vmem:[%s1 + $0x240] sm:$0xff]
    %v300 = vld [vmem:[%s1 + $0x248] sm:$0xff]
    %v301 = vld [vmem:[%s1 + $0x250] sm:$0xff]
    %v302 = vld [vmem:[%s1 + $0x258] sm:$0xff]
    %v303 = vld [vmem:[%s1 + $0x260] sm:$0xff]
    %v304 = vld [vmem:[%s1 + $0x268] sm:$0xff]
    %v305 = vld [vmem:[%s1 + $0x270] sm:$0xff]
    %v306 = vld [vmem:[%s1 + $0x278] sm:$0xff]
    %v307 = vld [vmem:[%s1 + $0x280] sm:$0xff]
    %v308 = vld [vmem:[%s1 + $0x288] sm:$0xff]
    %v309 = vld [vmem:[%s1 + $0x290] sm:$0xff]
    %v310 = vld [vmem:[%s1 + $0x298] sm:$0xff]
    %v311 = vld [vmem:[%s1 + $0x2a0] sm:$0xff]
    %v312 = vld [vmem:[%s1 + $0x2a8] sm:$0xff]
    %v313 = vld [vmem:[%s1 + $0x2b0] sm:$0xff]
    %v314 = vld [vmem:[%s1 + $0x2b8] sm:$0xff]
    %v315 = vld [vmem:[%s1 + $0x2c0] sm:$0xff]
    %v316 = vld [vmem:[%s1 + $0x2c8] sm:$0xff]
    %v317 = vld [vmem:[%s1 + $0x2d0] sm:$0xff]
    %v318 = vld [vmem:[%s1 + $0x2d8] sm:$0xff]
    %v319 = vld [vmem:[%s1 + $0x2e0] sm:$0xff]
    %v320 = vld [vmem:[%s1 + $0x2e8] sm:$0xff]
    %v321 = vld [vmem:[%s1 + $0x2f0] sm:$0xff]
    %v322 = vld [vmem:[%s1 + $0x2f8] sm:$0xff]
    %v323 = vld [vmem:[%s1 + $0x300] sm:$0xff]
    %v324 = vld [vmem:[%s1 + $0x308] sm:$0xff]
    %v325 = vld [vmem:[%s1 + $0x310] sm:$0xff]
    %v326 = vld [vmem:[%s1 + $0x318] sm:$0xff]
    %v327 = vld [vmem:[%s1 + $0x320] sm:$0xff]
    %v328 = vld [vmem:[%s1 + $0x328] sm:$0xff]
    %v329 = vld [vmem:[%s1 + $0x330] sm:$0xff]
    %v330 = vld [vmem:[%s1 + $0x338] sm:$0xff]
    %v331 = vld [vmem:[%s1 + $0x340] sm:$0xff]
    %v332 = vld [vmem:[%s1 + $0x348] sm:$0xff]
    %v333 = vld [vmem:[%s1 + $0x350] sm:$0xff]
    %v334 = vld [vmem:[%s1 + $0x358] sm:$0xff]
    %v335 = vld [vmem:[%s1 + $0x360] sm:$0xff]
    %v336 = vld [vmem:[%s1 + $0x368] sm:$0xff]
    %v337 = vld [vmem:[%s1 + $0x370] sm:$0xff]
    %v338 = vld [vmem:[%s1 + $0x378] sm:$0xff]
    %v339 = vld [vmem:[%s1 + $0x380] sm:$0xff]
    %v340 = vld [vmem:[%s1 + $0x388] sm:$0xff]
    %v341 = vld [vmem:[%s1 + $0x390] sm:$0xff]
    %v342 = vld [vmem:[%s1 + $0x398] sm:$0xff]
    %v343 = vld [vmem:[%s1 + $0x3a0] sm:$0xff]
    %v344 = vld [vmem:[%s1 + $0x3a8] sm:$0xff]
    %v345 = vld [vmem:[%s1 + $0x3b0] sm:$0xff]
    %v346 = vld [vmem:[%s1 + $0x3b8] sm:$0xff]
    %v347 = vld [vmem:[%s1 + $0x3c0] sm:$0xff]
    %v348 = vld [vmem:[%s1 + $0x3c8] sm:$0xff]
    %v349 = vld [vmem:[%s1 + $0x3d0] sm:$0xff]
    %v350 = vld [vmem:[%s1 + $0x3d8] sm:$0xff]
    %v351 = vld [vmem:[%s1 + $0x3e0] sm:$0xff]
    %v352 = vld [vmem:[%s1 + $0x3e8] sm:$0xff]
    %v353 = vld [vmem:[%s1 + $0x3f0] sm:$0xff]
    %v354 = vld [vmem:[%s1 + $0x3f8] sm:$0xff]
    %v355 = vpack.c.bf16 %v228, %v227
    %v356 = vpack.c.bf16 %v230, %v229
    %v357 = vpack.c.bf16 %v232, %v231
    %v358 = vpack.c.bf16 %v234, %v233
    %v359 = vpack.c.bf16 %v236, %v235
    %v360 = vpack.c.bf16 %v238, %v237
    %v361 = vpack.c.bf16 %v240, %v239
    %v362 = vpack.c.bf16 %v242, %v241
    %v363 = vpack.c.bf16 %v244, %v243
    %v364 = vpack.c.bf16 %v246, %v245
    %v365 = vpack.c.bf16 %v248, %v247
    %v366 = vpack.c.bf16 %v250, %v249
    %v367 = vpack.c.bf16 %v252, %v251
    %v368 = vpack.c.bf16 %v254, %v253
    %v369 = vpack.c.bf16 %v256, %v255
    %v370 = vpack.c.bf16 %v258, %v257
    %v371 = vpack.c.bf16 %v260, %v259
    %v372 = vpack.c.bf16 %v262, %v261
    %v373 = vpack.c.bf16 %v264, %v263
    %v374 = vpack.c.bf16 %v266, %v265
    %v375 = vpack.c.bf16 %v268, %v267
    %v376 = vpack.c.bf16 %v270, %v269
    %v377 = vpack.c.bf16 %v272, %v271
    %v378 = vpack.c.bf16 %v274, %v273
    %v379 = vpack.c.bf16 %v276, %v275
    %v380 = vpack.c.bf16 %v278, %v277
    %v381 = vpack.c.bf16 %v280, %v279
    %v382 = vpack.c.bf16 %v282, %v281
    %v383 = vpack.c.bf16 %v284, %v283
    %v384 = vpack.c.bf16 %v286, %v285
    %v385 = vpack.c.bf16 %v288, %v287
    %v386 = vpack.c.bf16 %v290, %v289
    %v387 = vpack.c.bf16 %v292, %v291
    %v388 = vpack.c.bf16 %v294, %v293
    %v389 = vpack.c.bf16 %v296, %v295
    %v390 = vpack.c.bf16 %v298, %v297
    %v391 = vpack.c.bf16 %v300, %v299
    %v392 = vpack.c.bf16 %v302, %v301
    %v393 = vpack.c.bf16 %v304, %v303
    %v394 = vpack.c.bf16 %v306, %v305
    %v395 = vpack.c.bf16 %v308, %v307
    %v396 = vpack.c.bf16 %v310, %v309
    %v397 = vpack.c.bf16 %v312, %v311
    %v398 = vpack.c.bf16 %v314, %v313
    %v399 = vpack.c.bf16 %v316, %v315
    %v400 = vpack.c.bf16 %v318, %v317
    %v401 = vpack.c.bf16 %v320, %v319
    %v402 = vpack.c.bf16 %v322, %v321
    %v403 = vpack.c.bf16 %v324, %v323
    %v404 = vpack.c.bf16 %v326, %v325
    %v405 = vpack.c.bf16 %v328, %v327
    %v406 = vpack.c.bf16 %v330, %v329
    %v407 = vpack.c.bf16 %v332, %v331
    %v408 = vpack.c.bf16 %v334, %v333
    %v409 = vpack.c.bf16 %v336, %v335
    %v410 = vpack.c.bf16 %v338, %v337
    %v411 = vpack.c.bf16 %v340, %v339
    %v412 = vpack.c.bf16 %v342, %v341
    %v413 = vpack.c.bf16 %v344, %v343
    %v414 = vpack.c.bf16 %v346, %v345
    %v415 = vpack.c.bf16 %v348, %v347
    %v416 = vpack.c.bf16 %v350, %v349
    %v417 = vpack.c.bf16 %v352, %v351
    %v418 = vpack.c.bf16 %v354, %v353
    %v419 = vld [vmem:[%s2] sm:$0xff]
    %v420 = vld [vmem:[%s2 + $0x8] sm:$0xff]
    %v421 = vld [vmem:[%s2 + $0x10] sm:$0xff]
    %v422 = vld [vmem:[%s2 + $0x18] sm:$0xff]
    %v423 = vld [vmem:[%s3] sm:$0xf]
    %v425 = vlaneseq
    %v426 = vshrl.u32 %v425, 7
    %v427 = vsub.s32 0, %v426
    %v428 = vrot.slane %v423, %v427
    %v429 = vlaneseq
    %v430 = vshrl.u32 %v429, 7
    %v431 = vsub.s32 1, %v430
    %v432 = vrot.slane %v423, %v431
    %v433 = vlaneseq
    %v434 = vshrl.u32 %v433, 7
    %v435 = vsub.s32 2, %v434
    %v436 = vrot.slane %v423, %v435
    %v437 = vlaneseq
    %v438 = vshrl.u32 %v437, 7
    %v439 = vsub.s32 3, %v438
    %v440 = vrot.slane %v423, %v439
    %v449 = vunpack.c.l.b16 %v419
    %v450 = vunpack.c.h.b16 %v419
    %v451 = vunpack.c.l.b16 %v420
    %v452 = vunpack.c.h.b16 %v420
    %v453 = vunpack.c.l.b16 %v421
    %v454 = vunpack.c.h.b16 %v421
    %v455 = vunpack.c.l.b16 %v422
    %v456 = vunpack.c.h.b16 %v422
    %v457 = vpack.c.b16 %v453, %v449
    %v458 = vpack.c.b16 %v454, %v450
    %v459 = vpack.c.b16 %v455, %v451
    %v460 = vpack.c.b16 %v456, %v452
    %vm465 = vcmask 130048
    %v467 = vsel %vm465, %v163, 0
    %v470 = vsel %vm465, %v164, 0
    %v473 = vsel %vm465, %v165, 0
    %v476 = vsel %vm465, %v166, 0
    %v479 = vsel %vm465, %v167, 0
    %v482 = vsel %vm465, %v168, 0
    %v485 = vsel %vm465, %v169, 0
    %v488 = vsel %vm465, %v170, 0
    %v491 = vsel %vm465, %v171, 0
    %v494 = vsel %vm465, %v172, 0
    %v497 = vsel %vm465, %v173, 0
    %v500 = vsel %vm465, %v174, 0
    %v503 = vsel %vm465, %v175, 0
    %v506 = vsel %vm465, %v176, 0
    %v509 = vsel %vm465, %v177, 0
    %v512 = vsel %vm465, %v178, 0
    %v515 = vsel %vm465, %v179, 0
    %v518 = vsel %vm465, %v180, 0
    %v521 = vsel %vm465, %v181, 0
    %v524 = vsel %vm465, %v182, 0
    %v527 = vsel %vm465, %v183, 0
    %v530 = vsel %vm465, %v184, 0
    %v533 = vsel %vm465, %v185, 0
    %v536 = vsel %vm465, %v186, 0
    %v539 = vsel %vm465, %v187, 0
    %v542 = vsel %vm465, %v188, 0
    %v545 = vsel %vm465, %v189, 0
    %v548 = vsel %vm465, %v190, 0
    %v551 = vsel %vm465, %v191, 0
    %v554 = vsel %vm465, %v192, 0
    %v557 = vsel %vm465, %v193, 0
    %v560 = vsel %vm465, %v194, 0
    %v563 = vsel %vm465, %v195, 0
    %v566 = vsel %vm465, %v196, 0
    %v569 = vsel %vm465, %v197, 0
    %v572 = vsel %vm465, %v198, 0
    %v575 = vsel %vm465, %v199, 0
    %v578 = vsel %vm465, %v200, 0
    %v581 = vsel %vm465, %v201, 0
    %v584 = vsel %vm465, %v202, 0
    %v587 = vsel %vm465, %v203, 0
    %v590 = vsel %vm465, %v204, 0
    %v593 = vsel %vm465, %v205, 0
    %v596 = vsel %vm465, %v206, 0
    %v599 = vsel %vm465, %v207, 0
    %v602 = vsel %vm465, %v208, 0
    %v605 = vsel %vm465, %v209, 0
    %v608 = vsel %vm465, %v210, 0
    %v611 = vsel %vm465, %v211, 0
    %v614 = vsel %vm465, %v212, 0
    %v617 = vsel %vm465, %v213, 0
    %v620 = vsel %vm465, %v214, 0
    %v623 = vsel %vm465, %v215, 0
    %v626 = vsel %vm465, %v216, 0
    %v629 = vsel %vm465, %v217, 0
    %v632 = vsel %vm465, %v218, 0
    %v635 = vsel %vm465, %v219, 0
    %v638 = vsel %vm465, %v220, 0
    %v641 = vsel %vm465, %v221, 0
    %v644 = vsel %vm465, %v222, 0
    %v647 = vsel %vm465, %v223, 0
    %v650 = vsel %vm465, %v224, 0
    %v653 = vsel %vm465, %v225, 0
    %v656 = vsel %vm465, %v226, 0
    %658 = vmatprep.subr.bf16.mxu0 %v458
    %659 = vmatpush1.bf16.msra.mxu0 %v457
    %660 = vmatprep.subr.bf16.mxu0 0
    %661 = vmatpush1.bf16.msra.mxu0 0
    %662 = vmatprep.subr.bf16.mxu0 0
    %663 = vmatpush1.bf16.msra.mxu0 0
    %664 = vmatprep.subr.bf16.mxu0 0
    %665 = vmatpush1.bf16.msra.mxu0 0
    %666 = vmatprep.subr.bf16.mxu0 0
    %667 = vmatpush1.bf16.msra.mxu0 0
    %668 = vmatprep.subr.bf16.mxu0 0
    %669 = vmatpush1.bf16.msra.mxu0 0
    %670 = vmatprep.subr.bf16.mxu0 0
    %671 = vmatpush1.bf16.msra.mxu0 0
    %672 = vmatprep.subr.bf16.mxu0 0
    %673 = vmatpush1.bf16.msra.mxu0 0
    %674 = vmatprep.subr.bf16.mxu0 0
    %675 = vmatpush1.bf16.msra.mxu0 0
    %676 = vmatprep.subr.bf16.mxu0 0
    %677 = vmatpush1.bf16.msra.mxu0 0
    %678 = vmatprep.subr.bf16.mxu0 0
    %679 = vmatpush1.bf16.msra.mxu0 0
    %680 = vmatprep.subr.bf16.mxu0 0
    %681 = vmatpush1.bf16.msra.mxu0 0
    %682 = vmatprep.subr.bf16.mxu0 0
    %683 = vmatpush1.bf16.msra.mxu0 0
    %684 = vmatprep.subr.bf16.mxu0 0
    %685 = vmatpush1.bf16.msra.mxu0 0
    %686 = vmatprep.subr.bf16.mxu0 0
    %687 = vmatpush1.bf16.msra.mxu0 0
    %688 = vmatprep.subr.bf16.mxu0 0
    %689 = vmatpush1.bf16.msra.mxu0 0
    %690 = vmatprep.mubr.bf16.mxu0 0
    %691 = vmatmul.mubr.bf16.gmra.mrb[0].mxu0 %v467
    %v692 = vpop.f32.mrb[0].mxu0
    %v693 = vadd.f32 %v428, %v692
    %v694 = vpop.f32.mrb[0].mxu0
    %v695 = vadd.f32 %v432, %v694
    %v696 = vpop.f32.mrb[0].mxu0
    %v697 = vadd.f32 %v428, %v696
    %v698 = vpop.f32.mrb[0].mxu0
    %v699 = vadd.f32 %v432, %v698
    %700 = vmatprep.mubr.bf16.mxu0 0
    %701 = vmatmul.mubr.bf16.gmra.mrb[0].mxu0 %v470
    %v702 = vpop.f32.mrb[0].mxu0
    %v703 = vadd.f32 %v428, %v702
    %v704 = vpop.f32.mrb[0].mxu0
    %v705 = vadd.f32 %v432, %v704
    %v706 = vpop.f32.mrb[0].mxu0
    %v707 = vadd.f32 %v428, %v706
    %v708 = vpop.f32.mrb[0].mxu0
    %v709 = vadd.f32 %v432, %v708
    %710 = vmatprep.mubr.bf16.mxu0 0
    %711 = vmatmul.mubr.bf16.gmra.mrb[0].mxu0 %v473
    %v712 = vpop.f32.mrb[0].mxu0
    %v713 = vadd.f32 %v428, %v712
    %v714 = vpop.f32.mrb[0].mxu0
    %v715 = vadd.f32 %v432, %v714
    %v716 = vpop.f32.mrb[0].mxu0
    %v717 = vadd.f32 %v428, %v716
    %v718 = vpop.f32.mrb[0].mxu0
    %v719 = vadd.f32 %v432, %v718
    %720 = vmatprep.mubr.bf16.mxu0 0
    %721 = vmatmul.mubr.bf16.gmra.mrb[0].mxu0 %v476
    %v722 = vpop.f32.mrb[0].mxu0
    %v723 = vadd.f32 %v428, %v722
    %v724 = vpop.f32.mrb[0].mxu0
    %v725 = vadd.f32 %v432, %v724
    %v726 = vpop.f32.mrb[0].mxu0
    %v727 = vadd.f32 %v428, %v726
    %v728 = vpop.f32.mrb[0].mxu0
    %v729 = vadd.f32 %v432, %v728
    %730 = vmatprep.mubr.bf16.mxu0 0
    %731 = vmatmul.mubr.bf16.gmra.mrb[0].mxu0 %v479
    %v732 = vpop.f32.mrb[0].mxu0
    %v733 = vadd.f32 %v428, %v732
    %v734 = vpop.f32.mrb[0].mxu0
    %v735 = vadd.f32 %v432, %v734
    %v736 = vpop.f32.mrb[0].mxu0
    %v737 = vadd.f32 %v428, %v736
    %v738 = vpop.f32.mrb[0].mxu0
    %v739 = vadd.f32 %v432, %v738
    %740 = vmatprep.mubr.bf16.mxu0 0
    %741 = vmatmul.mubr.bf16.gmra.mrb[0].mxu0 %v482
    %v742 = vpop.f32.mrb[0].mxu0
    %v743 = vadd.f32 %v428, %v742
    %v744 = vpop.f32.mrb[0].mxu0
    %v745 = vadd.f32 %v432, %v744
    %v746 = vpop.f32.mrb[0].mxu0
    %v747 = vadd.f32 %v428, %v746
    %v748 = vpop.f32.mrb[0].mxu0
    %v749 = vadd.f32 %v432, %v748
    %750 = vmatprep.mubr.bf16.mxu0 0
    %751 = vmatmul.mubr.bf16.gmra.mrb[0].mxu0 %v485
    %v752 = vpop.f32.mrb[0].mxu0
    %v753 = vadd.f32 %v428, %v752
    %v754 = vpop.f32.mrb[0].mxu0
    %v755 = vadd.f32 %v432, %v754
    %v756 = vpop.f32.mrb[0].mxu0
    %v757 = vadd.f32 %v428, %v756
    %v758 = vpop.f32.mrb[0].mxu0
    %v759 = vadd.f32 %v432, %v758
    %760 = vmatprep.mubr.bf16.mxu0 0
    %761 = vmatmul.mubr.bf16.gmra.mrb[0].mxu0 %v488
    %v762 = vpop.f32.mrb[0].mxu0
    %v763 = vadd.f32 %v428, %v762
    %v764 = vpop.f32.mrb[0].mxu0
    %v765 = vadd.f32 %v432, %v764
    %v766 = vpop.f32.mrb[0].mxu0
    %v767 = vadd.f32 %v428, %v766
    %v768 = vpop.f32.mrb[0].mxu0
    %v769 = vadd.f32 %v432, %v768
    %770 = vmatprep.mubr.bf16.mxu0 0
    %771 = vmatmul.mubr.bf16.gmra.mrb[0].mxu0 %v491
    %v772 = vpop.f32.mrb[0].mxu0
    %v773 = vadd.f32 %v428, %v772
    %v774 = vpop.f32.mrb[0].mxu0
    %v775 = vadd.f32 %v432, %v774
    %v776 = vpop.f32.mrb[0].mxu0
    %v777 = vadd.f32 %v428, %v776
    %v778 = vpop.f32.mrb[0].mxu0
    %v779 = vadd.f32 %v432, %v778
    %780 = vmatprep.mubr.bf16.mxu0 0
    %781 = vmatmul.mubr.bf16.gmra.mrb[0].mxu0 %v494
    %v782 = vpop.f32.mrb[0].mxu0
    %v783 = vadd.f32 %v428, %v782
    %v784 = vpop.f32.mrb[0].mxu0
    %v785 = vadd.f32 %v432, %v784
    %v786 = vpop.f32.mrb[0].mxu0
    %v787 = vadd.f32 %v428, %v786
    %v788 = vpop.f32.mrb[0].mxu0
    %v789 = vadd.f32 %v432, %v788
    %790 = vmatprep.mubr.bf16.mxu0 0
    %791 = vmatmul.mubr.bf16.gmra.mrb[0].mxu0 %v497
    %v792 = vpop.f32.mrb[0].mxu0
    %v793 = vadd.f32 %v428, %v792
    %v794 = vpop.f32.mrb[0].mxu0
    %v795 = vadd.f32 %v432, %v794
    %v796 = vpop.f32.mrb[0].mxu0
    %v797 = vadd.f32 %v428, %v796
    %v798 = vpop.f32.mrb[0].mxu0
    %v799 = vadd.f32 %v432, %v798
    %800 = vmatprep.mubr.bf16.mxu0 0
    %801 = vmatmul.mubr.bf16.gmra.mrb[0].mxu0 %v500
    %v802 = vpop.f32.mrb[0].mxu0
    %v803 = vadd.f32 %v428, %v802
    %v804 = vpop.f32.mrb[0].mxu0
    %v805 = vadd.f32 %v432, %v804
    %v806 = vpop.f32.mrb[0].mxu0
    %v807 = vadd.f32 %v428, %v806
    %v808 = vpop.f32.mrb[0].mxu0
    %v809 = vadd.f32 %v432, %v808
    %810 = vmatprep.mubr.bf16.mxu0 0
    %811 = vmatmul.mubr.bf16.gmra.mrb[0].mxu0 %v503
    %v812 = vpop.f32.mrb[0].mxu0
    %v813 = vadd.f32 %v428, %v812
    %v814 = vpop.f32.mrb[0].mxu0
    %v815 = vadd.f32 %v432, %v814
    %v816 = vpop.f32.mrb[0].mxu0
    %v817 = vadd.f32 %v428, %v816
    %v818 = vpop.f32.mrb[0].mxu0
    %v819 = vadd.f32 %v432, %v818
    %820 = vmatprep.mubr.bf16.mxu0 0
    %821 = vmatmul.mubr.bf16.gmra.mrb[0].mxu0 %v506
    %v822 = vpop.f32.mrb[0].mxu0
    %v823 = vadd.f32 %v428, %v822
    %v824 = vpop.f32.mrb[0].mxu0
    %v825 = vadd.f32 %v432, %v824
    %v826 = vpop.f32.mrb[0].mxu0
    %v827 = vadd.f32 %v428, %v826
    %v828 = vpop.f32.mrb[0].mxu0
    %v829 = vadd.f32 %v432, %v828
    %830 = vmatprep.mubr.bf16.mxu0 0
    %831 = vmatmul.mubr.bf16.gmra.mrb[0].mxu0 %v509
    %v832 = vpop.f32.mrb[0].mxu0
    %v833 = vadd.f32 %v428, %v832
    %v834 = vpop.f32.mrb[0].mxu0
    %v835 = vadd.f32 %v432, %v834
    %v836 = vpop.f32.mrb[0].mxu0
    %v837 = vadd.f32 %v428, %v836
    %v838 = vpop.f32.mrb[0].mxu0
    %v839 = vadd.f32 %v432, %v838
    %840 = vmatprep.mubr.bf16.mxu0 0
    %841 = vmatmul.mubr.bf16.gmra.mrb[0].mxu0 %v512
    %v842 = vpop.f32.mrb[0].mxu0
    %v843 = vadd.f32 %v428, %v842
    %v844 = vpop.f32.mrb[0].mxu0
    %v845 = vadd.f32 %v432, %v844
    %v846 = vpop.f32.mrb[0].mxu0
    %v847 = vadd.f32 %v428, %v846
    %v848 = vpop.f32.mrb[0].mxu0
    %v849 = vadd.f32 %v432, %v848
    %850 = vmatprep.mubr.bf16.mxu0 0
    %851 = vmatmul.mubr.bf16.gmra.mrb[0].mxu0 %v515
    %v852 = vpop.f32.mrb[0].mxu0
    %v853 = vadd.f32 %v428, %v852
    %v854 = vpop.f32.mrb[0].mxu0
    %v855 = vadd.f32 %v432, %v854
    %v856 = vpop.f32.mrb[0].mxu0
    %v857 = vadd.f32 %v428, %v856
    %v858 = vpop.f32.mrb[0].mxu0
    %v859 = vadd.f32 %v432, %v858
    %860 = vmatprep.mubr.bf16.mxu0 0
    %861 = vmatmul.mubr.bf16.gmra.mrb[0].mxu0 %v518
    %v862 = vpop.f32.mrb[0].mxu0
    %v863 = vadd.f32 %v428, %v862
    %v864 = vpop.f32.mrb[0].mxu0
    %v865 = vadd.f32 %v432, %v864
    %v866 = vpop.f32.mrb[0].mxu0
    %v867 = vadd.f32 %v428, %v866
    %v868 = vpop.f32.mrb[0].mxu0
    %v869 = vadd.f32 %v432, %v868
    %870 = vmatprep.mubr.bf16.mxu0 0
    %871 = vmatmul.mubr.bf16.gmra.mrb[0].mxu0 %v521
    %v872 = vpop.f32.mrb[0].mxu0
    %v873 = vadd.f32 %v428, %v872
    %v874 = vpop.f32.mrb[0].mxu0
    %v875 = vadd.f32 %v432, %v874
    %v876 = vpop.f32.mrb[0].mxu0
    %v877 = vadd.f32 %v428, %v876
    %v878 = vpop.f32.mrb[0].mxu0
    %v879 = vadd.f32 %v432, %v878
    %880 = vmatprep.mubr.bf16.mxu0 0
    %881 = vmatmul.mubr.bf16.gmra.mrb[0].mxu0 %v524
    %v882 = vpop.f32.mrb[0].mxu0
    %v883 = vadd.f32 %v428, %v882
    %v884 = vpop.f32.mrb[0].mxu0
    %v885 = vadd.f32 %v432, %v884
    %v886 = vpop.f32.mrb[0].mxu0
    %v887 = vadd.f32 %v428, %v886
    %v888 = vpop.f32.mrb[0].mxu0
    %v889 = vadd.f32 %v432, %v888
    %890 = vmatprep.mubr.bf16.mxu0 0
    %891 = vmatmul.mubr.bf16.gmra.mrb[0].mxu0 %v527
    %v892 = vpop.f32.mrb[0].mxu0
    %v893 = vadd.f32 %v428, %v892
    %v894 = vpop.f32.mrb[0].mxu0
    %v895 = vadd.f32 %v432, %v894
    %v896 = vpop.f32.mrb[0].mxu0
    %v897 = vadd.f32 %v428, %v896
    %v898 = vpop.f32.mrb[0].mxu0
    %v899 = vadd.f32 %v432, %v898
    %900 = vmatprep.mubr.bf16.mxu0 0
    %901 = vmatmul.mubr.bf16.gmra.mrb[0].mxu0 %v530
    %v902 = vpop.f32.mrb[0].mxu0
    %v903 = vadd.f32 %v428, %v902
    %v904 = vpop.f32.mrb[0].mxu0
    %v905 = vadd.f32 %v432, %v904
    %v906 = vpop.f32.mrb[0].mxu0
    %v907 = vadd.f32 %v428, %v906
    %v908 = vpop.f32.mrb[0].mxu0
    %v909 = vadd.f32 %v432, %v908
    %910 = vmatprep.mubr.bf16.mxu0 0
    %911 = vmatmul.mubr.bf16.gmra.mrb[0].mxu0 %v533
    %v912 = vpop.f32.mrb[0].mxu0
    %v913 = vadd.f32 %v428, %v912
    %v914 = vpop.f32.mrb[0].mxu0
    %v915 = vadd.f32 %v432, %v914
    %v916 = vpop.f32.mrb[0].mxu0
    %v917 = vadd.f32 %v428, %v916
    %v918 = vpop.f32.mrb[0].mxu0
    %v919 = vadd.f32 %v432, %v918
    %920 = vmatprep.mubr.bf16.mxu0 0
    %921 = vmatmul.mubr.bf16.gmra.mrb[0].mxu0 %v536
    %v922 = vpop.f32.mrb[0].mxu0
    %v923 = vadd.f32 %v428, %v922
    %v924 = vpop.f32.mrb[0].mxu0
    %v925 = vadd.f32 %v432, %v924
    %v926 = vpop.f32.mrb[0].mxu0
    %v927 = vadd.f32 %v428, %v926
    %v928 = vpop.f32.mrb[0].mxu0
    %v929 = vadd.f32 %v432, %v928
    %930 = vmatprep.mubr.bf16.mxu0 0
    %931 = vmatmul.mubr.bf16.gmra.mrb[0].mxu0 %v539
    %v932 = vpop.f32.mrb[0].mxu0
    %v933 = vadd.f32 %v428, %v932
    %v934 = vpop.f32.mrb[0].mxu0
    %v935 = vadd.f32 %v432, %v934
    %v936 = vpop.f32.mrb[0].mxu0
    %v937 = vadd.f32 %v428, %v936
    %v938 = vpop.f32.mrb[0].mxu0
    %v939 = vadd.f32 %v432, %v938
    %940 = vmatprep.mubr.bf16.mxu0 0
    %941 = vmatmul.mubr.bf16.gmra.mrb[0].mxu0 %v542
    %v942 = vpop.f32.mrb[0].mxu0
    %v943 = vadd.f32 %v428, %v942
    %v944 = vpop.f32.mrb[0].mxu0
    %v945 = vadd.f32 %v432, %v944
    %v946 = vpop.f32.mrb[0].mxu0
    %v947 = vadd.f32 %v428, %v946
    %v948 = vpop.f32.mrb[0].mxu0
    %v949 = vadd.f32 %v432, %v948
    %950 = vmatprep.mubr.bf16.mxu0 0
    %951 = vmatmul.mubr.bf16.gmra.mrb[0].mxu0 %v545
    %v952 = vpop.f32.mrb[0].mxu0
    %v953 = vadd.f32 %v428, %v952
    %v954 = vpop.f32.mrb[0].mxu0
    %v955 = vadd.f32 %v432, %v954
    %v956 = vpop.f32.mrb[0].mxu0
    %v957 = vadd.f32 %v428, %v956
    %v958 = vpop.f32.mrb[0].mxu0
    %v959 = vadd.f32 %v432, %v958
    %960 = vmatprep.mubr.bf16.mxu0 0
    %961 = vmatmul.mubr.bf16.gmra.mrb[0].mxu0 %v548
    %v962 = vpop.f32.mrb[0].mxu0
    %v963 = vadd.f32 %v428, %v962
    %v964 = vpop.f32.mrb[0].mxu0
    %v965 = vadd.f32 %v432, %v964
    %v966 = vpop.f32.mrb[0].mxu0
    %v967 = vadd.f32 %v428, %v966
    %v968 = vpop.f32.mrb[0].mxu0
    %v969 = vadd.f32 %v432, %v968
    %970 = vmatprep.mubr.bf16.mxu0 0
    %971 = vmatmul.mubr.bf16.gmra.mrb[0].mxu0 %v551
    %v972 = vpop.f32.mrb[0].mxu0
    %v973 = vadd.f32 %v428, %v972
    %v974 = vpop.f32.mrb[0].mxu0
    %v975 = vadd.f32 %v432, %v974
    %v976 = vpop.f32.mrb[0].mxu0
    %v977 = vadd.f32 %v428, %v976
    %v978 = vpop.f32.mrb[0].mxu0
    %v979 = vadd.f32 %v432, %v978
    %980 = vmatprep.mubr.bf16.mxu0 0
    %981 = vmatmul.mubr.bf16.gmra.mrb[0].mxu0 %v554
    %v982 = vpop.f32.mrb[0].mxu0
    %v983 = vadd.f32 %v428, %v982
    %v984 = vpop.f32.mrb[0].mxu0
    %v985 = vadd.f32 %v432, %v984
    %v986 = vpop.f32.mrb[0].mxu0
    %v987 = vadd.f32 %v428, %v986
    %v988 = vpop.f32.mrb[0].mxu0
    %v989 = vadd.f32 %v432, %v988
    %990 = vmatprep.mubr.bf16.mxu0 0
    %991 = vmatmul.mubr.bf16.gmra.mrb[0].mxu0 %v557
    %v992 = vpop.f32.mrb[0].mxu0
    %v993 = vadd.f32 %v428, %v992
    %v994 = vpop.f32.mrb[0].mxu0
    %v995 = vadd.f32 %v432, %v994
    %v996 = vpop.f32.mrb[0].mxu0
    %v997 = vadd.f32 %v428, %v996
    %v998 = vpop.f32.mrb[0].mxu0
    %v999 = vadd.f32 %v432, %v998
    %1000 = vmatprep.mubr.bf16.mxu0 0
    %1001 = vmatmul.mubr.bf16.gmra.mrb[0].mxu0 %v560
    %v1002 = vpop.f32.mrb[0].mxu0
    %v1003 = vadd.f32 %v428, %v1002
    %v1004 = vpop.f32.mrb[0].mxu0
    %v1005 = vadd.f32 %v432, %v1004
    %v1006 = vpop.f32.mrb[0].mxu0
    %v1007 = vadd.f32 %v428, %v1006
    %v1008 = vpop.f32.mrb[0].mxu0
    %v1009 = vadd.f32 %v432, %v1008
    %1010 = vmatprep.mubr.bf16.mxu0 0
    %1011 = vmatmul.mubr.bf16.gmra.mrb[0].mxu0 %v563
    %v1012 = vpop.f32.mrb[0].mxu0
    %v1013 = vadd.f32 %v428, %v1012
    %v1014 = vpop.f32.mrb[0].mxu0
    %v1015 = vadd.f32 %v432, %v1014
    %v1016 = vpop.f32.mrb[0].mxu0
    %v1017 = vadd.f32 %v428, %v1016
    %v1018 = vpop.f32.mrb[0].mxu0
    %v1019 = vadd.f32 %v432, %v1018
    %1020 = vmatprep.mubr.bf16.mxu0 0
    %1021 = vmatmul.mubr.bf16.gmra.mrb[0].mxu0 %v566
    %v1022 = vpop.f32.mrb[0].mxu0
    %v1023 = vadd.f32 %v428, %v1022
    %v1024 = vpop.f32.mrb[0].mxu0
    %v1025 = vadd.f32 %v432, %v1024
    %v1026 = vpop.f32.mrb[0].mxu0
    %v1027 = vadd.f32 %v428, %v1026
    %v1028 = vpop.f32.mrb[0].mxu0
    %v1029 = vadd.f32 %v432, %v1028
    %1030 = vmatprep.mubr.bf16.mxu0 0
    %1031 = vmatmul.mubr.bf16.gmra.mrb[0].mxu0 %v569
    %v1032 = vpop.f32.mrb[0].mxu0
    %v1033 = vadd.f32 %v428, %v1032
    %v1034 = vpop.f32.mrb[0].mxu0
    %v1035 = vadd.f32 %v432, %v1034
    %v1036 = vpop.f32.mrb[0].mxu0
    %v1037 = vadd.f32 %v428, %v1036
    %v1038 = vpop.f32.mrb[0].mxu0
    %v1039 = vadd.f32 %v432, %v1038
    %1040 = vmatprep.mubr.bf16.mxu0 0
    %1041 = vmatmul.mubr.bf16.gmra.mrb[0].mxu0 %v572
    %v1042 = vpop.f32.mrb[0].mxu0
    %v1043 = vadd.f32 %v428, %v1042
    %v1044 = vpop.f32.mrb[0].mxu0
    %v1045 = vadd.f32 %v432, %v1044
    %v1046 = vpop.f32.mrb[0].mxu0
    %v1047 = vadd.f32 %v428, %v1046
    %v1048 = vpop.f32.mrb[0].mxu0
    %v1049 = vadd.f32 %v432, %v1048
    %1050 = vmatprep.mubr.bf16.mxu0 0
    %1051 = vmatmul.mubr.bf16.gmra.mrb[0].mxu0 %v575
    %v1052 = vpop.f32.mrb[0].mxu0
    %v1053 = vadd.f32 %v428, %v1052
    %v1054 = vpop.f32.mrb[0].mxu0
    %v1055 = vadd.f32 %v432, %v1054
    %v1056 = vpop.f32.mrb[0].mxu0
    %v1057 = vadd.f32 %v428, %v1056
    %v1058 = vpop.f32.mrb[0].mxu0
    %v1059 = vadd.f32 %v432, %v1058
    %1060 = vmatprep.mubr.bf16.mxu0 0
    %1061 = vmatmul.mubr.bf16.gmra.mrb[0].mxu0 %v578
    %v1062 = vpop.f32.mrb[0].mxu0
    %v1063 = vadd.f32 %v428, %v1062
    %v1064 = vpop.f32.mrb[0].mxu0
    %v1065 = vadd.f32 %v432, %v1064
    %v1066 = vpop.f32.mrb[0].mxu0
    %v1067 = vadd.f32 %v428, %v1066
    %v1068 = vpop.f32.mrb[0].mxu0
    %v1069 = vadd.f32 %v432, %v1068
    %1070 = vmatprep.mubr.bf16.mxu0 0
    %1071 = vmatmul.mubr.bf16.gmra.mrb[0].mxu0 %v581
    %v1072 = vpop.f32.mrb[0].mxu0
    %v1073 = vadd.f32 %v428, %v1072
    %v1074 = vpop.f32.mrb[0].mxu0
    %v1075 = vadd.f32 %v432, %v1074
    %v1076 = vpop.f32.mrb[0].mxu0
    %v1077 = vadd.f32 %v428, %v1076
    %v1078 = vpop.f32.mrb[0].mxu0
    %v1079 = vadd.f32 %v432, %v1078
    %1080 = vmatprep.mubr.bf16.mxu0 0
    %1081 = vmatmul.mubr.bf16.gmra.mrb[0].mxu0 %v584
    %v1082 = vpop.f32.mrb[0].mxu0
    %v1083 = vadd.f32 %v428, %v1082
    %v1084 = vpop.f32.mrb[0].mxu0
    %v1085 = vadd.f32 %v432, %v1084
    %v1086 = vpop.f32.mrb[0].mxu0
    %v1087 = vadd.f32 %v428, %v1086
    %v1088 = vpop.f32.mrb[0].mxu0
    %v1089 = vadd.f32 %v432, %v1088
    %1090 = vmatprep.mubr.bf16.mxu0 0
    %1091 = vmatmul.mubr.bf16.gmra.mrb[0].mxu0 %v587
    %v1092 = vpop.f32.mrb[0].mxu0
    %v1093 = vadd.f32 %v428, %v1092
    %v1094 = vpop.f32.mrb[0].mxu0
    %v1095 = vadd.f32 %v432, %v1094
    %v1096 = vpop.f32.mrb[0].mxu0
    %v1097 = vadd.f32 %v428, %v1096
    %v1098 = vpop.f32.mrb[0].mxu0
    %v1099 = vadd.f32 %v432, %v1098
    %1100 = vmatprep.mubr.bf16.mxu0 0
    %1101 = vmatmul.mubr.bf16.gmra.mrb[0].mxu0 %v590
    %v1102 = vpop.f32.mrb[0].mxu0
    %v1103 = vadd.f32 %v428, %v1102
    %v1104 = vpop.f32.mrb[0].mxu0
    %v1105 = vadd.f32 %v432, %v1104
    %v1106 = vpop.f32.mrb[0].mxu0
    %v1107 = vadd.f32 %v428, %v1106
    %v1108 = vpop.f32.mrb[0].mxu0
    %v1109 = vadd.f32 %v432, %v1108
    %1110 = vmatprep.mubr.bf16.mxu0 0
    %1111 = vmatmul.mubr.bf16.gmra.mrb[0].mxu0 %v593
    %v1112 = vpop.f32.mrb[0].mxu0
    %v1113 = vadd.f32 %v428, %v1112
    %v1114 = vpop.f32.mrb[0].mxu0
    %v1115 = vadd.f32 %v432, %v1114
    %v1116 = vpop.f32.mrb[0].mxu0
    %v1117 = vadd.f32 %v428, %v1116
    %v1118 = vpop.f32.mrb[0].mxu0
    %v1119 = vadd.f32 %v432, %v1118
    %1120 = vmatprep.mubr.bf16.mxu0 0
    %1121 = vmatmul.mubr.bf16.gmra.mrb[0].mxu0 %v596
    %v1122 = vpop.f32.mrb[0].mxu0
    %v1123 = vadd.f32 %v428, %v1122
    %v1124 = vpop.f32.mrb[0].mxu0
    %v1125 = vadd.f32 %v432, %v1124
    %v1126 = vpop.f32.mrb[0].mxu0
    %v1127 = vadd.f32 %v428, %v1126
    %v1128 = vpop.f32.mrb[0].mxu0
    %v1129 = vadd.f32 %v432, %v1128
    %1130 = vmatprep.mubr.bf16.mxu0 0
    %1131 = vmatmul.mubr.bf16.gmra.mrb[0].mxu0 %v599
    %v1132 = vpop.f32.mrb[0].mxu0
    %v1133 = vadd.f32 %v428, %v1132
    %v1134 = vpop.f32.mrb[0].mxu0
    %v1135 = vadd.f32 %v432, %v1134
    %v1136 = vpop.f32.mrb[0].mxu0
    %v1137 = vadd.f32 %v428, %v1136
    %v1138 = vpop.f32.mrb[0].mxu0
    %v1139 = vadd.f32 %v432, %v1138
    %1140 = vmatprep.mubr.bf16.mxu0 0
    %1141 = vmatmul.mubr.bf16.gmra.mrb[0].mxu0 %v602
    %v1142 = vpop.f32.mrb[0].mxu0
    %v1143 = vadd.f32 %v428, %v1142
    %v1144 = vpop.f32.mrb[0].mxu0
    %v1145 = vadd.f32 %v432, %v1144
    %v1146 = vpop.f32.mrb[0].mxu0
    %v1147 = vadd.f32 %v428, %v1146
    %v1148 = vpop.f32.mrb[0].mxu0
    %v1149 = vadd.f32 %v432, %v1148
    %1150 = vmatprep.mubr.bf16.mxu0 0
    %1151 = vmatmul.mubr.bf16.gmra.mrb[0].mxu0 %v605
    %v1152 = vpop.f32.mrb[0].mxu0
    %v1153 = vadd.f32 %v428, %v1152
    %v1154 = vpop.f32.mrb[0].mxu0
    %v1155 = vadd.f32 %v432, %v1154
    %v1156 = vpop.f32.mrb[0].mxu0
    %v1157 = vadd.f32 %v428, %v1156
    %v1158 = vpop.f32.mrb[0].mxu0
    %v1159 = vadd.f32 %v432, %v1158
    %1160 = vmatprep.mubr.bf16.mxu0 0
    %1161 = vmatmul.mubr.bf16.gmra.mrb[0].mxu0 %v608
    %v1162 = vpop.f32.mrb[0].mxu0
    %v1163 = vadd.f32 %v428, %v1162
    %v1164 = vpop.f32.mrb[0].mxu0
    %v1165 = vadd.f32 %v432, %v1164
    %v1166 = vpop.f32.mrb[0].mxu0
    %v1167 = vadd.f32 %v428, %v1166
    %v1168 = vpop.f32.mrb[0].mxu0
    %v1169 = vadd.f32 %v432, %v1168
    %1170 = vmatprep.mubr.bf16.mxu0 0
    %1171 = vmatmul.mubr.bf16.gmra.mrb[0].mxu0 %v611
    %v1172 = vpop.f32.mrb[0].mxu0
    %v1173 = vadd.f32 %v428, %v1172
    %v1174 = vpop.f32.mrb[0].mxu0
    %v1175 = vadd.f32 %v432, %v1174
    %v1176 = vpop.f32.mrb[0].mxu0
    %v1177 = vadd.f32 %v428, %v1176
    %v1178 = vpop.f32.mrb[0].mxu0
    %v1179 = vadd.f32 %v432, %v1178
    %1180 = vmatprep.mubr.bf16.mxu0 0
    %1181 = vmatmul.mubr.bf16.gmra.mrb[0].mxu0 %v614
    %v1182 = vpop.f32.mrb[0].mxu0
    %v1183 = vadd.f32 %v428, %v1182
    %v1184 = vpop.f32.mrb[0].mxu0
    %v1185 = vadd.f32 %v432, %v1184
    %v1186 = vpop.f32.mrb[0].mxu0
    %v1187 = vadd.f32 %v428, %v1186
    %v1188 = vpop.f32.mrb[0].mxu0
    %v1189 = vadd.f32 %v432, %v1188
    %1190 = vmatprep.mubr.bf16.mxu0 0
    %1191 = vmatmul.mubr.bf16.gmra.mrb[0].mxu0 %v617
    %v1192 = vpop.f32.mrb[0].mxu0
    %v1193 = vadd.f32 %v428, %v1192
    %v1194 = vpop.f32.mrb[0].mxu0
    %v1195 = vadd.f32 %v432, %v1194
    %v1196 = vpop.f32.mrb[0].mxu0
    %v1197 = vadd.f32 %v428, %v1196
    %v1198 = vpop.f32.mrb[0].mxu0
    %v1199 = vadd.f32 %v432, %v1198
    %1200 = vmatprep.mubr.bf16.mxu0 0
    %1201 = vmatmul.mubr.bf16.gmra.mrb[0].mxu0 %v620
    %v1202 = vpop.f32.mrb[0].mxu0
    %v1203 = vadd.f32 %v428, %v1202
    %v1204 = vpop.f32.mrb[0].mxu0
    %v1205 = vadd.f32 %v432, %v1204
    %v1206 = vpop.f32.mrb[0].mxu0
    %v1207 = vadd.f32 %v428, %v1206
    %v1208 = vpop.f32.mrb[0].mxu0
    %v1209 = vadd.f32 %v432, %v1208
    %1210 = vmatprep.mubr.bf16.mxu0 0
    %1211 = vmatmul.mubr.bf16.gmra.mrb[0].mxu0 %v623
    %v1212 = vpop.f32.mrb[0].mxu0
    %v1213 = vadd.f32 %v428, %v1212
    %v1214 = vpop.f32.mrb[0].mxu0
    %v1215 = vadd.f32 %v432, %v1214
    %v1216 = vpop.f32.mrb[0].mxu0
    %v1217 = vadd.f32 %v428, %v1216
    %v1218 = vpop.f32.mrb[0].mxu0
    %v1219 = vadd.f32 %v432, %v1218
    %1220 = vmatprep.mubr.bf16.mxu0 0
    %1221 = vmatmul.mubr.bf16.gmra.mrb[0].mxu0 %v626
    %v1222 = vpop.f32.mrb[0].mxu0
    %v1223 = vadd.f32 %v428, %v1222
    %v1224 = vpop.f32.mrb[0].mxu0
    %v1225 = vadd.f32 %v432, %v1224
    %v1226 = vpop.f32.mrb[0].mxu0
    %v1227 = vadd.f32 %v428, %v1226
    %v1228 = vpop.f32.mrb[0].mxu0
    %v1229 = vadd.f32 %v432, %v1228
    %1230 = vmatprep.mubr.bf16.mxu0 0
    %1231 = vmatmul.mubr.bf16.gmra.mrb[0].mxu0 %v629
    %v1232 = vpop.f32.mrb[0].mxu0
    %v1233 = vadd.f32 %v428, %v1232
    %v1234 = vpop.f32.mrb[0].mxu0
    %v1235 = vadd.f32 %v432, %v1234
    %v1236 = vpop.f32.mrb[0].mxu0
    %v1237 = vadd.f32 %v428, %v1236
    %v1238 = vpop.f32.mrb[0].mxu0
    %v1239 = vadd.f32 %v432, %v1238
    %1240 = vmatprep.mubr.bf16.mxu0 0
    %1241 = vmatmul.mubr.bf16.gmra.mrb[0].mxu0 %v632
    %v1242 = vpop.f32.mrb[0].mxu0
    %v1243 = vadd.f32 %v428, %v1242
    %v1244 = vpop.f32.mrb[0].mxu0
    %v1245 = vadd.f32 %v432, %v1244
    %v1246 = vpop.f32.mrb[0].mxu0
    %v1247 = vadd.f32 %v428, %v1246
    %v1248 = vpop.f32.mrb[0].mxu0
    %v1249 = vadd.f32 %v432, %v1248
    %1250 = vmatprep.mubr.bf16.mxu0 0
    %1251 = vmatmul.mubr.bf16.gmra.mrb[0].mxu0 %v635
    %v1252 = vpop.f32.mrb[0].mxu0
    %v1253 = vadd.f32 %v428, %v1252
    %v1254 = vpop.f32.mrb[0].mxu0
    %v1255 = vadd.f32 %v432, %v1254
    %v1256 = vpop.f32.mrb[0].mxu0
    %v1257 = vadd.f32 %v428, %v1256
    %v1258 = vpop.f32.mrb[0].mxu0
    %v1259 = vadd.f32 %v432, %v1258
    %1260 = vmatprep.mubr.bf16.mxu0 0
    %1261 = vmatmul.mubr.bf16.gmra.mrb[0].mxu0 %v638
    %v1262 = vpop.f32.mrb[0].mxu0
    %v1263 = vadd.f32 %v428, %v1262
    %v1264 = vpop.f32.mrb[0].mxu0
    %v1265 = vadd.f32 %v432, %v1264
    %v1266 = vpop.f32.mrb[0].mxu0
    %v1267 = vadd.f32 %v428, %v1266
    %v1268 = vpop.f32.mrb[0].mxu0
    %v1269 = vadd.f32 %v432, %v1268
    %1270 = vmatprep.mubr.bf16.mxu0 0
    %1271 = vmatmul.mubr.bf16.gmra.mrb[0].mxu0 %v641
    %v1272 = vpop.f32.mrb[0].mxu0
    %v1273 = vadd.f32 %v428, %v1272
    %v1274 = vpop.f32.mrb[0].mxu0
    %v1275 = vadd.f32 %v432, %v1274
    %v1276 = vpop.f32.mrb[0].mxu0
    %v1277 = vadd.f32 %v428, %v1276
    %v1278 = vpop.f32.mrb[0].mxu0
    %v1279 = vadd.f32 %v432, %v1278
    %1280 = vmatprep.mubr.bf16.mxu0 0
    %1281 = vmatmul.mubr.bf16.gmra.mrb[0].mxu0 %v644
    %v1282 = vpop.f32.mrb[0].mxu0
    %v1283 = vadd.f32 %v428, %v1282
    %v1284 = vpop.f32.mrb[0].mxu0
    %v1285 = vadd.f32 %v432, %v1284
    %v1286 = vpop.f32.mrb[0].mxu0
    %v1287 = vadd.f32 %v428, %v1286
    %v1288 = vpop.f32.mrb[0].mxu0
    %v1289 = vadd.f32 %v432, %v1288
    %1290 = vmatprep.mubr.bf16.mxu0 0
    %1291 = vmatmul.mubr.bf16.gmra.mrb[0].mxu0 %v647
    %v1292 = vpop.f32.mrb[0].mxu0
    %v1293 = vadd.f32 %v428, %v1292
    %v1294 = vpop.f32.mrb[0].mxu0
    %v1295 = vadd.f32 %v432, %v1294
    %v1296 = vpop.f32.mrb[0].mxu0
    %v1297 = vadd.f32 %v428, %v1296
    %v1298 = vpop.f32.mrb[0].mxu0
    %v1299 = vadd.f32 %v432, %v1298
    %1300 = vmatprep.mubr.bf16.mxu0 0
    %1301 = vmatmul.mubr.bf16.gmra.mrb[0].mxu0 %v650
    %v1302 = vpop.f32.mrb[0].mxu0
    %v1303 = vadd.f32 %v428, %v1302
    %v1304 = vpop.f32.mrb[0].mxu0
    %v1305 = vadd.f32 %v432, %v1304
    %v1306 = vpop.f32.mrb[0].mxu0
    %v1307 = vadd.f32 %v428, %v1306
    %v1308 = vpop.f32.mrb[0].mxu0
    %v1309 = vadd.f32 %v432, %v1308
    %1310 = vmatprep.mubr.bf16.mxu0 0
    %1311 = vmatmul.mubr.bf16.gmra.mrb[0].mxu0 %v653
    %v1312 = vpop.f32.mrb[0].mxu0
    %v1313 = vadd.f32 %v428, %v1312
    %v1314 = vpop.f32.mrb[0].mxu0
    %v1315 = vadd.f32 %v432, %v1314
    %v1316 = vpop.f32.mrb[0].mxu0
    %v1317 = vadd.f32 %v428, %v1316
    %v1318 = vpop.f32.mrb[0].mxu0
    %v1319 = vadd.f32 %v432, %v1318
    %1320 = vmatprep.mubr.bf16.mxu0 0
    %1321 = vmatmul.mubr.bf16.gmra.mrb[0].mxu0 %v656
    %v1322 = vpop.f32.mrb[0].mxu0
    %v1323 = vadd.f32 %v428, %v1322
    %v1324 = vpop.f32.mrb[0].mxu0
    %v1325 = vadd.f32 %v432, %v1324
    %v1326 = vpop.f32.mrb[0].mxu0
    %v1327 = vadd.f32 %v428, %v1326
    %v1328 = vpop.f32.mrb[0].mxu0
    %v1329 = vadd.f32 %v432, %v1328
    %1330 = vdwg.mxu0
    %1331 = vmatprep.subr.bf16.mxu0 %v460
    %1332 = vmatpush1.bf16.msra.mxu0 %v459
    %1333 = vmatprep.subr.bf16.mxu0 0
    %1334 = vmatpush1.bf16.msra.mxu0 0
    %1335 = vmatprep.subr.bf16.mxu0 0
    %1336 = vmatpush1.bf16.msra.mxu0 0
    %1337 = vmatprep.subr.bf16.mxu0 0
    %1338 = vmatpush1.bf16.msra.mxu0 0
    %1339 = vmatprep.subr.bf16.mxu0 0
    %1340 = vmatpush1.bf16.msra.mxu0 0
    %1341 = vmatprep.subr.bf16.mxu0 0
    %1342 = vmatpush1.bf16.msra.mxu0 0
    %1343 = vmatprep.subr.bf16.mxu0 0
    %1344 = vmatpush1.bf16.msra.mxu0 0
    %1345 = vmatprep.subr.bf16.mxu0 0
    %1346 = vmatpush1.bf16.msra.mxu0 0
    %1347 = vmatprep.subr.bf16.mxu0 0
    %1348 = vmatpush1.bf16.msra.mxu0 0
    %1349 = vmatprep.subr.bf16.mxu0 0
    %1350 = vmatpush1.bf16.msra.mxu0 0
    %1351 = vmatprep.subr.bf16.mxu0 0
    %1352 = vmatpush1.bf16.msra.mxu0 0
    %1353 = vmatprep.subr.bf16.mxu0 0
    %1354 = vmatpush1.bf16.msra.mxu0 0
    %1355 = vmatprep.subr.bf16.mxu0 0
    %1356 = vmatpush1.bf16.msra.mxu0 0
    %1357 = vmatprep.subr.bf16.mxu0 0
    %1358 = vmatpush1.bf16.msra.mxu0 0
    %1359 = vmatprep.subr.bf16.mxu0 0
    %1360 = vmatpush1.bf16.msra.mxu0 0
    %1361 = vmatprep.subr.bf16.mxu0 0
    %1362 = vmatpush1.bf16.msra.mxu0 0
    %1363 = vmatprep.mubr.bf16.mxu0 0
    %1364 = vmatmul.mubr.bf16.gmra.mrb[0].mxu0 %v467
    %v1365 = vpop.f32.mrb[0].mxu0
    %v1366 = vadd.f32 %v436, %v1365
    %v1367 = vpop.f32.mrb[0].mxu0
    %v1368 = vadd.f32 %v440, %v1367
    %v1369 = vpop.f32.mrb[0].mxu0
    %v1370 = vadd.f32 %v436, %v1369
    %v1371 = vpop.f32.mrb[0].mxu0
    %v1372 = vadd.f32 %v440, %v1371
    %1373 = vmatprep.mubr.bf16.mxu0 0
    %1374 = vmatmul.mubr.bf16.gmra.mrb[0].mxu0 %v470
    %v1375 = vpop.f32.mrb[0].mxu0
    %v1376 = vadd.f32 %v436, %v1375
    %v1377 = vpop.f32.mrb[0].mxu0
    %v1378 = vadd.f32 %v440, %v1377
    %v1379 = vpop.f32.mrb[0].mxu0
    %v1380 = vadd.f32 %v436, %v1379
    %v1381 = vpop.f32.mrb[0].mxu0
    %v1382 = vadd.f32 %v440, %v1381
    %1383 = vmatprep.mubr.bf16.mxu0 0
    %1384 = vmatmul.mubr.bf16.gmra.mrb[0].mxu0 %v473
    %v1385 = vpop.f32.mrb[0].mxu0
    %v1386 = vadd.f32 %v436, %v1385
    %v1387 = vpop.f32.mrb[0].mxu0
    %v1388 = vadd.f32 %v440, %v1387
    %v1389 = vpop.f32.mrb[0].mxu0
    %v1390 = vadd.f32 %v436, %v1389
    %v1391 = vpop.f32.mrb[0].mxu0
    %v1392 = vadd.f32 %v440, %v1391
    %1393 = vmatprep.mubr.bf16.mxu0 0
    %1394 = vmatmul.mubr.bf16.gmra.mrb[0].mxu0 %v476
    %v1395 = vpop.f32.mrb[0].mxu0
    %v1396 = vadd.f32 %v436, %v1395
    %v1397 = vpop.f32.mrb[0].mxu0
    %v1398 = vadd.f32 %v440, %v1397
    %v1399 = vpop.f32.mrb[0].mxu0
    %v1400 = vadd.f32 %v436, %v1399
    %v1401 = vpop.f32.mrb[0].mxu0
    %v1402 = vadd.f32 %v440, %v1401
    %1403 = vmatprep.mubr.bf16.mxu0 0
    %1404 = vmatmul.mubr.bf16.gmra.mrb[0].mxu0 %v479
    %v1405 = vpop.f32.mrb[0].mxu0
    %v1406 = vadd.f32 %v436, %v1405
    %v1407 = vpop.f32.mrb[0].mxu0
    %v1408 = vadd.f32 %v440, %v1407
    %v1409 = vpop.f32.mrb[0].mxu0
    %v1410 = vadd.f32 %v436, %v1409
    %v1411 = vpop.f32.mrb[0].mxu0
    %v1412 = vadd.f32 %v440, %v1411
    %1413 = vmatprep.mubr.bf16.mxu0 0
    %1414 = vmatmul.mubr.bf16.gmra.mrb[0].mxu0 %v482
    %v1415 = vpop.f32.mrb[0].mxu0
    %v1416 = vadd.f32 %v436, %v1415
    %v1417 = vpop.f32.mrb[0].mxu0
    %v1418 = vadd.f32 %v440, %v1417
    %v1419 = vpop.f32.mrb[0].mxu0
    %v1420 = vadd.f32 %v436, %v1419
    %v1421 = vpop.f32.mrb[0].mxu0
    %v1422 = vadd.f32 %v440, %v1421
    %1423 = vmatprep.mubr.bf16.mxu0 0
    %1424 = vmatmul.mubr.bf16.gmra.mrb[0].mxu0 %v485
    %v1425 = vpop.f32.mrb[0].mxu0
    %v1426 = vadd.f32 %v436, %v1425
    %v1427 = vpop.f32.mrb[0].mxu0
    %v1428 = vadd.f32 %v440, %v1427
    %v1429 = vpop.f32.mrb[0].mxu0
    %v1430 = vadd.f32 %v436, %v1429
    %v1431 = vpop.f32.mrb[0].mxu0
    %v1432 = vadd.f32 %v440, %v1431
    %1433 = vmatprep.mubr.bf16.mxu0 0
    %1434 = vmatmul.mubr.bf16.gmra.mrb[0].mxu0 %v488
    %v1435 = vpop.f32.mrb[0].mxu0
    %v1436 = vadd.f32 %v436, %v1435
    %v1437 = vpop.f32.mrb[0].mxu0
    %v1438 = vadd.f32 %v440, %v1437
    %v1439 = vpop.f32.mrb[0].mxu0
    %v1440 = vadd.f32 %v436, %v1439
    %v1441 = vpop.f32.mrb[0].mxu0
    %v1442 = vadd.f32 %v440, %v1441
    %1443 = vmatprep.mubr.bf16.mxu0 0
    %1444 = vmatmul.mubr.bf16.gmra.mrb[0].mxu0 %v491
    %v1445 = vpop.f32.mrb[0].mxu0
    %v1446 = vadd.f32 %v436, %v1445
    %v1447 = vpop.f32.mrb[0].mxu0
    %v1448 = vadd.f32 %v440, %v1447
    %v1449 = vpop.f32.mrb[0].mxu0
    %v1450 = vadd.f32 %v436, %v1449
    %v1451 = vpop.f32.mrb[0].mxu0
    %v1452 = vadd.f32 %v440, %v1451
    %1453 = vmatprep.mubr.bf16.mxu0 0
    %1454 = vmatmul.mubr.bf16.gmra.mrb[0].mxu0 %v494
    %v1455 = vpop.f32.mrb[0].mxu0
    %v1456 = vadd.f32 %v436, %v1455
    %v1457 = vpop.f32.mrb[0].mxu0
    %v1458 = vadd.f32 %v440, %v1457
    %v1459 = vpop.f32.mrb[0].mxu0
    %v1460 = vadd.f32 %v436, %v1459
    %v1461 = vpop.f32.mrb[0].mxu0
    %v1462 = vadd.f32 %v440, %v1461
    %1463 = vmatprep.mubr.bf16.mxu0 0
    %1464 = vmatmul.mubr.bf16.gmra.mrb[0].mxu0 %v497
    %v1465 = vpop.f32.mrb[0].mxu0
    %v1466 = vadd.f32 %v436, %v1465
    %v1467 = vpop.f32.mrb[0].mxu0
    %v1468 = vadd.f32 %v440, %v1467
    %v1469 = vpop.f32.mrb[0].mxu0
    %v1470 = vadd.f32 %v436, %v1469
    %v1471 = vpop.f32.mrb[0].mxu0
    %v1472 = vadd.f32 %v440, %v1471
    %1473 = vmatprep.mubr.bf16.mxu0 0
    %1474 = vmatmul.mubr.bf16.gmra.mrb[0].mxu0 %v500
    %v1475 = vpop.f32.mrb[0].mxu0
    %v1476 = vadd.f32 %v436, %v1475
    %v1477 = vpop.f32.mrb[0].mxu0
    %v1478 = vadd.f32 %v440, %v1477
    %v1479 = vpop.f32.mrb[0].mxu0
    %v1480 = vadd.f32 %v436, %v1479
    %v1481 = vpop.f32.mrb[0].mxu0
    %v1482 = vadd.f32 %v440, %v1481
    %1483 = vmatprep.mubr.bf16.mxu0 0
    %1484 = vmatmul.mubr.bf16.gmra.mrb[0].mxu0 %v503
    %v1485 = vpop.f32.mrb[0].mxu0
    %v1486 = vadd.f32 %v436, %v1485
    %v1487 = vpop.f32.mrb[0].mxu0
    %v1488 = vadd.f32 %v440, %v1487
    %v1489 = vpop.f32.mrb[0].mxu0
    %v1490 = vadd.f32 %v436, %v1489
    %v1491 = vpop.f32.mrb[0].mxu0
    %v1492 = vadd.f32 %v440, %v1491
    %1493 = vmatprep.mubr.bf16.mxu0 0
    %1494 = vmatmul.mubr.bf16.gmra.mrb[0].mxu0 %v506
    %v1495 = vpop.f32.mrb[0].mxu0
    %v1496 = vadd.f32 %v436, %v1495
    %v1497 = vpop.f32.mrb[0].mxu0
    %v1498 = vadd.f32 %v440, %v1497
    %v1499 = vpop.f32.mrb[0].mxu0
    %v1500 = vadd.f32 %v436, %v1499
    %v1501 = vpop.f32.mrb[0].mxu0
    %v1502 = vadd.f32 %v440, %v1501
    %1503 = vmatprep.mubr.bf16.mxu0 0
    %1504 = vmatmul.mubr.bf16.gmra.mrb[0].mxu0 %v509
    %v1505 = vpop.f32.mrb[0].mxu0
    %v1506 = vadd.f32 %v436, %v1505
    %v1507 = vpop.f32.mrb[0].mxu0
    %v1508 = vadd.f32 %v440, %v1507
    %v1509 = vpop.f32.mrb[0].mxu0
    %v1510 = vadd.f32 %v436, %v1509
    %v1511 = vpop.f32.mrb[0].mxu0
    %v1512 = vadd.f32 %v440, %v1511
    %1513 = vmatprep.mubr.bf16.mxu0 0
    %1514 = vmatmul.mubr.bf16.gmra.mrb[0].mxu0 %v512
    %v1515 = vpop.f32.mrb[0].mxu0
    %v1516 = vadd.f32 %v436, %v1515
    %v1517 = vpop.f32.mrb[0].mxu0
    %v1518 = vadd.f32 %v440, %v1517
    %v1519 = vpop.f32.mrb[0].mxu0
    %v1520 = vadd.f32 %v436, %v1519
    %v1521 = vpop.f32.mrb[0].mxu0
    %v1522 = vadd.f32 %v440, %v1521
    %1523 = vmatprep.mubr.bf16.mxu0 0
    %1524 = vmatmul.mubr.bf16.gmra.mrb[0].mxu0 %v515
    %v1525 = vpop.f32.mrb[0].mxu0
    %v1526 = vadd.f32 %v436, %v1525
    %v1527 = vpop.f32.mrb[0].mxu0
    %v1528 = vadd.f32 %v440, %v1527
    %v1529 = vpop.f32.mrb[0].mxu0
    %v1530 = vadd.f32 %v436, %v1529
    %v1531 = vpop.f32.mrb[0].mxu0
    %v1532 = vadd.f32 %v440, %v1531
    %1533 = vmatprep.mubr.bf16.mxu0 0
    %1534 = vmatmul.mubr.bf16.gmra.mrb[0].mxu0 %v518
    %v1535 = vpop.f32.mrb[0].mxu0
    %v1536 = vadd.f32 %v436, %v1535
    %v1537 = vpop.f32.mrb[0].mxu0
    %v1538 = vadd.f32 %v440, %v1537
    %v1539 = vpop.f32.mrb[0].mxu0
    %v1540 = vadd.f32 %v436, %v1539
    %v1541 = vpop.f32.mrb[0].mxu0
    %v1542 = vadd.f32 %v440, %v1541
    %1543 = vmatprep.mubr.bf16.mxu0 0
    %1544 = vmatmul.mubr.bf16.gmra.mrb[0].mxu0 %v521
    %v1545 = vpop.f32.mrb[0].mxu0
    %v1546 = vadd.f32 %v436, %v1545
    %v1547 = vpop.f32.mrb[0].mxu0
    %v1548 = vadd.f32 %v440, %v1547
    %v1549 = vpop.f32.mrb[0].mxu0
    %v1550 = vadd.f32 %v436, %v1549
    %v1551 = vpop.f32.mrb[0].mxu0
    %v1552 = vadd.f32 %v440, %v1551
    %1553 = vmatprep.mubr.bf16.mxu0 0
    %1554 = vmatmul.mubr.bf16.gmra.mrb[0].mxu0 %v524
    %v1555 = vpop.f32.mrb[0].mxu0
    %v1556 = vadd.f32 %v436, %v1555
    %v1557 = vpop.f32.mrb[0].mxu0
    %v1558 = vadd.f32 %v440, %v1557
    %v1559 = vpop.f32.mrb[0].mxu0
    %v1560 = vadd.f32 %v436, %v1559
    %v1561 = vpop.f32.mrb[0].mxu0
    %v1562 = vadd.f32 %v440, %v1561
    %1563 = vmatprep.mubr.bf16.mxu0 0
    %1564 = vmatmul.mubr.bf16.gmra.mrb[0].mxu0 %v527
    %v1565 = vpop.f32.mrb[0].mxu0
    %v1566 = vadd.f32 %v436, %v1565
    %v1567 = vpop.f32.mrb[0].mxu0
    %v1568 = vadd.f32 %v440, %v1567
    %v1569 = vpop.f32.mrb[0].mxu0
    %v1570 = vadd.f32 %v436, %v1569
    %v1571 = vpop.f32.mrb[0].mxu0
    %v1572 = vadd.f32 %v440, %v1571
    %1573 = vmatprep.mubr.bf16.mxu0 0
    %1574 = vmatmul.mubr.bf16.gmra.mrb[0].mxu0 %v530
    %v1575 = vpop.f32.mrb[0].mxu0
    %v1576 = vadd.f32 %v436, %v1575
    %v1577 = vpop.f32.mrb[0].mxu0
    %v1578 = vadd.f32 %v440, %v1577
    %v1579 = vpop.f32.mrb[0].mxu0
    %v1580 = vadd.f32 %v436, %v1579
    %v1581 = vpop.f32.mrb[0].mxu0
    %v1582 = vadd.f32 %v440, %v1581
    %1583 = vmatprep.mubr.bf16.mxu0 0
    %1584 = vmatmul.mubr.bf16.gmra.mrb[0].mxu0 %v533
    %v1585 = vpop.f32.mrb[0].mxu0
    %v1586 = vadd.f32 %v436, %v1585
    %v1587 = vpop.f32.mrb[0].mxu0
    %v1588 = vadd.f32 %v440, %v1587
    %v1589 = vpop.f32.mrb[0].mxu0
    %v1590 = vadd.f32 %v436, %v1589
    %v1591 = vpop.f32.mrb[0].mxu0
    %v1592 = vadd.f32 %v440, %v1591
    %1593 = vmatprep.mubr.bf16.mxu0 0
    %1594 = vmatmul.mubr.bf16.gmra.mrb[0].mxu0 %v536
    %v1595 = vpop.f32.mrb[0].mxu0
    %v1596 = vadd.f32 %v436, %v1595
    %v1597 = vpop.f32.mrb[0].mxu0
    %v1598 = vadd.f32 %v440, %v1597
    %v1599 = vpop.f32.mrb[0].mxu0
    %v1600 = vadd.f32 %v436, %v1599
    %v1601 = vpop.f32.mrb[0].mxu0
    %v1602 = vadd.f32 %v440, %v1601
    %1603 = vmatprep.mubr.bf16.mxu0 0
    %1604 = vmatmul.mubr.bf16.gmra.mrb[0].mxu0 %v539
    %v1605 = vpop.f32.mrb[0].mxu0
    %v1606 = vadd.f32 %v436, %v1605
    %v1607 = vpop.f32.mrb[0].mxu0
    %v1608 = vadd.f32 %v440, %v1607
    %v1609 = vpop.f32.mrb[0].mxu0
    %v1610 = vadd.f32 %v436, %v1609
    %v1611 = vpop.f32.mrb[0].mxu0
    %v1612 = vadd.f32 %v440, %v1611
    %1613 = vmatprep.mubr.bf16.mxu0 0
    %1614 = vmatmul.mubr.bf16.gmra.mrb[0].mxu0 %v542
    %v1615 = vpop.f32.mrb[0].mxu0
    %v1616 = vadd.f32 %v436, %v1615
    %v1617 = vpop.f32.mrb[0].mxu0
    %v1618 = vadd.f32 %v440, %v1617
    %v1619 = vpop.f32.mrb[0].mxu0
    %v1620 = vadd.f32 %v436, %v1619
    %v1621 = vpop.f32.mrb[0].mxu0
    %v1622 = vadd.f32 %v440, %v1621
    %1623 = vmatprep.mubr.bf16.mxu0 0
    %1624 = vmatmul.mubr.bf16.gmra.mrb[0].mxu0 %v545
    %v1625 = vpop.f32.mrb[0].mxu0
    %v1626 = vadd.f32 %v436, %v1625
    %v1627 = vpop.f32.mrb[0].mxu0
    %v1628 = vadd.f32 %v440, %v1627
    %v1629 = vpop.f32.mrb[0].mxu0
    %v1630 = vadd.f32 %v436, %v1629
    %v1631 = vpop.f32.mrb[0].mxu0
    %v1632 = vadd.f32 %v440, %v1631
    %1633 = vmatprep.mubr.bf16.mxu0 0
    %1634 = vmatmul.mubr.bf16.gmra.mrb[0].mxu0 %v548
    %v1635 = vpop.f32.mrb[0].mxu0
    %v1636 = vadd.f32 %v436, %v1635
    %v1637 = vpop.f32.mrb[0].mxu0
    %v1638 = vadd.f32 %v440, %v1637
    %v1639 = vpop.f32.mrb[0].mxu0
    %v1640 = vadd.f32 %v436, %v1639
    %v1641 = vpop.f32.mrb[0].mxu0
    %v1642 = vadd.f32 %v440, %v1641
    %1643 = vmatprep.mubr.bf16.mxu0 0
    %1644 = vmatmul.mubr.bf16.gmra.mrb[0].mxu0 %v551
    %v1645 = vpop.f32.mrb[0].mxu0
    %v1646 = vadd.f32 %v436, %v1645
    %v1647 = vpop.f32.mrb[0].mxu0
    %v1648 = vadd.f32 %v440, %v1647
    %v1649 = vpop.f32.mrb[0].mxu0
    %v1650 = vadd.f32 %v436, %v1649
    %v1651 = vpop.f32.mrb[0].mxu0
    %v1652 = vadd.f32 %v440, %v1651
    %1653 = vmatprep.mubr.bf16.mxu0 0
    %1654 = vmatmul.mubr.bf16.gmra.mrb[0].mxu0 %v554
    %v1655 = vpop.f32.mrb[0].mxu0
    %v1656 = vadd.f32 %v436, %v1655
    %v1657 = vpop.f32.mrb[0].mxu0
    %v1658 = vadd.f32 %v440, %v1657
    %v1659 = vpop.f32.mrb[0].mxu0
    %v1660 = vadd.f32 %v436, %v1659
    %v1661 = vpop.f32.mrb[0].mxu0
    %v1662 = vadd.f32 %v440, %v1661
    %1663 = vmatprep.mubr.bf16.mxu0 0
    %1664 = vmatmul.mubr.bf16.gmra.mrb[0].mxu0 %v557
    %v1665 = vpop.f32.mrb[0].mxu0
    %v1666 = vadd.f32 %v436, %v1665
    %v1667 = vpop.f32.mrb[0].mxu0
    %v1668 = vadd.f32 %v440, %v1667
    %v1669 = vpop.f32.mrb[0].mxu0
    %v1670 = vadd.f32 %v436, %v1669
    %v1671 = vpop.f32.mrb[0].mxu0
    %v1672 = vadd.f32 %v440, %v1671
    %1673 = vmatprep.mubr.bf16.mxu0 0
    %1674 = vmatmul.mubr.bf16.gmra.mrb[0].mxu0 %v560
    %v1675 = vpop.f32.mrb[0].mxu0
    %v1676 = vadd.f32 %v436, %v1675
    %v1677 = vpop.f32.mrb[0].mxu0
    %v1678 = vadd.f32 %v440, %v1677
    %v1679 = vpop.f32.mrb[0].mxu0
    %v1680 = vadd.f32 %v436, %v1679
    %v1681 = vpop.f32.mrb[0].mxu0
    %v1682 = vadd.f32 %v440, %v1681
    %1683 = vmatprep.mubr.bf16.mxu0 0
    %1684 = vmatmul.mubr.bf16.gmra.mrb[0].mxu0 %v563
    %v1685 = vpop.f32.mrb[0].mxu0
    %v1686 = vadd.f32 %v436, %v1685
    %v1687 = vpop.f32.mrb[0].mxu0
    %v1688 = vadd.f32 %v440, %v1687
    %v1689 = vpop.f32.mrb[0].mxu0
    %v1690 = vadd.f32 %v436, %v1689
    %v1691 = vpop.f32.mrb[0].mxu0
    %v1692 = vadd.f32 %v440, %v1691
    %1693 = vmatprep.mubr.bf16.mxu0 0
    %1694 = vmatmul.mubr.bf16.gmra.mrb[0].mxu0 %v566
    %v1695 = vpop.f32.mrb[0].mxu0
    %v1696 = vadd.f32 %v436, %v1695
    %v1697 = vpop.f32.mrb[0].mxu0
    %v1698 = vadd.f32 %v440, %v1697
    %v1699 = vpop.f32.mrb[0].mxu0
    %v1700 = vadd.f32 %v436, %v1699
    %v1701 = vpop.f32.mrb[0].mxu0
    %v1702 = vadd.f32 %v440, %v1701
    %1703 = vmatprep.mubr.bf16.mxu0 0
    %1704 = vmatmul.mubr.bf16.gmra.mrb[0].mxu0 %v569
    %v1705 = vpop.f32.mrb[0].mxu0
    %v1706 = vadd.f32 %v436, %v1705
    %v1707 = vpop.f32.mrb[0].mxu0
    %v1708 = vadd.f32 %v440, %v1707
    %v1709 = vpop.f32.mrb[0].mxu0
    %v1710 = vadd.f32 %v436, %v1709
    %v1711 = vpop.f32.mrb[0].mxu0
    %v1712 = vadd.f32 %v440, %v1711
    %1713 = vmatprep.mubr.bf16.mxu0 0
    %1714 = vmatmul.mubr.bf16.gmra.mrb[0].mxu0 %v572
    %v1715 = vpop.f32.mrb[0].mxu0
    %v1716 = vadd.f32 %v436, %v1715
    %v1717 = vpop.f32.mrb[0].mxu0
    %v1718 = vadd.f32 %v440, %v1717
    %v1719 = vpop.f32.mrb[0].mxu0
    %v1720 = vadd.f32 %v436, %v1719
    %v1721 = vpop.f32.mrb[0].mxu0
    %v1722 = vadd.f32 %v440, %v1721
    %1723 = vmatprep.mubr.bf16.mxu0 0
    %1724 = vmatmul.mubr.bf16.gmra.mrb[0].mxu0 %v575
    %v1725 = vpop.f32.mrb[0].mxu0
    %v1726 = vadd.f32 %v436, %v1725
    %v1727 = vpop.f32.mrb[0].mxu0
    %v1728 = vadd.f32 %v440, %v1727
    %v1729 = vpop.f32.mrb[0].mxu0
    %v1730 = vadd.f32 %v436, %v1729
    %v1731 = vpop.f32.mrb[0].mxu0
    %v1732 = vadd.f32 %v440, %v1731
    %1733 = vmatprep.mubr.bf16.mxu0 0
    %1734 = vmatmul.mubr.bf16.gmra.mrb[0].mxu0 %v578
    %v1735 = vpop.f32.mrb[0].mxu0
    %v1736 = vadd.f32 %v436, %v1735
    %v1737 = vpop.f32.mrb[0].mxu0
    %v1738 = vadd.f32 %v440, %v1737
    %v1739 = vpop.f32.mrb[0].mxu0
    %v1740 = vadd.f32 %v436, %v1739
    %v1741 = vpop.f32.mrb[0].mxu0
    %v1742 = vadd.f32 %v440, %v1741
    %1743 = vmatprep.mubr.bf16.mxu0 0
    %1744 = vmatmul.mubr.bf16.gmra.mrb[0].mxu0 %v581
    %v1745 = vpop.f32.mrb[0].mxu0
    %v1746 = vadd.f32 %v436, %v1745
    %v1747 = vpop.f32.mrb[0].mxu0
    %v1748 = vadd.f32 %v440, %v1747
    %v1749 = vpop.f32.mrb[0].mxu0
    %v1750 = vadd.f32 %v436, %v1749
    %v1751 = vpop.f32.mrb[0].mxu0
    %v1752 = vadd.f32 %v440, %v1751
    %1753 = vmatprep.mubr.bf16.mxu0 0
    %1754 = vmatmul.mubr.bf16.gmra.mrb[0].mxu0 %v584
    %v1755 = vpop.f32.mrb[0].mxu0
    %v1756 = vadd.f32 %v436, %v1755
    %v1757 = vpop.f32.mrb[0].mxu0
    %v1758 = vadd.f32 %v440, %v1757
    %v1759 = vpop.f32.mrb[0].mxu0
    %v1760 = vadd.f32 %v436, %v1759
    %v1761 = vpop.f32.mrb[0].mxu0
    %v1762 = vadd.f32 %v440, %v1761
    %1763 = vmatprep.mubr.bf16.mxu0 0
    %1764 = vmatmul.mubr.bf16.gmra.mrb[0].mxu0 %v587
    %v1765 = vpop.f32.mrb[0].mxu0
    %v1766 = vadd.f32 %v436, %v1765
    %v1767 = vpop.f32.mrb[0].mxu0
    %v1768 = vadd.f32 %v440, %v1767
    %v1769 = vpop.f32.mrb[0].mxu0
    %v1770 = vadd.f32 %v436, %v1769
    %v1771 = vpop.f32.mrb[0].mxu0
    %v1772 = vadd.f32 %v440, %v1771
    %1773 = vmatprep.mubr.bf16.mxu0 0
    %1774 = vmatmul.mubr.bf16.gmra.mrb[0].mxu0 %v590
    %v1775 = vpop.f32.mrb[0].mxu0
    %v1776 = vadd.f32 %v436, %v1775
    %v1777 = vpop.f32.mrb[0].mxu0
    %v1778 = vadd.f32 %v440, %v1777
    %v1779 = vpop.f32.mrb[0].mxu0
    %v1780 = vadd.f32 %v436, %v1779
    %v1781 = vpop.f32.mrb[0].mxu0
    %v1782 = vadd.f32 %v440, %v1781
    %1783 = vmatprep.mubr.bf16.mxu0 0
    %1784 = vmatmul.mubr.bf16.gmra.mrb[0].mxu0 %v593
    %v1785 = vpop.f32.mrb[0].mxu0
    %v1786 = vadd.f32 %v436, %v1785
    %v1787 = vpop.f32.mrb[0].mxu0
    %v1788 = vadd.f32 %v440, %v1787
    %v1789 = vpop.f32.mrb[0].mxu0
    %v1790 = vadd.f32 %v436, %v1789
    %v1791 = vpop.f32.mrb[0].mxu0
    %v1792 = vadd.f32 %v440, %v1791
    %1793 = vmatprep.mubr.bf16.mxu0 0
    %1794 = vmatmul.mubr.bf16.gmra.mrb[0].mxu0 %v596
    %v1795 = vpop.f32.mrb[0].mxu0
    %v1796 = vadd.f32 %v436, %v1795
    %v1797 = vpop.f32.mrb[0].mxu0
    %v1798 = vadd.f32 %v440, %v1797
    %v1799 = vpop.f32.mrb[0].mxu0
    %v1800 = vadd.f32 %v436, %v1799
    %v1801 = vpop.f32.mrb[0].mxu0
    %v1802 = vadd.f32 %v440, %v1801
    %1803 = vmatprep.mubr.bf16.mxu0 0
    %1804 = vmatmul.mubr.bf16.gmra.mrb[0].mxu0 %v599
    %v1805 = vpop.f32.mrb[0].mxu0
    %v1806 = vadd.f32 %v436, %v1805
    %v1807 = vpop.f32.mrb[0].mxu0
    %v1808 = vadd.f32 %v440, %v1807
    %v1809 = vpop.f32.mrb[0].mxu0
    %v1810 = vadd.f32 %v436, %v1809
    %v1811 = vpop.f32.mrb[0].mxu0
    %v1812 = vadd.f32 %v440, %v1811
    %1813 = vmatprep.mubr.bf16.mxu0 0
    %1814 = vmatmul.mubr.bf16.gmra.mrb[0].mxu0 %v602
    %v1815 = vpop.f32.mrb[0].mxu0
    %v1816 = vadd.f32 %v436, %v1815
    %v1817 = vpop.f32.mrb[0].mxu0
    %v1818 = vadd.f32 %v440, %v1817
    %v1819 = vpop.f32.mrb[0].mxu0
    %v1820 = vadd.f32 %v436, %v1819
    %v1821 = vpop.f32.mrb[0].mxu0
    %v1822 = vadd.f32 %v440, %v1821
    %1823 = vmatprep.mubr.bf16.mxu0 0
    %1824 = vmatmul.mubr.bf16.gmra.mrb[0].mxu0 %v605
    %v1825 = vpop.f32.mrb[0].mxu0
    %v1826 = vadd.f32 %v436, %v1825
    %v1827 = vpop.f32.mrb[0].mxu0
    %v1828 = vadd.f32 %v440, %v1827
    %v1829 = vpop.f32.mrb[0].mxu0
    %v1830 = vadd.f32 %v436, %v1829
    %v1831 = vpop.f32.mrb[0].mxu0
    %v1832 = vadd.f32 %v440, %v1831
    %1833 = vmatprep.mubr.bf16.mxu0 0
    %1834 = vmatmul.mubr.bf16.gmra.mrb[0].mxu0 %v608
    %v1835 = vpop.f32.mrb[0].mxu0
    %v1836 = vadd.f32 %v436, %v1835
    %v1837 = vpop.f32.mrb[0].mxu0
    %v1838 = vadd.f32 %v440, %v1837
    %v1839 = vpop.f32.mrb[0].mxu0
    %v1840 = vadd.f32 %v436, %v1839
    %v1841 = vpop.f32.mrb[0].mxu0
    %v1842 = vadd.f32 %v440, %v1841
    %1843 = vmatprep.mubr.bf16.mxu0 0
    %1844 = vmatmul.mubr.bf16.gmra.mrb[0].mxu0 %v611
    %v1845 = vpop.f32.mrb[0].mxu0
    %v1846 = vadd.f32 %v436, %v1845
    %v1847 = vpop.f32.mrb[0].mxu0
    %v1848 = vadd.f32 %v440, %v1847
    %v1849 = vpop.f32.mrb[0].mxu0
    %v1850 = vadd.f32 %v436, %v1849
    %v1851 = vpop.f32.mrb[0].mxu0
    %v1852 = vadd.f32 %v440, %v1851
    %1853 = vmatprep.mubr.bf16.mxu0 0
    %1854 = vmatmul.mubr.bf16.gmra.mrb[0].mxu0 %v614
    %v1855 = vpop.f32.mrb[0].mxu0
    %v1856 = vadd.f32 %v436, %v1855
    %v1857 = vpop.f32.mrb[0].mxu0
    %v1858 = vadd.f32 %v440, %v1857
    %v1859 = vpop.f32.mrb[0].mxu0
    %v1860 = vadd.f32 %v436, %v1859
    %v1861 = vpop.f32.mrb[0].mxu0
    %v1862 = vadd.f32 %v440, %v1861
    %1863 = vmatprep.mubr.bf16.mxu0 0
    %1864 = vmatmul.mubr.bf16.gmra.mrb[0].mxu0 %v617
    %v1865 = vpop.f32.mrb[0].mxu0
    %v1866 = vadd.f32 %v436, %v1865
    %v1867 = vpop.f32.mrb[0].mxu0
    %v1868 = vadd.f32 %v440, %v1867
    %v1869 = vpop.f32.mrb[0].mxu0
    %v1870 = vadd.f32 %v436, %v1869
    %v1871 = vpop.f32.mrb[0].mxu0
    %v1872 = vadd.f32 %v440, %v1871
    %1873 = vmatprep.mubr.bf16.mxu0 0
    %1874 = vmatmul.mubr.bf16.gmra.mrb[0].mxu0 %v620
    %v1875 = vpop.f32.mrb[0].mxu0
    %v1876 = vadd.f32 %v436, %v1875
    %v1877 = vpop.f32.mrb[0].mxu0
    %v1878 = vadd.f32 %v440, %v1877
    %v1879 = vpop.f32.mrb[0].mxu0
    %v1880 = vadd.f32 %v436, %v1879
    %v1881 = vpop.f32.mrb[0].mxu0
    %v1882 = vadd.f32 %v440, %v1881
    %1883 = vmatprep.mubr.bf16.mxu0 0
    %1884 = vmatmul.mubr.bf16.gmra.mrb[0].mxu0 %v623
    %v1885 = vpop.f32.mrb[0].mxu0
    %v1886 = vadd.f32 %v436, %v1885
    %v1887 = vpop.f32.mrb[0].mxu0
    %v1888 = vadd.f32 %v440, %v1887
    %v1889 = vpop.f32.mrb[0].mxu0
    %v1890 = vadd.f32 %v436, %v1889
    %v1891 = vpop.f32.mrb[0].mxu0
    %v1892 = vadd.f32 %v440, %v1891
    %1893 = vmatprep.mubr.bf16.mxu0 0
    %1894 = vmatmul.mubr.bf16.gmra.mrb[0].mxu0 %v626
    %v1895 = vpop.f32.mrb[0].mxu0
    %v1896 = vadd.f32 %v436, %v1895
    %v1897 = vpop.f32.mrb[0].mxu0
    %v1898 = vadd.f32 %v440, %v1897
    %v1899 = vpop.f32.mrb[0].mxu0
    %v1900 = vadd.f32 %v436, %v1899
    %v1901 = vpop.f32.mrb[0].mxu0
    %v1902 = vadd.f32 %v440, %v1901
    %1903 = vmatprep.mubr.bf16.mxu0 0
    %1904 = vmatmul.mubr.bf16.gmra.mrb[0].mxu0 %v629
    %v1905 = vpop.f32.mrb[0].mxu0
    %v1906 = vadd.f32 %v436, %v1905
    %v1907 = vpop.f32.mrb[0].mxu0
    %v1908 = vadd.f32 %v440, %v1907
    %v1909 = vpop.f32.mrb[0].mxu0
    %v1910 = vadd.f32 %v436, %v1909
    %v1911 = vpop.f32.mrb[0].mxu0
    %v1912 = vadd.f32 %v440, %v1911
    %1913 = vmatprep.mubr.bf16.mxu0 0
    %1914 = vmatmul.mubr.bf16.gmra.mrb[0].mxu0 %v632
    %v1915 = vpop.f32.mrb[0].mxu0
    %v1916 = vadd.f32 %v436, %v1915
    %v1917 = vpop.f32.mrb[0].mxu0
    %v1918 = vadd.f32 %v440, %v1917
    %v1919 = vpop.f32.mrb[0].mxu0
    %v1920 = vadd.f32 %v436, %v1919
    %v1921 = vpop.f32.mrb[0].mxu0
    %v1922 = vadd.f32 %v440, %v1921
    %1923 = vmatprep.mubr.bf16.mxu0 0
    %1924 = vmatmul.mubr.bf16.gmra.mrb[0].mxu0 %v635
    %v1925 = vpop.f32.mrb[0].mxu0
    %v1926 = vadd.f32 %v436, %v1925
    %v1927 = vpop.f32.mrb[0].mxu0
    %v1928 = vadd.f32 %v440, %v1927
    %v1929 = vpop.f32.mrb[0].mxu0
    %v1930 = vadd.f32 %v436, %v1929
    %v1931 = vpop.f32.mrb[0].mxu0
    %v1932 = vadd.f32 %v440, %v1931
    %1933 = vmatprep.mubr.bf16.mxu0 0
    %1934 = vmatmul.mubr.bf16.gmra.mrb[0].mxu0 %v638
    %v1935 = vpop.f32.mrb[0].mxu0
    %v1936 = vadd.f32 %v436, %v1935
    %v1937 = vpop.f32.mrb[0].mxu0
    %v1938 = vadd.f32 %v440, %v1937
    %v1939 = vpop.f32.mrb[0].mxu0
    %v1940 = vadd.f32 %v436, %v1939
    %v1941 = vpop.f32.mrb[0].mxu0
    %v1942 = vadd.f32 %v440, %v1941
    %1943 = vmatprep.mubr.bf16.mxu0 0
    %1944 = vmatmul.mubr.bf16.gmra.mrb[0].mxu0 %v641
    %v1945 = vpop.f32.mrb[0].mxu0
    %v1946 = vadd.f32 %v436, %v1945
    %v1947 = vpop.f32.mrb[0].mxu0
    %v1948 = vadd.f32 %v440, %v1947
    %v1949 = vpop.f32.mrb[0].mxu0
    %v1950 = vadd.f32 %v436, %v1949
    %v1951 = vpop.f32.mrb[0].mxu0
    %v1952 = vadd.f32 %v440, %v1951
    %1953 = vmatprep.mubr.bf16.mxu0 0
    %1954 = vmatmul.mubr.bf16.gmra.mrb[0].mxu0 %v644
    %v1955 = vpop.f32.mrb[0].mxu0
    %v1956 = vadd.f32 %v436, %v1955
    %v1957 = vpop.f32.mrb[0].mxu0
    %v1958 = vadd.f32 %v440, %v1957
    %v1959 = vpop.f32.mrb[0].mxu0
    %v1960 = vadd.f32 %v436, %v1959
    %v1961 = vpop.f32.mrb[0].mxu0
    %v1962 = vadd.f32 %v440, %v1961
    %1963 = vmatprep.mubr.bf16.mxu0 0
    %1964 = vmatmul.mubr.bf16.gmra.mrb[0].mxu0 %v647
    %v1965 = vpop.f32.mrb[0].mxu0
    %v1966 = vadd.f32 %v436, %v1965
    %v1967 = vpop.f32.mrb[0].mxu0
    %v1968 = vadd.f32 %v440, %v1967
    %v1969 = vpop.f32.mrb[0].mxu0
    %v1970 = vadd.f32 %v436, %v1969
    %v1971 = vpop.f32.mrb[0].mxu0
    %v1972 = vadd.f32 %v440, %v1971
    %1973 = vmatprep.mubr.bf16.mxu0 0
    %1974 = vmatmul.mubr.bf16.gmra.mrb[0].mxu0 %v650
    %v1975 = vpop.f32.mrb[0].mxu0
    %v1976 = vadd.f32 %v436, %v1975
    %v1977 = vpop.f32.mrb[0].mxu0
    %v1978 = vadd.f32 %v440, %v1977
    %v1979 = vpop.f32.mrb[0].mxu0
    %v1980 = vadd.f32 %v436, %v1979
    %v1981 = vpop.f32.mrb[0].mxu0
    %v1982 = vadd.f32 %v440, %v1981
    %1983 = vmatprep.mubr.bf16.mxu0 0
    %1984 = vmatmul.mubr.bf16.gmra.mrb[0].mxu0 %v653
    %v1985 = vpop.f32.mrb[0].mxu0
    %v1986 = vadd.f32 %v436, %v1985
    %v1987 = vpop.f32.mrb[0].mxu0
    %v1988 = vadd.f32 %v440, %v1987
    %v1989 = vpop.f32.mrb[0].mxu0
    %v1990 = vadd.f32 %v436, %v1989
    %v1991 = vpop.f32.mrb[0].mxu0
    %v1992 = vadd.f32 %v440, %v1991
    %1993 = vmatprep.mubr.bf16.mxu0 0
    %1994 = vmatmul.mubr.bf16.gmra.mrb[0].mxu0 %v656
    %v1995 = vpop.f32.mrb[0].mxu0
    %v1996 = vadd.f32 %v436, %v1995
    %v1997 = vpop.f32.mrb[0].mxu0
    %v1998 = vadd.f32 %v440, %v1997
    %v1999 = vpop.f32.mrb[0].mxu0
    %v2000 = vadd.f32 %v436, %v1999
    %v2001 = vpop.f32.mrb[0].mxu0
    %v2002 = vadd.f32 %v440, %v2001
    %2003 = vdwg.mxu0
    %v2004 = vmax.f32 %v693, 0.0
    %v2005 = vmax.f32 %v695, 0.0
    %v2006 = vmax.f32 %v1366, 0.0
    %v2007 = vmax.f32 %v1368, 0.0
    %v2008 = vmax.f32 %v697, 0.0
    %v2009 = vmax.f32 %v699, 0.0
    %v2010 = vmax.f32 %v1370, 0.0
    %v2011 = vmax.f32 %v1372, 0.0
    %v2012 = vmax.f32 %v703, 0.0
    %v2013 = vmax.f32 %v705, 0.0
    %v2014 = vmax.f32 %v1376, 0.0
    %v2015 = vmax.f32 %v1378, 0.0
    %v2016 = vmax.f32 %v707, 0.0
    %v2017 = vmax.f32 %v709, 0.0
    %v2018 = vmax.f32 %v1380, 0.0
    %v2019 = vmax.f32 %v1382, 0.0
    %v2020 = vmax.f32 %v713, 0.0
    %v2021 = vmax.f32 %v715, 0.0
    %v2022 = vmax.f32 %v1386, 0.0
    %v2023 = vmax.f32 %v1388, 0.0
    %v2024 = vmax.f32 %v717, 0.0
    %v2025 = vmax.f32 %v719, 0.0
    %v2026 = vmax.f32 %v1390, 0.0
    %v2027 = vmax.f32 %v1392, 0.0
    %v2028 = vmax.f32 %v723, 0.0
    %v2029 = vmax.f32 %v725, 0.0
    %v2030 = vmax.f32 %v1396, 0.0
    %v2031 = vmax.f32 %v1398, 0.0
    %v2032 = vmax.f32 %v727, 0.0
    %v2033 = vmax.f32 %v729, 0.0
    %v2034 = vmax.f32 %v1400, 0.0
    %v2035 = vmax.f32 %v1402, 0.0
    %v2036 = vmax.f32 %v733, 0.0
    %v2037 = vmax.f32 %v735, 0.0
    %v2038 = vmax.f32 %v1406, 0.0
    %v2039 = vmax.f32 %v1408, 0.0
    %v2040 = vmax.f32 %v737, 0.0
    %v2041 = vmax.f32 %v739, 0.0
    %v2042 = vmax.f32 %v1410, 0.0
    %v2043 = vmax.f32 %v1412, 0.0
    %v2044 = vmax.f32 %v743, 0.0
    %v2045 = vmax.f32 %v745, 0.0
    %v2046 = vmax.f32 %v1416, 0.0
    %v2047 = vmax.f32 %v1418, 0.0
    %v2048 = vmax.f32 %v747, 0.0
    %v2049 = vmax.f32 %v749, 0.0
    %v2050 = vmax.f32 %v1420, 0.0
    %v2051 = vmax.f32 %v1422, 0.0
    %v2052 = vmax.f32 %v753, 0.0
    %v2053 = vmax.f32 %v755, 0.0
    %v2054 = vmax.f32 %v1426, 0.0
    %v2055 = vmax.f32 %v1428, 0.0
    %v2056 = vmax.f32 %v757, 0.0
    %v2057 = vmax.f32 %v759, 0.0
    %v2058 = vmax.f32 %v1430, 0.0
    %v2059 = vmax.f32 %v1432, 0.0
    %v2060 = vmax.f32 %v763, 0.0
    %v2061 = vmax.f32 %v765, 0.0
    %v2062 = vmax.f32 %v1436, 0.0
    %v2063 = vmax.f32 %v1438, 0.0
    %v2064 = vmax.f32 %v767, 0.0
    %v2065 = vmax.f32 %v769, 0.0
    %v2066 = vmax.f32 %v1440, 0.0
    %v2067 = vmax.f32 %v1442, 0.0
    %v2068 = vmax.f32 %v773, 0.0
    %v2069 = vmax.f32 %v775, 0.0
    %v2070 = vmax.f32 %v1446, 0.0
    %v2071 = vmax.f32 %v1448, 0.0
    %v2072 = vmax.f32 %v777, 0.0
    %v2073 = vmax.f32 %v779, 0.0
    %v2074 = vmax.f32 %v1450, 0.0
    %v2075 = vmax.f32 %v1452, 0.0
    %v2076 = vmax.f32 %v783, 0.0
    %v2077 = vmax.f32 %v785, 0.0
    %v2078 = vmax.f32 %v1456, 0.0
    %v2079 = vmax.f32 %v1458, 0.0
    %v2080 = vmax.f32 %v787, 0.0
    %v2081 = vmax.f32 %v789, 0.0
    %v2082 = vmax.f32 %v1460, 0.0
    %v2083 = vmax.f32 %v1462, 0.0
    %v2084 = vmax.f32 %v793, 0.0
    %v2085 = vmax.f32 %v795, 0.0
    %v2086 = vmax.f32 %v1466, 0.0
    %v2087 = vmax.f32 %v1468, 0.0
    %v2088 = vmax.f32 %v797, 0.0
    %v2089 = vmax.f32 %v799, 0.0
    %v2090 = vmax.f32 %v1470, 0.0
    %v2091 = vmax.f32 %v1472, 0.0
    %v2092 = vmax.f32 %v803, 0.0
    %v2093 = vmax.f32 %v805, 0.0
    %v2094 = vmax.f32 %v1476, 0.0
    %v2095 = vmax.f32 %v1478, 0.0
    %v2096 = vmax.f32 %v807, 0.0
    %v2097 = vmax.f32 %v809, 0.0
    %v2098 = vmax.f32 %v1480, 0.0
    %v2099 = vmax.f32 %v1482, 0.0
    %v2100 = vmax.f32 %v813, 0.0
    %v2101 = vmax.f32 %v815, 0.0
    %v2102 = vmax.f32 %v1486, 0.0
    %v2103 = vmax.f32 %v1488, 0.0
    %v2104 = vmax.f32 %v817, 0.0
    %v2105 = vmax.f32 %v819, 0.0
    %v2106 = vmax.f32 %v1490, 0.0
    %v2107 = vmax.f32 %v1492, 0.0
    %v2108 = vmax.f32 %v823, 0.0
    %v2109 = vmax.f32 %v825, 0.0
    %v2110 = vmax.f32 %v1496, 0.0
    %v2111 = vmax.f32 %v1498, 0.0
    %v2112 = vmax.f32 %v827, 0.0
    %v2113 = vmax.f32 %v829, 0.0
    %v2114 = vmax.f32 %v1500, 0.0
    %v2115 = vmax.f32 %v1502, 0.0
    %v2116 = vmax.f32 %v833, 0.0
    %v2117 = vmax.f32 %v835, 0.0
    %v2118 = vmax.f32 %v1506, 0.0
    %v2119 = vmax.f32 %v1508, 0.0
    %v2120 = vmax.f32 %v837, 0.0
    %v2121 = vmax.f32 %v839, 0.0
    %v2122 = vmax.f32 %v1510, 0.0
    %v2123 = vmax.f32 %v1512, 0.0
    %v2124 = vmax.f32 %v843, 0.0
    %v2125 = vmax.f32 %v845, 0.0
    %v2126 = vmax.f32 %v1516, 0.0
    %v2127 = vmax.f32 %v1518, 0.0
    %v2128 = vmax.f32 %v847, 0.0
    %v2129 = vmax.f32 %v849, 0.0
    %v2130 = vmax.f32 %v1520, 0.0
    %v2131 = vmax.f32 %v1522, 0.0
    %v2132 = vmax.f32 %v853, 0.0
    %v2133 = vmax.f32 %v855, 0.0
    %v2134 = vmax.f32 %v1526, 0.0
    %v2135 = vmax.f32 %v1528, 0.0
    %v2136 = vmax.f32 %v857, 0.0
    %v2137 = vmax.f32 %v859, 0.0
    %v2138 = vmax.f32 %v1530, 0.0
    %v2139 = vmax.f32 %v1532, 0.0
    %v2140 = vmax.f32 %v863, 0.0
    %v2141 = vmax.f32 %v865, 0.0
    %v2142 = vmax.f32 %v1536, 0.0
    %v2143 = vmax.f32 %v1538, 0.0
    %v2144 = vmax.f32 %v867, 0.0
    %v2145 = vmax.f32 %v869, 0.0
    %v2146 = vmax.f32 %v1540, 0.0
    %v2147 = vmax.f32 %v1542, 0.0
    %v2148 = vmax.f32 %v873, 0.0
    %v2149 = vmax.f32 %v875, 0.0
    %v2150 = vmax.f32 %v1546, 0.0
    %v2151 = vmax.f32 %v1548, 0.0
    %v2152 = vmax.f32 %v877, 0.0
    %v2153 = vmax.f32 %v879, 0.0
    %v2154 = vmax.f32 %v1550, 0.0
    %v2155 = vmax.f32 %v1552, 0.0
    %v2156 = vmax.f32 %v883, 0.0
    %v2157 = vmax.f32 %v885, 0.0
    %v2158 = vmax.f32 %v1556, 0.0
    %v2159 = vmax.f32 %v1558, 0.0
    %v2160 = vmax.f32 %v887, 0.0
    %v2161 = vmax.f32 %v889, 0.0
    %v2162 = vmax.f32 %v1560, 0.0
    %v2163 = vmax.f32 %v1562, 0.0
    %v2164 = vmax.f32 %v893, 0.0
    %v2165 = vmax.f32 %v895, 0.0
    %v2166 = vmax.f32 %v1566, 0.0
    %v2167 = vmax.f32 %v1568, 0.0
    %v2168 = vmax.f32 %v897, 0.0
    %v2169 = vmax.f32 %v899, 0.0
    %v2170 = vmax.f32 %v1570, 0.0
    %v2171 = vmax.f32 %v1572, 0.0
    %v2172 = vmax.f32 %v903, 0.0
    %v2173 = vmax.f32 %v905, 0.0
    %v2174 = vmax.f32 %v1576, 0.0
    %v2175 = vmax.f32 %v1578, 0.0
    %v2176 = vmax.f32 %v907, 0.0
    %v2177 = vmax.f32 %v909, 0.0
    %v2178 = vmax.f32 %v1580, 0.0
    %v2179 = vmax.f32 %v1582, 0.0
    %v2180 = vmax.f32 %v913, 0.0
    %v2181 = vmax.f32 %v915, 0.0
    %v2182 = vmax.f32 %v1586, 0.0
    %v2183 = vmax.f32 %v1588, 0.0
    %v2184 = vmax.f32 %v917, 0.0
    %v2185 = vmax.f32 %v919, 0.0
    %v2186 = vmax.f32 %v1590, 0.0
    %v2187 = vmax.f32 %v1592, 0.0
    %v2188 = vmax.f32 %v923, 0.0
    %v2189 = vmax.f32 %v925, 0.0
    %v2190 = vmax.f32 %v1596, 0.0
    %v2191 = vmax.f32 %v1598, 0.0
    %v2192 = vmax.f32 %v927, 0.0
    %v2193 = vmax.f32 %v929, 0.0
    %v2194 = vmax.f32 %v1600, 0.0
    %v2195 = vmax.f32 %v1602, 0.0
    %v2196 = vmax.f32 %v933, 0.0
    %v2197 = vmax.f32 %v935, 0.0
    %v2198 = vmax.f32 %v1606, 0.0
    %v2199 = vmax.f32 %v1608, 0.0
    %v2200 = vmax.f32 %v937, 0.0
    %v2201 = vmax.f32 %v939, 0.0
    %v2202 = vmax.f32 %v1610, 0.0
    %v2203 = vmax.f32 %v1612, 0.0
    %v2204 = vmax.f32 %v943, 0.0
    %v2205 = vmax.f32 %v945, 0.0
    %v2206 = vmax.f32 %v1616, 0.0
    %v2207 = vmax.f32 %v1618, 0.0
    %v2208 = vmax.f32 %v947, 0.0
    %v2209 = vmax.f32 %v949, 0.0
    %v2210 = vmax.f32 %v1620, 0.0
    %v2211 = vmax.f32 %v1622, 0.0
    %v2212 = vmax.f32 %v953, 0.0
    %v2213 = vmax.f32 %v955, 0.0
    %v2214 = vmax.f32 %v1626, 0.0
    %v2215 = vmax.f32 %v1628, 0.0
    %v2216 = vmax.f32 %v957, 0.0
    %v2217 = vmax.f32 %v959, 0.0
    %v2218 = vmax.f32 %v1630, 0.0
    %v2219 = vmax.f32 %v1632, 0.0
    %v2220 = vmax.f32 %v963, 0.0
    %v2221 = vmax.f32 %v965, 0.0
    %v2222 = vmax.f32 %v1636, 0.0
    %v2223 = vmax.f32 %v1638, 0.0
    %v2224 = vmax.f32 %v967, 0.0
    %v2225 = vmax.f32 %v969, 0.0
    %v2226 = vmax.f32 %v1640, 0.0
    %v2227 = vmax.f32 %v1642, 0.0
    %v2228 = vmax.f32 %v973, 0.0
    %v2229 = vmax.f32 %v975, 0.0
    %v2230 = vmax.f32 %v1646, 0.0
    %v2231 = vmax.f32 %v1648, 0.0
    %v2232 = vmax.f32 %v977, 0.0
    %v2233 = vmax.f32 %v979, 0.0
    %v2234 = vmax.f32 %v1650, 0.0
    %v2235 = vmax.f32 %v1652, 0.0
    %v2236 = vmax.f32 %v983, 0.0
    %v2237 = vmax.f32 %v985, 0.0
    %v2238 = vmax.f32 %v1656, 0.0
    %v2239 = vmax.f32 %v1658, 0.0
    %v2240 = vmax.f32 %v987, 0.0
    %v2241 = vmax.f32 %v989, 0.0
    %v2242 = vmax.f32 %v1660, 0.0
    %v2243 = vmax.f32 %v1662, 0.0
    %v2244 = vmax.f32 %v993, 0.0
    %v2245 = vmax.f32 %v995, 0.0
    %v2246 = vmax.f32 %v1666, 0.0
    %v2247 = vmax.f32 %v1668, 0.0
    %v2248 = vmax.f32 %v997, 0.0
    %v2249 = vmax.f32 %v999, 0.0
    %v2250 = vmax.f32 %v1670, 0.0
    %v2251 = vmax.f32 %v1672, 0.0
    %v2252 = vmax.f32 %v1003, 0.0
    %v2253 = vmax.f32 %v1005, 0.0
    %v2254 = vmax.f32 %v1676, 0.0
    %v2255 = vmax.f32 %v1678, 0.0
    %v2256 = vmax.f32 %v1007, 0.0
    %v2257 = vmax.f32 %v1009, 0.0
    %v2258 = vmax.f32 %v1680, 0.0
    %v2259 = vmax.f32 %v1682, 0.0
    %v2260 = vmax.f32 %v1013, 0.0
    %v2261 = vmax.f32 %v1015, 0.0
    %v2262 = vmax.f32 %v1686, 0.0
    %v2263 = vmax.f32 %v1688, 0.0
    %v2264 = vmax.f32 %v1017, 0.0
    %v2265 = vmax.f32 %v1019, 0.0
    %v2266 = vmax.f32 %v1690, 0.0
    %v2267 = vmax.f32 %v1692, 0.0
    %v2268 = vmax.f32 %v1023, 0.0
    %v2269 = vmax.f32 %v1025, 0.0
    %v2270 = vmax.f32 %v1696, 0.0
    %v2271 = vmax.f32 %v1698, 0.0
    %v2272 = vmax.f32 %v1027, 0.0
    %v2273 = vmax.f32 %v1029, 0.0
    %v2274 = vmax.f32 %v1700, 0.0
    %v2275 = vmax.f32 %v1702, 0.0
    %v2276 = vmax.f32 %v1033, 0.0
    %v2277 = vmax.f32 %v1035, 0.0
    %v2278 = vmax.f32 %v1706, 0.0
    %v2279 = vmax.f32 %v1708, 0.0
    %v2280 = vmax.f32 %v1037, 0.0
    %v2281 = vmax.f32 %v1039, 0.0
    %v2282 = vmax.f32 %v1710, 0.0
    %v2283 = vmax.f32 %v1712, 0.0
    %v2284 = vmax.f32 %v1043, 0.0
    %v2285 = vmax.f32 %v1045, 0.0
    %v2286 = vmax.f32 %v1716, 0.0
    %v2287 = vmax.f32 %v1718, 0.0
    %v2288 = vmax.f32 %v1047, 0.0
    %v2289 = vmax.f32 %v1049, 0.0
    %v2290 = vmax.f32 %v1720, 0.0
    %v2291 = vmax.f32 %v1722, 0.0
    %v2292 = vmax.f32 %v1053, 0.0
    %v2293 = vmax.f32 %v1055, 0.0
    %v2294 = vmax.f32 %v1726, 0.0
    %v2295 = vmax.f32 %v1728, 0.0
    %v2296 = vmax.f32 %v1057, 0.0
    %v2297 = vmax.f32 %v1059, 0.0
    %v2298 = vmax.f32 %v1730, 0.0
    %v2299 = vmax.f32 %v1732, 0.0
    %v2300 = vmax.f32 %v1063, 0.0
    %v2301 = vmax.f32 %v1065, 0.0
    %v2302 = vmax.f32 %v1736, 0.0
    %v2303 = vmax.f32 %v1738, 0.0
    %v2304 = vmax.f32 %v1067, 0.0
    %v2305 = vmax.f32 %v1069, 0.0
    %v2306 = vmax.f32 %v1740, 0.0
    %v2307 = vmax.f32 %v1742, 0.0
    %v2308 = vmax.f32 %v1073, 0.0
    %v2309 = vmax.f32 %v1075, 0.0
    %v2310 = vmax.f32 %v1746, 0.0
    %v2311 = vmax.f32 %v1748, 0.0
    %v2312 = vmax.f32 %v1077, 0.0
    %v2313 = vmax.f32 %v1079, 0.0
    %v2314 = vmax.f32 %v1750, 0.0
    %v2315 = vmax.f32 %v1752, 0.0
    %v2316 = vmax.f32 %v1083, 0.0
    %v2317 = vmax.f32 %v1085, 0.0
    %v2318 = vmax.f32 %v1756, 0.0
    %v2319 = vmax.f32 %v1758, 0.0
    %v2320 = vmax.f32 %v1087, 0.0
    %v2321 = vmax.f32 %v1089, 0.0
    %v2322 = vmax.f32 %v1760, 0.0
    %v2323 = vmax.f32 %v1762, 0.0
    %v2324 = vmax.f32 %v1093, 0.0
    %v2325 = vmax.f32 %v1095, 0.0
    %v2326 = vmax.f32 %v1766, 0.0
    %v2327 = vmax.f32 %v1768, 0.0
    %v2328 = vmax.f32 %v1097, 0.0
    %v2329 = vmax.f32 %v1099, 0.0
    %v2330 = vmax.f32 %v1770, 0.0
    %v2331 = vmax.f32 %v1772, 0.0
    %v2332 = vmax.f32 %v1103, 0.0
    %v2333 = vmax.f32 %v1105, 0.0
    %v2334 = vmax.f32 %v1776, 0.0
    %v2335 = vmax.f32 %v1778, 0.0
    %v2336 = vmax.f32 %v1107, 0.0
    %v2337 = vmax.f32 %v1109, 0.0
    %v2338 = vmax.f32 %v1780, 0.0
    %v2339 = vmax.f32 %v1782, 0.0
    %v2340 = vmax.f32 %v1113, 0.0
    %v2341 = vmax.f32 %v1115, 0.0
    %v2342 = vmax.f32 %v1786, 0.0
    %v2343 = vmax.f32 %v1788, 0.0
    %v2344 = vmax.f32 %v1117, 0.0
    %v2345 = vmax.f32 %v1119, 0.0
    %v2346 = vmax.f32 %v1790, 0.0
    %v2347 = vmax.f32 %v1792, 0.0
    %v2348 = vmax.f32 %v1123, 0.0
    %v2349 = vmax.f32 %v1125, 0.0
    %v2350 = vmax.f32 %v1796, 0.0
    %v2351 = vmax.f32 %v1798, 0.0
    %v2352 = vmax.f32 %v1127, 0.0
    %v2353 = vmax.f32 %v1129, 0.0
    %v2354 = vmax.f32 %v1800, 0.0
    %v2355 = vmax.f32 %v1802, 0.0
    %v2356 = vmax.f32 %v1133, 0.0
    %v2357 = vmax.f32 %v1135, 0.0
    %v2358 = vmax.f32 %v1806, 0.0
    %v2359 = vmax.f32 %v1808, 0.0
    %v2360 = vmax.f32 %v1137, 0.0
    %v2361 = vmax.f32 %v1139, 0.0
    %v2362 = vmax.f32 %v1810, 0.0
    %v2363 = vmax.f32 %v1812, 0.0
    %v2364 = vmax.f32 %v1143, 0.0
    %v2365 = vmax.f32 %v1145, 0.0
    %v2366 = vmax.f32 %v1816, 0.0
    %v2367 = vmax.f32 %v1818, 0.0
    %v2368 = vmax.f32 %v1147, 0.0
    %v2369 = vmax.f32 %v1149, 0.0
    %v2370 = vmax.f32 %v1820, 0.0
    %v2371 = vmax.f32 %v1822, 0.0
    %v2372 = vmax.f32 %v1153, 0.0
    %v2373 = vmax.f32 %v1155, 0.0
    %v2374 = vmax.f32 %v1826, 0.0
    %v2375 = vmax.f32 %v1828, 0.0
    %v2376 = vmax.f32 %v1157, 0.0
    %v2377 = vmax.f32 %v1159, 0.0
    %v2378 = vmax.f32 %v1830, 0.0
    %v2379 = vmax.f32 %v1832, 0.0
    %v2380 = vmax.f32 %v1163, 0.0
    %v2381 = vmax.f32 %v1165, 0.0
    %v2382 = vmax.f32 %v1836, 0.0
    %v2383 = vmax.f32 %v1838, 0.0
    %v2384 = vmax.f32 %v1167, 0.0
    %v2385 = vmax.f32 %v1169, 0.0
    %v2386 = vmax.f32 %v1840, 0.0
    %v2387 = vmax.f32 %v1842, 0.0
    %v2388 = vmax.f32 %v1173, 0.0
    %v2389 = vmax.f32 %v1175, 0.0
    %v2390 = vmax.f32 %v1846, 0.0
    %v2391 = vmax.f32 %v1848, 0.0
    %v2392 = vmax.f32 %v1177, 0.0
    %v2393 = vmax.f32 %v1179, 0.0
    %v2394 = vmax.f32 %v1850, 0.0
    %v2395 = vmax.f32 %v1852, 0.0
    %v2396 = vmax.f32 %v1183, 0.0
    %v2397 = vmax.f32 %v1185, 0.0
    %v2398 = vmax.f32 %v1856, 0.0
    %v2399 = vmax.f32 %v1858, 0.0
    %v2400 = vmax.f32 %v1187, 0.0
    %v2401 = vmax.f32 %v1189, 0.0
    %v2402 = vmax.f32 %v1860, 0.0
    %v2403 = vmax.f32 %v1862, 0.0
    %v2404 = vmax.f32 %v1193, 0.0
    %v2405 = vmax.f32 %v1195, 0.0
    %v2406 = vmax.f32 %v1866, 0.0
    %v2407 = vmax.f32 %v1868, 0.0
    %v2408 = vmax.f32 %v1197, 0.0
    %v2409 = vmax.f32 %v1199, 0.0
    %v2410 = vmax.f32 %v1870, 0.0
    %v2411 = vmax.f32 %v1872, 0.0
    %v2412 = vmax.f32 %v1203, 0.0
    %v2413 = vmax.f32 %v1205, 0.0
    %v2414 = vmax.f32 %v1876, 0.0
    %v2415 = vmax.f32 %v1878, 0.0
    %v2416 = vmax.f32 %v1207, 0.0
    %v2417 = vmax.f32 %v1209, 0.0
    %v2418 = vmax.f32 %v1880, 0.0
    %v2419 = vmax.f32 %v1882, 0.0
    %v2420 = vmax.f32 %v1213, 0.0
    %v2421 = vmax.f32 %v1215, 0.0
    %v2422 = vmax.f32 %v1886, 0.0
    %v2423 = vmax.f32 %v1888, 0.0
    %v2424 = vmax.f32 %v1217, 0.0
    %v2425 = vmax.f32 %v1219, 0.0
    %v2426 = vmax.f32 %v1890, 0.0
    %v2427 = vmax.f32 %v1892, 0.0
    %v2428 = vmax.f32 %v1223, 0.0
    %v2429 = vmax.f32 %v1225, 0.0
    %v2430 = vmax.f32 %v1896, 0.0
    %v2431 = vmax.f32 %v1898, 0.0
    %v2432 = vmax.f32 %v1227, 0.0
    %v2433 = vmax.f32 %v1229, 0.0
    %v2434 = vmax.f32 %v1900, 0.0
    %v2435 = vmax.f32 %v1902, 0.0
    %v2436 = vmax.f32 %v1233, 0.0
    %v2437 = vmax.f32 %v1235, 0.0
    %v2438 = vmax.f32 %v1906, 0.0
    %v2439 = vmax.f32 %v1908, 0.0
    %v2440 = vmax.f32 %v1237, 0.0
    %v2441 = vmax.f32 %v1239, 0.0
    %v2442 = vmax.f32 %v1910, 0.0
    %v2443 = vmax.f32 %v1912, 0.0
    %v2444 = vmax.f32 %v1243, 0.0
    %v2445 = vmax.f32 %v1245, 0.0
    %v2446 = vmax.f32 %v1916, 0.0
    %v2447 = vmax.f32 %v1918, 0.0
    %v2448 = vmax.f32 %v1247, 0.0
    %v2449 = vmax.f32 %v1249, 0.0
    %v2450 = vmax.f32 %v1920, 0.0
    %v2451 = vmax.f32 %v1922, 0.0
    %v2452 = vmax.f32 %v1253, 0.0
    %v2453 = vmax.f32 %v1255, 0.0
    %v2454 = vmax.f32 %v1926, 0.0
    %v2455 = vmax.f32 %v1928, 0.0
    %v2456 = vmax.f32 %v1257, 0.0
    %v2457 = vmax.f32 %v1259, 0.0
    %v2458 = vmax.f32 %v1930, 0.0
    %v2459 = vmax.f32 %v1932, 0.0
    %v2460 = vmax.f32 %v1263, 0.0
    %v2461 = vmax.f32 %v1265, 0.0
    %v2462 = vmax.f32 %v1936, 0.0
    %v2463 = vmax.f32 %v1938, 0.0
    %v2464 = vmax.f32 %v1267, 0.0
    %v2465 = vmax.f32 %v1269, 0.0
    %v2466 = vmax.f32 %v1940, 0.0
    %v2467 = vmax.f32 %v1942, 0.0
    %v2468 = vmax.f32 %v1273, 0.0
    %v2469 = vmax.f32 %v1275, 0.0
    %v2470 = vmax.f32 %v1946, 0.0
    %v2471 = vmax.f32 %v1948, 0.0
    %v2472 = vmax.f32 %v1277, 0.0
    %v2473 = vmax.f32 %v1279, 0.0
    %v2474 = vmax.f32 %v1950, 0.0
    %v2475 = vmax.f32 %v1952, 0.0
    %v2476 = vmax.f32 %v1283, 0.0
    %v2477 = vmax.f32 %v1285, 0.0
    %v2478 = vmax.f32 %v1956, 0.0
    %v2479 = vmax.f32 %v1958, 0.0
    %v2480 = vmax.f32 %v1287, 0.0
    %v2481 = vmax.f32 %v1289, 0.0
    %v2482 = vmax.f32 %v1960, 0.0
    %v2483 = vmax.f32 %v1962, 0.0
    %v2484 = vmax.f32 %v1293, 0.0
    %v2485 = vmax.f32 %v1295, 0.0
    %v2486 = vmax.f32 %v1966, 0.0
    %v2487 = vmax.f32 %v1968, 0.0
    %v2488 = vmax.f32 %v1297, 0.0
    %v2489 = vmax.f32 %v1299, 0.0
    %v2490 = vmax.f32 %v1970, 0.0
    %v2491 = vmax.f32 %v1972, 0.0
    %v2492 = vmax.f32 %v1303, 0.0
    %v2493 = vmax.f32 %v1305, 0.0
    %v2494 = vmax.f32 %v1976, 0.0
    %v2495 = vmax.f32 %v1978, 0.0
    %v2496 = vmax.f32 %v1307, 0.0
    %v2497 = vmax.f32 %v1309, 0.0
    %v2498 = vmax.f32 %v1980, 0.0
    %v2499 = vmax.f32 %v1982, 0.0
    %v2500 = vmax.f32 %v1313, 0.0
    %v2501 = vmax.f32 %v1315, 0.0
    %v2502 = vmax.f32 %v1986, 0.0
    %v2503 = vmax.f32 %v1988, 0.0
    %v2504 = vmax.f32 %v1317, 0.0
    %v2505 = vmax.f32 %v1319, 0.0
    %v2506 = vmax.f32 %v1990, 0.0
    %v2507 = vmax.f32 %v1992, 0.0
    %v2508 = vmax.f32 %v1323, 0.0
    %v2509 = vmax.f32 %v1325, 0.0
    %v2510 = vmax.f32 %v1996, 0.0
    %v2511 = vmax.f32 %v1998, 0.0
    %v2512 = vmax.f32 %v1327, 0.0
    %v2513 = vmax.f32 %v1329, 0.0
    %v2514 = vmax.f32 %v2000, 0.0
    %v2515 = vmax.f32 %v2002, 0.0
    %v2516 = vpack.c.bf16 %v2008, %v2004
    %v2517 = vpack.c.bf16 %v2009, %v2005
    %v2518 = vpack.c.bf16 %v2010, %v2006
    %v2519 = vpack.c.bf16 %v2011, %v2007
    %v2520 = vpack.c.bf16 %v2016, %v2012
    %v2521 = vpack.c.bf16 %v2017, %v2013
    %v2522 = vpack.c.bf16 %v2018, %v2014
    %v2523 = vpack.c.bf16 %v2019, %v2015
    %v2524 = vpack.c.bf16 %v2024, %v2020
    %v2525 = vpack.c.bf16 %v2025, %v2021
    %v2526 = vpack.c.bf16 %v2026, %v2022
    %v2527 = vpack.c.bf16 %v2027, %v2023
    %v2528 = vpack.c.bf16 %v2032, %v2028
    %v2529 = vpack.c.bf16 %v2033, %v2029
    %v2530 = vpack.c.bf16 %v2034, %v2030
    %v2531 = vpack.c.bf16 %v2035, %v2031
    %v2532 = vpack.c.bf16 %v2040, %v2036
    %v2533 = vpack.c.bf16 %v2041, %v2037
    %v2534 = vpack.c.bf16 %v2042, %v2038
    %v2535 = vpack.c.bf16 %v2043, %v2039
    %v2536 = vpack.c.bf16 %v2048, %v2044
    %v2537 = vpack.c.bf16 %v2049, %v2045
    %v2538 = vpack.c.bf16 %v2050, %v2046
    %v2539 = vpack.c.bf16 %v2051, %v2047
    %v2540 = vpack.c.bf16 %v2056, %v2052
    %v2541 = vpack.c.bf16 %v2057, %v2053
    %v2542 = vpack.c.bf16 %v2058, %v2054
    %v2543 = vpack.c.bf16 %v2059, %v2055
    %v2544 = vpack.c.bf16 %v2064, %v2060
    %v2545 = vpack.c.bf16 %v2065, %v2061
    %v2546 = vpack.c.bf16 %v2066, %v2062
    %v2547 = vpack.c.bf16 %v2067, %v2063
    %v2548 = vpack.c.bf16 %v2072, %v2068
    %v2549 = vpack.c.bf16 %v2073, %v2069
    %v2550 = vpack.c.bf16 %v2074, %v2070
    %v2551 = vpack.c.bf16 %v2075, %v2071
    %v2552 = vpack.c.bf16 %v2080, %v2076
    %v2553 = vpack.c.bf16 %v2081, %v2077
    %v2554 = vpack.c.bf16 %v2082, %v2078
    %v2555 = vpack.c.bf16 %v2083, %v2079
    %v2556 = vpack.c.bf16 %v2088, %v2084
    %v2557 = vpack.c.bf16 %v2089, %v2085
    %v2558 = vpack.c.bf16 %v2090, %v2086
    %v2559 = vpack.c.bf16 %v2091, %v2087
    %v2560 = vpack.c.bf16 %v2096, %v2092
    %v2561 = vpack.c.bf16 %v2097, %v2093
    %v2562 = vpack.c.bf16 %v2098, %v2094
    %v2563 = vpack.c.bf16 %v2099, %v2095
    %v2564 = vpack.c.bf16 %v2104, %v2100
    %v2565 = vpack.c.bf16 %v2105, %v2101
    %v2566 = vpack.c.bf16 %v2106, %v2102
    %v2567 = vpack.c.bf16 %v2107, %v2103
    %v2568 = vpack.c.bf16 %v2112, %v2108
    %v2569 = vpack.c.bf16 %v2113, %v2109
    %v2570 = vpack.c.bf16 %v2114, %v2110
    %v2571 = vpack.c.bf16 %v2115, %v2111
    %v2572 = vpack.c.bf16 %v2120, %v2116
    %v2573 = vpack.c.bf16 %v2121, %v2117
    %v2574 = vpack.c.bf16 %v2122, %v2118
    %v2575 = vpack.c.bf16 %v2123, %v2119
    %v2576 = vpack.c.bf16 %v2128, %v2124
    %v2577 = vpack.c.bf16 %v2129, %v2125
    %v2578 = vpack.c.bf16 %v2130, %v2126
    %v2579 = vpack.c.bf16 %v2131, %v2127
    %v2580 = vpack.c.bf16 %v2136, %v2132
    %v2581 = vpack.c.bf16 %v2137, %v2133
    %v2582 = vpack.c.bf16 %v2138, %v2134
    %v2583 = vpack.c.bf16 %v2139, %v2135
    %v2584 = vpack.c.bf16 %v2144, %v2140
    %v2585 = vpack.c.bf16 %v2145, %v2141
    %v2586 = vpack.c.bf16 %v2146, %v2142
    %v2587 = vpack.c.bf16 %v2147, %v2143
    %v2588 = vpack.c.bf16 %v2152, %v2148
    %v2589 = vpack.c.bf16 %v2153, %v2149
    %v2590 = vpack.c.bf16 %v2154, %v2150
    %v2591 = vpack.c.bf16 %v2155, %v2151
    %v2592 = vpack.c.bf16 %v2160, %v2156
    %v2593 = vpack.c.bf16 %v2161, %v2157
    %v2594 = vpack.c.bf16 %v2162, %v2158
    %v2595 = vpack.c.bf16 %v2163, %v2159
    %v2596 = vpack.c.bf16 %v2168, %v2164
    %v2597 = vpack.c.bf16 %v2169, %v2165
    %v2598 = vpack.c.bf16 %v2170, %v2166
    %v2599 = vpack.c.bf16 %v2171, %v2167
    %v2600 = vpack.c.bf16 %v2176, %v2172
    %v2601 = vpack.c.bf16 %v2177, %v2173
    %v2602 = vpack.c.bf16 %v2178, %v2174
    %v2603 = vpack.c.bf16 %v2179, %v2175
    %v2604 = vpack.c.bf16 %v2184, %v2180
    %v2605 = vpack.c.bf16 %v2185, %v2181
    %v2606 = vpack.c.bf16 %v2186, %v2182
    %v2607 = vpack.c.bf16 %v2187, %v2183
    %v2608 = vpack.c.bf16 %v2192, %v2188
    %v2609 = vpack.c.bf16 %v2193, %v2189
    %v2610 = vpack.c.bf16 %v2194, %v2190
    %v2611 = vpack.c.bf16 %v2195, %v2191
    %v2612 = vpack.c.bf16 %v2200, %v2196
    %v2613 = vpack.c.bf16 %v2201, %v2197
    %v2614 = vpack.c.bf16 %v2202, %v2198
    %v2615 = vpack.c.bf16 %v2203, %v2199
    %v2616 = vpack.c.bf16 %v2208, %v2204
    %v2617 = vpack.c.bf16 %v2209, %v2205
    %v2618 = vpack.c.bf16 %v2210, %v2206
    %v2619 = vpack.c.bf16 %v2211, %v2207
    %v2620 = vpack.c.bf16 %v2216, %v2212
    %v2621 = vpack.c.bf16 %v2217, %v2213
    %v2622 = vpack.c.bf16 %v2218, %v2214
    %v2623 = vpack.c.bf16 %v2219, %v2215
    %v2624 = vpack.c.bf16 %v2224, %v2220
    %v2625 = vpack.c.bf16 %v2225, %v2221
    %v2626 = vpack.c.bf16 %v2226, %v2222
    %v2627 = vpack.c.bf16 %v2227, %v2223
    %v2628 = vpack.c.bf16 %v2232, %v2228
    %v2629 = vpack.c.bf16 %v2233, %v2229
    %v2630 = vpack.c.bf16 %v2234, %v2230
    %v2631 = vpack.c.bf16 %v2235, %v2231
    %v2632 = vpack.c.bf16 %v2240, %v2236
    %v2633 = vpack.c.bf16 %v2241, %v2237
    %v2634 = vpack.c.bf16 %v2242, %v2238
    %v2635 = vpack.c.bf16 %v2243, %v2239
    %v2636 = vpack.c.bf16 %v2248, %v2244
    %v2637 = vpack.c.bf16 %v2249, %v2245
    %v2638 = vpack.c.bf16 %v2250, %v2246
    %v2639 = vpack.c.bf16 %v2251, %v2247
    %v2640 = vpack.c.bf16 %v2256, %v2252
    %v2641 = vpack.c.bf16 %v2257, %v2253
    %v2642 = vpack.c.bf16 %v2258, %v2254
    %v2643 = vpack.c.bf16 %v2259, %v2255
    %v2644 = vpack.c.bf16 %v2264, %v2260
    %v2645 = vpack.c.bf16 %v2265, %v2261
    %v2646 = vpack.c.bf16 %v2266, %v2262
    %v2647 = vpack.c.bf16 %v2267, %v2263
    %v2648 = vpack.c.bf16 %v2272, %v2268
    %v2649 = vpack.c.bf16 %v2273, %v2269
    %v2650 = vpack.c.bf16 %v2274, %v2270
    %v2651 = vpack.c.bf16 %v2275, %v2271
    %v2652 = vpack.c.bf16 %v2280, %v2276
    %v2653 = vpack.c.bf16 %v2281, %v2277
    %v2654 = vpack.c.bf16 %v2282, %v2278
    %v2655 = vpack.c.bf16 %v2283, %v2279
    %v2656 = vpack.c.bf16 %v2288, %v2284
    %v2657 = vpack.c.bf16 %v2289, %v2285
    %v2658 = vpack.c.bf16 %v2290, %v2286
    %v2659 = vpack.c.bf16 %v2291, %v2287
    %v2660 = vpack.c.bf16 %v2296, %v2292
    %v2661 = vpack.c.bf16 %v2297, %v2293
    %v2662 = vpack.c.bf16 %v2298, %v2294
    %v2663 = vpack.c.bf16 %v2299, %v2295
    %v2664 = vpack.c.bf16 %v2304, %v2300
    %v2665 = vpack.c.bf16 %v2305, %v2301
    %v2666 = vpack.c.bf16 %v2306, %v2302
    %v2667 = vpack.c.bf16 %v2307, %v2303
    %v2668 = vpack.c.bf16 %v2312, %v2308
    %v2669 = vpack.c.bf16 %v2313, %v2309
    %v2670 = vpack.c.bf16 %v2314, %v2310
    %v2671 = vpack.c.bf16 %v2315, %v2311
    %v2672 = vpack.c.bf16 %v2320, %v2316
    %v2673 = vpack.c.bf16 %v2321, %v2317
    %v2674 = vpack.c.bf16 %v2322, %v2318
    %v2675 = vpack.c.bf16 %v2323, %v2319
    %v2676 = vpack.c.bf16 %v2328, %v2324
    %v2677 = vpack.c.bf16 %v2329, %v2325
    %v2678 = vpack.c.bf16 %v2330, %v2326
    %v2679 = vpack.c.bf16 %v2331, %v2327
    %v2680 = vpack.c.bf16 %v2336, %v2332
    %v2681 = vpack.c.bf16 %v2337, %v2333
    %v2682 = vpack.c.bf16 %v2338, %v2334
    %v2683 = vpack.c.bf16 %v2339, %v2335
    %v2684 = vpack.c.bf16 %v2344, %v2340
    %v2685 = vpack.c.bf16 %v2345, %v2341
    %v2686 = vpack.c.bf16 %v2346, %v2342
    %v2687 = vpack.c.bf16 %v2347, %v2343
    %v2688 = vpack.c.bf16 %v2352, %v2348
    %v2689 = vpack.c.bf16 %v2353, %v2349
    %v2690 = vpack.c.bf16 %v2354, %v2350
    %v2691 = vpack.c.bf16 %v2355, %v2351
    %v2692 = vpack.c.bf16 %v2360, %v2356
    %v2693 = vpack.c.bf16 %v2361, %v2357
    %v2694 = vpack.c.bf16 %v2362, %v2358
    %v2695 = vpack.c.bf16 %v2363, %v2359
    %v2696 = vpack.c.bf16 %v2368, %v2364
    %v2697 = vpack.c.bf16 %v2369, %v2365
    %v2698 = vpack.c.bf16 %v2370, %v2366
    %v2699 = vpack.c.bf16 %v2371, %v2367
    %v2700 = vpack.c.bf16 %v2376, %v2372
    %v2701 = vpack.c.bf16 %v2377, %v2373
    %v2702 = vpack.c.bf16 %v2378, %v2374
    %v2703 = vpack.c.bf16 %v2379, %v2375
    %v2704 = vpack.c.bf16 %v2384, %v2380
    %v2705 = vpack.c.bf16 %v2385, %v2381
    %v2706 = vpack.c.bf16 %v2386, %v2382
    %v2707 = vpack.c.bf16 %v2387, %v2383
    %v2708 = vpack.c.bf16 %v2392, %v2388
    %v2709 = vpack.c.bf16 %v2393, %v2389
    %v2710 = vpack.c.bf16 %v2394, %v2390
    %v2711 = vpack.c.bf16 %v2395, %v2391
    %v2712 = vpack.c.bf16 %v2400, %v2396
    %v2713 = vpack.c.bf16 %v2401, %v2397
    %v2714 = vpack.c.bf16 %v2402, %v2398
    %v2715 = vpack.c.bf16 %v2403, %v2399
    %v2716 = vpack.c.bf16 %v2408, %v2404
    %v2717 = vpack.c.bf16 %v2409, %v2405
    %v2718 = vpack.c.bf16 %v2410, %v2406
    %v2719 = vpack.c.bf16 %v2411, %v2407
    %v2720 = vpack.c.bf16 %v2416, %v2412
    %v2721 = vpack.c.bf16 %v2417, %v2413
    %v2722 = vpack.c.bf16 %v2418, %v2414
    %v2723 = vpack.c.bf16 %v2419, %v2415
    %v2724 = vpack.c.bf16 %v2424, %v2420
    %v2725 = vpack.c.bf16 %v2425, %v2421
    %v2726 = vpack.c.bf16 %v2426, %v2422
    %v2727 = vpack.c.bf16 %v2427, %v2423
    %v2728 = vpack.c.bf16 %v2432, %v2428
    %v2729 = vpack.c.bf16 %v2433, %v2429
    %v2730 = vpack.c.bf16 %v2434, %v2430
    %v2731 = vpack.c.bf16 %v2435, %v2431
    %v2732 = vpack.c.bf16 %v2440, %v2436
    %v2733 = vpack.c.bf16 %v2441, %v2437
    %v2734 = vpack.c.bf16 %v2442, %v2438
    %v2735 = vpack.c.bf16 %v2443, %v2439
    %v2736 = vpack.c.bf16 %v2448, %v2444
    %v2737 = vpack.c.bf16 %v2449, %v2445
    %v2738 = vpack.c.bf16 %v2450, %v2446
    %v2739 = vpack.c.bf16 %v2451, %v2447
    %v2740 = vpack.c.bf16 %v2456, %v2452
    %v2741 = vpack.c.bf16 %v2457, %v2453
    %v2742 = vpack.c.bf16 %v2458, %v2454
    %v2743 = vpack.c.bf16 %v2459, %v2455
    %v2744 = vpack.c.bf16 %v2464, %v2460
    %v2745 = vpack.c.bf16 %v2465, %v2461
    %v2746 = vpack.c.bf16 %v2466, %v2462
    %v2747 = vpack.c.bf16 %v2467, %v2463
    %v2748 = vpack.c.bf16 %v2472, %v2468
    %v2749 = vpack.c.bf16 %v2473, %v2469
    %v2750 = vpack.c.bf16 %v2474, %v2470
    %v2751 = vpack.c.bf16 %v2475, %v2471
    %v2752 = vpack.c.bf16 %v2480, %v2476
    %v2753 = vpack.c.bf16 %v2481, %v2477
    %v2754 = vpack.c.bf16 %v2482, %v2478
    %v2755 = vpack.c.bf16 %v2483, %v2479
    %v2756 = vpack.c.bf16 %v2488, %v2484
    %v2757 = vpack.c.bf16 %v2489, %v2485
    %v2758 = vpack.c.bf16 %v2490, %v2486
    %v2759 = vpack.c.bf16 %v2491, %v2487
    %v2760 = vpack.c.bf16 %v2496, %v2492
    %v2761 = vpack.c.bf16 %v2497, %v2493
    %v2762 = vpack.c.bf16 %v2498, %v2494
    %v2763 = vpack.c.bf16 %v2499, %v2495
    %v2764 = vpack.c.bf16 %v2504, %v2500
    %v2765 = vpack.c.bf16 %v2505, %v2501
    %v2766 = vpack.c.bf16 %v2506, %v2502
    %v2767 = vpack.c.bf16 %v2507, %v2503
    %v2768 = vpack.c.bf16 %v2512, %v2508
    %v2769 = vpack.c.bf16 %v2513, %v2509
    %v2770 = vpack.c.bf16 %v2514, %v2510
    %v2771 = vpack.c.bf16 %v2515, %v2511
    %v2772 = vld [vmem:[%s4] sm:$0xff]
    %v2773 = vld [vmem:[%s4 + $0x8] sm:$0xf]
    %v2774 = vld [vmem:[%s4 + $0xc] sm:$0xff]
    %v2775 = vld [vmem:[%s4 + $0x14] sm:$0xf]
    %v2776 = vld [vmem:[%s4 + $0x18] sm:$0xff]
    %v2777 = vld [vmem:[%s4 + $0x20] sm:$0xf]
    %v2778 = vld [vmem:[%s4 + $0x24] sm:$0xff]
    %v2779 = vld [vmem:[%s4 + $0x2c] sm:$0xf]
    %v2780 = vld [vmem:[%s4 + $0x30] sm:$0xff]
    %v2781 = vld [vmem:[%s4 + $0x38] sm:$0xf]
    %v2782 = vld [vmem:[%s4 + $0x3c] sm:$0xff]
    %v2783 = vld [vmem:[%s4 + $0x44] sm:$0xf]
    %v2784 = vld [vmem:[%s4 + $0x48] sm:$0xff]
    %v2785 = vld [vmem:[%s4 + $0x50] sm:$0xf]
    %v2786 = vld [vmem:[%s4 + $0x54] sm:$0xff]
    %v2787 = vld [vmem:[%s4 + $0x5c] sm:$0xf]
    %v2788 = vld [vmem:[%s4 + $0x60] sm:$0xff]
    %v2789 = vld [vmem:[%s4 + $0x68] sm:$0xf]
    %v2790 = vld [vmem:[%s4 + $0x6c] sm:$0xff]
    %v2791 = vld [vmem:[%s4 + $0x74] sm:$0xf]
    %v2792 = vld [vmem:[%s4 + $0x78] sm:$0xff]
    %v2793 = vld [vmem:[%s4 + $0x80] sm:$0xf]
    %v2794 = vld [vmem:[%s4 + $0x84] sm:$0xff]
    %v2795 = vld [vmem:[%s4 + $0x8c] sm:$0xf]
    %v2796 = vld [vmem:[%s4 + $0x90] sm:$0xff]
    %v2797 = vld [vmem:[%s4 + $0x98] sm:$0xf]
    %v2798 = vld [vmem:[%s4 + $0x9c] sm:$0xff]
    %v2799 = vld [vmem:[%s4 + $0xa4] sm:$0xf]
    %v2800 = vld [vmem:[%s4 + $0xa8] sm:$0xff]
    %v2801 = vld [vmem:[%s4 + $0xb0] sm:$0xf]
    %v2802 = vld [vmem:[%s4 + $0xb4] sm:$0xff]
    %v2803 = vld [vmem:[%s4 + $0xbc] sm:$0xf]
    %v2804 = vld [vmem:[%s4 + $0xc0] sm:$0xff]
    %v2805 = vld [vmem:[%s4 + $0xc8] sm:$0xf]
    %v2806 = vld [vmem:[%s4 + $0xcc] sm:$0xff]
    %v2807 = vld [vmem:[%s4 + $0xd4] sm:$0xf]
    %v2808 = vld [vmem:[%s4 + $0xd8] sm:$0xff]
    %v2809 = vld [vmem:[%s4 + $0xe0] sm:$0xf]
    %v2810 = vld [vmem:[%s4 + $0xe4] sm:$0xff]
    %v2811 = vld [vmem:[%s4 + $0xec] sm:$0xf]
    %v2812 = vld [vmem:[%s4 + $0xf0] sm:$0xff]
    %v2813 = vld [vmem:[%s4 + $0xf8] sm:$0xf]
    %v2814 = vld [vmem:[%s4 + $0xfc] sm:$0xff]
    %v2815 = vld [vmem:[%s4 + $0x104] sm:$0xf]
    %v2816 = vld [vmem:[%s4 + $0x108] sm:$0xff]
    %v2817 = vld [vmem:[%s4 + $0x110] sm:$0xf]
    %v2818 = vld [vmem:[%s4 + $0x114] sm:$0xff]
    %v2819 = vld [vmem:[%s4 + $0x11c] sm:$0xf]
    %v2820 = vld [vmem:[%s4 + $0x120] sm:$0xff]
    %v2821 = vld [vmem:[%s4 + $0x128] sm:$0xf]
    %v2822 = vld [vmem:[%s4 + $0x12c] sm:$0xff]
    %v2823 = vld [vmem:[%s4 + $0x134] sm:$0xf]
    %v2824 = vld [vmem:[%s4 + $0x138] sm:$0xff]
    %v2825 = vld [vmem:[%s4 + $0x140] sm:$0xf]
    %v2826 = vld [vmem:[%s4 + $0x144] sm:$0xff]
    %v2827 = vld [vmem:[%s4 + $0x14c] sm:$0xf]
    %v2828 = vld [vmem:[%s4 + $0x150] sm:$0xff]
    %v2829 = vld [vmem:[%s4 + $0x158] sm:$0xf]
    %v2830 = vld [vmem:[%s4 + $0x15c] sm:$0xff]
    %v2831 = vld [vmem:[%s4 + $0x164] sm:$0xf]
    %v2832 = vld [vmem:[%s4 + $0x168] sm:$0xff]
    %v2833 = vld [vmem:[%s4 + $0x170] sm:$0xf]
    %v2834 = vld [vmem:[%s4 + $0x174] sm:$0xff]
    %v2835 = vld [vmem:[%s4 + $0x17c] sm:$0xf]
    %v2836 = vld [vmem:[%s4 + $0x180] sm:$0xff]
    %v2837 = vld [vmem:[%s4 + $0x188] sm:$0xf]
    %v2838 = vld [vmem:[%s4 + $0x18c] sm:$0xff]
    %v2839 = vld [vmem:[%s4 + $0x194] sm:$0xf]
    %v2840 = vld [vmem:[%s4 + $0x198] sm:$0xff]
    %v2841 = vld [vmem:[%s4 + $0x1a0] sm:$0xf]
    %v2842 = vld [vmem:[%s4 + $0x1a4] sm:$0xff]
    %v2843 = vld [vmem:[%s4 + $0x1ac] sm:$0xf]
    %v2844 = vld [vmem:[%s4 + $0x1b0] sm:$0xff]
    %v2845 = vld [vmem:[%s4 + $0x1b8] sm:$0xf]
    %v2846 = vld [vmem:[%s4 + $0x1bc] sm:$0xff]
    %v2847 = vld [vmem:[%s4 + $0x1c4] sm:$0xf]
    %v2848 = vld [vmem:[%s4 + $0x1c8] sm:$0xff]
    %v2849 = vld [vmem:[%s4 + $0x1d0] sm:$0xf]
    %v2850 = vld [vmem:[%s4 + $0x1d4] sm:$0xff]
    %v2851 = vld [vmem:[%s4 + $0x1dc] sm:$0xf]
    %v2852 = vld [vmem:[%s4 + $0x1e0] sm:$0xff]
    %v2853 = vld [vmem:[%s4 + $0x1e8] sm:$0xf]
    %v2854 = vld [vmem:[%s4 + $0x1ec] sm:$0xff]
    %v2855 = vld [vmem:[%s4 + $0x1f4] sm:$0xf]
    %v2856 = vld [vmem:[%s4 + $0x1f8] sm:$0xff]
    %v2857 = vld [vmem:[%s4 + $0x200] sm:$0xf]
    %v2858 = vld [vmem:[%s4 + $0x204] sm:$0xff]
    %v2859 = vld [vmem:[%s4 + $0x20c] sm:$0xf]
    %v2860 = vld [vmem:[%s4 + $0x210] sm:$0xff]
    %v2861 = vld [vmem:[%s4 + $0x218] sm:$0xf]
    %v2862 = vld [vmem:[%s4 + $0x21c] sm:$0xff]
    %v2863 = vld [vmem:[%s4 + $0x224] sm:$0xf]
    %v2864 = vld [vmem:[%s4 + $0x228] sm:$0xff]
    %v2865 = vld [vmem:[%s4 + $0x230] sm:$0xf]
    %v2866 = vld [vmem:[%s4 + $0x234] sm:$0xff]
    %v2867 = vld [vmem:[%s4 + $0x23c] sm:$0xf]
    %v2868 = vld [vmem:[%s4 + $0x240] sm:$0xff]
    %v2869 = vld [vmem:[%s4 + $0x248] sm:$0xf]
    %v2870 = vld [vmem:[%s4 + $0x24c] sm:$0xff]
    %v2871 = vld [vmem:[%s4 + $0x254] sm:$0xf]
    %v2872 = vld [vmem:[%s4 + $0x258] sm:$0xff]
    %v2873 = vld [vmem:[%s4 + $0x260] sm:$0xf]
    %v2874 = vld [vmem:[%s4 + $0x264] sm:$0xff]
    %v2875 = vld [vmem:[%s4 + $0x26c] sm:$0xf]
    %v2876 = vld [vmem:[%s4 + $0x270] sm:$0xff]
    %v2877 = vld [vmem:[%s4 + $0x278] sm:$0xf]
    %v2878 = vld [vmem:[%s4 + $0x27c] sm:$0xff]
    %v2879 = vld [vmem:[%s4 + $0x284] sm:$0xf]
    %v2880 = vld [vmem:[%s4 + $0x288] sm:$0xff]
    %v2881 = vld [vmem:[%s4 + $0x290] sm:$0xf]
    %v2882 = vld [vmem:[%s4 + $0x294] sm:$0xff]
    %v2883 = vld [vmem:[%s4 + $0x29c] sm:$0xf]
    %v2884 = vld [vmem:[%s4 + $0x2a0] sm:$0xff]
    %v2885 = vld [vmem:[%s4 + $0x2a8] sm:$0xf]
    %v2886 = vld [vmem:[%s4 + $0x2ac] sm:$0xff]
    %v2887 = vld [vmem:[%s4 + $0x2b4] sm:$0xf]
    %v2888 = vld [vmem:[%s4 + $0x2b8] sm:$0xff]
    %v2889 = vld [vmem:[%s4 + $0x2c0] sm:$0xf]
    %v2890 = vld [vmem:[%s4 + $0x2c4] sm:$0xff]
    %v2891 = vld [vmem:[%s4 + $0x2cc] sm:$0xf]
    %v2892 = vld [vmem:[%s4 + $0x2d0] sm:$0xff]
    %v2893 = vld [vmem:[%s4 + $0x2d8] sm:$0xf]
    %v2894 = vld [vmem:[%s4 + $0x2dc] sm:$0xff]
    %v2895 = vld [vmem:[%s4 + $0x2e4] sm:$0xf]
    %v2896 = vld [vmem:[%s4 + $0x2e8] sm:$0xff]
    %v2897 = vld [vmem:[%s4 + $0x2f0] sm:$0xf]
    %v2898 = vld [vmem:[%s4 + $0x2f4] sm:$0xff]
    %v2899 = vld [vmem:[%s4 + $0x2fc] sm:$0xf]
    %v2900 = vld [vmem:[%s5] sm:$0x3f]
    %v2902 = vcombine.high %v2900, %v2900
    %v2904 = vunpack.c.l.s4 1983009808
    %v2905 = vunpack.c.0.s8 %v2904
    %v2906 = vlaneseq
    %v2907 = vshrl.u32 %v2906, 7
    %v2908 = vsub.s32 %v2905, %v2907
    %v2909 = vrot.slane %v2900, %v2908
    %v2911 = vunpack.c.l.s4 1983009808
    %v2912 = vunpack.c.0.s8 %v2911
    %v2913 = vlaneseq
    %v2914 = vshrl.u32 %v2913, 7
    %v2915 = vsub.s32 %v2912, %v2914
    %v2916 = vrot.slane %v2902, %v2915
    %v2917 = vcombine.high %v2909, %v2909
    %vm2918 = vcmask 31744
    %v2920 = vsel %vm2918, %v355, 0
    %v2923 = vsel %vm2918, %v356, 0
    %v2926 = vsel %vm2918, %v357, 0
    %v2929 = vsel %vm2918, %v358, 0
    %v2932 = vsel %vm2918, %v359, 0
    %v2935 = vsel %vm2918, %v360, 0
    %v2938 = vsel %vm2918, %v361, 0
    %v2941 = vsel %vm2918, %v362, 0
    %v2944 = vsel %vm2918, %v363, 0
    %v2947 = vsel %vm2918, %v364, 0
    %v2950 = vsel %vm2918, %v365, 0
    %v2953 = vsel %vm2918, %v366, 0
    %v2956 = vsel %vm2918, %v367, 0
    %v2959 = vsel %vm2918, %v368, 0
    %v2962 = vsel %vm2918, %v369, 0
    %v2965 = vsel %vm2918, %v370, 0
    %v2968 = vsel %vm2918, %v371, 0
    %v2971 = vsel %vm2918, %v372, 0
    %v2974 = vsel %vm2918, %v373, 0
    %v2977 = vsel %vm2918, %v374, 0
    %v2980 = vsel %vm2918, %v375, 0
    %v2983 = vsel %vm2918, %v376, 0
    %v2986 = vsel %vm2918, %v377, 0
    %v2989 = vsel %vm2918, %v378, 0
    %v2992 = vsel %vm2918, %v379, 0
    %v2995 = vsel %vm2918, %v380, 0
    %v2998 = vsel %vm2918, %v381, 0
    %v3001 = vsel %vm2918, %v382, 0
    %v3004 = vsel %vm2918, %v383, 0
    %v3007 = vsel %vm2918, %v384, 0
    %v3010 = vsel %vm2918, %v385, 0
    %v3013 = vsel %vm2918, %v386, 0
    %v3016 = vsel %vm2918, %v387, 0
    %v3019 = vsel %vm2918, %v388, 0
    %v3022 = vsel %vm2918, %v389, 0
    %v3025 = vsel %vm2918, %v390, 0
    %v3028 = vsel %vm2918, %v391, 0
    %v3031 = vsel %vm2918, %v392, 0
    %v3034 = vsel %vm2918, %v393, 0
    %v3037 = vsel %vm2918, %v394, 0
    %v3040 = vsel %vm2918, %v395, 0
    %v3043 = vsel %vm2918, %v396, 0
    %v3046 = vsel %vm2918, %v397, 0
    %v3049 = vsel %vm2918, %v398, 0
    %v3052 = vsel %vm2918, %v399, 0
    %v3055 = vsel %vm2918, %v400, 0
    %v3058 = vsel %vm2918, %v401, 0
    %v3061 = vsel %vm2918, %v402, 0
    %v3064 = vsel %vm2918, %v403, 0
    %v3067 = vsel %vm2918, %v404, 0
    %v3070 = vsel %vm2918, %v405, 0
    %v3073 = vsel %vm2918, %v406, 0
    %v3076 = vsel %vm2918, %v407, 0
    %v3079 = vsel %vm2918, %v408, 0
    %v3082 = vsel %vm2918, %v409, 0
    %v3085 = vsel %vm2918, %v410, 0
    %v3088 = vsel %vm2918, %v411, 0
    %v3091 = vsel %vm2918, %v412, 0
    %v3094 = vsel %vm2918, %v413, 0
    %v3097 = vsel %vm2918, %v414, 0
    %v3100 = vsel %vm2918, %v415, 0
    %v3103 = vsel %vm2918, %v416, 0
    %v3106 = vsel %vm2918, %v417, 0
    %v3109 = vsel %vm2918, %v418, 0
    %vm3111 = vcmask 1041408
    %v3113 = vsel %vm3111, %v2909, 0
    %v3116 = vsel %vm3111, %v2917, 0
    %v3119 = vsel %vm3111, %v2916, 0
    %3121 = vmatprep.subr.bf16.mxu0 %v3116
    %3122 = vmatpush1.bf16.msra.mxu0 %v3113
    %3123 = vmatprep.subr.bf16.mxu0 0
    %3124 = vmatpush1.bf16.msra.mxu0 0
    %3125 = vmatprep.subr.bf16.mxu0 0
    %3126 = vmatpush1.bf16.msra.mxu0 0
    %3127 = vmatprep.subr.bf16.mxu0 0
    %3128 = vmatpush1.bf16.msra.mxu0 0
    %3129 = vmatprep.subr.bf16.mxu0 0
    %3130 = vmatpush1.bf16.msra.mxu0 0
    %3131 = vmatprep.subr.bf16.mxu0 0
    %3132 = vmatpush1.bf16.msra.mxu0 0
    %3133 = vmatprep.subr.bf16.mxu0 0
    %3134 = vmatpush1.bf16.msra.mxu0 0
    %3135 = vmatprep.subr.bf16.mxu0 0
    %3136 = vmatpush1.bf16.msra.mxu0 0
    %3137 = vmatprep.subr.bf16.mxu0 0
    %3138 = vmatpush1.bf16.msra.mxu0 0
    %3139 = vmatprep.subr.bf16.mxu0 0
    %3140 = vmatpush1.bf16.msra.mxu0 0
    %3141 = vmatprep.subr.bf16.mxu0 0
    %3142 = vmatpush1.bf16.msra.mxu0 0
    %3143 = vmatprep.subr.bf16.mxu0 0
    %3144 = vmatpush1.bf16.msra.mxu0 0
    %3145 = vmatprep.subr.bf16.mxu0 0
    %3146 = vmatpush1.bf16.msra.mxu0 0
    %3147 = vmatprep.subr.bf16.mxu0 0
    %3148 = vmatpush1.bf16.msra.mxu0 0
    %3149 = vmatprep.subr.bf16.mxu0 0
    %3150 = vmatpush1.bf16.msra.mxu0 0
    %3151 = vmatprep.subr.bf16.mxu0 0
    %3152 = vmatpush1.bf16.msra.mxu0 0
    %3153 = vmatprep.mubr.bf16.mxu0 0
    %3154 = vmatmul.mubr.bf16.gmra.mrb[0].mxu0 %v2920
    %v3155 = vpop.f32.mrb[0].mxu0
    %v3156 = vadd.f32 0.0, %v3155
    %v3157 = vpop.f32.mrb[0].mxu0
    %v3158 = vadd.f32 0.0, %v3157
    %v3159 = vpop.f32.mrb[0].mxu0
    %v3160 = vadd.f32 0.0, %v3159
    %v3161 = vpop.f32.mrb[0].mxu0
    %v3162 = vadd.f32 0.0, %v3161
    %3163 = vmatprep.mubr.bf16.mxu0 0
    %3164 = vmatmul.mubr.bf16.gmra.mrb[0].mxu0 %v2923
    %v3165 = vpop.f32.mrb[0].mxu0
    %v3166 = vadd.f32 0.0, %v3165
    %v3167 = vpop.f32.mrb[0].mxu0
    %v3168 = vadd.f32 0.0, %v3167
    %v3169 = vpop.f32.mrb[0].mxu0
    %v3170 = vadd.f32 0.0, %v3169
    %v3171 = vpop.f32.mrb[0].mxu0
    %v3172 = vadd.f32 0.0, %v3171
    %3173 = vmatprep.mubr.bf16.mxu0 0
    %3174 = vmatmul.mubr.bf16.gmra.mrb[0].mxu0 %v2926
    %v3175 = vpop.f32.mrb[0].mxu0
    %v3176 = vadd.f32 0.0, %v3175
    %v3177 = vpop.f32.mrb[0].mxu0
    %v3178 = vadd.f32 0.0, %v3177
    %v3179 = vpop.f32.mrb[0].mxu0
    %v3180 = vadd.f32 0.0, %v3179
    %v3181 = vpop.f32.mrb[0].mxu0
    %v3182 = vadd.f32 0.0, %v3181
    %3183 = vmatprep.mubr.bf16.mxu0 0
    %3184 = vmatmul.mubr.bf16.gmra.mrb[0].mxu0 %v2929
    %v3185 = vpop.f32.mrb[0].mxu0
    %v3186 = vadd.f32 0.0, %v3185
    %v3187 = vpop.f32.mrb[0].mxu0
    %v3188 = vadd.f32 0.0, %v3187
    %v3189 = vpop.f32.mrb[0].mxu0
    %v3190 = vadd.f32 0.0, %v3189
    %v3191 = vpop.f32.mrb[0].mxu0
    %v3192 = vadd.f32 0.0, %v3191
    %3193 = vmatprep.mubr.bf16.mxu0 0
    %3194 = vmatmul.mubr.bf16.gmra.mrb[0].mxu0 %v2932
    %v3195 = vpop.f32.mrb[0].mxu0
    %v3196 = vadd.f32 0.0, %v3195
    %v3197 = vpop.f32.mrb[0].mxu0
    %v3198 = vadd.f32 0.0, %v3197
    %v3199 = vpop.f32.mrb[0].mxu0
    %v3200 = vadd.f32 0.0, %v3199
    %v3201 = vpop.f32.mrb[0].mxu0
    %v3202 = vadd.f32 0.0, %v3201
    %3203 = vmatprep.mubr.bf16.mxu0 0
    %3204 = vmatmul.mubr.bf16.gmra.mrb[0].mxu0 %v2935
    %v3205 = vpop.f32.mrb[0].mxu0
    %v3206 = vadd.f32 0.0, %v3205
    %v3207 = vpop.f32.mrb[0].mxu0
    %v3208 = vadd.f32 0.0, %v3207
    %v3209 = vpop.f32.mrb[0].mxu0
    %v3210 = vadd.f32 0.0, %v3209
    %v3211 = vpop.f32.mrb[0].mxu0
    %v3212 = vadd.f32 0.0, %v3211
    %3213 = vmatprep.mubr.bf16.mxu0 0
    %3214 = vmatmul.mubr.bf16.gmra.mrb[0].mxu0 %v2938
    %v3215 = vpop.f32.mrb[0].mxu0
    %v3216 = vadd.f32 0.0, %v3215
    %v3217 = vpop.f32.mrb[0].mxu0
    %v3218 = vadd.f32 0.0, %v3217
    %v3219 = vpop.f32.mrb[0].mxu0
    %v3220 = vadd.f32 0.0, %v3219
    %v3221 = vpop.f32.mrb[0].mxu0
    %v3222 = vadd.f32 0.0, %v3221
    %3223 = vmatprep.mubr.bf16.mxu0 0
    %3224 = vmatmul.mubr.bf16.gmra.mrb[0].mxu0 %v2941
    %v3225 = vpop.f32.mrb[0].mxu0
    %v3226 = vadd.f32 0.0, %v3225
    %v3227 = vpop.f32.mrb[0].mxu0
    %v3228 = vadd.f32 0.0, %v3227
    %v3229 = vpop.f32.mrb[0].mxu0
    %v3230 = vadd.f32 0.0, %v3229
    %v3231 = vpop.f32.mrb[0].mxu0
    %v3232 = vadd.f32 0.0, %v3231
    %3233 = vmatprep.mubr.bf16.mxu0 0
    %3234 = vmatmul.mubr.bf16.gmra.mrb[0].mxu0 %v2944
    %v3235 = vpop.f32.mrb[0].mxu0
    %v3236 = vadd.f32 0.0, %v3235
    %v3237 = vpop.f32.mrb[0].mxu0
    %v3238 = vadd.f32 0.0, %v3237
    %v3239 = vpop.f32.mrb[0].mxu0
    %v3240 = vadd.f32 0.0, %v3239
    %v3241 = vpop.f32.mrb[0].mxu0
    %v3242 = vadd.f32 0.0, %v3241
    %3243 = vmatprep.mubr.bf16.mxu0 0
    %3244 = vmatmul.mubr.bf16.gmra.mrb[0].mxu0 %v2947
    %v3245 = vpop.f32.mrb[0].mxu0
    %v3246 = vadd.f32 0.0, %v3245
    %v3247 = vpop.f32.mrb[0].mxu0
    %v3248 = vadd.f32 0.0, %v3247
    %v3249 = vpop.f32.mrb[0].mxu0
    %v3250 = vadd.f32 0.0, %v3249
    %v3251 = vpop.f32.mrb[0].mxu0
    %v3252 = vadd.f32 0.0, %v3251
    %3253 = vmatprep.mubr.bf16.mxu0 0
    %3254 = vmatmul.mubr.bf16.gmra.mrb[0].mxu0 %v2950
    %v3255 = vpop.f32.mrb[0].mxu0
    %v3256 = vadd.f32 0.0, %v3255
    %v3257 = vpop.f32.mrb[0].mxu0
    %v3258 = vadd.f32 0.0, %v3257
    %v3259 = vpop.f32.mrb[0].mxu0
    %v3260 = vadd.f32 0.0, %v3259
    %v3261 = vpop.f32.mrb[0].mxu0
    %v3262 = vadd.f32 0.0, %v3261
    %3263 = vmatprep.mubr.bf16.mxu0 0
    %3264 = vmatmul.mubr.bf16.gmra.mrb[0].mxu0 %v2953
    %v3265 = vpop.f32.mrb[0].mxu0
    %v3266 = vadd.f32 0.0, %v3265
    %v3267 = vpop.f32.mrb[0].mxu0
    %v3268 = vadd.f32 0.0, %v3267
    %v3269 = vpop.f32.mrb[0].mxu0
    %v3270 = vadd.f32 0.0, %v3269
    %v3271 = vpop.f32.mrb[0].mxu0
    %v3272 = vadd.f32 0.0, %v3271
    %3273 = vmatprep.mubr.bf16.mxu0 0
    %3274 = vmatmul.mubr.bf16.gmra.mrb[0].mxu0 %v2956
    %v3275 = vpop.f32.mrb[0].mxu0
    %v3276 = vadd.f32 0.0, %v3275
    %v3277 = vpop.f32.mrb[0].mxu0
    %v3278 = vadd.f32 0.0, %v3277
    %v3279 = vpop.f32.mrb[0].mxu0
    %v3280 = vadd.f32 0.0, %v3279
    %v3281 = vpop.f32.mrb[0].mxu0
    %v3282 = vadd.f32 0.0, %v3281
    %3283 = vmatprep.mubr.bf16.mxu0 0
    %3284 = vmatmul.mubr.bf16.gmra.mrb[0].mxu0 %v2959
    %v3285 = vpop.f32.mrb[0].mxu0
    %v3286 = vadd.f32 0.0, %v3285
    %v3287 = vpop.f32.mrb[0].mxu0
    %v3288 = vadd.f32 0.0, %v3287
    %v3289 = vpop.f32.mrb[0].mxu0
    %v3290 = vadd.f32 0.0, %v3289
    %v3291 = vpop.f32.mrb[0].mxu0
    %v3292 = vadd.f32 0.0, %v3291
    %3293 = vmatprep.mubr.bf16.mxu0 0
    %3294 = vmatmul.mubr.bf16.gmra.mrb[0].mxu0 %v2962
    %v3295 = vpop.f32.mrb[0].mxu0
    %v3296 = vadd.f32 0.0, %v3295
    %v3297 = vpop.f32.mrb[0].mxu0
    %v3298 = vadd.f32 0.0, %v3297
    %v3299 = vpop.f32.mrb[0].mxu0
    %v3300 = vadd.f32 0.0, %v3299
    %v3301 = vpop.f32.mrb[0].mxu0
    %v3302 = vadd.f32 0.0, %v3301
    %3303 = vmatprep.mubr.bf16.mxu0 0
    %3304 = vmatmul.mubr.bf16.gmra.mrb[0].mxu0 %v2965
    %v3305 = vpop.f32.mrb[0].mxu0
    %v3306 = vadd.f32 0.0, %v3305
    %v3307 = vpop.f32.mrb[0].mxu0
    %v3308 = vadd.f32 0.0, %v3307
    %v3309 = vpop.f32.mrb[0].mxu0
    %v3310 = vadd.f32 0.0, %v3309
    %v3311 = vpop.f32.mrb[0].mxu0
    %v3312 = vadd.f32 0.0, %v3311
    %3313 = vmatprep.mubr.bf16.mxu0 0
    %3314 = vmatmul.mubr.bf16.gmra.mrb[0].mxu0 %v2968
    %v3315 = vpop.f32.mrb[0].mxu0
    %v3316 = vadd.f32 0.0, %v3315
    %v3317 = vpop.f32.mrb[0].mxu0
    %v3318 = vadd.f32 0.0, %v3317
    %v3319 = vpop.f32.mrb[0].mxu0
    %v3320 = vadd.f32 0.0, %v3319
    %v3321 = vpop.f32.mrb[0].mxu0
    %v3322 = vadd.f32 0.0, %v3321
    %3323 = vmatprep.mubr.bf16.mxu0 0
    %3324 = vmatmul.mubr.bf16.gmra.mrb[0].mxu0 %v2971
    %v3325 = vpop.f32.mrb[0].mxu0
    %v3326 = vadd.f32 0.0, %v3325
    %v3327 = vpop.f32.mrb[0].mxu0
    %v3328 = vadd.f32 0.0, %v3327
    %v3329 = vpop.f32.mrb[0].mxu0
    %v3330 = vadd.f32 0.0, %v3329
    %v3331 = vpop.f32.mrb[0].mxu0
    %v3332 = vadd.f32 0.0, %v3331
    %3333 = vmatprep.mubr.bf16.mxu0 0
    %3334 = vmatmul.mubr.bf16.gmra.mrb[0].mxu0 %v2974
    %v3335 = vpop.f32.mrb[0].mxu0
    %v3336 = vadd.f32 0.0, %v3335
    %v3337 = vpop.f32.mrb[0].mxu0
    %v3338 = vadd.f32 0.0, %v3337
    %v3339 = vpop.f32.mrb[0].mxu0
    %v3340 = vadd.f32 0.0, %v3339
    %v3341 = vpop.f32.mrb[0].mxu0
    %v3342 = vadd.f32 0.0, %v3341
    %3343 = vmatprep.mubr.bf16.mxu0 0
    %3344 = vmatmul.mubr.bf16.gmra.mrb[0].mxu0 %v2977
    %v3345 = vpop.f32.mrb[0].mxu0
    %v3346 = vadd.f32 0.0, %v3345
    %v3347 = vpop.f32.mrb[0].mxu0
    %v3348 = vadd.f32 0.0, %v3347
    %v3349 = vpop.f32.mrb[0].mxu0
    %v3350 = vadd.f32 0.0, %v3349
    %v3351 = vpop.f32.mrb[0].mxu0
    %v3352 = vadd.f32 0.0, %v3351
    %3353 = vmatprep.mubr.bf16.mxu0 0
    %3354 = vmatmul.mubr.bf16.gmra.mrb[0].mxu0 %v2980
    %v3355 = vpop.f32.mrb[0].mxu0
    %v3356 = vadd.f32 0.0, %v3355
    %v3357 = vpop.f32.mrb[0].mxu0
    %v3358 = vadd.f32 0.0, %v3357
    %v3359 = vpop.f32.mrb[0].mxu0
    %v3360 = vadd.f32 0.0, %v3359
    %v3361 = vpop.f32.mrb[0].mxu0
    %v3362 = vadd.f32 0.0, %v3361
    %3363 = vmatprep.mubr.bf16.mxu0 0
    %3364 = vmatmul.mubr.bf16.gmra.mrb[0].mxu0 %v2983
    %v3365 = vpop.f32.mrb[0].mxu0
    %v3366 = vadd.f32 0.0, %v3365
    %v3367 = vpop.f32.mrb[0].mxu0
    %v3368 = vadd.f32 0.0, %v3367
    %v3369 = vpop.f32.mrb[0].mxu0
    %v3370 = vadd.f32 0.0, %v3369
    %v3371 = vpop.f32.mrb[0].mxu0
    %v3372 = vadd.f32 0.0, %v3371
    %3373 = vmatprep.mubr.bf16.mxu0 0
    %3374 = vmatmul.mubr.bf16.gmra.mrb[0].mxu0 %v2986
    %v3375 = vpop.f32.mrb[0].mxu0
    %v3376 = vadd.f32 0.0, %v3375
    %v3377 = vpop.f32.mrb[0].mxu0
    %v3378 = vadd.f32 0.0, %v3377
    %v3379 = vpop.f32.mrb[0].mxu0
    %v3380 = vadd.f32 0.0, %v3379
    %v3381 = vpop.f32.mrb[0].mxu0
    %v3382 = vadd.f32 0.0, %v3381
    %3383 = vmatprep.mubr.bf16.mxu0 0
    %3384 = vmatmul.mubr.bf16.gmra.mrb[0].mxu0 %v2989
    %v3385 = vpop.f32.mrb[0].mxu0
    %v3386 = vadd.f32 0.0, %v3385
    %v3387 = vpop.f32.mrb[0].mxu0
    %v3388 = vadd.f32 0.0, %v3387
    %v3389 = vpop.f32.mrb[0].mxu0
    %v3390 = vadd.f32 0.0, %v3389
    %v3391 = vpop.f32.mrb[0].mxu0
    %v3392 = vadd.f32 0.0, %v3391
    %3393 = vmatprep.mubr.bf16.mxu0 0
    %3394 = vmatmul.mubr.bf16.gmra.mrb[0].mxu0 %v2992
    %v3395 = vpop.f32.mrb[0].mxu0
    %v3396 = vadd.f32 0.0, %v3395
    %v3397 = vpop.f32.mrb[0].mxu0
    %v3398 = vadd.f32 0.0, %v3397
    %v3399 = vpop.f32.mrb[0].mxu0
    %v3400 = vadd.f32 0.0, %v3399
    %v3401 = vpop.f32.mrb[0].mxu0
    %v3402 = vadd.f32 0.0, %v3401
    %3403 = vmatprep.mubr.bf16.mxu0 0
    %3404 = vmatmul.mubr.bf16.gmra.mrb[0].mxu0 %v2995
    %v3405 = vpop.f32.mrb[0].mxu0
    %v3406 = vadd.f32 0.0, %v3405
    %v3407 = vpop.f32.mrb[0].mxu0
    %v3408 = vadd.f32 0.0, %v3407
    %v3409 = vpop.f32.mrb[0].mxu0
    %v3410 = vadd.f32 0.0, %v3409
    %v3411 = vpop.f32.mrb[0].mxu0
    %v3412 = vadd.f32 0.0, %v3411
    %3413 = vmatprep.mubr.bf16.mxu0 0
    %3414 = vmatmul.mubr.bf16.gmra.mrb[0].mxu0 %v2998
    %v3415 = vpop.f32.mrb[0].mxu0
    %v3416 = vadd.f32 0.0, %v3415
    %v3417 = vpop.f32.mrb[0].mxu0
    %v3418 = vadd.f32 0.0, %v3417
    %v3419 = vpop.f32.mrb[0].mxu0
    %v3420 = vadd.f32 0.0, %v3419
    %v3421 = vpop.f32.mrb[0].mxu0
    %v3422 = vadd.f32 0.0, %v3421
    %3423 = vmatprep.mubr.bf16.mxu0 0
    %3424 = vmatmul.mubr.bf16.gmra.mrb[0].mxu0 %v3001
    %v3425 = vpop.f32.mrb[0].mxu0
    %v3426 = vadd.f32 0.0, %v3425
    %v3427 = vpop.f32.mrb[0].mxu0
    %v3428 = vadd.f32 0.0, %v3427
    %v3429 = vpop.f32.mrb[0].mxu0
    %v3430 = vadd.f32 0.0, %v3429
    %v3431 = vpop.f32.mrb[0].mxu0
    %v3432 = vadd.f32 0.0, %v3431
    %3433 = vmatprep.mubr.bf16.mxu0 0
    %3434 = vmatmul.mubr.bf16.gmra.mrb[0].mxu0 %v3004
    %v3435 = vpop.f32.mrb[0].mxu0
    %v3436 = vadd.f32 0.0, %v3435
    %v3437 = vpop.f32.mrb[0].mxu0
    %v3438 = vadd.f32 0.0, %v3437
    %v3439 = vpop.f32.mrb[0].mxu0
    %v3440 = vadd.f32 0.0, %v3439
    %v3441 = vpop.f32.mrb[0].mxu0
    %v3442 = vadd.f32 0.0, %v3441
    %3443 = vmatprep.mubr.bf16.mxu0 0
    %3444 = vmatmul.mubr.bf16.gmra.mrb[0].mxu0 %v3007
    %v3445 = vpop.f32.mrb[0].mxu0
    %v3446 = vadd.f32 0.0, %v3445
    %v3447 = vpop.f32.mrb[0].mxu0
    %v3448 = vadd.f32 0.0, %v3447
    %v3449 = vpop.f32.mrb[0].mxu0
    %v3450 = vadd.f32 0.0, %v3449
    %v3451 = vpop.f32.mrb[0].mxu0
    %v3452 = vadd.f32 0.0, %v3451
    %3453 = vmatprep.mubr.bf16.mxu0 0
    %3454 = vmatmul.mubr.bf16.gmra.mrb[0].mxu0 %v3010
    %v3455 = vpop.f32.mrb[0].mxu0
    %v3456 = vadd.f32 0.0, %v3455
    %v3457 = vpop.f32.mrb[0].mxu0
    %v3458 = vadd.f32 0.0, %v3457
    %v3459 = vpop.f32.mrb[0].mxu0
    %v3460 = vadd.f32 0.0, %v3459
    %v3461 = vpop.f32.mrb[0].mxu0
    %v3462 = vadd.f32 0.0, %v3461
    %3463 = vmatprep.mubr.bf16.mxu0 0
    %3464 = vmatmul.mubr.bf16.gmra.mrb[0].mxu0 %v3013
    %v3465 = vpop.f32.mrb[0].mxu0
    %v3466 = vadd.f32 0.0, %v3465
    %v3467 = vpop.f32.mrb[0].mxu0
    %v3468 = vadd.f32 0.0, %v3467
    %v3469 = vpop.f32.mrb[0].mxu0
    %v3470 = vadd.f32 0.0, %v3469
    %v3471 = vpop.f32.mrb[0].mxu0
    %v3472 = vadd.f32 0.0, %v3471
    %3473 = vmatprep.mubr.bf16.mxu0 0
    %3474 = vmatmul.mubr.bf16.gmra.mrb[0].mxu0 %v3016
    %v3475 = vpop.f32.mrb[0].mxu0
    %v3476 = vadd.f32 0.0, %v3475
    %v3477 = vpop.f32.mrb[0].mxu0
    %v3478 = vadd.f32 0.0, %v3477
    %v3479 = vpop.f32.mrb[0].mxu0
    %v3480 = vadd.f32 0.0, %v3479
    %v3481 = vpop.f32.mrb[0].mxu0
    %v3482 = vadd.f32 0.0, %v3481
    %3483 = vmatprep.mubr.bf16.mxu0 0
    %3484 = vmatmul.mubr.bf16.gmra.mrb[0].mxu0 %v3019
    %v3485 = vpop.f32.mrb[0].mxu0
    %v3486 = vadd.f32 0.0, %v3485
    %v3487 = vpop.f32.mrb[0].mxu0
    %v3488 = vadd.f32 0.0, %v3487
    %v3489 = vpop.f32.mrb[0].mxu0
    %v3490 = vadd.f32 0.0, %v3489
    %v3491 = vpop.f32.mrb[0].mxu0
    %v3492 = vadd.f32 0.0, %v3491
    %3493 = vmatprep.mubr.bf16.mxu0 0
    %3494 = vmatmul.mubr.bf16.gmra.mrb[0].mxu0 %v3022
    %v3495 = vpop.f32.mrb[0].mxu0
    %v3496 = vadd.f32 0.0, %v3495
    %v3497 = vpop.f32.mrb[0].mxu0
    %v3498 = vadd.f32 0.0, %v3497
    %v3499 = vpop.f32.mrb[0].mxu0
    %v3500 = vadd.f32 0.0, %v3499
    %v3501 = vpop.f32.mrb[0].mxu0
    %v3502 = vadd.f32 0.0, %v3501
    %3503 = vmatprep.mubr.bf16.mxu0 0
    %3504 = vmatmul.mubr.bf16.gmra.mrb[0].mxu0 %v3025
    %v3505 = vpop.f32.mrb[0].mxu0
    %v3506 = vadd.f32 0.0, %v3505
    %v3507 = vpop.f32.mrb[0].mxu0
    %v3508 = vadd.f32 0.0, %v3507
    %v3509 = vpop.f32.mrb[0].mxu0
    %v3510 = vadd.f32 0.0, %v3509
    %v3511 = vpop.f32.mrb[0].mxu0
    %v3512 = vadd.f32 0.0, %v3511
    %3513 = vmatprep.mubr.bf16.mxu0 0
    %3514 = vmatmul.mubr.bf16.gmra.mrb[0].mxu0 %v3028
    %v3515 = vpop.f32.mrb[0].mxu0
    %v3516 = vadd.f32 0.0, %v3515
    %v3517 = vpop.f32.mrb[0].mxu0
    %v3518 = vadd.f32 0.0, %v3517
    %v3519 = vpop.f32.mrb[0].mxu0
    %v3520 = vadd.f32 0.0, %v3519
    %v3521 = vpop.f32.mrb[0].mxu0
    %v3522 = vadd.f32 0.0, %v3521
    %3523 = vmatprep.mubr.bf16.mxu0 0
    %3524 = vmatmul.mubr.bf16.gmra.mrb[0].mxu0 %v3031
    %v3525 = vpop.f32.mrb[0].mxu0
    %v3526 = vadd.f32 0.0, %v3525
    %v3527 = vpop.f32.mrb[0].mxu0
    %v3528 = vadd.f32 0.0, %v3527
    %v3529 = vpop.f32.mrb[0].mxu0
    %v3530 = vadd.f32 0.0, %v3529
    %v3531 = vpop.f32.mrb[0].mxu0
    %v3532 = vadd.f32 0.0, %v3531
    %3533 = vmatprep.mubr.bf16.mxu0 0
    %3534 = vmatmul.mubr.bf16.gmra.mrb[0].mxu0 %v3034
    %v3535 = vpop.f32.mrb[0].mxu0
    %v3536 = vadd.f32 0.0, %v3535
    %v3537 = vpop.f32.mrb[0].mxu0
    %v3538 = vadd.f32 0.0, %v3537
    %v3539 = vpop.f32.mrb[0].mxu0
    %v3540 = vadd.f32 0.0, %v3539
    %v3541 = vpop.f32.mrb[0].mxu0
    %v3542 = vadd.f32 0.0, %v3541
    %3543 = vmatprep.mubr.bf16.mxu0 0
    %3544 = vmatmul.mubr.bf16.gmra.mrb[0].mxu0 %v3037
    %v3545 = vpop.f32.mrb[0].mxu0
    %v3546 = vadd.f32 0.0, %v3545
    %v3547 = vpop.f32.mrb[0].mxu0
    %v3548 = vadd.f32 0.0, %v3547
    %v3549 = vpop.f32.mrb[0].mxu0
    %v3550 = vadd.f32 0.0, %v3549
    %v3551 = vpop.f32.mrb[0].mxu0
    %v3552 = vadd.f32 0.0, %v3551
    %3553 = vmatprep.mubr.bf16.mxu0 0
    %3554 = vmatmul.mubr.bf16.gmra.mrb[0].mxu0 %v3040
    %v3555 = vpop.f32.mrb[0].mxu0
    %v3556 = vadd.f32 0.0, %v3555
    %v3557 = vpop.f32.mrb[0].mxu0
    %v3558 = vadd.f32 0.0, %v3557
    %v3559 = vpop.f32.mrb[0].mxu0
    %v3560 = vadd.f32 0.0, %v3559
    %v3561 = vpop.f32.mrb[0].mxu0
    %v3562 = vadd.f32 0.0, %v3561
    %3563 = vmatprep.mubr.bf16.mxu0 0
    %3564 = vmatmul.mubr.bf16.gmra.mrb[0].mxu0 %v3043
    %v3565 = vpop.f32.mrb[0].mxu0
    %v3566 = vadd.f32 0.0, %v3565
    %v3567 = vpop.f32.mrb[0].mxu0
    %v3568 = vadd.f32 0.0, %v3567
    %v3569 = vpop.f32.mrb[0].mxu0
    %v3570 = vadd.f32 0.0, %v3569
    %v3571 = vpop.f32.mrb[0].mxu0
    %v3572 = vadd.f32 0.0, %v3571
    %3573 = vmatprep.mubr.bf16.mxu0 0
    %3574 = vmatmul.mubr.bf16.gmra.mrb[0].mxu0 %v3046
    %v3575 = vpop.f32.mrb[0].mxu0
    %v3576 = vadd.f32 0.0, %v3575
    %v3577 = vpop.f32.mrb[0].mxu0
    %v3578 = vadd.f32 0.0, %v3577
    %v3579 = vpop.f32.mrb[0].mxu0
    %v3580 = vadd.f32 0.0, %v3579
    %v3581 = vpop.f32.mrb[0].mxu0
    %v3582 = vadd.f32 0.0, %v3581
    %3583 = vmatprep.mubr.bf16.mxu0 0
    %3584 = vmatmul.mubr.bf16.gmra.mrb[0].mxu0 %v3049
    %v3585 = vpop.f32.mrb[0].mxu0
    %v3586 = vadd.f32 0.0, %v3585
    %v3587 = vpop.f32.mrb[0].mxu0
    %v3588 = vadd.f32 0.0, %v3587
    %v3589 = vpop.f32.mrb[0].mxu0
    %v3590 = vadd.f32 0.0, %v3589
    %v3591 = vpop.f32.mrb[0].mxu0
    %v3592 = vadd.f32 0.0, %v3591
    %3593 = vmatprep.mubr.bf16.mxu0 0
    %3594 = vmatmul.mubr.bf16.gmra.mrb[0].mxu0 %v3052
    %v3595 = vpop.f32.mrb[0].mxu0
    %v3596 = vadd.f32 0.0, %v3595
    %v3597 = vpop.f32.mrb[0].mxu0
    %v3598 = vadd.f32 0.0, %v3597
    %v3599 = vpop.f32.mrb[0].mxu0
    %v3600 = vadd.f32 0.0, %v3599
    %v3601 = vpop.f32.mrb[0].mxu0
    %v3602 = vadd.f32 0.0, %v3601
    %3603 = vmatprep.mubr.bf16.mxu0 0
    %3604 = vmatmul.mubr.bf16.gmra.mrb[0].mxu0 %v3055
    %v3605 = vpop.f32.mrb[0].mxu0
    %v3606 = vadd.f32 0.0, %v3605
    %v3607 = vpop.f32.mrb[0].mxu0
    %v3608 = vadd.f32 0.0, %v3607
    %v3609 = vpop.f32.mrb[0].mxu0
    %v3610 = vadd.f32 0.0, %v3609
    %v3611 = vpop.f32.mrb[0].mxu0
    %v3612 = vadd.f32 0.0, %v3611
    %3613 = vmatprep.mubr.bf16.mxu0 0
    %3614 = vmatmul.mubr.bf16.gmra.mrb[0].mxu0 %v3058
    %v3615 = vpop.f32.mrb[0].mxu0
    %v3616 = vadd.f32 0.0, %v3615
    %v3617 = vpop.f32.mrb[0].mxu0
    %v3618 = vadd.f32 0.0, %v3617
    %v3619 = vpop.f32.mrb[0].mxu0
    %v3620 = vadd.f32 0.0, %v3619
    %v3621 = vpop.f32.mrb[0].mxu0
    %v3622 = vadd.f32 0.0, %v3621
    %3623 = vmatprep.mubr.bf16.mxu0 0
    %3624 = vmatmul.mubr.bf16.gmra.mrb[0].mxu0 %v3061
    %v3625 = vpop.f32.mrb[0].mxu0
    %v3626 = vadd.f32 0.0, %v3625
    %v3627 = vpop.f32.mrb[0].mxu0
    %v3628 = vadd.f32 0.0, %v3627
    %v3629 = vpop.f32.mrb[0].mxu0
    %v3630 = vadd.f32 0.0, %v3629
    %v3631 = vpop.f32.mrb[0].mxu0
    %v3632 = vadd.f32 0.0, %v3631
    %3633 = vmatprep.mubr.bf16.mxu0 0
    %3634 = vmatmul.mubr.bf16.gmra.mrb[0].mxu0 %v3064
    %v3635 = vpop.f32.mrb[0].mxu0
    %v3636 = vadd.f32 0.0, %v3635
    %v3637 = vpop.f32.mrb[0].mxu0
    %v3638 = vadd.f32 0.0, %v3637
    %v3639 = vpop.f32.mrb[0].mxu0
    %v3640 = vadd.f32 0.0, %v3639
    %v3641 = vpop.f32.mrb[0].mxu0
    %v3642 = vadd.f32 0.0, %v3641
    %3643 = vmatprep.mubr.bf16.mxu0 0
    %3644 = vmatmul.mubr.bf16.gmra.mrb[0].mxu0 %v3067
    %v3645 = vpop.f32.mrb[0].mxu0
    %v3646 = vadd.f32 0.0, %v3645
    %v3647 = vpop.f32.mrb[0].mxu0
    %v3648 = vadd.f32 0.0, %v3647
    %v3649 = vpop.f32.mrb[0].mxu0
    %v3650 = vadd.f32 0.0, %v3649
    %v3651 = vpop.f32.mrb[0].mxu0
    %v3652 = vadd.f32 0.0, %v3651
    %3653 = vmatprep.mubr.bf16.mxu0 0
    %3654 = vmatmul.mubr.bf16.gmra.mrb[0].mxu0 %v3070
    %v3655 = vpop.f32.mrb[0].mxu0
    %v3656 = vadd.f32 0.0, %v3655
    %v3657 = vpop.f32.mrb[0].mxu0
    %v3658 = vadd.f32 0.0, %v3657
    %v3659 = vpop.f32.mrb[0].mxu0
    %v3660 = vadd.f32 0.0, %v3659
    %v3661 = vpop.f32.mrb[0].mxu0
    %v3662 = vadd.f32 0.0, %v3661
    %3663 = vmatprep.mubr.bf16.mxu0 0
    %3664 = vmatmul.mubr.bf16.gmra.mrb[0].mxu0 %v3073
    %v3665 = vpop.f32.mrb[0].mxu0
    %v3666 = vadd.f32 0.0, %v3665
    %v3667 = vpop.f32.mrb[0].mxu0
    %v3668 = vadd.f32 0.0, %v3667
    %v3669 = vpop.f32.mrb[0].mxu0
    %v3670 = vadd.f32 0.0, %v3669
    %v3671 = vpop.f32.mrb[0].mxu0
    %v3672 = vadd.f32 0.0, %v3671
    %3673 = vmatprep.mubr.bf16.mxu0 0
    %3674 = vmatmul.mubr.bf16.gmra.mrb[0].mxu0 %v3076
    %v3675 = vpop.f32.mrb[0].mxu0
    %v3676 = vadd.f32 0.0, %v3675
    %v3677 = vpop.f32.mrb[0].mxu0
    %v3678 = vadd.f32 0.0, %v3677
    %v3679 = vpop.f32.mrb[0].mxu0
    %v3680 = vadd.f32 0.0, %v3679
    %v3681 = vpop.f32.mrb[0].mxu0
    %v3682 = vadd.f32 0.0, %v3681
    %3683 = vmatprep.mubr.bf16.mxu0 0
    %3684 = vmatmul.mubr.bf16.gmra.mrb[0].mxu0 %v3079
    %v3685 = vpop.f32.mrb[0].mxu0
    %v3686 = vadd.f32 0.0, %v3685
    %v3687 = vpop.f32.mrb[0].mxu0
    %v3688 = vadd.f32 0.0, %v3687
    %v3689 = vpop.f32.mrb[0].mxu0
    %v3690 = vadd.f32 0.0, %v3689
    %v3691 = vpop.f32.mrb[0].mxu0
    %v3692 = vadd.f32 0.0, %v3691
    %3693 = vmatprep.mubr.bf16.mxu0 0
    %3694 = vmatmul.mubr.bf16.gmra.mrb[0].mxu0 %v3082
    %v3695 = vpop.f32.mrb[0].mxu0
    %v3696 = vadd.f32 0.0, %v3695
    %v3697 = vpop.f32.mrb[0].mxu0
    %v3698 = vadd.f32 0.0, %v3697
    %v3699 = vpop.f32.mrb[0].mxu0
    %v3700 = vadd.f32 0.0, %v3699
    %v3701 = vpop.f32.mrb[0].mxu0
    %v3702 = vadd.f32 0.0, %v3701
    %3703 = vmatprep.mubr.bf16.mxu0 0
    %3704 = vmatmul.mubr.bf16.gmra.mrb[0].mxu0 %v3085
    %v3705 = vpop.f32.mrb[0].mxu0
    %v3706 = vadd.f32 0.0, %v3705
    %v3707 = vpop.f32.mrb[0].mxu0
    %v3708 = vadd.f32 0.0, %v3707
    %v3709 = vpop.f32.mrb[0].mxu0
    %v3710 = vadd.f32 0.0, %v3709
    %v3711 = vpop.f32.mrb[0].mxu0
    %v3712 = vadd.f32 0.0, %v3711
    %3713 = vmatprep.mubr.bf16.mxu0 0
    %3714 = vmatmul.mubr.bf16.gmra.mrb[0].mxu0 %v3088
    %v3715 = vpop.f32.mrb[0].mxu0
    %v3716 = vadd.f32 0.0, %v3715
    %v3717 = vpop.f32.mrb[0].mxu0
    %v3718 = vadd.f32 0.0, %v3717
    %v3719 = vpop.f32.mrb[0].mxu0
    %v3720 = vadd.f32 0.0, %v3719
    %v3721 = vpop.f32.mrb[0].mxu0
    %v3722 = vadd.f32 0.0, %v3721
    %3723 = vmatprep.mubr.bf16.mxu0 0
    %3724 = vmatmul.mubr.bf16.gmra.mrb[0].mxu0 %v3091
    %v3725 = vpop.f32.mrb[0].mxu0
    %v3726 = vadd.f32 0.0, %v3725
    %v3727 = vpop.f32.mrb[0].mxu0
    %v3728 = vadd.f32 0.0, %v3727
    %v3729 = vpop.f32.mrb[0].mxu0
    %v3730 = vadd.f32 0.0, %v3729
    %v3731 = vpop.f32.mrb[0].mxu0
    %v3732 = vadd.f32 0.0, %v3731
    %3733 = vmatprep.mubr.bf16.mxu0 0
    %3734 = vmatmul.mubr.bf16.gmra.mrb[0].mxu0 %v3094
    %v3735 = vpop.f32.mrb[0].mxu0
    %v3736 = vadd.f32 0.0, %v3735
    %v3737 = vpop.f32.mrb[0].mxu0
    %v3738 = vadd.f32 0.0, %v3737
    %v3739 = vpop.f32.mrb[0].mxu0
    %v3740 = vadd.f32 0.0, %v3739
    %v3741 = vpop.f32.mrb[0].mxu0
    %v3742 = vadd.f32 0.0, %v3741
    %3743 = vmatprep.mubr.bf16.mxu0 0
    %3744 = vmatmul.mubr.bf16.gmra.mrb[0].mxu0 %v3097
    %v3745 = vpop.f32.mrb[0].mxu0
    %v3746 = vadd.f32 0.0, %v3745
    %v3747 = vpop.f32.mrb[0].mxu0
    %v3748 = vadd.f32 0.0, %v3747
    %v3749 = vpop.f32.mrb[0].mxu0
    %v3750 = vadd.f32 0.0, %v3749
    %v3751 = vpop.f32.mrb[0].mxu0
    %v3752 = vadd.f32 0.0, %v3751
    %3753 = vmatprep.mubr.bf16.mxu0 0
    %3754 = vmatmul.mubr.bf16.gmra.mrb[0].mxu0 %v3100
    %v3755 = vpop.f32.mrb[0].mxu0
    %v3756 = vadd.f32 0.0, %v3755
    %v3757 = vpop.f32.mrb[0].mxu0
    %v3758 = vadd.f32 0.0, %v3757
    %v3759 = vpop.f32.mrb[0].mxu0
    %v3760 = vadd.f32 0.0, %v3759
    %v3761 = vpop.f32.mrb[0].mxu0
    %v3762 = vadd.f32 0.0, %v3761
    %3763 = vmatprep.mubr.bf16.mxu0 0
    %3764 = vmatmul.mubr.bf16.gmra.mrb[0].mxu0 %v3103
    %v3765 = vpop.f32.mrb[0].mxu0
    %v3766 = vadd.f32 0.0, %v3765
    %v3767 = vpop.f32.mrb[0].mxu0
    %v3768 = vadd.f32 0.0, %v3767
    %v3769 = vpop.f32.mrb[0].mxu0
    %v3770 = vadd.f32 0.0, %v3769
    %v3771 = vpop.f32.mrb[0].mxu0
    %v3772 = vadd.f32 0.0, %v3771
    %3773 = vmatprep.mubr.bf16.mxu0 0
    %3774 = vmatmul.mubr.bf16.gmra.mrb[0].mxu0 %v3106
    %v3775 = vpop.f32.mrb[0].mxu0
    %v3776 = vadd.f32 0.0, %v3775
    %v3777 = vpop.f32.mrb[0].mxu0
    %v3778 = vadd.f32 0.0, %v3777
    %v3779 = vpop.f32.mrb[0].mxu0
    %v3780 = vadd.f32 0.0, %v3779
    %v3781 = vpop.f32.mrb[0].mxu0
    %v3782 = vadd.f32 0.0, %v3781
    %3783 = vmatprep.mubr.bf16.mxu0 0
    %3784 = vmatmul.mubr.bf16.gmra.mrb[0].mxu0 %v3109
    %v3785 = vpop.f32.mrb[0].mxu0
    %v3786 = vadd.f32 0.0, %v3785
    %v3787 = vpop.f32.mrb[0].mxu0
    %v3788 = vadd.f32 0.0, %v3787
    %v3789 = vpop.f32.mrb[0].mxu0
    %v3790 = vadd.f32 0.0, %v3789
    %v3791 = vpop.f32.mrb[0].mxu0
    %v3792 = vadd.f32 0.0, %v3791
    %3793 = vdwg.mxu0
    %3794 = vmatprep.subr.bf16.mxu0 0
    %3795 = vmatpush1.bf16.msra.mxu0 %v3119
    %3796 = vmatprep.subr.bf16.mxu0 0
    %3797 = vmatpush1.bf16.msra.mxu0 0
    %3798 = vmatprep.subr.bf16.mxu0 0
    %3799 = vmatpush1.bf16.msra.mxu0 0
    %3800 = vmatprep.subr.bf16.mxu0 0
    %3801 = vmatpush1.bf16.msra.mxu0 0
    %3802 = vmatprep.subr.bf16.mxu0 0
    %3803 = vmatpush1.bf16.msra.mxu0 0
    %3804 = vmatprep.subr.bf16.mxu0 0
    %3805 = vmatpush1.bf16.msra.mxu0 0
    %3806 = vmatprep.subr.bf16.mxu0 0
    %3807 = vmatpush1.bf16.msra.mxu0 0
    %3808 = vmatprep.subr.bf16.mxu0 0
    %3809 = vmatpush1.bf16.msra.mxu0 0
    %3810 = vmatprep.subr.bf16.mxu0 0
    %3811 = vmatpush1.bf16.msra.mxu0 0
    %3812 = vmatprep.subr.bf16.mxu0 0
    %3813 = vmatpush1.bf16.msra.mxu0 0
    %3814 = vmatprep.subr.bf16.mxu0 0
    %3815 = vmatpush1.bf16.msra.mxu0 0
    %3816 = vmatprep.subr.bf16.mxu0 0
    %3817 = vmatpush1.bf16.msra.mxu0 0
    %3818 = vmatprep.subr.bf16.mxu0 0
    %3819 = vmatpush1.bf16.msra.mxu0 0
    %3820 = vmatprep.subr.bf16.mxu0 0
    %3821 = vmatpush1.bf16.msra.mxu0 0
    %3822 = vmatprep.subr.bf16.mxu0 0
    %3823 = vmatpush1.bf16.msra.mxu0 0
    %3824 = vmatprep.subr.bf16.mxu0 0
    %3825 = vmatpush1.bf16.msra.mxu0 0
    %3826 = vmatprep.mubr.bf16.mxu0 0
    %3827 = vmatmul.mubr.bf16.gmra.mrb[0].mxu0 %v2920
    %v3828 = vpop.f32.mrb[0].mxu0
    %v3829 = vadd.f32 0.0, %v3828
    %v3830 = vpop.f32.mrb[0].mxu0
    %v3831 = vpop.f32.mrb[0].mxu0
    %v3832 = vadd.f32 0.0, %v3831
    %v3833 = vpop.f32.mrb[0].mxu0
    %3834 = vmatprep.mubr.bf16.mxu0 0
    %3835 = vmatmul.mubr.bf16.gmra.mrb[0].mxu0 %v2923
    %v3836 = vpop.f32.mrb[0].mxu0
    %v3837 = vadd.f32 0.0, %v3836
    %v3838 = vpop.f32.mrb[0].mxu0
    %v3839 = vpop.f32.mrb[0].mxu0
    %v3840 = vadd.f32 0.0, %v3839
    %v3841 = vpop.f32.mrb[0].mxu0
    %3842 = vmatprep.mubr.bf16.mxu0 0
    %3843 = vmatmul.mubr.bf16.gmra.mrb[0].mxu0 %v2926
    %v3844 = vpop.f32.mrb[0].mxu0
    %v3845 = vadd.f32 0.0, %v3844
    %v3846 = vpop.f32.mrb[0].mxu0
    %v3847 = vpop.f32.mrb[0].mxu0
    %v3848 = vadd.f32 0.0, %v3847
    %v3849 = vpop.f32.mrb[0].mxu0
    %3850 = vmatprep.mubr.bf16.mxu0 0
    %3851 = vmatmul.mubr.bf16.gmra.mrb[0].mxu0 %v2929
    %v3852 = vpop.f32.mrb[0].mxu0
    %v3853 = vadd.f32 0.0, %v3852
    %v3854 = vpop.f32.mrb[0].mxu0
    %v3855 = vpop.f32.mrb[0].mxu0
    %v3856 = vadd.f32 0.0, %v3855
    %v3857 = vpop.f32.mrb[0].mxu0
    %3858 = vmatprep.mubr.bf16.mxu0 0
    %3859 = vmatmul.mubr.bf16.gmra.mrb[0].mxu0 %v2932
    %v3860 = vpop.f32.mrb[0].mxu0
    %v3861 = vadd.f32 0.0, %v3860
    %v3862 = vpop.f32.mrb[0].mxu0
    %v3863 = vpop.f32.mrb[0].mxu0
    %v3864 = vadd.f32 0.0, %v3863
    %v3865 = vpop.f32.mrb[0].mxu0
    %3866 = vmatprep.mubr.bf16.mxu0 0
    %3867 = vmatmul.mubr.bf16.gmra.mrb[0].mxu0 %v2935
    %v3868 = vpop.f32.mrb[0].mxu0
    %v3869 = vadd.f32 0.0, %v3868
    %v3870 = vpop.f32.mrb[0].mxu0
    %v3871 = vpop.f32.mrb[0].mxu0
    %v3872 = vadd.f32 0.0, %v3871
    %v3873 = vpop.f32.mrb[0].mxu0
    %3874 = vmatprep.mubr.bf16.mxu0 0
    %3875 = vmatmul.mubr.bf16.gmra.mrb[0].mxu0 %v2938
    %v3876 = vpop.f32.mrb[0].mxu0
    %v3877 = vadd.f32 0.0, %v3876
    %v3878 = vpop.f32.mrb[0].mxu0
    %v3879 = vpop.f32.mrb[0].mxu0
    %v3880 = vadd.f32 0.0, %v3879
    %v3881 = vpop.f32.mrb[0].mxu0
    %3882 = vmatprep.mubr.bf16.mxu0 0
    %3883 = vmatmul.mubr.bf16.gmra.mrb[0].mxu0 %v2941
    %v3884 = vpop.f32.mrb[0].mxu0
    %v3885 = vadd.f32 0.0, %v3884
    %v3886 = vpop.f32.mrb[0].mxu0
    %v3887 = vpop.f32.mrb[0].mxu0
    %v3888 = vadd.f32 0.0, %v3887
    %v3889 = vpop.f32.mrb[0].mxu0
    %3890 = vmatprep.mubr.bf16.mxu0 0
    %3891 = vmatmul.mubr.bf16.gmra.mrb[0].mxu0 %v2944
    %v3892 = vpop.f32.mrb[0].mxu0
    %v3893 = vadd.f32 0.0, %v3892
    %v3894 = vpop.f32.mrb[0].mxu0
    %v3895 = vpop.f32.mrb[0].mxu0
    %v3896 = vadd.f32 0.0, %v3895
    %v3897 = vpop.f32.mrb[0].mxu0
    %3898 = vmatprep.mubr.bf16.mxu0 0
    %3899 = vmatmul.mubr.bf16.gmra.mrb[0].mxu0 %v2947
    %v3900 = vpop.f32.mrb[0].mxu0
    %v3901 = vadd.f32 0.0, %v3900
    %v3902 = vpop.f32.mrb[0].mxu0
    %v3903 = vpop.f32.mrb[0].mxu0
    %v3904 = vadd.f32 0.0, %v3903
    %v3905 = vpop.f32.mrb[0].mxu0
    %3906 = vmatprep.mubr.bf16.mxu0 0
    %3907 = vmatmul.mubr.bf16.gmra.mrb[0].mxu0 %v2950
    %v3908 = vpop.f32.mrb[0].mxu0
    %v3909 = vadd.f32 0.0, %v3908
    %v3910 = vpop.f32.mrb[0].mxu0
    %v3911 = vpop.f32.mrb[0].mxu0
    %v3912 = vadd.f32 0.0, %v3911
    %v3913 = vpop.f32.mrb[0].mxu0
    %3914 = vmatprep.mubr.bf16.mxu0 0
    %3915 = vmatmul.mubr.bf16.gmra.mrb[0].mxu0 %v2953
    %v3916 = vpop.f32.mrb[0].mxu0
    %v3917 = vadd.f32 0.0, %v3916
    %v3918 = vpop.f32.mrb[0].mxu0
    %v3919 = vpop.f32.mrb[0].mxu0
    %v3920 = vadd.f32 0.0, %v3919
    %v3921 = vpop.f32.mrb[0].mxu0
    %3922 = vmatprep.mubr.bf16.mxu0 0
    %3923 = vmatmul.mubr.bf16.gmra.mrb[0].mxu0 %v2956
    %v3924 = vpop.f32.mrb[0].mxu0
    %v3925 = vadd.f32 0.0, %v3924
    %v3926 = vpop.f32.mrb[0].mxu0
    %v3927 = vpop.f32.mrb[0].mxu0
    %v3928 = vadd.f32 0.0, %v3927
    %v3929 = vpop.f32.mrb[0].mxu0
    %3930 = vmatprep.mubr.bf16.mxu0 0
    %3931 = vmatmul.mubr.bf16.gmra.mrb[0].mxu0 %v2959
    %v3932 = vpop.f32.mrb[0].mxu0
    %v3933 = vadd.f32 0.0, %v3932
    %v3934 = vpop.f32.mrb[0].mxu0
    %v3935 = vpop.f32.mrb[0].mxu0
    %v3936 = vadd.f32 0.0, %v3935
    %v3937 = vpop.f32.mrb[0].mxu0
    %3938 = vmatprep.mubr.bf16.mxu0 0
    %3939 = vmatmul.mubr.bf16.gmra.mrb[0].mxu0 %v2962
    %v3940 = vpop.f32.mrb[0].mxu0
    %v3941 = vadd.f32 0.0, %v3940
    %v3942 = vpop.f32.mrb[0].mxu0
    %v3943 = vpop.f32.mrb[0].mxu0
    %v3944 = vadd.f32 0.0, %v3943
    %v3945 = vpop.f32.mrb[0].mxu0
    %3946 = vmatprep.mubr.bf16.mxu0 0
    %3947 = vmatmul.mubr.bf16.gmra.mrb[0].mxu0 %v2965
    %v3948 = vpop.f32.mrb[0].mxu0
    %v3949 = vadd.f32 0.0, %v3948
    %v3950 = vpop.f32.mrb[0].mxu0
    %v3951 = vpop.f32.mrb[0].mxu0
    %v3952 = vadd.f32 0.0, %v3951
    %v3953 = vpop.f32.mrb[0].mxu0
    %3954 = vmatprep.mubr.bf16.mxu0 0
    %3955 = vmatmul.mubr.bf16.gmra.mrb[0].mxu0 %v2968
    %v3956 = vpop.f32.mrb[0].mxu0
    %v3957 = vadd.f32 0.0, %v3956
    %v3958 = vpop.f32.mrb[0].mxu0
    %v3959 = vpop.f32.mrb[0].mxu0
    %v3960 = vadd.f32 0.0, %v3959
    %v3961 = vpop.f32.mrb[0].mxu0
    %3962 = vmatprep.mubr.bf16.mxu0 0
    %3963 = vmatmul.mubr.bf16.gmra.mrb[0].mxu0 %v2971
    %v3964 = vpop.f32.mrb[0].mxu0
    %v3965 = vadd.f32 0.0, %v3964
    %v3966 = vpop.f32.mrb[0].mxu0
    %v3967 = vpop.f32.mrb[0].mxu0
    %v3968 = vadd.f32 0.0, %v3967
    %v3969 = vpop.f32.mrb[0].mxu0
    %3970 = vmatprep.mubr.bf16.mxu0 0
    %3971 = vmatmul.mubr.bf16.gmra.mrb[0].mxu0 %v2974
    %v3972 = vpop.f32.mrb[0].mxu0
    %v3973 = vadd.f32 0.0, %v3972
    %v3974 = vpop.f32.mrb[0].mxu0
    %v3975 = vpop.f32.mrb[0].mxu0
    %v3976 = vadd.f32 0.0, %v3975
    %v3977 = vpop.f32.mrb[0].mxu0
    %3978 = vmatprep.mubr.bf16.mxu0 0
    %3979 = vmatmul.mubr.bf16.gmra.mrb[0].mxu0 %v2977
    %v3980 = vpop.f32.mrb[0].mxu0
    %v3981 = vadd.f32 0.0, %v3980
    %v3982 = vpop.f32.mrb[0].mxu0
    %v3983 = vpop.f32.mrb[0].mxu0
    %v3984 = vadd.f32 0.0, %v3983
    %v3985 = vpop.f32.mrb[0].mxu0
    %3986 = vmatprep.mubr.bf16.mxu0 0
    %3987 = vmatmul.mubr.bf16.gmra.mrb[0].mxu0 %v2980
    %v3988 = vpop.f32.mrb[0].mxu0
    %v3989 = vadd.f32 0.0, %v3988
    %v3990 = vpop.f32.mrb[0].mxu0
    %v3991 = vpop.f32.mrb[0].mxu0
    %v3992 = vadd.f32 0.0, %v3991
    %v3993 = vpop.f32.mrb[0].mxu0
    %3994 = vmatprep.mubr.bf16.mxu0 0
    %3995 = vmatmul.mubr.bf16.gmra.mrb[0].mxu0 %v2983
    %v3996 = vpop.f32.mrb[0].mxu0
    %v3997 = vadd.f32 0.0, %v3996
    %v3998 = vpop.f32.mrb[0].mxu0
    %v3999 = vpop.f32.mrb[0].mxu0
    %v4000 = vadd.f32 0.0, %v3999
    %v4001 = vpop.f32.mrb[0].mxu0
    %4002 = vmatprep.mubr.bf16.mxu0 0
    %4003 = vmatmul.mubr.bf16.gmra.mrb[0].mxu0 %v2986
    %v4004 = vpop.f32.mrb[0].mxu0
    %v4005 = vadd.f32 0.0, %v4004
    %v4006 = vpop.f32.mrb[0].mxu0
    %v4007 = vpop.f32.mrb[0].mxu0
    %v4008 = vadd.f32 0.0, %v4007
    %v4009 = vpop.f32.mrb[0].mxu0
    %4010 = vmatprep.mubr.bf16.mxu0 0
    %4011 = vmatmul.mubr.bf16.gmra.mrb[0].mxu0 %v2989
    %v4012 = vpop.f32.mrb[0].mxu0
    %v4013 = vadd.f32 0.0, %v4012
    %v4014 = vpop.f32.mrb[0].mxu0
    %v4015 = vpop.f32.mrb[0].mxu0
    %v4016 = vadd.f32 0.0, %v4015
    %v4017 = vpop.f32.mrb[0].mxu0
    %4018 = vmatprep.mubr.bf16.mxu0 0
    %4019 = vmatmul.mubr.bf16.gmra.mrb[0].mxu0 %v2992
    %v4020 = vpop.f32.mrb[0].mxu0
    %v4021 = vadd.f32 0.0, %v4020
    %v4022 = vpop.f32.mrb[0].mxu0
    %v4023 = vpop.f32.mrb[0].mxu0
    %v4024 = vadd.f32 0.0, %v4023
    %v4025 = vpop.f32.mrb[0].mxu0
    %4026 = vmatprep.mubr.bf16.mxu0 0
    %4027 = vmatmul.mubr.bf16.gmra.mrb[0].mxu0 %v2995
    %v4028 = vpop.f32.mrb[0].mxu0
    %v4029 = vadd.f32 0.0, %v4028
    %v4030 = vpop.f32.mrb[0].mxu0
    %v4031 = vpop.f32.mrb[0].mxu0
    %v4032 = vadd.f32 0.0, %v4031
    %v4033 = vpop.f32.mrb[0].mxu0
    %4034 = vmatprep.mubr.bf16.mxu0 0
    %4035 = vmatmul.mubr.bf16.gmra.mrb[0].mxu0 %v2998
    %v4036 = vpop.f32.mrb[0].mxu0
    %v4037 = vadd.f32 0.0, %v4036
    %v4038 = vpop.f32.mrb[0].mxu0
    %v4039 = vpop.f32.mrb[0].mxu0
    %v4040 = vadd.f32 0.0, %v4039
    %v4041 = vpop.f32.mrb[0].mxu0
    %4042 = vmatprep.mubr.bf16.mxu0 0
    %4043 = vmatmul.mubr.bf16.gmra.mrb[0].mxu0 %v3001
    %v4044 = vpop.f32.mrb[0].mxu0
    %v4045 = vadd.f32 0.0, %v4044
    %v4046 = vpop.f32.mrb[0].mxu0
    %v4047 = vpop.f32.mrb[0].mxu0
    %v4048 = vadd.f32 0.0, %v4047
    %v4049 = vpop.f32.mrb[0].mxu0
    %4050 = vmatprep.mubr.bf16.mxu0 0
    %4051 = vmatmul.mubr.bf16.gmra.mrb[0].mxu0 %v3004
    %v4052 = vpop.f32.mrb[0].mxu0
    %v4053 = vadd.f32 0.0, %v4052
    %v4054 = vpop.f32.mrb[0].mxu0
    %v4055 = vpop.f32.mrb[0].mxu0
    %v4056 = vadd.f32 0.0, %v4055
    %v4057 = vpop.f32.mrb[0].mxu0
    %4058 = vmatprep.mubr.bf16.mxu0 0
    %4059 = vmatmul.mubr.bf16.gmra.mrb[0].mxu0 %v3007
    %v4060 = vpop.f32.mrb[0].mxu0
    %v4061 = vadd.f32 0.0, %v4060
    %v4062 = vpop.f32.mrb[0].mxu0
    %v4063 = vpop.f32.mrb[0].mxu0
    %v4064 = vadd.f32 0.0, %v4063
    %v4065 = vpop.f32.mrb[0].mxu0
    %4066 = vmatprep.mubr.bf16.mxu0 0
    %4067 = vmatmul.mubr.bf16.gmra.mrb[0].mxu0 %v3010
    %v4068 = vpop.f32.mrb[0].mxu0
    %v4069 = vadd.f32 0.0, %v4068
    %v4070 = vpop.f32.mrb[0].mxu0
    %v4071 = vpop.f32.mrb[0].mxu0
    %v4072 = vadd.f32 0.0, %v4071
    %v4073 = vpop.f32.mrb[0].mxu0
    %4074 = vmatprep.mubr.bf16.mxu0 0
    %4075 = vmatmul.mubr.bf16.gmra.mrb[0].mxu0 %v3013
    %v4076 = vpop.f32.mrb[0].mxu0
    %v4077 = vadd.f32 0.0, %v4076
    %v4078 = vpop.f32.mrb[0].mxu0
    %v4079 = vpop.f32.mrb[0].mxu0
    %v4080 = vadd.f32 0.0, %v4079
    %v4081 = vpop.f32.mrb[0].mxu0
    %4082 = vmatprep.mubr.bf16.mxu0 0
    %4083 = vmatmul.mubr.bf16.gmra.mrb[0].mxu0 %v3016
    %v4084 = vpop.f32.mrb[0].mxu0
    %v4085 = vadd.f32 0.0, %v4084
    %v4086 = vpop.f32.mrb[0].mxu0
    %v4087 = vpop.f32.mrb[0].mxu0
    %v4088 = vadd.f32 0.0, %v4087
    %v4089 = vpop.f32.mrb[0].mxu0
    %4090 = vmatprep.mubr.bf16.mxu0 0
    %4091 = vmatmul.mubr.bf16.gmra.mrb[0].mxu0 %v3019
    %v4092 = vpop.f32.mrb[0].mxu0
    %v4093 = vadd.f32 0.0, %v4092
    %v4094 = vpop.f32.mrb[0].mxu0
    %v4095 = vpop.f32.mrb[0].mxu0
    %v4096 = vadd.f32 0.0, %v4095
    %v4097 = vpop.f32.mrb[0].mxu0
    %4098 = vmatprep.mubr.bf16.mxu0 0
    %4099 = vmatmul.mubr.bf16.gmra.mrb[0].mxu0 %v3022
    %v4100 = vpop.f32.mrb[0].mxu0
    %v4101 = vadd.f32 0.0, %v4100
    %v4102 = vpop.f32.mrb[0].mxu0
    %v4103 = vpop.f32.mrb[0].mxu0
    %v4104 = vadd.f32 0.0, %v4103
    %v4105 = vpop.f32.mrb[0].mxu0
    %4106 = vmatprep.mubr.bf16.mxu0 0
    %4107 = vmatmul.mubr.bf16.gmra.mrb[0].mxu0 %v3025
    %v4108 = vpop.f32.mrb[0].mxu0
    %v4109 = vadd.f32 0.0, %v4108
    %v4110 = vpop.f32.mrb[0].mxu0
    %v4111 = vpop.f32.mrb[0].mxu0
    %v4112 = vadd.f32 0.0, %v4111
    %v4113 = vpop.f32.mrb[0].mxu0
    %4114 = vmatprep.mubr.bf16.mxu0 0
    %4115 = vmatmul.mubr.bf16.gmra.mrb[0].mxu0 %v3028
    %v4116 = vpop.f32.mrb[0].mxu0
    %v4117 = vadd.f32 0.0, %v4116
    %v4118 = vpop.f32.mrb[0].mxu0
    %v4119 = vpop.f32.mrb[0].mxu0
    %v4120 = vadd.f32 0.0, %v4119
    %v4121 = vpop.f32.mrb[0].mxu0
    %4122 = vmatprep.mubr.bf16.mxu0 0
    %4123 = vmatmul.mubr.bf16.gmra.mrb[0].mxu0 %v3031
    %v4124 = vpop.f32.mrb[0].mxu0
    %v4125 = vadd.f32 0.0, %v4124
    %v4126 = vpop.f32.mrb[0].mxu0
    %v4127 = vpop.f32.mrb[0].mxu0
    %v4128 = vadd.f32 0.0, %v4127
    %v4129 = vpop.f32.mrb[0].mxu0
    %4130 = vmatprep.mubr.bf16.mxu0 0
    %4131 = vmatmul.mubr.bf16.gmra.mrb[0].mxu0 %v3034
    %v4132 = vpop.f32.mrb[0].mxu0
    %v4133 = vadd.f32 0.0, %v4132
    %v4134 = vpop.f32.mrb[0].mxu0
    %v4135 = vpop.f32.mrb[0].mxu0
    %v4136 = vadd.f32 0.0, %v4135
    %v4137 = vpop.f32.mrb[0].mxu0
    %4138 = vmatprep.mubr.bf16.mxu0 0
    %4139 = vmatmul.mubr.bf16.gmra.mrb[0].mxu0 %v3037
    %v4140 = vpop.f32.mrb[0].mxu0
    %v4141 = vadd.f32 0.0, %v4140
    %v4142 = vpop.f32.mrb[0].mxu0
    %v4143 = vpop.f32.mrb[0].mxu0
    %v4144 = vadd.f32 0.0, %v4143
    %v4145 = vpop.f32.mrb[0].mxu0
    %4146 = vmatprep.mubr.bf16.mxu0 0
    %4147 = vmatmul.mubr.bf16.gmra.mrb[0].mxu0 %v3040
    %v4148 = vpop.f32.mrb[0].mxu0
    %v4149 = vadd.f32 0.0, %v4148
    %v4150 = vpop.f32.mrb[0].mxu0
    %v4151 = vpop.f32.mrb[0].mxu0
    %v4152 = vadd.f32 0.0, %v4151
    %v4153 = vpop.f32.mrb[0].mxu0
    %4154 = vmatprep.mubr.bf16.mxu0 0
    %4155 = vmatmul.mubr.bf16.gmra.mrb[0].mxu0 %v3043
    %v4156 = vpop.f32.mrb[0].mxu0
    %v4157 = vadd.f32 0.0, %v4156
    %v4158 = vpop.f32.mrb[0].mxu0
    %v4159 = vpop.f32.mrb[0].mxu0
    %v4160 = vadd.f32 0.0, %v4159
    %v4161 = vpop.f32.mrb[0].mxu0
    %4162 = vmatprep.mubr.bf16.mxu0 0
    %4163 = vmatmul.mubr.bf16.gmra.mrb[0].mxu0 %v3046
    %v4164 = vpop.f32.mrb[0].mxu0
    %v4165 = vadd.f32 0.0, %v4164
    %v4166 = vpop.f32.mrb[0].mxu0
    %v4167 = vpop.f32.mrb[0].mxu0
    %v4168 = vadd.f32 0.0, %v4167
    %v4169 = vpop.f32.mrb[0].mxu0
    %4170 = vmatprep.mubr.bf16.mxu0 0
    %4171 = vmatmul.mubr.bf16.gmra.mrb[0].mxu0 %v3049
    %v4172 = vpop.f32.mrb[0].mxu0
    %v4173 = vadd.f32 0.0, %v4172
    %v4174 = vpop.f32.mrb[0].mxu0
    %v4175 = vpop.f32.mrb[0].mxu0
    %v4176 = vadd.f32 0.0, %v4175
    %v4177 = vpop.f32.mrb[0].mxu0
    %4178 = vmatprep.mubr.bf16.mxu0 0
    %4179 = vmatmul.mubr.bf16.gmra.mrb[0].mxu0 %v3052
    %v4180 = vpop.f32.mrb[0].mxu0
    %v4181 = vadd.f32 0.0, %v4180
    %v4182 = vpop.f32.mrb[0].mxu0
    %v4183 = vpop.f32.mrb[0].mxu0
    %v4184 = vadd.f32 0.0, %v4183
    %v4185 = vpop.f32.mrb[0].mxu0
    %4186 = vmatprep.mubr.bf16.mxu0 0
    %4187 = vmatmul.mubr.bf16.gmra.mrb[0].mxu0 %v3055
    %v4188 = vpop.f32.mrb[0].mxu0
    %v4189 = vadd.f32 0.0, %v4188
    %v4190 = vpop.f32.mrb[0].mxu0
    %v4191 = vpop.f32.mrb[0].mxu0
    %v4192 = vadd.f32 0.0, %v4191
    %v4193 = vpop.f32.mrb[0].mxu0
    %4194 = vmatprep.mubr.bf16.mxu0 0
    %4195 = vmatmul.mubr.bf16.gmra.mrb[0].mxu0 %v3058
    %v4196 = vpop.f32.mrb[0].mxu0
    %v4197 = vadd.f32 0.0, %v4196
    %v4198 = vpop.f32.mrb[0].mxu0
    %v4199 = vpop.f32.mrb[0].mxu0
    %v4200 = vadd.f32 0.0, %v4199
    %v4201 = vpop.f32.mrb[0].mxu0
    %4202 = vmatprep.mubr.bf16.mxu0 0
    %4203 = vmatmul.mubr.bf16.gmra.mrb[0].mxu0 %v3061
    %v4204 = vpop.f32.mrb[0].mxu0
    %v4205 = vadd.f32 0.0, %v4204
    %v4206 = vpop.f32.mrb[0].mxu0
    %v4207 = vpop.f32.mrb[0].mxu0
    %v4208 = vadd.f32 0.0, %v4207
    %v4209 = vpop.f32.mrb[0].mxu0
    %4210 = vmatprep.mubr.bf16.mxu0 0
    %4211 = vmatmul.mubr.bf16.gmra.mrb[0].mxu0 %v3064
    %v4212 = vpop.f32.mrb[0].mxu0
    %v4213 = vadd.f32 0.0, %v4212
    %v4214 = vpop.f32.mrb[0].mxu0
    %v4215 = vpop.f32.mrb[0].mxu0
    %v4216 = vadd.f32 0.0, %v4215
    %v4217 = vpop.f32.mrb[0].mxu0
    %4218 = vmatprep.mubr.bf16.mxu0 0
    %4219 = vmatmul.mubr.bf16.gmra.mrb[0].mxu0 %v3067
    %v4220 = vpop.f32.mrb[0].mxu0
    %v4221 = vadd.f32 0.0, %v4220
    %v4222 = vpop.f32.mrb[0].mxu0
    %v4223 = vpop.f32.mrb[0].mxu0
    %v4224 = vadd.f32 0.0, %v4223
    %v4225 = vpop.f32.mrb[0].mxu0
    %4226 = vmatprep.mubr.bf16.mxu0 0
    %4227 = vmatmul.mubr.bf16.gmra.mrb[0].mxu0 %v3070
    %v4228 = vpop.f32.mrb[0].mxu0
    %v4229 = vadd.f32 0.0, %v4228
    %v4230 = vpop.f32.mrb[0].mxu0
    %v4231 = vpop.f32.mrb[0].mxu0
    %v4232 = vadd.f32 0.0, %v4231
    %v4233 = vpop.f32.mrb[0].mxu0
    %4234 = vmatprep.mubr.bf16.mxu0 0
    %4235 = vmatmul.mubr.bf16.gmra.mrb[0].mxu0 %v3073
    %v4236 = vpop.f32.mrb[0].mxu0
    %v4237 = vadd.f32 0.0, %v4236
    %v4238 = vpop.f32.mrb[0].mxu0
    %v4239 = vpop.f32.mrb[0].mxu0
    %v4240 = vadd.f32 0.0, %v4239
    %v4241 = vpop.f32.mrb[0].mxu0
    %4242 = vmatprep.mubr.bf16.mxu0 0
    %4243 = vmatmul.mubr.bf16.gmra.mrb[0].mxu0 %v3076
    %v4244 = vpop.f32.mrb[0].mxu0
    %v4245 = vadd.f32 0.0, %v4244
    %v4246 = vpop.f32.mrb[0].mxu0
    %v4247 = vpop.f32.mrb[0].mxu0
    %v4248 = vadd.f32 0.0, %v4247
    %v4249 = vpop.f32.mrb[0].mxu0
    %4250 = vmatprep.mubr.bf16.mxu0 0
    %4251 = vmatmul.mubr.bf16.gmra.mrb[0].mxu0 %v3079
    %v4252 = vpop.f32.mrb[0].mxu0
    %v4253 = vadd.f32 0.0, %v4252
    %v4254 = vpop.f32.mrb[0].mxu0
    %v4255 = vpop.f32.mrb[0].mxu0
    %v4256 = vadd.f32 0.0, %v4255
    %v4257 = vpop.f32.mrb[0].mxu0
    %4258 = vmatprep.mubr.bf16.mxu0 0
    %4259 = vmatmul.mubr.bf16.gmra.mrb[0].mxu0 %v3082
    %v4260 = vpop.f32.mrb[0].mxu0
    %v4261 = vadd.f32 0.0, %v4260
    %v4262 = vpop.f32.mrb[0].mxu0
    %v4263 = vpop.f32.mrb[0].mxu0
    %v4264 = vadd.f32 0.0, %v4263
    %v4265 = vpop.f32.mrb[0].mxu0
    %4266 = vmatprep.mubr.bf16.mxu0 0
    %4267 = vmatmul.mubr.bf16.gmra.mrb[0].mxu0 %v3085
    %v4268 = vpop.f32.mrb[0].mxu0
    %v4269 = vadd.f32 0.0, %v4268
    %v4270 = vpop.f32.mrb[0].mxu0
    %v4271 = vpop.f32.mrb[0].mxu0
    %v4272 = vadd.f32 0.0, %v4271
    %v4273 = vpop.f32.mrb[0].mxu0
    %4274 = vmatprep.mubr.bf16.mxu0 0
    %4275 = vmatmul.mubr.bf16.gmra.mrb[0].mxu0 %v3088
    %v4276 = vpop.f32.mrb[0].mxu0
    %v4277 = vadd.f32 0.0, %v4276
    %v4278 = vpop.f32.mrb[0].mxu0
    %v4279 = vpop.f32.mrb[0].mxu0
    %v4280 = vadd.f32 0.0, %v4279
    %v4281 = vpop.f32.mrb[0].mxu0
    %4282 = vmatprep.mubr.bf16.mxu0 0
    %4283 = vmatmul.mubr.bf16.gmra.mrb[0].mxu0 %v3091
    %v4284 = vpop.f32.mrb[0].mxu0
    %v4285 = vadd.f32 0.0, %v4284
    %v4286 = vpop.f32.mrb[0].mxu0
    %v4287 = vpop.f32.mrb[0].mxu0
    %v4288 = vadd.f32 0.0, %v4287
    %v4289 = vpop.f32.mrb[0].mxu0
    %4290 = vmatprep.mubr.bf16.mxu0 0
    %4291 = vmatmul.mubr.bf16.gmra.mrb[0].mxu0 %v3094
    %v4292 = vpop.f32.mrb[0].mxu0
    %v4293 = vadd.f32 0.0, %v4292
    %v4294 = vpop.f32.mrb[0].mxu0
    %v4295 = vpop.f32.mrb[0].mxu0
    %v4296 = vadd.f32 0.0, %v4295
    %v4297 = vpop.f32.mrb[0].mxu0
    %4298 = vmatprep.mubr.bf16.mxu0 0
    %4299 = vmatmul.mubr.bf16.gmra.mrb[0].mxu0 %v3097
    %v4300 = vpop.f32.mrb[0].mxu0
    %v4301 = vadd.f32 0.0, %v4300
    %v4302 = vpop.f32.mrb[0].mxu0
    %v4303 = vpop.f32.mrb[0].mxu0
    %v4304 = vadd.f32 0.0, %v4303
    %v4305 = vpop.f32.mrb[0].mxu0
    %4306 = vmatprep.mubr.bf16.mxu0 0
    %4307 = vmatmul.mubr.bf16.gmra.mrb[0].mxu0 %v3100
    %v4308 = vpop.f32.mrb[0].mxu0
    %v4309 = vadd.f32 0.0, %v4308
    %v4310 = vpop.f32.mrb[0].mxu0
    %v4311 = vpop.f32.mrb[0].mxu0
    %v4312 = vadd.f32 0.0, %v4311
    %v4313 = vpop.f32.mrb[0].mxu0
    %4314 = vmatprep.mubr.bf16.mxu0 0
    %4315 = vmatmul.mubr.bf16.gmra.mrb[0].mxu0 %v3103
    %v4316 = vpop.f32.mrb[0].mxu0
    %v4317 = vadd.f32 0.0, %v4316
    %v4318 = vpop.f32.mrb[0].mxu0
    %v4319 = vpop.f32.mrb[0].mxu0
    %v4320 = vadd.f32 0.0, %v4319
    %v4321 = vpop.f32.mrb[0].mxu0
    %4322 = vmatprep.mubr.bf16.mxu0 0
    %4323 = vmatmul.mubr.bf16.gmra.mrb[0].mxu0 %v3106
    %v4324 = vpop.f32.mrb[0].mxu0
    %v4325 = vadd.f32 0.0, %v4324
    %v4326 = vpop.f32.mrb[0].mxu0
    %v4327 = vpop.f32.mrb[0].mxu0
    %v4328 = vadd.f32 0.0, %v4327
    %v4329 = vpop.f32.mrb[0].mxu0
    %4330 = vmatprep.mubr.bf16.mxu0 0
    %4331 = vmatmul.mubr.bf16.gmra.mrb[0].mxu0 %v3109
    %v4332 = vpop.f32.mrb[0].mxu0
    %v4333 = vadd.f32 0.0, %v4332
    %v4334 = vpop.f32.mrb[0].mxu0
    %v4335 = vpop.f32.mrb[0].mxu0
    %v4336 = vadd.f32 0.0, %v4335
    %v4337 = vpop.f32.mrb[0].mxu0
    %4338 = vdwg.mxu0
    %v4467 = vunpack.c.l.b16 %v2772
    %v4468 = vunpack.c.h.b16 %v2772
    %v4469 = vunpack.c.l.b16 %v2773
    %v4470 = vunpack.c.l.b16 %v2774
    %v4471 = vunpack.c.h.b16 %v2774
    %v4472 = vunpack.c.l.b16 %v2775
    %v4473 = vunpack.c.l.b16 %v2776
    %v4474 = vunpack.c.h.b16 %v2776
    %v4475 = vunpack.c.l.b16 %v2777
    %v4476 = vunpack.c.l.b16 %v2778
    %v4477 = vunpack.c.h.b16 %v2778
    %v4478 = vunpack.c.l.b16 %v2779
    %v4479 = vunpack.c.l.b16 %v2780
    %v4480 = vunpack.c.h.b16 %v2780
    %v4481 = vunpack.c.l.b16 %v2781
    %v4482 = vunpack.c.l.b16 %v2782
    %v4483 = vunpack.c.h.b16 %v2782
    %v4484 = vunpack.c.l.b16 %v2783
    %v4485 = vunpack.c.l.b16 %v2784
    %v4486 = vunpack.c.h.b16 %v2784
    %v4487 = vunpack.c.l.b16 %v2785
    %v4488 = vunpack.c.l.b16 %v2786
    %v4489 = vunpack.c.h.b16 %v2786
    %v4490 = vunpack.c.l.b16 %v2787
    %v4491 = vunpack.c.l.b16 %v2788
    %v4492 = vunpack.c.h.b16 %v2788
    %v4493 = vunpack.c.l.b16 %v2789
    %v4494 = vunpack.c.l.b16 %v2790
    %v4495 = vunpack.c.h.b16 %v2790
    %v4496 = vunpack.c.l.b16 %v2791
    %v4497 = vunpack.c.l.b16 %v2792
    %v4498 = vunpack.c.h.b16 %v2792
    %v4499 = vunpack.c.l.b16 %v2793
    %v4500 = vunpack.c.l.b16 %v2794
    %v4501 = vunpack.c.h.b16 %v2794
    %v4502 = vunpack.c.l.b16 %v2795
    %v4503 = vunpack.c.l.b16 %v2796
    %v4504 = vunpack.c.h.b16 %v2796
    %v4505 = vunpack.c.l.b16 %v2797
    %v4506 = vunpack.c.l.b16 %v2798
    %v4507 = vunpack.c.h.b16 %v2798
    %v4508 = vunpack.c.l.b16 %v2799
    %v4509 = vunpack.c.l.b16 %v2800
    %v4510 = vunpack.c.h.b16 %v2800
    %v4511 = vunpack.c.l.b16 %v2801
    %v4512 = vunpack.c.l.b16 %v2802
    %v4513 = vunpack.c.h.b16 %v2802
    %v4514 = vunpack.c.l.b16 %v2803
    %v4515 = vunpack.c.l.b16 %v2804
    %v4516 = vunpack.c.h.b16 %v2804
    %v4517 = vunpack.c.l.b16 %v2805
    %v4518 = vunpack.c.l.b16 %v2806
    %v4519 = vunpack.c.h.b16 %v2806
    %v4520 = vunpack.c.l.b16 %v2807
    %v4521 = vunpack.c.l.b16 %v2808
    %v4522 = vunpack.c.h.b16 %v2808
    %v4523 = vunpack.c.l.b16 %v2809
    %v4524 = vunpack.c.l.b16 %v2810
    %v4525 = vunpack.c.h.b16 %v2810
    %v4526 = vunpack.c.l.b16 %v2811
    %v4527 = vunpack.c.l.b16 %v2812
    %v4528 = vunpack.c.h.b16 %v2812
    %v4529 = vunpack.c.l.b16 %v2813
    %v4530 = vunpack.c.l.b16 %v2814
    %v4531 = vunpack.c.h.b16 %v2814
    %v4532 = vunpack.c.l.b16 %v2815
    %v4533 = vunpack.c.l.b16 %v2816
    %v4534 = vunpack.c.h.b16 %v2816
    %v4535 = vunpack.c.l.b16 %v2817
    %v4536 = vunpack.c.l.b16 %v2818
    %v4537 = vunpack.c.h.b16 %v2818
    %v4538 = vunpack.c.l.b16 %v2819
    %v4539 = vunpack.c.l.b16 %v2820
    %v4540 = vunpack.c.h.b16 %v2820
    %v4541 = vunpack.c.l.b16 %v2821
    %v4542 = vunpack.c.l.b16 %v2822
    %v4543 = vunpack.c.h.b16 %v2822
    %v4544 = vunpack.c.l.b16 %v2823
    %v4545 = vunpack.c.l.b16 %v2824
    %v4546 = vunpack.c.h.b16 %v2824
    %v4547 = vunpack.c.l.b16 %v2825
    %v4548 = vunpack.c.l.b16 %v2826
    %v4549 = vunpack.c.h.b16 %v2826
    %v4550 = vunpack.c.l.b16 %v2827
    %v4551 = vunpack.c.l.b16 %v2828
    %v4552 = vunpack.c.h.b16 %v2828
    %v4553 = vunpack.c.l.b16 %v2829
    %v4554 = vunpack.c.l.b16 %v2830
    %v4555 = vunpack.c.h.b16 %v2830
    %v4556 = vunpack.c.l.b16 %v2831
    %v4557 = vunpack.c.l.b16 %v2832
    %v4558 = vunpack.c.h.b16 %v2832
    %v4559 = vunpack.c.l.b16 %v2833
    %v4560 = vunpack.c.l.b16 %v2834
    %v4561 = vunpack.c.h.b16 %v2834
    %v4562 = vunpack.c.l.b16 %v2835
    %v4563 = vunpack.c.l.b16 %v2836
    %v4564 = vunpack.c.h.b16 %v2836
    %v4565 = vunpack.c.l.b16 %v2837
    %v4566 = vunpack.c.l.b16 %v2838
    %v4567 = vunpack.c.h.b16 %v2838
    %v4568 = vunpack.c.l.b16 %v2839
    %v4569 = vunpack.c.l.b16 %v2840
    %v4570 = vunpack.c.h.b16 %v2840
    %v4571 = vunpack.c.l.b16 %v2841
    %v4572 = vunpack.c.l.b16 %v2842
    %v4573 = vunpack.c.h.b16 %v2842
    %v4574 = vunpack.c.l.b16 %v2843
    %v4575 = vunpack.c.l.b16 %v2844
    %v4576 = vunpack.c.h.b16 %v2844
    %v4577 = vunpack.c.l.b16 %v2845
    %v4578 = vunpack.c.l.b16 %v2846
    %v4579 = vunpack.c.h.b16 %v2846
    %v4580 = vunpack.c.l.b16 %v2847
    %v4581 = vunpack.c.l.b16 %v2848
    %v4582 = vunpack.c.h.b16 %v2848
    %v4583 = vunpack.c.l.b16 %v2849
    %v4584 = vunpack.c.l.b16 %v2850
    %v4585 = vunpack.c.h.b16 %v2850
    %v4586 = vunpack.c.l.b16 %v2851
    %v4587 = vunpack.c.l.b16 %v2852
    %v4588 = vunpack.c.h.b16 %v2852
    %v4589 = vunpack.c.l.b16 %v2853
    %v4590 = vunpack.c.l.b16 %v2854
    %v4591 = vunpack.c.h.b16 %v2854
    %v4592 = vunpack.c.l.b16 %v2855
    %v4593 = vunpack.c.l.b16 %v2856
    %v4594 = vunpack.c.h.b16 %v2856
    %v4595 = vunpack.c.l.b16 %v2857
    %v4596 = vunpack.c.l.b16 %v2858
    %v4597 = vunpack.c.h.b16 %v2858
    %v4598 = vunpack.c.l.b16 %v2859
    %v4599 = vunpack.c.l.b16 %v2860
    %v4600 = vunpack.c.h.b16 %v2860
    %v4601 = vunpack.c.l.b16 %v2861
    %v4602 = vunpack.c.l.b16 %v2862
    %v4603 = vunpack.c.h.b16 %v2862
    %v4604 = vunpack.c.l.b16 %v2863
    %v4605 = vunpack.c.l.b16 %v2864
    %v4606 = vunpack.c.h.b16 %v2864
    %v4607 = vunpack.c.l.b16 %v2865
    %v4608 = vunpack.c.l.b16 %v2866
    %v4609 = vunpack.c.h.b16 %v2866
    %v4610 = vunpack.c.l.b16 %v2867
    %v4611 = vunpack.c.l.b16 %v2868
    %v4612 = vunpack.c.h.b16 %v2868
    %v4613 = vunpack.c.l.b16 %v2869
    %v4614 = vunpack.c.l.b16 %v2870
    %v4615 = vunpack.c.h.b16 %v2870
    %v4616 = vunpack.c.l.b16 %v2871
    %v4617 = vunpack.c.l.b16 %v2872
    %v4618 = vunpack.c.h.b16 %v2872
    %v4619 = vunpack.c.l.b16 %v2873
    %v4620 = vunpack.c.l.b16 %v2874
    %v4621 = vunpack.c.h.b16 %v2874
    %v4622 = vunpack.c.l.b16 %v2875
    %v4623 = vunpack.c.l.b16 %v2876
    %v4624 = vunpack.c.h.b16 %v2876
    %v4625 = vunpack.c.l.b16 %v2877
    %v4626 = vunpack.c.l.b16 %v2878
    %v4627 = vunpack.c.h.b16 %v2878
    %v4628 = vunpack.c.l.b16 %v2879
    %v4629 = vunpack.c.l.b16 %v2880
    %v4630 = vunpack.c.h.b16 %v2880
    %v4631 = vunpack.c.l.b16 %v2881
    %v4632 = vunpack.c.l.b16 %v2882
    %v4633 = vunpack.c.h.b16 %v2882
    %v4634 = vunpack.c.l.b16 %v2883
    %v4635 = vunpack.c.l.b16 %v2884
    %v4636 = vunpack.c.h.b16 %v2884
    %v4637 = vunpack.c.l.b16 %v2885
    %v4638 = vunpack.c.l.b16 %v2886
    %v4639 = vunpack.c.h.b16 %v2886
    %v4640 = vunpack.c.l.b16 %v2887
    %v4641 = vunpack.c.l.b16 %v2888
    %v4642 = vunpack.c.h.b16 %v2888
    %v4643 = vunpack.c.l.b16 %v2889
    %v4644 = vunpack.c.l.b16 %v2890
    %v4645 = vunpack.c.h.b16 %v2890
    %v4646 = vunpack.c.l.b16 %v2891
    %v4647 = vunpack.c.l.b16 %v2892
    %v4648 = vunpack.c.h.b16 %v2892
    %v4649 = vunpack.c.l.b16 %v2893
    %v4650 = vunpack.c.l.b16 %v2894
    %v4651 = vunpack.c.h.b16 %v2894
    %v4652 = vunpack.c.l.b16 %v2895
    %v4653 = vunpack.c.l.b16 %v2896
    %v4654 = vunpack.c.h.b16 %v2896
    %v4655 = vunpack.c.l.b16 %v2897
    %v4656 = vunpack.c.l.b16 %v2898
    %v4657 = vunpack.c.h.b16 %v2898
    %v4658 = vunpack.c.l.b16 %v2899
    %v4659 = vpack.c.b16 %v4470, %v4467
    %v4660 = vpack.c.b16 %v4471, %v4468
    %v4661 = vpack.c.b16 %v4472, %v4469
    %v4662 = vpack.c.b16 %v4476, %v4473
    %v4663 = vpack.c.b16 %v4477, %v4474
    %v4664 = vpack.c.b16 %v4478, %v4475
    %v4665 = vpack.c.b16 %v4482, %v4479
    %v4666 = vpack.c.b16 %v4483, %v4480
    %v4667 = vpack.c.b16 %v4484, %v4481
    %v4668 = vpack.c.b16 %v4488, %v4485
    %v4669 = vpack.c.b16 %v4489, %v4486
    %v4670 = vpack.c.b16 %v4490, %v4487
    %v4671 = vpack.c.b16 %v4494, %v4491
    %v4672 = vpack.c.b16 %v4495, %v4492
    %v4673 = vpack.c.b16 %v4496, %v4493
    %v4674 = vpack.c.b16 %v4500, %v4497
    %v4675 = vpack.c.b16 %v4501, %v4498
    %v4676 = vpack.c.b16 %v4502, %v4499
    %v4677 = vpack.c.b16 %v4506, %v4503
    %v4678 = vpack.c.b16 %v4507, %v4504
    %v4679 = vpack.c.b16 %v4508, %v4505
    %v4680 = vpack.c.b16 %v4512, %v4509
    %v4681 = vpack.c.b16 %v4513, %v4510
    %v4682 = vpack.c.b16 %v4514, %v4511
    %v4683 = vpack.c.b16 %v4518, %v4515
    %v4684 = vpack.c.b16 %v4519, %v4516
    %v4685 = vpack.c.b16 %v4520, %v4517
    %v4686 = vpack.c.b16 %v4524, %v4521
    %v4687 = vpack.c.b16 %v4525, %v4522
    %v4688 = vpack.c.b16 %v4526, %v4523
    %v4689 = vpack.c.b16 %v4530, %v4527
    %v4690 = vpack.c.b16 %v4531, %v4528
    %v4691 = vpack.c.b16 %v4532, %v4529
    %v4692 = vpack.c.b16 %v4536, %v4533
    %v4693 = vpack.c.b16 %v4537, %v4534
    %v4694 = vpack.c.b16 %v4538, %v4535
    %v4695 = vpack.c.b16 %v4542, %v4539
    %v4696 = vpack.c.b16 %v4543, %v4540
    %v4697 = vpack.c.b16 %v4544, %v4541
    %v4698 = vpack.c.b16 %v4548, %v4545
    %v4699 = vpack.c.b16 %v4549, %v4546
    %v4700 = vpack.c.b16 %v4550, %v4547
    %v4701 = vpack.c.b16 %v4554, %v4551
    %v4702 = vpack.c.b16 %v4555, %v4552
    %v4703 = vpack.c.b16 %v4556, %v4553
    %v4704 = vpack.c.b16 %v4560, %v4557
    %v4705 = vpack.c.b16 %v4561, %v4558
    %v4706 = vpack.c.b16 %v4562, %v4559
    %v4707 = vpack.c.b16 %v4566, %v4563
    %v4708 = vpack.c.b16 %v4567, %v4564
    %v4709 = vpack.c.b16 %v4568, %v4565
    %v4710 = vpack.c.b16 %v4572, %v4569
    %v4711 = vpack.c.b16 %v4573, %v4570
    %v4712 = vpack.c.b16 %v4574, %v4571
    %v4713 = vpack.c.b16 %v4578, %v4575
    %v4714 = vpack.c.b16 %v4579, %v4576
    %v4715 = vpack.c.b16 %v4580, %v4577
    %v4716 = vpack.c.b16 %v4584, %v4581
    %v4717 = vpack.c.b16 %v4585, %v4582
    %v4718 = vpack.c.b16 %v4586, %v4583
    %v4719 = vpack.c.b16 %v4590, %v4587
    %v4720 = vpack.c.b16 %v4591, %v4588
    %v4721 = vpack.c.b16 %v4592, %v4589
    %v4722 = vpack.c.b16 %v4596, %v4593
    %v4723 = vpack.c.b16 %v4597, %v4594
    %v4724 = vpack.c.b16 %v4598, %v4595
    %v4725 = vpack.c.b16 %v4602, %v4599
    %v4726 = vpack.c.b16 %v4603, %v4600
    %v4727 = vpack.c.b16 %v4604, %v4601
    %v4728 = vpack.c.b16 %v4608, %v4605
    %v4729 = vpack.c.b16 %v4609, %v4606
    %v4730 = vpack.c.b16 %v4610, %v4607
    %v4731 = vpack.c.b16 %v4614, %v4611
    %v4732 = vpack.c.b16 %v4615, %v4612
    %v4733 = vpack.c.b16 %v4616, %v4613
    %v4734 = vpack.c.b16 %v4620, %v4617
    %v4735 = vpack.c.b16 %v4621, %v4618
    %v4736 = vpack.c.b16 %v4622, %v4619
    %v4737 = vpack.c.b16 %v4626, %v4623
    %v4738 = vpack.c.b16 %v4627, %v4624
    %v4739 = vpack.c.b16 %v4628, %v4625
    %v4740 = vpack.c.b16 %v4632, %v4629
    %v4741 = vpack.c.b16 %v4633, %v4630
    %v4742 = vpack.c.b16 %v4634, %v4631
    %v4743 = vpack.c.b16 %v4638, %v4635
    %v4744 = vpack.c.b16 %v4639, %v4636
    %v4745 = vpack.c.b16 %v4640, %v4637
    %v4746 = vpack.c.b16 %v4644, %v4641
    %v4747 = vpack.c.b16 %v4645, %v4642
    %v4748 = vpack.c.b16 %v4646, %v4643
    %v4749 = vpack.c.b16 %v4650, %v4647
    %v4750 = vpack.c.b16 %v4651, %v4648
    %v4751 = vpack.c.b16 %v4652, %v4649
    %v4752 = vpack.c.b16 %v4656, %v4653
    %v4753 = vpack.c.b16 %v4657, %v4654
    %v4754 = vpack.c.b16 %v4658, %v4655
    %4851 = vmatprep.subr.bf16.mxu0 %v4660
    %4852 = vmatpush1.bf16.msra.mxu0 %v4659
    %4853 = vmatprep.subr.bf16.mxu0 %v4663
    %4854 = vmatpush1.bf16.msra.mxu0 %v4662
    %4855 = vmatprep.subr.bf16.mxu0 %v4666
    %4856 = vmatpush1.bf16.msra.mxu0 %v4665
    %4857 = vmatprep.subr.bf16.mxu0 %v4669
    %4858 = vmatpush1.bf16.msra.mxu0 %v4668
    %4859 = vmatprep.subr.bf16.mxu0 %v4672
    %4860 = vmatpush1.bf16.msra.mxu0 %v4671
    %4861 = vmatprep.subr.bf16.mxu0 %v4675
    %4862 = vmatpush1.bf16.msra.mxu0 %v4674
    %4863 = vmatprep.subr.bf16.mxu0 %v4678
    %4864 = vmatpush1.bf16.msra.mxu0 %v4677
    %4865 = vmatprep.subr.bf16.mxu0 %v4681
    %4866 = vmatpush1.bf16.msra.mxu0 %v4680
    %4867 = vmatprep.subr.bf16.mxu0 %v4684
    %4868 = vmatpush1.bf16.msra.mxu0 %v4683
    %4869 = vmatprep.subr.bf16.mxu0 %v4687
    %4870 = vmatpush1.bf16.msra.mxu0 %v4686
    %4871 = vmatprep.subr.bf16.mxu0 %v4690
    %4872 = vmatpush1.bf16.msra.mxu0 %v4689
    %4873 = vmatprep.subr.bf16.mxu0 %v4693
    %4874 = vmatpush1.bf16.msra.mxu0 %v4692
    %4875 = vmatprep.subr.bf16.mxu0 %v4696
    %4876 = vmatpush1.bf16.msra.mxu0 %v4695
    %4877 = vmatprep.subr.bf16.mxu0 %v4699
    %4878 = vmatpush1.bf16.msra.mxu0 %v4698
    %4879 = vmatprep.subr.bf16.mxu0 %v4702
    %4880 = vmatpush1.bf16.msra.mxu0 %v4701
    %4881 = vmatprep.subr.bf16.mxu0 %v4705
    %4882 = vmatpush1.bf16.msra.mxu0 %v4704
    %4883 = vmatprep.mubr.bf16.mxu0 %v2517
    %4884 = vmatmul.mubr.bf16.gmra.mrb[0].mxu0 %v2516
    %v4885 = vpop.f32.mrb[0].mxu0
    %v4886 = vadd.f32 %v3156, %v4885
    %v4887 = vpop.f32.mrb[0].mxu0
    %v4888 = vadd.f32 %v3158, %v4887
    %v4889 = vpop.f32.mrb[0].mxu0
    %v4890 = vadd.f32 %v3160, %v4889
    %v4891 = vpop.f32.mrb[0].mxu0
    %v4892 = vadd.f32 %v3162, %v4891
    %4893 = vmatprep.mubr.bf16.mxu0 %v2521
    %4894 = vmatmul.mubr.bf16.gmra.mrb[0].mxu0 %v2520
    %v4895 = vpop.f32.mrb[0].mxu0
    %v4896 = vadd.f32 %v3166, %v4895
    %v4897 = vpop.f32.mrb[0].mxu0
    %v4898 = vadd.f32 %v3168, %v4897
    %v4899 = vpop.f32.mrb[0].mxu0
    %v4900 = vadd.f32 %v3170, %v4899
    %v4901 = vpop.f32.mrb[0].mxu0
    %v4902 = vadd.f32 %v3172, %v4901
    %4903 = vmatprep.mubr.bf16.mxu0 %v2525
    %4904 = vmatmul.mubr.bf16.gmra.mrb[0].mxu0 %v2524
    %v4905 = vpop.f32.mrb[0].mxu0
    %v4906 = vadd.f32 %v3176, %v4905
    %v4907 = vpop.f32.mrb[0].mxu0
    %v4908 = vadd.f32 %v3178, %v4907
    %v4909 = vpop.f32.mrb[0].mxu0
    %v4910 = vadd.f32 %v3180, %v4909
    %v4911 = vpop.f32.mrb[0].mxu0
    %v4912 = vadd.f32 %v3182, %v4911
    %4913 = vmatprep.mubr.bf16.mxu0 %v2529
    %4914 = vmatmul.mubr.bf16.gmra.mrb[0].mxu0 %v2528
    %v4915 = vpop.f32.mrb[0].mxu0
    %v4916 = vadd.f32 %v3186, %v4915
    %v4917 = vpop.f32.mrb[0].mxu0
    %v4918 = vadd.f32 %v3188, %v4917
    %v4919 = vpop.f32.mrb[0].mxu0
    %v4920 = vadd.f32 %v3190, %v4919
    %v4921 = vpop.f32.mrb[0].mxu0
    %v4922 = vadd.f32 %v3192, %v4921
    %4923 = vmatprep.mubr.bf16.mxu0 %v2533
    %4924 = vmatmul.mubr.bf16.gmra.mrb[0].mxu0 %v2532
    %v4925 = vpop.f32.mrb[0].mxu0
    %v4926 = vadd.f32 %v3196, %v4925
    %v4927 = vpop.f32.mrb[0].mxu0
    %v4928 = vadd.f32 %v3198, %v4927
    %v4929 = vpop.f32.mrb[0].mxu0
    %v4930 = vadd.f32 %v3200, %v4929
    %v4931 = vpop.f32.mrb[0].mxu0
    %v4932 = vadd.f32 %v3202, %v4931
    %4933 = vmatprep.mubr.bf16.mxu0 %v2537
    %4934 = vmatmul.mubr.bf16.gmra.mrb[0].mxu0 %v2536
    %v4935 = vpop.f32.mrb[0].mxu0
    %v4936 = vadd.f32 %v3206, %v4935
    %v4937 = vpop.f32.mrb[0].mxu0
    %v4938 = vadd.f32 %v3208, %v4937
    %v4939 = vpop.f32.mrb[0].mxu0
    %v4940 = vadd.f32 %v3210, %v4939
    %v4941 = vpop.f32.mrb[0].mxu0
    %v4942 = vadd.f32 %v3212, %v4941
    %4943 = vmatprep.mubr.bf16.mxu0 %v2541
    %4944 = vmatmul.mubr.bf16.gmra.mrb[0].mxu0 %v2540
    %v4945 = vpop.f32.mrb[0].mxu0
    %v4946 = vadd.f32 %v3216, %v4945
    %v4947 = vpop.f32.mrb[0].mxu0
    %v4948 = vadd.f32 %v3218, %v4947
    %v4949 = vpop.f32.mrb[0].mxu0
    %v4950 = vadd.f32 %v3220, %v4949
    %v4951 = vpop.f32.mrb[0].mxu0
    %v4952 = vadd.f32 %v3222, %v4951
    %4953 = vmatprep.mubr.bf16.mxu0 %v2545
    %4954 = vmatmul.mubr.bf16.gmra.mrb[0].mxu0 %v2544
    %v4955 = vpop.f32.mrb[0].mxu0
    %v4956 = vadd.f32 %v3226, %v4955
    %v4957 = vpop.f32.mrb[0].mxu0
    %v4958 = vadd.f32 %v3228, %v4957
    %v4959 = vpop.f32.mrb[0].mxu0
    %v4960 = vadd.f32 %v3230, %v4959
    %v4961 = vpop.f32.mrb[0].mxu0
    %v4962 = vadd.f32 %v3232, %v4961
    %4963 = vmatprep.mubr.bf16.mxu0 %v2549
    %4964 = vmatmul.mubr.bf16.gmra.mrb[0].mxu0 %v2548
    %v4965 = vpop.f32.mrb[0].mxu0
    %v4966 = vadd.f32 %v3236, %v4965
    %v4967 = vpop.f32.mrb[0].mxu0
    %v4968 = vadd.f32 %v3238, %v4967
    %v4969 = vpop.f32.mrb[0].mxu0
    %v4970 = vadd.f32 %v3240, %v4969
    %v4971 = vpop.f32.mrb[0].mxu0
    %v4972 = vadd.f32 %v3242, %v4971
    %4973 = vmatprep.mubr.bf16.mxu0 %v2553
    %4974 = vmatmul.mubr.bf16.gmra.mrb[0].mxu0 %v2552
    %v4975 = vpop.f32.mrb[0].mxu0
    %v4976 = vadd.f32 %v3246, %v4975
    %v4977 = vpop.f32.mrb[0].mxu0
    %v4978 = vadd.f32 %v3248, %v4977
    %v4979 = vpop.f32.mrb[0].mxu0
    %v4980 = vadd.f32 %v3250, %v4979
    %v4981 = vpop.f32.mrb[0].mxu0
    %v4982 = vadd.f32 %v3252, %v4981
    %4983 = vmatprep.mubr.bf16.mxu0 %v2557
    %4984 = vmatmul.mubr.bf16.gmra.mrb[0].mxu0 %v2556
    %v4985 = vpop.f32.mrb[0].mxu0
    %v4986 = vadd.f32 %v3256, %v4985
    %v4987 = vpop.f32.mrb[0].mxu0
    %v4988 = vadd.f32 %v3258, %v4987
    %v4989 = vpop.f32.mrb[0].mxu0
    %v4990 = vadd.f32 %v3260, %v4989
    %v4991 = vpop.f32.mrb[0].mxu0
    %v4992 = vadd.f32 %v3262, %v4991
    %4993 = vmatprep.mubr.bf16.mxu0 %v2561
    %4994 = vmatmul.mubr.bf16.gmra.mrb[0].mxu0 %v2560
    %v4995 = vpop.f32.mrb[0].mxu0
    %v4996 = vadd.f32 %v3266, %v4995
    %v4997 = vpop.f32.mrb[0].mxu0
    %v4998 = vadd.f32 %v3268, %v4997
    %v4999 = vpop.f32.mrb[0].mxu0
    %v5000 = vadd.f32 %v3270, %v4999
    %v5001 = vpop.f32.mrb[0].mxu0
    %v5002 = vadd.f32 %v3272, %v5001
    %5003 = vmatprep.mubr.bf16.mxu0 %v2565
    %5004 = vmatmul.mubr.bf16.gmra.mrb[0].mxu0 %v2564
    %v5005 = vpop.f32.mrb[0].mxu0
    %v5006 = vadd.f32 %v3276, %v5005
    %v5007 = vpop.f32.mrb[0].mxu0
    %v5008 = vadd.f32 %v3278, %v5007
    %v5009 = vpop.f32.mrb[0].mxu0
    %v5010 = vadd.f32 %v3280, %v5009
    %v5011 = vpop.f32.mrb[0].mxu0
    %v5012 = vadd.f32 %v3282, %v5011
    %5013 = vmatprep.mubr.bf16.mxu0 %v2569
    %5014 = vmatmul.mubr.bf16.gmra.mrb[0].mxu0 %v2568
    %v5015 = vpop.f32.mrb[0].mxu0
    %v5016 = vadd.f32 %v3286, %v5015
    %v5017 = vpop.f32.mrb[0].mxu0
    %v5018 = vadd.f32 %v3288, %v5017
    %v5019 = vpop.f32.mrb[0].mxu0
    %v5020 = vadd.f32 %v3290, %v5019
    %v5021 = vpop.f32.mrb[0].mxu0
    %v5022 = vadd.f32 %v3292, %v5021
    %5023 = vmatprep.mubr.bf16.mxu0 %v2573
    %5024 = vmatmul.mubr.bf16.gmra.mrb[0].mxu0 %v2572
    %v5025 = vpop.f32.mrb[0].mxu0
    %v5026 = vadd.f32 %v3296, %v5025
    %v5027 = vpop.f32.mrb[0].mxu0
    %v5028 = vadd.f32 %v3298, %v5027
    %v5029 = vpop.f32.mrb[0].mxu0
    %v5030 = vadd.f32 %v3300, %v5029
    %v5031 = vpop.f32.mrb[0].mxu0
    %v5032 = vadd.f32 %v3302, %v5031
    %5033 = vmatprep.mubr.bf16.mxu0 %v2577
    %5034 = vmatmul.mubr.bf16.gmra.mrb[0].mxu0 %v2576
    %v5035 = vpop.f32.mrb[0].mxu0
    %v5036 = vadd.f32 %v3306, %v5035
    %v5037 = vpop.f32.mrb[0].mxu0
    %v5038 = vadd.f32 %v3308, %v5037
    %v5039 = vpop.f32.mrb[0].mxu0
    %v5040 = vadd.f32 %v3310, %v5039
    %v5041 = vpop.f32.mrb[0].mxu0
    %v5042 = vadd.f32 %v3312, %v5041
    %5043 = vmatprep.mubr.bf16.mxu0 %v2581
    %5044 = vmatmul.mubr.bf16.gmra.mrb[0].mxu0 %v2580
    %v5045 = vpop.f32.mrb[0].mxu0
    %v5046 = vadd.f32 %v3316, %v5045
    %v5047 = vpop.f32.mrb[0].mxu0
    %v5048 = vadd.f32 %v3318, %v5047
    %v5049 = vpop.f32.mrb[0].mxu0
    %v5050 = vadd.f32 %v3320, %v5049
    %v5051 = vpop.f32.mrb[0].mxu0
    %v5052 = vadd.f32 %v3322, %v5051
    %5053 = vmatprep.mubr.bf16.mxu0 %v2585
    %5054 = vmatmul.mubr.bf16.gmra.mrb[0].mxu0 %v2584
    %v5055 = vpop.f32.mrb[0].mxu0
    %v5056 = vadd.f32 %v3326, %v5055
    %v5057 = vpop.f32.mrb[0].mxu0
    %v5058 = vadd.f32 %v3328, %v5057
    %v5059 = vpop.f32.mrb[0].mxu0
    %v5060 = vadd.f32 %v3330, %v5059
    %v5061 = vpop.f32.mrb[0].mxu0
    %v5062 = vadd.f32 %v3332, %v5061
    %5063 = vmatprep.mubr.bf16.mxu0 %v2589
    %5064 = vmatmul.mubr.bf16.gmra.mrb[0].mxu0 %v2588
    %v5065 = vpop.f32.mrb[0].mxu0
    %v5066 = vadd.f32 %v3336, %v5065
    %v5067 = vpop.f32.mrb[0].mxu0
    %v5068 = vadd.f32 %v3338, %v5067
    %v5069 = vpop.f32.mrb[0].mxu0
    %v5070 = vadd.f32 %v3340, %v5069
    %v5071 = vpop.f32.mrb[0].mxu0
    %v5072 = vadd.f32 %v3342, %v5071
    %5073 = vmatprep.mubr.bf16.mxu0 %v2593
    %5074 = vmatmul.mubr.bf16.gmra.mrb[0].mxu0 %v2592
    %v5075 = vpop.f32.mrb[0].mxu0
    %v5076 = vadd.f32 %v3346, %v5075
    %v5077 = vpop.f32.mrb[0].mxu0
    %v5078 = vadd.f32 %v3348, %v5077
    %v5079 = vpop.f32.mrb[0].mxu0
    %v5080 = vadd.f32 %v3350, %v5079
    %v5081 = vpop.f32.mrb[0].mxu0
    %v5082 = vadd.f32 %v3352, %v5081
    %5083 = vmatprep.mubr.bf16.mxu0 %v2597
    %5084 = vmatmul.mubr.bf16.gmra.mrb[0].mxu0 %v2596
    %v5085 = vpop.f32.mrb[0].mxu0
    %v5086 = vadd.f32 %v3356, %v5085
    %v5087 = vpop.f32.mrb[0].mxu0
    %v5088 = vadd.f32 %v3358, %v5087
    %v5089 = vpop.f32.mrb[0].mxu0
    %v5090 = vadd.f32 %v3360, %v5089
    %v5091 = vpop.f32.mrb[0].mxu0
    %v5092 = vadd.f32 %v3362, %v5091
    %5093 = vmatprep.mubr.bf16.mxu0 %v2601
    %5094 = vmatmul.mubr.bf16.gmra.mrb[0].mxu0 %v2600
    %v5095 = vpop.f32.mrb[0].mxu0
    %v5096 = vadd.f32 %v3366, %v5095
    %v5097 = vpop.f32.mrb[0].mxu0
    %v5098 = vadd.f32 %v3368, %v5097
    %v5099 = vpop.f32.mrb[0].mxu0
    %v5100 = vadd.f32 %v3370, %v5099
    %v5101 = vpop.f32.mrb[0].mxu0
    %v5102 = vadd.f32 %v3372, %v5101
    %5103 = vmatprep.mubr.bf16.mxu0 %v2605
    %5104 = vmatmul.mubr.bf16.gmra.mrb[0].mxu0 %v2604
    %v5105 = vpop.f32.mrb[0].mxu0
    %v5106 = vadd.f32 %v3376, %v5105
    %v5107 = vpop.f32.mrb[0].mxu0
    %v5108 = vadd.f32 %v3378, %v5107
    %v5109 = vpop.f32.mrb[0].mxu0
    %v5110 = vadd.f32 %v3380, %v5109
    %v5111 = vpop.f32.mrb[0].mxu0
    %v5112 = vadd.f32 %v3382, %v5111
    %5113 = vmatprep.mubr.bf16.mxu0 %v2609
    %5114 = vmatmul.mubr.bf16.gmra.mrb[0].mxu0 %v2608
    %v5115 = vpop.f32.mrb[0].mxu0
    %v5116 = vadd.f32 %v3386, %v5115
    %v5117 = vpop.f32.mrb[0].mxu0
    %v5118 = vadd.f32 %v3388, %v5117
    %v5119 = vpop.f32.mrb[0].mxu0
    %v5120 = vadd.f32 %v3390, %v5119
    %v5121 = vpop.f32.mrb[0].mxu0
    %v5122 = vadd.f32 %v3392, %v5121
    %5123 = vmatprep.mubr.bf16.mxu0 %v2613
    %5124 = vmatmul.mubr.bf16.gmra.mrb[0].mxu0 %v2612
    %v5125 = vpop.f32.mrb[0].mxu0
    %v5126 = vadd.f32 %v3396, %v5125
    %v5127 = vpop.f32.mrb[0].mxu0
    %v5128 = vadd.f32 %v3398, %v5127
    %v5129 = vpop.f32.mrb[0].mxu0
    %v5130 = vadd.f32 %v3400, %v5129
    %v5131 = vpop.f32.mrb[0].mxu0
    %v5132 = vadd.f32 %v3402, %v5131
    %5133 = vmatprep.mubr.bf16.mxu0 %v2617
    %5134 = vmatmul.mubr.bf16.gmra.mrb[0].mxu0 %v2616
    %v5135 = vpop.f32.mrb[0].mxu0
    %v5136 = vadd.f32 %v3406, %v5135
    %v5137 = vpop.f32.mrb[0].mxu0
    %v5138 = vadd.f32 %v3408, %v5137
    %v5139 = vpop.f32.mrb[0].mxu0
    %v5140 = vadd.f32 %v3410, %v5139
    %v5141 = vpop.f32.mrb[0].mxu0
    %v5142 = vadd.f32 %v3412, %v5141
    %5143 = vmatprep.mubr.bf16.mxu0 %v2621
    %5144 = vmatmul.mubr.bf16.gmra.mrb[0].mxu0 %v2620
    %v5145 = vpop.f32.mrb[0].mxu0
    %v5146 = vadd.f32 %v3416, %v5145
    %v5147 = vpop.f32.mrb[0].mxu0
    %v5148 = vadd.f32 %v3418, %v5147
    %v5149 = vpop.f32.mrb[0].mxu0
    %v5150 = vadd.f32 %v3420, %v5149
    %v5151 = vpop.f32.mrb[0].mxu0
    %v5152 = vadd.f32 %v3422, %v5151
    %5153 = vmatprep.mubr.bf16.mxu0 %v2625
    %5154 = vmatmul.mubr.bf16.gmra.mrb[0].mxu0 %v2624
    %v5155 = vpop.f32.mrb[0].mxu0
    %v5156 = vadd.f32 %v3426, %v5155
    %v5157 = vpop.f32.mrb[0].mxu0
    %v5158 = vadd.f32 %v3428, %v5157
    %v5159 = vpop.f32.mrb[0].mxu0
    %v5160 = vadd.f32 %v3430, %v5159
    %v5161 = vpop.f32.mrb[0].mxu0
    %v5162 = vadd.f32 %v3432, %v5161
    %5163 = vmatprep.mubr.bf16.mxu0 %v2629
    %5164 = vmatmul.mubr.bf16.gmra.mrb[0].mxu0 %v2628
    %v5165 = vpop.f32.mrb[0].mxu0
    %v5166 = vadd.f32 %v3436, %v5165
    %v5167 = vpop.f32.mrb[0].mxu0
    %v5168 = vadd.f32 %v3438, %v5167
    %v5169 = vpop.f32.mrb[0].mxu0
    %v5170 = vadd.f32 %v3440, %v5169
    %v5171 = vpop.f32.mrb[0].mxu0
    %v5172 = vadd.f32 %v3442, %v5171
    %5173 = vmatprep.mubr.bf16.mxu0 %v2633
    %5174 = vmatmul.mubr.bf16.gmra.mrb[0].mxu0 %v2632
    %v5175 = vpop.f32.mrb[0].mxu0
    %v5176 = vadd.f32 %v3446, %v5175
    %v5177 = vpop.f32.mrb[0].mxu0
    %v5178 = vadd.f32 %v3448, %v5177
    %v5179 = vpop.f32.mrb[0].mxu0
    %v5180 = vadd.f32 %v3450, %v5179
    %v5181 = vpop.f32.mrb[0].mxu0
    %v5182 = vadd.f32 %v3452, %v5181
    %5183 = vmatprep.mubr.bf16.mxu0 %v2637
    %5184 = vmatmul.mubr.bf16.gmra.mrb[0].mxu0 %v2636
    %v5185 = vpop.f32.mrb[0].mxu0
    %v5186 = vadd.f32 %v3456, %v5185
    %v5187 = vpop.f32.mrb[0].mxu0
    %v5188 = vadd.f32 %v3458, %v5187
    %v5189 = vpop.f32.mrb[0].mxu0
    %v5190 = vadd.f32 %v3460, %v5189
    %v5191 = vpop.f32.mrb[0].mxu0
    %v5192 = vadd.f32 %v3462, %v5191
    %5193 = vmatprep.mubr.bf16.mxu0 %v2641
    %5194 = vmatmul.mubr.bf16.gmra.mrb[0].mxu0 %v2640
    %v5195 = vpop.f32.mrb[0].mxu0
    %v5196 = vadd.f32 %v3466, %v5195
    %v5197 = vpop.f32.mrb[0].mxu0
    %v5198 = vadd.f32 %v3468, %v5197
    %v5199 = vpop.f32.mrb[0].mxu0
    %v5200 = vadd.f32 %v3470, %v5199
    %v5201 = vpop.f32.mrb[0].mxu0
    %v5202 = vadd.f32 %v3472, %v5201
    %5203 = vmatprep.mubr.bf16.mxu0 %v2645
    %5204 = vmatmul.mubr.bf16.gmra.mrb[0].mxu0 %v2644
    %v5205 = vpop.f32.mrb[0].mxu0
    %v5206 = vadd.f32 %v3476, %v5205
    %v5207 = vpop.f32.mrb[0].mxu0
    %v5208 = vadd.f32 %v3478, %v5207
    %v5209 = vpop.f32.mrb[0].mxu0
    %v5210 = vadd.f32 %v3480, %v5209
    %v5211 = vpop.f32.mrb[0].mxu0
    %v5212 = vadd.f32 %v3482, %v5211
    %5213 = vmatprep.mubr.bf16.mxu0 %v2649
    %5214 = vmatmul.mubr.bf16.gmra.mrb[0].mxu0 %v2648
    %v5215 = vpop.f32.mrb[0].mxu0
    %v5216 = vadd.f32 %v3486, %v5215
    %v5217 = vpop.f32.mrb[0].mxu0
    %v5218 = vadd.f32 %v3488, %v5217
    %v5219 = vpop.f32.mrb[0].mxu0
    %v5220 = vadd.f32 %v3490, %v5219
    %v5221 = vpop.f32.mrb[0].mxu0
    %v5222 = vadd.f32 %v3492, %v5221
    %5223 = vmatprep.mubr.bf16.mxu0 %v2653
    %5224 = vmatmul.mubr.bf16.gmra.mrb[0].mxu0 %v2652
    %v5225 = vpop.f32.mrb[0].mxu0
    %v5226 = vadd.f32 %v3496, %v5225
    %v5227 = vpop.f32.mrb[0].mxu0
    %v5228 = vadd.f32 %v3498, %v5227
    %v5229 = vpop.f32.mrb[0].mxu0
    %v5230 = vadd.f32 %v3500, %v5229
    %v5231 = vpop.f32.mrb[0].mxu0
    %v5232 = vadd.f32 %v3502, %v5231
    %5233 = vmatprep.mubr.bf16.mxu0 %v2657
    %5234 = vmatmul.mubr.bf16.gmra.mrb[0].mxu0 %v2656
    %v5235 = vpop.f32.mrb[0].mxu0
    %v5236 = vadd.f32 %v3506, %v5235
    %v5237 = vpop.f32.mrb[0].mxu0
    %v5238 = vadd.f32 %v3508, %v5237
    %v5239 = vpop.f32.mrb[0].mxu0
    %v5240 = vadd.f32 %v3510, %v5239
    %v5241 = vpop.f32.mrb[0].mxu0
    %v5242 = vadd.f32 %v3512, %v5241
    %5243 = vmatprep.mubr.bf16.mxu0 %v2661
    %5244 = vmatmul.mubr.bf16.gmra.mrb[0].mxu0 %v2660
    %v5245 = vpop.f32.mrb[0].mxu0
    %v5246 = vadd.f32 %v3516, %v5245
    %v5247 = vpop.f32.mrb[0].mxu0
    %v5248 = vadd.f32 %v3518, %v5247
    %v5249 = vpop.f32.mrb[0].mxu0
    %v5250 = vadd.f32 %v3520, %v5249
    %v5251 = vpop.f32.mrb[0].mxu0
    %v5252 = vadd.f32 %v3522, %v5251
    %5253 = vmatprep.mubr.bf16.mxu0 %v2665
    %5254 = vmatmul.mubr.bf16.gmra.mrb[0].mxu0 %v2664
    %v5255 = vpop.f32.mrb[0].mxu0
    %v5256 = vadd.f32 %v3526, %v5255
    %v5257 = vpop.f32.mrb[0].mxu0
    %v5258 = vadd.f32 %v3528, %v5257
    %v5259 = vpop.f32.mrb[0].mxu0
    %v5260 = vadd.f32 %v3530, %v5259
    %v5261 = vpop.f32.mrb[0].mxu0
    %v5262 = vadd.f32 %v3532, %v5261
    %5263 = vmatprep.mubr.bf16.mxu0 %v2669
    %5264 = vmatmul.mubr.bf16.gmra.mrb[0].mxu0 %v2668
    %v5265 = vpop.f32.mrb[0].mxu0
    %v5266 = vadd.f32 %v3536, %v5265
    %v5267 = vpop.f32.mrb[0].mxu0
    %v5268 = vadd.f32 %v3538, %v5267
    %v5269 = vpop.f32.mrb[0].mxu0
    %v5270 = vadd.f32 %v3540, %v5269
    %v5271 = vpop.f32.mrb[0].mxu0
    %v5272 = vadd.f32 %v3542, %v5271
    %5273 = vmatprep.mubr.bf16.mxu0 %v2673
    %5274 = vmatmul.mubr.bf16.gmra.mrb[0].mxu0 %v2672
    %v5275 = vpop.f32.mrb[0].mxu0
    %v5276 = vadd.f32 %v3546, %v5275
    %v5277 = vpop.f32.mrb[0].mxu0
    %v5278 = vadd.f32 %v3548, %v5277
    %v5279 = vpop.f32.mrb[0].mxu0
    %v5280 = vadd.f32 %v3550, %v5279
    %v5281 = vpop.f32.mrb[0].mxu0
    %v5282 = vadd.f32 %v3552, %v5281
    %5283 = vmatprep.mubr.bf16.mxu0 %v2677
    %5284 = vmatmul.mubr.bf16.gmra.mrb[0].mxu0 %v2676
    %v5285 = vpop.f32.mrb[0].mxu0
    %v5286 = vadd.f32 %v3556, %v5285
    %v5287 = vpop.f32.mrb[0].mxu0
    %v5288 = vadd.f32 %v3558, %v5287
    %v5289 = vpop.f32.mrb[0].mxu0
    %v5290 = vadd.f32 %v3560, %v5289
    %v5291 = vpop.f32.mrb[0].mxu0
    %v5292 = vadd.f32 %v3562, %v5291
    %5293 = vmatprep.mubr.bf16.mxu0 %v2681
    %5294 = vmatmul.mubr.bf16.gmra.mrb[0].mxu0 %v2680
    %v5295 = vpop.f32.mrb[0].mxu0
    %v5296 = vadd.f32 %v3566, %v5295
    %v5297 = vpop.f32.mrb[0].mxu0
    %v5298 = vadd.f32 %v3568, %v5297
    %v5299 = vpop.f32.mrb[0].mxu0
    %v5300 = vadd.f32 %v3570, %v5299
    %v5301 = vpop.f32.mrb[0].mxu0
    %v5302 = vadd.f32 %v3572, %v5301
    %5303 = vmatprep.mubr.bf16.mxu0 %v2685
    %5304 = vmatmul.mubr.bf16.gmra.mrb[0].mxu0 %v2684
    %v5305 = vpop.f32.mrb[0].mxu0
    %v5306 = vadd.f32 %v3576, %v5305
    %v5307 = vpop.f32.mrb[0].mxu0
    %v5308 = vadd.f32 %v3578, %v5307
    %v5309 = vpop.f32.mrb[0].mxu0
    %v5310 = vadd.f32 %v3580, %v5309
    %v5311 = vpop.f32.mrb[0].mxu0
    %v5312 = vadd.f32 %v3582, %v5311
    %5313 = vmatprep.mubr.bf16.mxu0 %v2689
    %5314 = vmatmul.mubr.bf16.gmra.mrb[0].mxu0 %v2688
    %v5315 = vpop.f32.mrb[0].mxu0
    %v5316 = vadd.f32 %v3586, %v5315
    %v5317 = vpop.f32.mrb[0].mxu0
    %v5318 = vadd.f32 %v3588, %v5317
    %v5319 = vpop.f32.mrb[0].mxu0
    %v5320 = vadd.f32 %v3590, %v5319
    %v5321 = vpop.f32.mrb[0].mxu0
    %v5322 = vadd.f32 %v3592, %v5321
    %5323 = vmatprep.mubr.bf16.mxu0 %v2693
    %5324 = vmatmul.mubr.bf16.gmra.mrb[0].mxu0 %v2692
    %v5325 = vpop.f32.mrb[0].mxu0
    %v5326 = vadd.f32 %v3596, %v5325
    %v5327 = vpop.f32.mrb[0].mxu0
    %v5328 = vadd.f32 %v3598, %v5327
    %v5329 = vpop.f32.mrb[0].mxu0
    %v5330 = vadd.f32 %v3600, %v5329
    %v5331 = vpop.f32.mrb[0].mxu0
    %v5332 = vadd.f32 %v3602, %v5331
    %5333 = vmatprep.mubr.bf16.mxu0 %v2697
    %5334 = vmatmul.mubr.bf16.gmra.mrb[0].mxu0 %v2696
    %v5335 = vpop.f32.mrb[0].mxu0
    %v5336 = vadd.f32 %v3606, %v5335
    %v5337 = vpop.f32.mrb[0].mxu0
    %v5338 = vadd.f32 %v3608, %v5337
    %v5339 = vpop.f32.mrb[0].mxu0
    %v5340 = vadd.f32 %v3610, %v5339
    %v5341 = vpop.f32.mrb[0].mxu0
    %v5342 = vadd.f32 %v3612, %v5341
    %5343 = vmatprep.mubr.bf16.mxu0 %v2701
    %5344 = vmatmul.mubr.bf16.gmra.mrb[0].mxu0 %v2700
    %v5345 = vpop.f32.mrb[0].mxu0
    %v5346 = vadd.f32 %v3616, %v5345
    %v5347 = vpop.f32.mrb[0].mxu0
    %v5348 = vadd.f32 %v3618, %v5347
    %v5349 = vpop.f32.mrb[0].mxu0
    %v5350 = vadd.f32 %v3620, %v5349
    %v5351 = vpop.f32.mrb[0].mxu0
    %v5352 = vadd.f32 %v3622, %v5351
    %5353 = vmatprep.mubr.bf16.mxu0 %v2705
    %5354 = vmatmul.mubr.bf16.gmra.mrb[0].mxu0 %v2704
    %v5355 = vpop.f32.mrb[0].mxu0
    %v5356 = vadd.f32 %v3626, %v5355
    %v5357 = vpop.f32.mrb[0].mxu0
    %v5358 = vadd.f32 %v3628, %v5357
    %v5359 = vpop.f32.mrb[0].mxu0
    %v5360 = vadd.f32 %v3630, %v5359
    %v5361 = vpop.f32.mrb[0].mxu0
    %v5362 = vadd.f32 %v3632, %v5361
    %5363 = vmatprep.mubr.bf16.mxu0 %v2709
    %5364 = vmatmul.mubr.bf16.gmra.mrb[0].mxu0 %v2708
    %v5365 = vpop.f32.mrb[0].mxu0
    %v5366 = vadd.f32 %v3636, %v5365
    %v5367 = vpop.f32.mrb[0].mxu0
    %v5368 = vadd.f32 %v3638, %v5367
    %v5369 = vpop.f32.mrb[0].mxu0
    %v5370 = vadd.f32 %v3640, %v5369
    %v5371 = vpop.f32.mrb[0].mxu0
    %v5372 = vadd.f32 %v3642, %v5371
    %5373 = vmatprep.mubr.bf16.mxu0 %v2713
    %5374 = vmatmul.mubr.bf16.gmra.mrb[0].mxu0 %v2712
    %v5375 = vpop.f32.mrb[0].mxu0
    %v5376 = vadd.f32 %v3646, %v5375
    %v5377 = vpop.f32.mrb[0].mxu0
    %v5378 = vadd.f32 %v3648, %v5377
    %v5379 = vpop.f32.mrb[0].mxu0
    %v5380 = vadd.f32 %v3650, %v5379
    %v5381 = vpop.f32.mrb[0].mxu0
    %v5382 = vadd.f32 %v3652, %v5381
    %5383 = vmatprep.mubr.bf16.mxu0 %v2717
    %5384 = vmatmul.mubr.bf16.gmra.mrb[0].mxu0 %v2716
    %v5385 = vpop.f32.mrb[0].mxu0
    %v5386 = vadd.f32 %v3656, %v5385
    %v5387 = vpop.f32.mrb[0].mxu0
    %v5388 = vadd.f32 %v3658, %v5387
    %v5389 = vpop.f32.mrb[0].mxu0
    %v5390 = vadd.f32 %v3660, %v5389
    %v5391 = vpop.f32.mrb[0].mxu0
    %v5392 = vadd.f32 %v3662, %v5391
    %5393 = vmatprep.mubr.bf16.mxu0 %v2721
    %5394 = vmatmul.mubr.bf16.gmra.mrb[0].mxu0 %v2720
    %v5395 = vpop.f32.mrb[0].mxu0
    %v5396 = vadd.f32 %v3666, %v5395
    %v5397 = vpop.f32.mrb[0].mxu0
    %v5398 = vadd.f32 %v3668, %v5397
    %v5399 = vpop.f32.mrb[0].mxu0
    %v5400 = vadd.f32 %v3670, %v5399
    %v5401 = vpop.f32.mrb[0].mxu0
    %v5402 = vadd.f32 %v3672, %v5401
    %5403 = vmatprep.mubr.bf16.mxu0 %v2725
    %5404 = vmatmul.mubr.bf16.gmra.mrb[0].mxu0 %v2724
    %v5405 = vpop.f32.mrb[0].mxu0
    %v5406 = vadd.f32 %v3676, %v5405
    %v5407 = vpop.f32.mrb[0].mxu0
    %v5408 = vadd.f32 %v3678, %v5407
    %v5409 = vpop.f32.mrb[0].mxu0
    %v5410 = vadd.f32 %v3680, %v5409
    %v5411 = vpop.f32.mrb[0].mxu0
    %v5412 = vadd.f32 %v3682, %v5411
    %5413 = vmatprep.mubr.bf16.mxu0 %v2729
    %5414 = vmatmul.mubr.bf16.gmra.mrb[0].mxu0 %v2728
    %v5415 = vpop.f32.mrb[0].mxu0
    %v5416 = vadd.f32 %v3686, %v5415
    %v5417 = vpop.f32.mrb[0].mxu0
    %v5418 = vadd.f32 %v3688, %v5417
    %v5419 = vpop.f32.mrb[0].mxu0
    %v5420 = vadd.f32 %v3690, %v5419
    %v5421 = vpop.f32.mrb[0].mxu0
    %v5422 = vadd.f32 %v3692, %v5421
    %5423 = vmatprep.mubr.bf16.mxu0 %v2733
    %5424 = vmatmul.mubr.bf16.gmra.mrb[0].mxu0 %v2732
    %v5425 = vpop.f32.mrb[0].mxu0
    %v5426 = vadd.f32 %v3696, %v5425
    %v5427 = vpop.f32.mrb[0].mxu0
    %v5428 = vadd.f32 %v3698, %v5427
    %v5429 = vpop.f32.mrb[0].mxu0
    %v5430 = vadd.f32 %v3700, %v5429
    %v5431 = vpop.f32.mrb[0].mxu0
    %v5432 = vadd.f32 %v3702, %v5431
    %5433 = vmatprep.mubr.bf16.mxu0 %v2737
    %5434 = vmatmul.mubr.bf16.gmra.mrb[0].mxu0 %v2736
    %v5435 = vpop.f32.mrb[0].mxu0
    %v5436 = vadd.f32 %v3706, %v5435
    %v5437 = vpop.f32.mrb[0].mxu0
    %v5438 = vadd.f32 %v3708, %v5437
    %v5439 = vpop.f32.mrb[0].mxu0
    %v5440 = vadd.f32 %v3710, %v5439
    %v5441 = vpop.f32.mrb[0].mxu0
    %v5442 = vadd.f32 %v3712, %v5441
    %5443 = vmatprep.mubr.bf16.mxu0 %v2741
    %5444 = vmatmul.mubr.bf16.gmra.mrb[0].mxu0 %v2740
    %v5445 = vpop.f32.mrb[0].mxu0
    %v5446 = vadd.f32 %v3716, %v5445
    %v5447 = vpop.f32.mrb[0].mxu0
    %v5448 = vadd.f32 %v3718, %v5447
    %v5449 = vpop.f32.mrb[0].mxu0
    %v5450 = vadd.f32 %v3720, %v5449
    %v5451 = vpop.f32.mrb[0].mxu0
    %v5452 = vadd.f32 %v3722, %v5451
    %5453 = vmatprep.mubr.bf16.mxu0 %v2745
    %5454 = vmatmul.mubr.bf16.gmra.mrb[0].mxu0 %v2744
    %v5455 = vpop.f32.mrb[0].mxu0
    %v5456 = vadd.f32 %v3726, %v5455
    %v5457 = vpop.f32.mrb[0].mxu0
    %v5458 = vadd.f32 %v3728, %v5457
    %v5459 = vpop.f32.mrb[0].mxu0
    %v5460 = vadd.f32 %v3730, %v5459
    %v5461 = vpop.f32.mrb[0].mxu0
    %v5462 = vadd.f32 %v3732, %v5461
    %5463 = vmatprep.mubr.bf16.mxu0 %v2749
    %5464 = vmatmul.mubr.bf16.gmra.mrb[0].mxu0 %v2748
    %v5465 = vpop.f32.mrb[0].mxu0
    %v5466 = vadd.f32 %v3736, %v5465
    %v5467 = vpop.f32.mrb[0].mxu0
    %v5468 = vadd.f32 %v3738, %v5467
    %v5469 = vpop.f32.mrb[0].mxu0
    %v5470 = vadd.f32 %v3740, %v5469
    %v5471 = vpop.f32.mrb[0].mxu0
    %v5472 = vadd.f32 %v3742, %v5471
    %5473 = vmatprep.mubr.bf16.mxu0 %v2753
    %5474 = vmatmul.mubr.bf16.gmra.mrb[0].mxu0 %v2752
    %v5475 = vpop.f32.mrb[0].mxu0
    %v5476 = vadd.f32 %v3746, %v5475
    %v5477 = vpop.f32.mrb[0].mxu0
    %v5478 = vadd.f32 %v3748, %v5477
    %v5479 = vpop.f32.mrb[0].mxu0
    %v5480 = vadd.f32 %v3750, %v5479
    %v5481 = vpop.f32.mrb[0].mxu0
    %v5482 = vadd.f32 %v3752, %v5481
    %5483 = vmatprep.mubr.bf16.mxu0 %v2757
    %5484 = vmatmul.mubr.bf16.gmra.mrb[0].mxu0 %v2756
    %v5485 = vpop.f32.mrb[0].mxu0
    %v5486 = vadd.f32 %v3756, %v5485
    %v5487 = vpop.f32.mrb[0].mxu0
    %v5488 = vadd.f32 %v3758, %v5487
    %v5489 = vpop.f32.mrb[0].mxu0
    %v5490 = vadd.f32 %v3760, %v5489
    %v5491 = vpop.f32.mrb[0].mxu0
    %v5492 = vadd.f32 %v3762, %v5491
    %5493 = vmatprep.mubr.bf16.mxu0 %v2761
    %5494 = vmatmul.mubr.bf16.gmra.mrb[0].mxu0 %v2760
    %v5495 = vpop.f32.mrb[0].mxu0
    %v5496 = vadd.f32 %v3766, %v5495
    %v5497 = vpop.f32.mrb[0].mxu0
    %v5498 = vadd.f32 %v3768, %v5497
    %v5499 = vpop.f32.mrb[0].mxu0
    %v5500 = vadd.f32 %v3770, %v5499
    %v5501 = vpop.f32.mrb[0].mxu0
    %v5502 = vadd.f32 %v3772, %v5501
    %5503 = vmatprep.mubr.bf16.mxu0 %v2765
    %5504 = vmatmul.mubr.bf16.gmra.mrb[0].mxu0 %v2764
    %v5505 = vpop.f32.mrb[0].mxu0
    %v5506 = vadd.f32 %v3776, %v5505
    %v5507 = vpop.f32.mrb[0].mxu0
    %v5508 = vadd.f32 %v3778, %v5507
    %v5509 = vpop.f32.mrb[0].mxu0
    %v5510 = vadd.f32 %v3780, %v5509
    %v5511 = vpop.f32.mrb[0].mxu0
    %v5512 = vadd.f32 %v3782, %v5511
    %5513 = vmatprep.mubr.bf16.mxu0 %v2769
    %5514 = vmatmul.mubr.bf16.gmra.mrb[0].mxu0 %v2768
    %v5515 = vpop.f32.mrb[0].mxu0
    %v5516 = vadd.f32 %v3786, %v5515
    %v5517 = vpop.f32.mrb[0].mxu0
    %v5518 = vadd.f32 %v3788, %v5517
    %v5519 = vpop.f32.mrb[0].mxu0
    %v5520 = vadd.f32 %v3790, %v5519
    %v5521 = vpop.f32.mrb[0].mxu0
    %v5522 = vadd.f32 %v3792, %v5521
    %5523 = vdwg.mxu0
    %5524 = vmatprep.subr.bf16.mxu0 %v4708
    %5525 = vmatpush1.bf16.msra.mxu0 %v4707
    %5526 = vmatprep.subr.bf16.mxu0 %v4711
    %5527 = vmatpush1.bf16.msra.mxu0 %v4710
    %5528 = vmatprep.subr.bf16.mxu0 %v4714
    %5529 = vmatpush1.bf16.msra.mxu0 %v4713
    %5530 = vmatprep.subr.bf16.mxu0 %v4717
    %5531 = vmatpush1.bf16.msra.mxu0 %v4716
    %5532 = vmatprep.subr.bf16.mxu0 %v4720
    %5533 = vmatpush1.bf16.msra.mxu0 %v4719
    %5534 = vmatprep.subr.bf16.mxu0 %v4723
    %5535 = vmatpush1.bf16.msra.mxu0 %v4722
    %5536 = vmatprep.subr.bf16.mxu0 %v4726
    %5537 = vmatpush1.bf16.msra.mxu0 %v4725
    %5538 = vmatprep.subr.bf16.mxu0 %v4729
    %5539 = vmatpush1.bf16.msra.mxu0 %v4728
    %5540 = vmatprep.subr.bf16.mxu0 %v4732
    %5541 = vmatpush1.bf16.msra.mxu0 %v4731
    %5542 = vmatprep.subr.bf16.mxu0 %v4735
    %5543 = vmatpush1.bf16.msra.mxu0 %v4734
    %5544 = vmatprep.subr.bf16.mxu0 %v4738
    %5545 = vmatpush1.bf16.msra.mxu0 %v4737
    %5546 = vmatprep.subr.bf16.mxu0 %v4741
    %5547 = vmatpush1.bf16.msra.mxu0 %v4740
    %5548 = vmatprep.subr.bf16.mxu0 %v4744
    %5549 = vmatpush1.bf16.msra.mxu0 %v4743
    %5550 = vmatprep.subr.bf16.mxu0 %v4747
    %5551 = vmatpush1.bf16.msra.mxu0 %v4746
    %5552 = vmatprep.subr.bf16.mxu0 %v4750
    %5553 = vmatpush1.bf16.msra.mxu0 %v4749
    %5554 = vmatprep.subr.bf16.mxu0 %v4753
    %5555 = vmatpush1.bf16.msra.mxu0 %v4752
    %5556 = vmatprep.mubr.bf16.mxu0 %v2519
    %5557 = vmatmul.mubr.bf16.gmra.mrb[0].mxu0 %v2518
    %v5558 = vpop.f32.mrb[0].mxu0
    %v5559 = vadd.f32 %v4886, %v5558
    %v5560 = vpop.f32.mrb[0].mxu0
    %v5561 = vadd.f32 %v4888, %v5560
    %v5562 = vpop.f32.mrb[0].mxu0
    %v5563 = vadd.f32 %v4890, %v5562
    %v5564 = vpop.f32.mrb[0].mxu0
    %v5565 = vadd.f32 %v4892, %v5564
    %5566 = vmatprep.mubr.bf16.mxu0 %v2523
    %5567 = vmatmul.mubr.bf16.gmra.mrb[0].mxu0 %v2522
    %v5568 = vpop.f32.mrb[0].mxu0
    %v5569 = vadd.f32 %v4896, %v5568
    %v5570 = vpop.f32.mrb[0].mxu0
    %v5571 = vadd.f32 %v4898, %v5570
    %v5572 = vpop.f32.mrb[0].mxu0
    %v5573 = vadd.f32 %v4900, %v5572
    %v5574 = vpop.f32.mrb[0].mxu0
    %v5575 = vadd.f32 %v4902, %v5574
    %5576 = vmatprep.mubr.bf16.mxu0 %v2527
    %5577 = vmatmul.mubr.bf16.gmra.mrb[0].mxu0 %v2526
    %v5578 = vpop.f32.mrb[0].mxu0
    %v5579 = vadd.f32 %v4906, %v5578
    %v5580 = vpop.f32.mrb[0].mxu0
    %v5581 = vadd.f32 %v4908, %v5580
    %v5582 = vpop.f32.mrb[0].mxu0
    %v5583 = vadd.f32 %v4910, %v5582
    %v5584 = vpop.f32.mrb[0].mxu0
    %v5585 = vadd.f32 %v4912, %v5584
    %5586 = vmatprep.mubr.bf16.mxu0 %v2531
    %5587 = vmatmul.mubr.bf16.gmra.mrb[0].mxu0 %v2530
    %v5588 = vpop.f32.mrb[0].mxu0
    %v5589 = vadd.f32 %v4916, %v5588
    %v5590 = vpop.f32.mrb[0].mxu0
    %v5591 = vadd.f32 %v4918, %v5590
    %v5592 = vpop.f32.mrb[0].mxu0
    %v5593 = vadd.f32 %v4920, %v5592
    %v5594 = vpop.f32.mrb[0].mxu0
    %v5595 = vadd.f32 %v4922, %v5594
    %5596 = vmatprep.mubr.bf16.mxu0 %v2535
    %5597 = vmatmul.mubr.bf16.gmra.mrb[0].mxu0 %v2534
    %v5598 = vpop.f32.mrb[0].mxu0
    %v5599 = vadd.f32 %v4926, %v5598
    %v5600 = vpop.f32.mrb[0].mxu0
    %v5601 = vadd.f32 %v4928, %v5600
    %v5602 = vpop.f32.mrb[0].mxu0
    %v5603 = vadd.f32 %v4930, %v5602
    %v5604 = vpop.f32.mrb[0].mxu0
    %v5605 = vadd.f32 %v4932, %v5604
    %5606 = vmatprep.mubr.bf16.mxu0 %v2539
    %5607 = vmatmul.mubr.bf16.gmra.mrb[0].mxu0 %v2538
    %v5608 = vpop.f32.mrb[0].mxu0
    %v5609 = vadd.f32 %v4936, %v5608
    %v5610 = vpop.f32.mrb[0].mxu0
    %v5611 = vadd.f32 %v4938, %v5610
    %v5612 = vpop.f32.mrb[0].mxu0
    %v5613 = vadd.f32 %v4940, %v5612
    %v5614 = vpop.f32.mrb[0].mxu0
    %v5615 = vadd.f32 %v4942, %v5614
    %5616 = vmatprep.mubr.bf16.mxu0 %v2543
    %5617 = vmatmul.mubr.bf16.gmra.mrb[0].mxu0 %v2542
    %v5618 = vpop.f32.mrb[0].mxu0
    %v5619 = vadd.f32 %v4946, %v5618
    %v5620 = vpop.f32.mrb[0].mxu0
    %v5621 = vadd.f32 %v4948, %v5620
    %v5622 = vpop.f32.mrb[0].mxu0
    %v5623 = vadd.f32 %v4950, %v5622
    %v5624 = vpop.f32.mrb[0].mxu0
    %v5625 = vadd.f32 %v4952, %v5624
    %5626 = vmatprep.mubr.bf16.mxu0 %v2547
    %5627 = vmatmul.mubr.bf16.gmra.mrb[0].mxu0 %v2546
    %v5628 = vpop.f32.mrb[0].mxu0
    %v5629 = vadd.f32 %v4956, %v5628
    %v5630 = vpop.f32.mrb[0].mxu0
    %v5631 = vadd.f32 %v4958, %v5630
    %v5632 = vpop.f32.mrb[0].mxu0
    %v5633 = vadd.f32 %v4960, %v5632
    %v5634 = vpop.f32.mrb[0].mxu0
    %v5635 = vadd.f32 %v4962, %v5634
    %5636 = vmatprep.mubr.bf16.mxu0 %v2551
    %5637 = vmatmul.mubr.bf16.gmra.mrb[0].mxu0 %v2550
    %v5638 = vpop.f32.mrb[0].mxu0
    %v5639 = vadd.f32 %v4966, %v5638
    %v5640 = vpop.f32.mrb[0].mxu0
    %v5641 = vadd.f32 %v4968, %v5640
    %v5642 = vpop.f32.mrb[0].mxu0
    %v5643 = vadd.f32 %v4970, %v5642
    %v5644 = vpop.f32.mrb[0].mxu0
    %v5645 = vadd.f32 %v4972, %v5644
    %5646 = vmatprep.mubr.bf16.mxu0 %v2555
    %5647 = vmatmul.mubr.bf16.gmra.mrb[0].mxu0 %v2554
    %v5648 = vpop.f32.mrb[0].mxu0
    %v5649 = vadd.f32 %v4976, %v5648
    %v5650 = vpop.f32.mrb[0].mxu0
    %v5651 = vadd.f32 %v4978, %v5650
    %v5652 = vpop.f32.mrb[0].mxu0
    %v5653 = vadd.f32 %v4980, %v5652
    %v5654 = vpop.f32.mrb[0].mxu0
    %v5655 = vadd.f32 %v4982, %v5654
    %5656 = vmatprep.mubr.bf16.mxu0 %v2559
    %5657 = vmatmul.mubr.bf16.gmra.mrb[0].mxu0 %v2558
    %v5658 = vpop.f32.mrb[0].mxu0
    %v5659 = vadd.f32 %v4986, %v5658
    %v5660 = vpop.f32.mrb[0].mxu0
    %v5661 = vadd.f32 %v4988, %v5660
    %v5662 = vpop.f32.mrb[0].mxu0
    %v5663 = vadd.f32 %v4990, %v5662
    %v5664 = vpop.f32.mrb[0].mxu0
    %v5665 = vadd.f32 %v4992, %v5664
    %5666 = vmatprep.mubr.bf16.mxu0 %v2563
    %5667 = vmatmul.mubr.bf16.gmra.mrb[0].mxu0 %v2562
    %v5668 = vpop.f32.mrb[0].mxu0
    %v5669 = vadd.f32 %v4996, %v5668
    %v5670 = vpop.f32.mrb[0].mxu0
    %v5671 = vadd.f32 %v4998, %v5670
    %v5672 = vpop.f32.mrb[0].mxu0
    %v5673 = vadd.f32 %v5000, %v5672
    %v5674 = vpop.f32.mrb[0].mxu0
    %v5675 = vadd.f32 %v5002, %v5674
    %5676 = vmatprep.mubr.bf16.mxu0 %v2567
    %5677 = vmatmul.mubr.bf16.gmra.mrb[0].mxu0 %v2566
    %v5678 = vpop.f32.mrb[0].mxu0
    %v5679 = vadd.f32 %v5006, %v5678
    %v5680 = vpop.f32.mrb[0].mxu0
    %v5681 = vadd.f32 %v5008, %v5680
    %v5682 = vpop.f32.mrb[0].mxu0
    %v5683 = vadd.f32 %v5010, %v5682
    %v5684 = vpop.f32.mrb[0].mxu0
    %v5685 = vadd.f32 %v5012, %v5684
    %5686 = vmatprep.mubr.bf16.mxu0 %v2571
    %5687 = vmatmul.mubr.bf16.gmra.mrb[0].mxu0 %v2570
    %v5688 = vpop.f32.mrb[0].mxu0
    %v5689 = vadd.f32 %v5016, %v5688
    %v5690 = vpop.f32.mrb[0].mxu0
    %v5691 = vadd.f32 %v5018, %v5690
    %v5692 = vpop.f32.mrb[0].mxu0
    %v5693 = vadd.f32 %v5020, %v5692
    %v5694 = vpop.f32.mrb[0].mxu0
    %v5695 = vadd.f32 %v5022, %v5694
    %5696 = vmatprep.mubr.bf16.mxu0 %v2575
    %5697 = vmatmul.mubr.bf16.gmra.mrb[0].mxu0 %v2574
    %v5698 = vpop.f32.mrb[0].mxu0
    %v5699 = vadd.f32 %v5026, %v5698
    %v5700 = vpop.f32.mrb[0].mxu0
    %v5701 = vadd.f32 %v5028, %v5700
    %v5702 = vpop.f32.mrb[0].mxu0
    %v5703 = vadd.f32 %v5030, %v5702
    %v5704 = vpop.f32.mrb[0].mxu0
    %v5705 = vadd.f32 %v5032, %v5704
    %5706 = vmatprep.mubr.bf16.mxu0 %v2579
    %5707 = vmatmul.mubr.bf16.gmra.mrb[0].mxu0 %v2578
    %v5708 = vpop.f32.mrb[0].mxu0
    %v5709 = vadd.f32 %v5036, %v5708
    %v5710 = vpop.f32.mrb[0].mxu0
    %v5711 = vadd.f32 %v5038, %v5710
    %v5712 = vpop.f32.mrb[0].mxu0
    %v5713 = vadd.f32 %v5040, %v5712
    %v5714 = vpop.f32.mrb[0].mxu0
    %v5715 = vadd.f32 %v5042, %v5714
    %5716 = vmatprep.mubr.bf16.mxu0 %v2583
    %5717 = vmatmul.mubr.bf16.gmra.mrb[0].mxu0 %v2582
    %v5718 = vpop.f32.mrb[0].mxu0
    %v5719 = vadd.f32 %v5046, %v5718
    %v5720 = vpop.f32.mrb[0].mxu0
    %v5721 = vadd.f32 %v5048, %v5720
    %v5722 = vpop.f32.mrb[0].mxu0
    %v5723 = vadd.f32 %v5050, %v5722
    %v5724 = vpop.f32.mrb[0].mxu0
    %v5725 = vadd.f32 %v5052, %v5724
    %5726 = vmatprep.mubr.bf16.mxu0 %v2587
    %5727 = vmatmul.mubr.bf16.gmra.mrb[0].mxu0 %v2586
    %v5728 = vpop.f32.mrb[0].mxu0
    %v5729 = vadd.f32 %v5056, %v5728
    %v5730 = vpop.f32.mrb[0].mxu0
    %v5731 = vadd.f32 %v5058, %v5730
    %v5732 = vpop.f32.mrb[0].mxu0
    %v5733 = vadd.f32 %v5060, %v5732
    %v5734 = vpop.f32.mrb[0].mxu0
    %v5735 = vadd.f32 %v5062, %v5734
    %5736 = vmatprep.mubr.bf16.mxu0 %v2591
    %5737 = vmatmul.mubr.bf16.gmra.mrb[0].mxu0 %v2590
    %v5738 = vpop.f32.mrb[0].mxu0
    %v5739 = vadd.f32 %v5066, %v5738
    %v5740 = vpop.f32.mrb[0].mxu0
    %v5741 = vadd.f32 %v5068, %v5740
    %v5742 = vpop.f32.mrb[0].mxu0
    %v5743 = vadd.f32 %v5070, %v5742
    %v5744 = vpop.f32.mrb[0].mxu0
    %v5745 = vadd.f32 %v5072, %v5744
    %5746 = vmatprep.mubr.bf16.mxu0 %v2595
    %5747 = vmatmul.mubr.bf16.gmra.mrb[0].mxu0 %v2594
    %v5748 = vpop.f32.mrb[0].mxu0
    %v5749 = vadd.f32 %v5076, %v5748
    %v5750 = vpop.f32.mrb[0].mxu0
    %v5751 = vadd.f32 %v5078, %v5750
    %v5752 = vpop.f32.mrb[0].mxu0
    %v5753 = vadd.f32 %v5080, %v5752
    %v5754 = vpop.f32.mrb[0].mxu0
    %v5755 = vadd.f32 %v5082, %v5754
    %5756 = vmatprep.mubr.bf16.mxu0 %v2599
    %5757 = vmatmul.mubr.bf16.gmra.mrb[0].mxu0 %v2598
    %v5758 = vpop.f32.mrb[0].mxu0
    %v5759 = vadd.f32 %v5086, %v5758
    %v5760 = vpop.f32.mrb[0].mxu0
    %v5761 = vadd.f32 %v5088, %v5760
    %v5762 = vpop.f32.mrb[0].mxu0
    %v5763 = vadd.f32 %v5090, %v5762
    %v5764 = vpop.f32.mrb[0].mxu0
    %v5765 = vadd.f32 %v5092, %v5764
    %5766 = vmatprep.mubr.bf16.mxu0 %v2603
    %5767 = vmatmul.mubr.bf16.gmra.mrb[0].mxu0 %v2602
    %v5768 = vpop.f32.mrb[0].mxu0
    %v5769 = vadd.f32 %v5096, %v5768
    %v5770 = vpop.f32.mrb[0].mxu0
    %v5771 = vadd.f32 %v5098, %v5770
    %v5772 = vpop.f32.mrb[0].mxu0
    %v5773 = vadd.f32 %v5100, %v5772
    %v5774 = vpop.f32.mrb[0].mxu0
    %v5775 = vadd.f32 %v5102, %v5774
    %5776 = vmatprep.mubr.bf16.mxu0 %v2607
    %5777 = vmatmul.mubr.bf16.gmra.mrb[0].mxu0 %v2606
    %v5778 = vpop.f32.mrb[0].mxu0
    %v5779 = vadd.f32 %v5106, %v5778
    %v5780 = vpop.f32.mrb[0].mxu0
    %v5781 = vadd.f32 %v5108, %v5780
    %v5782 = vpop.f32.mrb[0].mxu0
    %v5783 = vadd.f32 %v5110, %v5782
    %v5784 = vpop.f32.mrb[0].mxu0
    %v5785 = vadd.f32 %v5112, %v5784
    %5786 = vmatprep.mubr.bf16.mxu0 %v2611
    %5787 = vmatmul.mubr.bf16.gmra.mrb[0].mxu0 %v2610
    %v5788 = vpop.f32.mrb[0].mxu0
    %v5789 = vadd.f32 %v5116, %v5788
    %v5790 = vpop.f32.mrb[0].mxu0
    %v5791 = vadd.f32 %v5118, %v5790
    %v5792 = vpop.f32.mrb[0].mxu0
    %v5793 = vadd.f32 %v5120, %v5792
    %v5794 = vpop.f32.mrb[0].mxu0
    %v5795 = vadd.f32 %v5122, %v5794
    %5796 = vmatprep.mubr.bf16.mxu0 %v2615
    %5797 = vmatmul.mubr.bf16.gmra.mrb[0].mxu0 %v2614
    %v5798 = vpop.f32.mrb[0].mxu0
    %v5799 = vadd.f32 %v5126, %v5798
    %v5800 = vpop.f32.mrb[0].mxu0
    %v5801 = vadd.f32 %v5128, %v5800
    %v5802 = vpop.f32.mrb[0].mxu0
    %v5803 = vadd.f32 %v5130, %v5802
    %v5804 = vpop.f32.mrb[0].mxu0
    %v5805 = vadd.f32 %v5132, %v5804
    %5806 = vmatprep.mubr.bf16.mxu0 %v2619
    %5807 = vmatmul.mubr.bf16.gmra.mrb[0].mxu0 %v2618
    %v5808 = vpop.f32.mrb[0].mxu0
    %v5809 = vadd.f32 %v5136, %v5808
    %v5810 = vpop.f32.mrb[0].mxu0
    %v5811 = vadd.f32 %v5138, %v5810
    %v5812 = vpop.f32.mrb[0].mxu0
    %v5813 = vadd.f32 %v5140, %v5812
    %v5814 = vpop.f32.mrb[0].mxu0
    %v5815 = vadd.f32 %v5142, %v5814
    %5816 = vmatprep.mubr.bf16.mxu0 %v2623
    %5817 = vmatmul.mubr.bf16.gmra.mrb[0].mxu0 %v2622
    %v5818 = vpop.f32.mrb[0].mxu0
    %v5819 = vadd.f32 %v5146, %v5818
    %v5820 = vpop.f32.mrb[0].mxu0
    %v5821 = vadd.f32 %v5148, %v5820
    %v5822 = vpop.f32.mrb[0].mxu0
    %v5823 = vadd.f32 %v5150, %v5822
    %v5824 = vpop.f32.mrb[0].mxu0
    %v5825 = vadd.f32 %v5152, %v5824
    %5826 = vmatprep.mubr.bf16.mxu0 %v2627
    %5827 = vmatmul.mubr.bf16.gmra.mrb[0].mxu0 %v2626
    %v5828 = vpop.f32.mrb[0].mxu0
    %v5829 = vadd.f32 %v5156, %v5828
    %v5830 = vpop.f32.mrb[0].mxu0
    %v5831 = vadd.f32 %v5158, %v5830
    %v5832 = vpop.f32.mrb[0].mxu0
    %v5833 = vadd.f32 %v5160, %v5832
    %v5834 = vpop.f32.mrb[0].mxu0
    %v5835 = vadd.f32 %v5162, %v5834
    %5836 = vmatprep.mubr.bf16.mxu0 %v2631
    %5837 = vmatmul.mubr.bf16.gmra.mrb[0].mxu0 %v2630
    %v5838 = vpop.f32.mrb[0].mxu0
    %v5839 = vadd.f32 %v5166, %v5838
    %v5840 = vpop.f32.mrb[0].mxu0
    %v5841 = vadd.f32 %v5168, %v5840
    %v5842 = vpop.f32.mrb[0].mxu0
    %v5843 = vadd.f32 %v5170, %v5842
    %v5844 = vpop.f32.mrb[0].mxu0
    %v5845 = vadd.f32 %v5172, %v5844
    %5846 = vmatprep.mubr.bf16.mxu0 %v2635
    %5847 = vmatmul.mubr.bf16.gmra.mrb[0].mxu0 %v2634
    %v5848 = vpop.f32.mrb[0].mxu0
    %v5849 = vadd.f32 %v5176, %v5848
    %v5850 = vpop.f32.mrb[0].mxu0
    %v5851 = vadd.f32 %v5178, %v5850
    %v5852 = vpop.f32.mrb[0].mxu0
    %v5853 = vadd.f32 %v5180, %v5852
    %v5854 = vpop.f32.mrb[0].mxu0
    %v5855 = vadd.f32 %v5182, %v5854
    %5856 = vmatprep.mubr.bf16.mxu0 %v2639
    %5857 = vmatmul.mubr.bf16.gmra.mrb[0].mxu0 %v2638
    %v5858 = vpop.f32.mrb[0].mxu0
    %v5859 = vadd.f32 %v5186, %v5858
    %v5860 = vpop.f32.mrb[0].mxu0
    %v5861 = vadd.f32 %v5188, %v5860
    %v5862 = vpop.f32.mrb[0].mxu0
    %v5863 = vadd.f32 %v5190, %v5862
    %v5864 = vpop.f32.mrb[0].mxu0
    %v5865 = vadd.f32 %v5192, %v5864
    %5866 = vmatprep.mubr.bf16.mxu0 %v2643
    %5867 = vmatmul.mubr.bf16.gmra.mrb[0].mxu0 %v2642
    %v5868 = vpop.f32.mrb[0].mxu0
    %v5869 = vadd.f32 %v5196, %v5868
    %v5870 = vpop.f32.mrb[0].mxu0
    %v5871 = vadd.f32 %v5198, %v5870
    %v5872 = vpop.f32.mrb[0].mxu0
    %v5873 = vadd.f32 %v5200, %v5872
    %v5874 = vpop.f32.mrb[0].mxu0
    %v5875 = vadd.f32 %v5202, %v5874
    %5876 = vmatprep.mubr.bf16.mxu0 %v2647
    %5877 = vmatmul.mubr.bf16.gmra.mrb[0].mxu0 %v2646
    %v5878 = vpop.f32.mrb[0].mxu0
    %v5879 = vadd.f32 %v5206, %v5878
    %v5880 = vpop.f32.mrb[0].mxu0
    %v5881 = vadd.f32 %v5208, %v5880
    %v5882 = vpop.f32.mrb[0].mxu0
    %v5883 = vadd.f32 %v5210, %v5882
    %v5884 = vpop.f32.mrb[0].mxu0
    %v5885 = vadd.f32 %v5212, %v5884
    %5886 = vmatprep.mubr.bf16.mxu0 %v2651
    %5887 = vmatmul.mubr.bf16.gmra.mrb[0].mxu0 %v2650
    %v5888 = vpop.f32.mrb[0].mxu0
    %v5889 = vadd.f32 %v5216, %v5888
    %v5890 = vpop.f32.mrb[0].mxu0
    %v5891 = vadd.f32 %v5218, %v5890
    %v5892 = vpop.f32.mrb[0].mxu0
    %v5893 = vadd.f32 %v5220, %v5892
    %v5894 = vpop.f32.mrb[0].mxu0
    %v5895 = vadd.f32 %v5222, %v5894
    %5896 = vmatprep.mubr.bf16.mxu0 %v2655
    %5897 = vmatmul.mubr.bf16.gmra.mrb[0].mxu0 %v2654
    %v5898 = vpop.f32.mrb[0].mxu0
    %v5899 = vadd.f32 %v5226, %v5898
    %v5900 = vpop.f32.mrb[0].mxu0
    %v5901 = vadd.f32 %v5228, %v5900
    %v5902 = vpop.f32.mrb[0].mxu0
    %v5903 = vadd.f32 %v5230, %v5902
    %v5904 = vpop.f32.mrb[0].mxu0
    %v5905 = vadd.f32 %v5232, %v5904
    %5906 = vmatprep.mubr.bf16.mxu0 %v2659
    %5907 = vmatmul.mubr.bf16.gmra.mrb[0].mxu0 %v2658
    %v5908 = vpop.f32.mrb[0].mxu0
    %v5909 = vadd.f32 %v5236, %v5908
    %v5910 = vpop.f32.mrb[0].mxu0
    %v5911 = vadd.f32 %v5238, %v5910
    %v5912 = vpop.f32.mrb[0].mxu0
    %v5913 = vadd.f32 %v5240, %v5912
    %v5914 = vpop.f32.mrb[0].mxu0
    %v5915 = vadd.f32 %v5242, %v5914
    %5916 = vmatprep.mubr.bf16.mxu0 %v2663
    %5917 = vmatmul.mubr.bf16.gmra.mrb[0].mxu0 %v2662
    %v5918 = vpop.f32.mrb[0].mxu0
    %v5919 = vadd.f32 %v5246, %v5918
    %v5920 = vpop.f32.mrb[0].mxu0
    %v5921 = vadd.f32 %v5248, %v5920
    %v5922 = vpop.f32.mrb[0].mxu0
    %v5923 = vadd.f32 %v5250, %v5922
    %v5924 = vpop.f32.mrb[0].mxu0
    %v5925 = vadd.f32 %v5252, %v5924
    %5926 = vmatprep.mubr.bf16.mxu0 %v2667
    %5927 = vmatmul.mubr.bf16.gmra.mrb[0].mxu0 %v2666
    %v5928 = vpop.f32.mrb[0].mxu0
    %v5929 = vadd.f32 %v5256, %v5928
    %v5930 = vpop.f32.mrb[0].mxu0
    %v5931 = vadd.f32 %v5258, %v5930
    %v5932 = vpop.f32.mrb[0].mxu0
    %v5933 = vadd.f32 %v5260, %v5932
    %v5934 = vpop.f32.mrb[0].mxu0
    %v5935 = vadd.f32 %v5262, %v5934
    %5936 = vmatprep.mubr.bf16.mxu0 %v2671
    %5937 = vmatmul.mubr.bf16.gmra.mrb[0].mxu0 %v2670
    %v5938 = vpop.f32.mrb[0].mxu0
    %v5939 = vadd.f32 %v5266, %v5938
    %v5940 = vpop.f32.mrb[0].mxu0
    %v5941 = vadd.f32 %v5268, %v5940
    %v5942 = vpop.f32.mrb[0].mxu0
    %v5943 = vadd.f32 %v5270, %v5942
    %v5944 = vpop.f32.mrb[0].mxu0
    %v5945 = vadd.f32 %v5272, %v5944
    %5946 = vmatprep.mubr.bf16.mxu0 %v2675
    %5947 = vmatmul.mubr.bf16.gmra.mrb[0].mxu0 %v2674
    %v5948 = vpop.f32.mrb[0].mxu0
    %v5949 = vadd.f32 %v5276, %v5948
    %v5950 = vpop.f32.mrb[0].mxu0
    %v5951 = vadd.f32 %v5278, %v5950
    %v5952 = vpop.f32.mrb[0].mxu0
    %v5953 = vadd.f32 %v5280, %v5952
    %v5954 = vpop.f32.mrb[0].mxu0
    %v5955 = vadd.f32 %v5282, %v5954
    %5956 = vmatprep.mubr.bf16.mxu0 %v2679
    %5957 = vmatmul.mubr.bf16.gmra.mrb[0].mxu0 %v2678
    %v5958 = vpop.f32.mrb[0].mxu0
    %v5959 = vadd.f32 %v5286, %v5958
    %v5960 = vpop.f32.mrb[0].mxu0
    %v5961 = vadd.f32 %v5288, %v5960
    %v5962 = vpop.f32.mrb[0].mxu0
    %v5963 = vadd.f32 %v5290, %v5962
    %v5964 = vpop.f32.mrb[0].mxu0
    %v5965 = vadd.f32 %v5292, %v5964
    %5966 = vmatprep.mubr.bf16.mxu0 %v2683
    %5967 = vmatmul.mubr.bf16.gmra.mrb[0].mxu0 %v2682
    %v5968 = vpop.f32.mrb[0].mxu0
    %v5969 = vadd.f32 %v5296, %v5968
    %v5970 = vpop.f32.mrb[0].mxu0
    %v5971 = vadd.f32 %v5298, %v5970
    %v5972 = vpop.f32.mrb[0].mxu0
    %v5973 = vadd.f32 %v5300, %v5972
    %v5974 = vpop.f32.mrb[0].mxu0
    %v5975 = vadd.f32 %v5302, %v5974
    %5976 = vmatprep.mubr.bf16.mxu0 %v2687
    %5977 = vmatmul.mubr.bf16.gmra.mrb[0].mxu0 %v2686
    %v5978 = vpop.f32.mrb[0].mxu0
    %v5979 = vadd.f32 %v5306, %v5978
    %v5980 = vpop.f32.mrb[0].mxu0
    %v5981 = vadd.f32 %v5308, %v5980
    %v5982 = vpop.f32.mrb[0].mxu0
    %v5983 = vadd.f32 %v5310, %v5982
    %v5984 = vpop.f32.mrb[0].mxu0
    %v5985 = vadd.f32 %v5312, %v5984
    %5986 = vmatprep.mubr.bf16.mxu0 %v2691
    %5987 = vmatmul.mubr.bf16.gmra.mrb[0].mxu0 %v2690
    %v5988 = vpop.f32.mrb[0].mxu0
    %v5989 = vadd.f32 %v5316, %v5988
    %v5990 = vpop.f32.mrb[0].mxu0
    %v5991 = vadd.f32 %v5318, %v5990
    %v5992 = vpop.f32.mrb[0].mxu0
    %v5993 = vadd.f32 %v5320, %v5992
    %v5994 = vpop.f32.mrb[0].mxu0
    %v5995 = vadd.f32 %v5322, %v5994
    %5996 = vmatprep.mubr.bf16.mxu0 %v2695
    %5997 = vmatmul.mubr.bf16.gmra.mrb[0].mxu0 %v2694
    %v5998 = vpop.f32.mrb[0].mxu0
    %v5999 = vadd.f32 %v5326, %v5998
    %v6000 = vpop.f32.mrb[0].mxu0
    %v6001 = vadd.f32 %v5328, %v6000
    %v6002 = vpop.f32.mrb[0].mxu0
    %v6003 = vadd.f32 %v5330, %v6002
    %v6004 = vpop.f32.mrb[0].mxu0
    %v6005 = vadd.f32 %v5332, %v6004
    %6006 = vmatprep.mubr.bf16.mxu0 %v2699
    %6007 = vmatmul.mubr.bf16.gmra.mrb[0].mxu0 %v2698
    %v6008 = vpop.f32.mrb[0].mxu0
    %v6009 = vadd.f32 %v5336, %v6008
    %v6010 = vpop.f32.mrb[0].mxu0
    %v6011 = vadd.f32 %v5338, %v6010
    %v6012 = vpop.f32.mrb[0].mxu0
    %v6013 = vadd.f32 %v5340, %v6012
    %v6014 = vpop.f32.mrb[0].mxu0
    %v6015 = vadd.f32 %v5342, %v6014
    %6016 = vmatprep.mubr.bf16.mxu0 %v2703
    %6017 = vmatmul.mubr.bf16.gmra.mrb[0].mxu0 %v2702
    %v6018 = vpop.f32.mrb[0].mxu0
    %v6019 = vadd.f32 %v5346, %v6018
    %v6020 = vpop.f32.mrb[0].mxu0
    %v6021 = vadd.f32 %v5348, %v6020
    %v6022 = vpop.f32.mrb[0].mxu0
    %v6023 = vadd.f32 %v5350, %v6022
    %v6024 = vpop.f32.mrb[0].mxu0
    %v6025 = vadd.f32 %v5352, %v6024
    %6026 = vmatprep.mubr.bf16.mxu0 %v2707
    %6027 = vmatmul.mubr.bf16.gmra.mrb[0].mxu0 %v2706
    %v6028 = vpop.f32.mrb[0].mxu0
    %v6029 = vadd.f32 %v5356, %v6028
    %v6030 = vpop.f32.mrb[0].mxu0
    %v6031 = vadd.f32 %v5358, %v6030
    %v6032 = vpop.f32.mrb[0].mxu0
    %v6033 = vadd.f32 %v5360, %v6032
    %v6034 = vpop.f32.mrb[0].mxu0
    %v6035 = vadd.f32 %v5362, %v6034
    %6036 = vmatprep.mubr.bf16.mxu0 %v2711
    %6037 = vmatmul.mubr.bf16.gmra.mrb[0].mxu0 %v2710
    %v6038 = vpop.f32.mrb[0].mxu0
    %v6039 = vadd.f32 %v5366, %v6038
    %v6040 = vpop.f32.mrb[0].mxu0
    %v6041 = vadd.f32 %v5368, %v6040
    %v6042 = vpop.f32.mrb[0].mxu0
    %v6043 = vadd.f32 %v5370, %v6042
    %v6044 = vpop.f32.mrb[0].mxu0
    %v6045 = vadd.f32 %v5372, %v6044
    %6046 = vmatprep.mubr.bf16.mxu0 %v2715
    %6047 = vmatmul.mubr.bf16.gmra.mrb[0].mxu0 %v2714
    %v6048 = vpop.f32.mrb[0].mxu0
    %v6049 = vadd.f32 %v5376, %v6048
    %v6050 = vpop.f32.mrb[0].mxu0
    %v6051 = vadd.f32 %v5378, %v6050
    %v6052 = vpop.f32.mrb[0].mxu0
    %v6053 = vadd.f32 %v5380, %v6052
    %v6054 = vpop.f32.mrb[0].mxu0
    %v6055 = vadd.f32 %v5382, %v6054
    %6056 = vmatprep.mubr.bf16.mxu0 %v2719
    %6057 = vmatmul.mubr.bf16.gmra.mrb[0].mxu0 %v2718
    %v6058 = vpop.f32.mrb[0].mxu0
    %v6059 = vadd.f32 %v5386, %v6058
    %v6060 = vpop.f32.mrb[0].mxu0
    %v6061 = vadd.f32 %v5388, %v6060
    %v6062 = vpop.f32.mrb[0].mxu0
    %v6063 = vadd.f32 %v5390, %v6062
    %v6064 = vpop.f32.mrb[0].mxu0
    %v6065 = vadd.f32 %v5392, %v6064
    %6066 = vmatprep.mubr.bf16.mxu0 %v2723
    %6067 = vmatmul.mubr.bf16.gmra.mrb[0].mxu0 %v2722
    %v6068 = vpop.f32.mrb[0].mxu0
    %v6069 = vadd.f32 %v5396, %v6068
    %v6070 = vpop.f32.mrb[0].mxu0
    %v6071 = vadd.f32 %v5398, %v6070
    %v6072 = vpop.f32.mrb[0].mxu0
    %v6073 = vadd.f32 %v5400, %v6072
    %v6074 = vpop.f32.mrb[0].mxu0
    %v6075 = vadd.f32 %v5402, %v6074
    %6076 = vmatprep.mubr.bf16.mxu0 %v2727
    %6077 = vmatmul.mubr.bf16.gmra.mrb[0].mxu0 %v2726
    %v6078 = vpop.f32.mrb[0].mxu0
    %v6079 = vadd.f32 %v5406, %v6078
    %v6080 = vpop.f32.mrb[0].mxu0
    %v6081 = vadd.f32 %v5408, %v6080
    %v6082 = vpop.f32.mrb[0].mxu0
    %v6083 = vadd.f32 %v5410, %v6082
    %v6084 = vpop.f32.mrb[0].mxu0
    %v6085 = vadd.f32 %v5412, %v6084
    %6086 = vmatprep.mubr.bf16.mxu0 %v2731
    %6087 = vmatmul.mubr.bf16.gmra.mrb[0].mxu0 %v2730
    %v6088 = vpop.f32.mrb[0].mxu0
    %v6089 = vadd.f32 %v5416, %v6088
    %v6090 = vpop.f32.mrb[0].mxu0
    %v6091 = vadd.f32 %v5418, %v6090
    %v6092 = vpop.f32.mrb[0].mxu0
    %v6093 = vadd.f32 %v5420, %v6092
    %v6094 = vpop.f32.mrb[0].mxu0
    %v6095 = vadd.f32 %v5422, %v6094
    %6096 = vmatprep.mubr.bf16.mxu0 %v2735
    %6097 = vmatmul.mubr.bf16.gmra.mrb[0].mxu0 %v2734
    %v6098 = vpop.f32.mrb[0].mxu0
    %v6099 = vadd.f32 %v5426, %v6098
    %v6100 = vpop.f32.mrb[0].mxu0
    %v6101 = vadd.f32 %v5428, %v6100
    %v6102 = vpop.f32.mrb[0].mxu0
    %v6103 = vadd.f32 %v5430, %v6102
    %v6104 = vpop.f32.mrb[0].mxu0
    %v6105 = vadd.f32 %v5432, %v6104
    %6106 = vmatprep.mubr.bf16.mxu0 %v2739
    %6107 = vmatmul.mubr.bf16.gmra.mrb[0].mxu0 %v2738
    %v6108 = vpop.f32.mrb[0].mxu0
    %v6109 = vadd.f32 %v5436, %v6108
    %v6110 = vpop.f32.mrb[0].mxu0
    %v6111 = vadd.f32 %v5438, %v6110
    %v6112 = vpop.f32.mrb[0].mxu0
    %v6113 = vadd.f32 %v5440, %v6112
    %v6114 = vpop.f32.mrb[0].mxu0
    %v6115 = vadd.f32 %v5442, %v6114
    %6116 = vmatprep.mubr.bf16.mxu0 %v2743
    %6117 = vmatmul.mubr.bf16.gmra.mrb[0].mxu0 %v2742
    %v6118 = vpop.f32.mrb[0].mxu0
    %v6119 = vadd.f32 %v5446, %v6118
    %v6120 = vpop.f32.mrb[0].mxu0
    %v6121 = vadd.f32 %v5448, %v6120
    %v6122 = vpop.f32.mrb[0].mxu0
    %v6123 = vadd.f32 %v5450, %v6122
    %v6124 = vpop.f32.mrb[0].mxu0
    %v6125 = vadd.f32 %v5452, %v6124
    %6126 = vmatprep.mubr.bf16.mxu0 %v2747
    %6127 = vmatmul.mubr.bf16.gmra.mrb[0].mxu0 %v2746
    %v6128 = vpop.f32.mrb[0].mxu0
    %v6129 = vadd.f32 %v5456, %v6128
    %v6130 = vpop.f32.mrb[0].mxu0
    %v6131 = vadd.f32 %v5458, %v6130
    %v6132 = vpop.f32.mrb[0].mxu0
    %v6133 = vadd.f32 %v5460, %v6132
    %v6134 = vpop.f32.mrb[0].mxu0
    %v6135 = vadd.f32 %v5462, %v6134
    %6136 = vmatprep.mubr.bf16.mxu0 %v2751
    %6137 = vmatmul.mubr.bf16.gmra.mrb[0].mxu0 %v2750
    %v6138 = vpop.f32.mrb[0].mxu0
    %v6139 = vadd.f32 %v5466, %v6138
    %v6140 = vpop.f32.mrb[0].mxu0
    %v6141 = vadd.f32 %v5468, %v6140
    %v6142 = vpop.f32.mrb[0].mxu0
    %v6143 = vadd.f32 %v5470, %v6142
    %v6144 = vpop.f32.mrb[0].mxu0
    %v6145 = vadd.f32 %v5472, %v6144
    %6146 = vmatprep.mubr.bf16.mxu0 %v2755
    %6147 = vmatmul.mubr.bf16.gmra.mrb[0].mxu0 %v2754
    %v6148 = vpop.f32.mrb[0].mxu0
    %v6149 = vadd.f32 %v5476, %v6148
    %v6150 = vpop.f32.mrb[0].mxu0
    %v6151 = vadd.f32 %v5478, %v6150
    %v6152 = vpop.f32.mrb[0].mxu0
    %v6153 = vadd.f32 %v5480, %v6152
    %v6154 = vpop.f32.mrb[0].mxu0
    %v6155 = vadd.f32 %v5482, %v6154
    %6156 = vmatprep.mubr.bf16.mxu0 %v2759
    %6157 = vmatmul.mubr.bf16.gmra.mrb[0].mxu0 %v2758
    %v6158 = vpop.f32.mrb[0].mxu0
    %v6159 = vadd.f32 %v5486, %v6158
    %v6160 = vpop.f32.mrb[0].mxu0
    %v6161 = vadd.f32 %v5488, %v6160
    %v6162 = vpop.f32.mrb[0].mxu0
    %v6163 = vadd.f32 %v5490, %v6162
    %v6164 = vpop.f32.mrb[0].mxu0
    %v6165 = vadd.f32 %v5492, %v6164
    %6166 = vmatprep.mubr.bf16.mxu0 %v2763
    %6167 = vmatmul.mubr.bf16.gmra.mrb[0].mxu0 %v2762
    %v6168 = vpop.f32.mrb[0].mxu0
    %v6169 = vadd.f32 %v5496, %v6168
    %v6170 = vpop.f32.mrb[0].mxu0
    %v6171 = vadd.f32 %v5498, %v6170
    %v6172 = vpop.f32.mrb[0].mxu0
    %v6173 = vadd.f32 %v5500, %v6172
    %v6174 = vpop.f32.mrb[0].mxu0
    %v6175 = vadd.f32 %v5502, %v6174
    %6176 = vmatprep.mubr.bf16.mxu0 %v2767
    %6177 = vmatmul.mubr.bf16.gmra.mrb[0].mxu0 %v2766
    %v6178 = vpop.f32.mrb[0].mxu0
    %v6179 = vadd.f32 %v5506, %v6178
    %v6180 = vpop.f32.mrb[0].mxu0
    %v6181 = vadd.f32 %v5508, %v6180
    %v6182 = vpop.f32.mrb[0].mxu0
    %v6183 = vadd.f32 %v5510, %v6182
    %v6184 = vpop.f32.mrb[0].mxu0
    %v6185 = vadd.f32 %v5512, %v6184
    %6186 = vmatprep.mubr.bf16.mxu0 %v2771
    %6187 = vmatmul.mubr.bf16.gmra.mrb[0].mxu0 %v2770
    %v6188 = vpop.f32.mrb[0].mxu0
    %v6189 = vadd.f32 %v5516, %v6188
    %v6190 = vpop.f32.mrb[0].mxu0
    %v6191 = vadd.f32 %v5518, %v6190
    %v6192 = vpop.f32.mrb[0].mxu0
    %v6193 = vadd.f32 %v5520, %v6192
    %v6194 = vpop.f32.mrb[0].mxu0
    %v6195 = vadd.f32 %v5522, %v6194
    %6196 = vdwg.mxu0
    %6197 = vmatprep.subr.bf16.mxu0 0
    %6198 = vmatpush1.bf16.msra.mxu0 %v4661
    %6199 = vmatprep.subr.bf16.mxu0 0
    %6200 = vmatpush1.bf16.msra.mxu0 %v4664
    %6201 = vmatprep.subr.bf16.mxu0 0
    %6202 = vmatpush1.bf16.msra.mxu0 %v4667
    %6203 = vmatprep.subr.bf16.mxu0 0
    %6204 = vmatpush1.bf16.msra.mxu0 %v4670
    %6205 = vmatprep.subr.bf16.mxu0 0
    %6206 = vmatpush1.bf16.msra.mxu0 %v4673
    %6207 = vmatprep.subr.bf16.mxu0 0
    %6208 = vmatpush1.bf16.msra.mxu0 %v4676
    %6209 = vmatprep.subr.bf16.mxu0 0
    %6210 = vmatpush1.bf16.msra.mxu0 %v4679
    %6211 = vmatprep.subr.bf16.mxu0 0
    %6212 = vmatpush1.bf16.msra.mxu0 %v4682
    %6213 = vmatprep.subr.bf16.mxu0 0
    %6214 = vmatpush1.bf16.msra.mxu0 %v4685
    %6215 = vmatprep.subr.bf16.mxu0 0
    %6216 = vmatpush1.bf16.msra.mxu0 %v4688
    %6217 = vmatprep.subr.bf16.mxu0 0
    %6218 = vmatpush1.bf16.msra.mxu0 %v4691
    %6219 = vmatprep.subr.bf16.mxu0 0
    %6220 = vmatpush1.bf16.msra.mxu0 %v4694
    %6221 = vmatprep.subr.bf16.mxu0 0
    %6222 = vmatpush1.bf16.msra.mxu0 %v4697
    %6223 = vmatprep.subr.bf16.mxu0 0
    %6224 = vmatpush1.bf16.msra.mxu0 %v4700
    %6225 = vmatprep.subr.bf16.mxu0 0
    %6226 = vmatpush1.bf16.msra.mxu0 %v4703
    %6227 = vmatprep.subr.bf16.mxu0 0
    %6228 = vmatpush1.bf16.msra.mxu0 %v4706
    %6229 = vmatprep.mubr.bf16.mxu0 %v2517
    %6230 = vmatmul.mubr.bf16.gmra.mrb[0].mxu0 %v2516
    %v6231 = vpop.f32.mrb[0].mxu0
    %v6232 = vadd.f32 %v3829, %v6231
    %v6233 = vpop.f32.mrb[0].mxu0
    %v6234 = vpop.f32.mrb[0].mxu0
    %v6235 = vadd.f32 %v3832, %v6234
    %v6236 = vpop.f32.mrb[0].mxu0
    %6237 = vmatprep.mubr.bf16.mxu0 %v2521
    %6238 = vmatmul.mubr.bf16.gmra.mrb[0].mxu0 %v2520
    %v6239 = vpop.f32.mrb[0].mxu0
    %v6240 = vadd.f32 %v3837, %v6239
    %v6241 = vpop.f32.mrb[0].mxu0
    %v6242 = vpop.f32.mrb[0].mxu0
    %v6243 = vadd.f32 %v3840, %v6242
    %v6244 = vpop.f32.mrb[0].mxu0
    %6245 = vmatprep.mubr.bf16.mxu0 %v2525
    %6246 = vmatmul.mubr.bf16.gmra.mrb[0].mxu0 %v2524
    %v6247 = vpop.f32.mrb[0].mxu0
    %v6248 = vadd.f32 %v3845, %v6247
    %v6249 = vpop.f32.mrb[0].mxu0
    %v6250 = vpop.f32.mrb[0].mxu0
    %v6251 = vadd.f32 %v3848, %v6250
    %v6252 = vpop.f32.mrb[0].mxu0
    %6253 = vmatprep.mubr.bf16.mxu0 %v2529
    %6254 = vmatmul.mubr.bf16.gmra.mrb[0].mxu0 %v2528
    %v6255 = vpop.f32.mrb[0].mxu0
    %v6256 = vadd.f32 %v3853, %v6255
    %v6257 = vpop.f32.mrb[0].mxu0
    %v6258 = vpop.f32.mrb[0].mxu0
    %v6259 = vadd.f32 %v3856, %v6258
    %v6260 = vpop.f32.mrb[0].mxu0
    %6261 = vmatprep.mubr.bf16.mxu0 %v2533
    %6262 = vmatmul.mubr.bf16.gmra.mrb[0].mxu0 %v2532
    %v6263 = vpop.f32.mrb[0].mxu0
    %v6264 = vadd.f32 %v3861, %v6263
    %v6265 = vpop.f32.mrb[0].mxu0
    %v6266 = vpop.f32.mrb[0].mxu0
    %v6267 = vadd.f32 %v3864, %v6266
    %v6268 = vpop.f32.mrb[0].mxu0
    %6269 = vmatprep.mubr.bf16.mxu0 %v2537
    %6270 = vmatmul.mubr.bf16.gmra.mrb[0].mxu0 %v2536
    %v6271 = vpop.f32.mrb[0].mxu0
    %v6272 = vadd.f32 %v3869, %v6271
    %v6273 = vpop.f32.mrb[0].mxu0
    %v6274 = vpop.f32.mrb[0].mxu0
    %v6275 = vadd.f32 %v3872, %v6274
    %v6276 = vpop.f32.mrb[0].mxu0
    %6277 = vmatprep.mubr.bf16.mxu0 %v2541
    %6278 = vmatmul.mubr.bf16.gmra.mrb[0].mxu0 %v2540
    %v6279 = vpop.f32.mrb[0].mxu0
    %v6280 = vadd.f32 %v3877, %v6279
    %v6281 = vpop.f32.mrb[0].mxu0
    %v6282 = vpop.f32.mrb[0].mxu0
    %v6283 = vadd.f32 %v3880, %v6282
    %v6284 = vpop.f32.mrb[0].mxu0
    %6285 = vmatprep.mubr.bf16.mxu0 %v2545
    %6286 = vmatmul.mubr.bf16.gmra.mrb[0].mxu0 %v2544
    %v6287 = vpop.f32.mrb[0].mxu0
    %v6288 = vadd.f32 %v3885, %v6287
    %v6289 = vpop.f32.mrb[0].mxu0
    %v6290 = vpop.f32.mrb[0].mxu0
    %v6291 = vadd.f32 %v3888, %v6290
    %v6292 = vpop.f32.mrb[0].mxu0
    %6293 = vmatprep.mubr.bf16.mxu0 %v2549
    %6294 = vmatmul.mubr.bf16.gmra.mrb[0].mxu0 %v2548
    %v6295 = vpop.f32.mrb[0].mxu0
    %v6296 = vadd.f32 %v3893, %v6295
    %v6297 = vpop.f32.mrb[0].mxu0
    %v6298 = vpop.f32.mrb[0].mxu0
    %v6299 = vadd.f32 %v3896, %v6298
    %v6300 = vpop.f32.mrb[0].mxu0
    %6301 = vmatprep.mubr.bf16.mxu0 %v2553
    %6302 = vmatmul.mubr.bf16.gmra.mrb[0].mxu0 %v2552
    %v6303 = vpop.f32.mrb[0].mxu0
    %v6304 = vadd.f32 %v3901, %v6303
    %v6305 = vpop.f32.mrb[0].mxu0
    %v6306 = vpop.f32.mrb[0].mxu0
    %v6307 = vadd.f32 %v3904, %v6306
    %v6308 = vpop.f32.mrb[0].mxu0
    %6309 = vmatprep.mubr.bf16.mxu0 %v2557
    %6310 = vmatmul.mubr.bf16.gmra.mrb[0].mxu0 %v2556
    %v6311 = vpop.f32.mrb[0].mxu0
    %v6312 = vadd.f32 %v3909, %v6311
    %v6313 = vpop.f32.mrb[0].mxu0
    %v6314 = vpop.f32.mrb[0].mxu0
    %v6315 = vadd.f32 %v3912, %v6314
    %v6316 = vpop.f32.mrb[0].mxu0
    %6317 = vmatprep.mubr.bf16.mxu0 %v2561
    %6318 = vmatmul.mubr.bf16.gmra.mrb[0].mxu0 %v2560
    %v6319 = vpop.f32.mrb[0].mxu0
    %v6320 = vadd.f32 %v3917, %v6319
    %v6321 = vpop.f32.mrb[0].mxu0
    %v6322 = vpop.f32.mrb[0].mxu0
    %v6323 = vadd.f32 %v3920, %v6322
    %v6324 = vpop.f32.mrb[0].mxu0
    %6325 = vmatprep.mubr.bf16.mxu0 %v2565
    %6326 = vmatmul.mubr.bf16.gmra.mrb[0].mxu0 %v2564
    %v6327 = vpop.f32.mrb[0].mxu0
    %v6328 = vadd.f32 %v3925, %v6327
    %v6329 = vpop.f32.mrb[0].mxu0
    %v6330 = vpop.f32.mrb[0].mxu0
    %v6331 = vadd.f32 %v3928, %v6330
    %v6332 = vpop.f32.mrb[0].mxu0
    %6333 = vmatprep.mubr.bf16.mxu0 %v2569
    %6334 = vmatmul.mubr.bf16.gmra.mrb[0].mxu0 %v2568
    %v6335 = vpop.f32.mrb[0].mxu0
    %v6336 = vadd.f32 %v3933, %v6335
    %v6337 = vpop.f32.mrb[0].mxu0
    %v6338 = vpop.f32.mrb[0].mxu0
    %v6339 = vadd.f32 %v3936, %v6338
    %v6340 = vpop.f32.mrb[0].mxu0
    %6341 = vmatprep.mubr.bf16.mxu0 %v2573
    %6342 = vmatmul.mubr.bf16.gmra.mrb[0].mxu0 %v2572
    %v6343 = vpop.f32.mrb[0].mxu0
    %v6344 = vadd.f32 %v3941, %v6343
    %v6345 = vpop.f32.mrb[0].mxu0
    %v6346 = vpop.f32.mrb[0].mxu0
    %v6347 = vadd.f32 %v3944, %v6346
    %v6348 = vpop.f32.mrb[0].mxu0
    %6349 = vmatprep.mubr.bf16.mxu0 %v2577
    %6350 = vmatmul.mubr.bf16.gmra.mrb[0].mxu0 %v2576
    %v6351 = vpop.f32.mrb[0].mxu0
    %v6352 = vadd.f32 %v3949, %v6351
    %v6353 = vpop.f32.mrb[0].mxu0
    %v6354 = vpop.f32.mrb[0].mxu0
    %v6355 = vadd.f32 %v3952, %v6354
    %v6356 = vpop.f32.mrb[0].mxu0
    %6357 = vmatprep.mubr.bf16.mxu0 %v2581
    %6358 = vmatmul.mubr.bf16.gmra.mrb[0].mxu0 %v2580
    %v6359 = vpop.f32.mrb[0].mxu0
    %v6360 = vadd.f32 %v3957, %v6359
    %v6361 = vpop.f32.mrb[0].mxu0
    %v6362 = vpop.f32.mrb[0].mxu0
    %v6363 = vadd.f32 %v3960, %v6362
    %v6364 = vpop.f32.mrb[0].mxu0
    %6365 = vmatprep.mubr.bf16.mxu0 %v2585
    %6366 = vmatmul.mubr.bf16.gmra.mrb[0].mxu0 %v2584
    %v6367 = vpop.f32.mrb[0].mxu0
    %v6368 = vadd.f32 %v3965, %v6367
    %v6369 = vpop.f32.mrb[0].mxu0
    %v6370 = vpop.f32.mrb[0].mxu0
    %v6371 = vadd.f32 %v3968, %v6370
    %v6372 = vpop.f32.mrb[0].mxu0
    %6373 = vmatprep.mubr.bf16.mxu0 %v2589
    %6374 = vmatmul.mubr.bf16.gmra.mrb[0].mxu0 %v2588
    %v6375 = vpop.f32.mrb[0].mxu0
    %v6376 = vadd.f32 %v3973, %v6375
    %v6377 = vpop.f32.mrb[0].mxu0
    %v6378 = vpop.f32.mrb[0].mxu0
    %v6379 = vadd.f32 %v3976, %v6378
    %v6380 = vpop.f32.mrb[0].mxu0
    %6381 = vmatprep.mubr.bf16.mxu0 %v2593
    %6382 = vmatmul.mubr.bf16.gmra.mrb[0].mxu0 %v2592
    %v6383 = vpop.f32.mrb[0].mxu0
    %v6384 = vadd.f32 %v3981, %v6383
    %v6385 = vpop.f32.mrb[0].mxu0
    %v6386 = vpop.f32.mrb[0].mxu0
    %v6387 = vadd.f32 %v3984, %v6386
    %v6388 = vpop.f32.mrb[0].mxu0
    %6389 = vmatprep.mubr.bf16.mxu0 %v2597
    %6390 = vmatmul.mubr.bf16.gmra.mrb[0].mxu0 %v2596
    %v6391 = vpop.f32.mrb[0].mxu0
    %v6392 = vadd.f32 %v3989, %v6391
    %v6393 = vpop.f32.mrb[0].mxu0
    %v6394 = vpop.f32.mrb[0].mxu0
    %v6395 = vadd.f32 %v3992, %v6394
    %v6396 = vpop.f32.mrb[0].mxu0
    %6397 = vmatprep.mubr.bf16.mxu0 %v2601
    %6398 = vmatmul.mubr.bf16.gmra.mrb[0].mxu0 %v2600
    %v6399 = vpop.f32.mrb[0].mxu0
    %v6400 = vadd.f32 %v3997, %v6399
    %v6401 = vpop.f32.mrb[0].mxu0
    %v6402 = vpop.f32.mrb[0].mxu0
    %v6403 = vadd.f32 %v4000, %v6402
    %v6404 = vpop.f32.mrb[0].mxu0
    %6405 = vmatprep.mubr.bf16.mxu0 %v2605
    %6406 = vmatmul.mubr.bf16.gmra.mrb[0].mxu0 %v2604
    %v6407 = vpop.f32.mrb[0].mxu0
    %v6408 = vadd.f32 %v4005, %v6407
    %v6409 = vpop.f32.mrb[0].mxu0
    %v6410 = vpop.f32.mrb[0].mxu0
    %v6411 = vadd.f32 %v4008, %v6410
    %v6412 = vpop.f32.mrb[0].mxu0
    %6413 = vmatprep.mubr.bf16.mxu0 %v2609
    %6414 = vmatmul.mubr.bf16.gmra.mrb[0].mxu0 %v2608
    %v6415 = vpop.f32.mrb[0].mxu0
    %v6416 = vadd.f32 %v4013, %v6415
    %v6417 = vpop.f32.mrb[0].mxu0
    %v6418 = vpop.f32.mrb[0].mxu0
    %v6419 = vadd.f32 %v4016, %v6418
    %v6420 = vpop.f32.mrb[0].mxu0
    %6421 = vmatprep.mubr.bf16.mxu0 %v2613
    %6422 = vmatmul.mubr.bf16.gmra.mrb[0].mxu0 %v2612
    %v6423 = vpop.f32.mrb[0].mxu0
    %v6424 = vadd.f32 %v4021, %v6423
    %v6425 = vpop.f32.mrb[0].mxu0
    %v6426 = vpop.f32.mrb[0].mxu0
    %v6427 = vadd.f32 %v4024, %v6426
    %v6428 = vpop.f32.mrb[0].mxu0
    %6429 = vmatprep.mubr.bf16.mxu0 %v2617
    %6430 = vmatmul.mubr.bf16.gmra.mrb[0].mxu0 %v2616
    %v6431 = vpop.f32.mrb[0].mxu0
    %v6432 = vadd.f32 %v4029, %v6431
    %v6433 = vpop.f32.mrb[0].mxu0
    %v6434 = vpop.f32.mrb[0].mxu0
    %v6435 = vadd.f32 %v4032, %v6434
    %v6436 = vpop.f32.mrb[0].mxu0
    %6437 = vmatprep.mubr.bf16.mxu0 %v2621
    %6438 = vmatmul.mubr.bf16.gmra.mrb[0].mxu0 %v2620
    %v6439 = vpop.f32.mrb[0].mxu0
    %v6440 = vadd.f32 %v4037, %v6439
    %v6441 = vpop.f32.mrb[0].mxu0
    %v6442 = vpop.f32.mrb[0].mxu0
    %v6443 = vadd.f32 %v4040, %v6442
    %v6444 = vpop.f32.mrb[0].mxu0
    %6445 = vmatprep.mubr.bf16.mxu0 %v2625
    %6446 = vmatmul.mubr.bf16.gmra.mrb[0].mxu0 %v2624
    %v6447 = vpop.f32.mrb[0].mxu0
    %v6448 = vadd.f32 %v4045, %v6447
    %v6449 = vpop.f32.mrb[0].mxu0
    %v6450 = vpop.f32.mrb[0].mxu0
    %v6451 = vadd.f32 %v4048, %v6450
    %v6452 = vpop.f32.mrb[0].mxu0
    %6453 = vmatprep.mubr.bf16.mxu0 %v2629
    %6454 = vmatmul.mubr.bf16.gmra.mrb[0].mxu0 %v2628
    %v6455 = vpop.f32.mrb[0].mxu0
    %v6456 = vadd.f32 %v4053, %v6455
    %v6457 = vpop.f32.mrb[0].mxu0
    %v6458 = vpop.f32.mrb[0].mxu0
    %v6459 = vadd.f32 %v4056, %v6458
    %v6460 = vpop.f32.mrb[0].mxu0
    %6461 = vmatprep.mubr.bf16.mxu0 %v2633
    %6462 = vmatmul.mubr.bf16.gmra.mrb[0].mxu0 %v2632
    %v6463 = vpop.f32.mrb[0].mxu0
    %v6464 = vadd.f32 %v4061, %v6463
    %v6465 = vpop.f32.mrb[0].mxu0
    %v6466 = vpop.f32.mrb[0].mxu0
    %v6467 = vadd.f32 %v4064, %v6466
    %v6468 = vpop.f32.mrb[0].mxu0
    %6469 = vmatprep.mubr.bf16.mxu0 %v2637
    %6470 = vmatmul.mubr.bf16.gmra.mrb[0].mxu0 %v2636
    %v6471 = vpop.f32.mrb[0].mxu0
    %v6472 = vadd.f32 %v4069, %v6471
    %v6473 = vpop.f32.mrb[0].mxu0
    %v6474 = vpop.f32.mrb[0].mxu0
    %v6475 = vadd.f32 %v4072, %v6474
    %v6476 = vpop.f32.mrb[0].mxu0
    %6477 = vmatprep.mubr.bf16.mxu0 %v2641
    %6478 = vmatmul.mubr.bf16.gmra.mrb[0].mxu0 %v2640
    %v6479 = vpop.f32.mrb[0].mxu0
    %v6480 = vadd.f32 %v4077, %v6479
    %v6481 = vpop.f32.mrb[0].mxu0
    %v6482 = vpop.f32.mrb[0].mxu0
    %v6483 = vadd.f32 %v4080, %v6482
    %v6484 = vpop.f32.mrb[0].mxu0
    %6485 = vmatprep.mubr.bf16.mxu0 %v2645
    %6486 = vmatmul.mubr.bf16.gmra.mrb[0].mxu0 %v2644
    %v6487 = vpop.f32.mrb[0].mxu0
    %v6488 = vadd.f32 %v4085, %v6487
    %v6489 = vpop.f32.mrb[0].mxu0
    %v6490 = vpop.f32.mrb[0].mxu0
    %v6491 = vadd.f32 %v4088, %v6490
    %v6492 = vpop.f32.mrb[0].mxu0
    %6493 = vmatprep.mubr.bf16.mxu0 %v2649
    %6494 = vmatmul.mubr.bf16.gmra.mrb[0].mxu0 %v2648
    %v6495 = vpop.f32.mrb[0].mxu0
    %v6496 = vadd.f32 %v4093, %v6495
    %v6497 = vpop.f32.mrb[0].mxu0
    %v6498 = vpop.f32.mrb[0].mxu0
    %v6499 = vadd.f32 %v4096, %v6498
    %v6500 = vpop.f32.mrb[0].mxu0
    %6501 = vmatprep.mubr.bf16.mxu0 %v2653
    %6502 = vmatmul.mubr.bf16.gmra.mrb[0].mxu0 %v2652
    %v6503 = vpop.f32.mrb[0].mxu0
    %v6504 = vadd.f32 %v4101, %v6503
    %v6505 = vpop.f32.mrb[0].mxu0
    %v6506 = vpop.f32.mrb[0].mxu0
    %v6507 = vadd.f32 %v4104, %v6506
    %v6508 = vpop.f32.mrb[0].mxu0
    %6509 = vmatprep.mubr.bf16.mxu0 %v2657
    %6510 = vmatmul.mubr.bf16.gmra.mrb[0].mxu0 %v2656
    %v6511 = vpop.f32.mrb[0].mxu0
    %v6512 = vadd.f32 %v4109, %v6511
    %v6513 = vpop.f32.mrb[0].mxu0
    %v6514 = vpop.f32.mrb[0].mxu0
    %v6515 = vadd.f32 %v4112, %v6514
    %v6516 = vpop.f32.mrb[0].mxu0
    %6517 = vmatprep.mubr.bf16.mxu0 %v2661
    %6518 = vmatmul.mubr.bf16.gmra.mrb[0].mxu0 %v2660
    %v6519 = vpop.f32.mrb[0].mxu0
    %v6520 = vadd.f32 %v4117, %v6519
    %v6521 = vpop.f32.mrb[0].mxu0
    %v6522 = vpop.f32.mrb[0].mxu0
    %v6523 = vadd.f32 %v4120, %v6522
    %v6524 = vpop.f32.mrb[0].mxu0
    %6525 = vmatprep.mubr.bf16.mxu0 %v2665
    %6526 = vmatmul.mubr.bf16.gmra.mrb[0].mxu0 %v2664
    %v6527 = vpop.f32.mrb[0].mxu0
    %v6528 = vadd.f32 %v4125, %v6527
    %v6529 = vpop.f32.mrb[0].mxu0
    %v6530 = vpop.f32.mrb[0].mxu0
    %v6531 = vadd.f32 %v4128, %v6530
    %v6532 = vpop.f32.mrb[0].mxu0
    %6533 = vmatprep.mubr.bf16.mxu0 %v2669
    %6534 = vmatmul.mubr.bf16.gmra.mrb[0].mxu0 %v2668
    %v6535 = vpop.f32.mrb[0].mxu0
    %v6536 = vadd.f32 %v4133, %v6535
    %v6537 = vpop.f32.mrb[0].mxu0
    %v6538 = vpop.f32.mrb[0].mxu0
    %v6539 = vadd.f32 %v4136, %v6538
    %v6540 = vpop.f32.mrb[0].mxu0
    %6541 = vmatprep.mubr.bf16.mxu0 %v2673
    %6542 = vmatmul.mubr.bf16.gmra.mrb[0].mxu0 %v2672
    %v6543 = vpop.f32.mrb[0].mxu0
    %v6544 = vadd.f32 %v4141, %v6543
    %v6545 = vpop.f32.mrb[0].mxu0
    %v6546 = vpop.f32.mrb[0].mxu0
    %v6547 = vadd.f32 %v4144, %v6546
    %v6548 = vpop.f32.mrb[0].mxu0
    %6549 = vmatprep.mubr.bf16.mxu0 %v2677
    %6550 = vmatmul.mubr.bf16.gmra.mrb[0].mxu0 %v2676
    %v6551 = vpop.f32.mrb[0].mxu0
    %v6552 = vadd.f32 %v4149, %v6551
    %v6553 = vpop.f32.mrb[0].mxu0
    %v6554 = vpop.f32.mrb[0].mxu0
    %v6555 = vadd.f32 %v4152, %v6554
    %v6556 = vpop.f32.mrb[0].mxu0
    %6557 = vmatprep.mubr.bf16.mxu0 %v2681
    %6558 = vmatmul.mubr.bf16.gmra.mrb[0].mxu0 %v2680
    %v6559 = vpop.f32.mrb[0].mxu0
    %v6560 = vadd.f32 %v4157, %v6559
    %v6561 = vpop.f32.mrb[0].mxu0
    %v6562 = vpop.f32.mrb[0].mxu0
    %v6563 = vadd.f32 %v4160, %v6562
    %v6564 = vpop.f32.mrb[0].mxu0
    %6565 = vmatprep.mubr.bf16.mxu0 %v2685
    %6566 = vmatmul.mubr.bf16.gmra.mrb[0].mxu0 %v2684
    %v6567 = vpop.f32.mrb[0].mxu0
    %v6568 = vadd.f32 %v4165, %v6567
    %v6569 = vpop.f32.mrb[0].mxu0
    %v6570 = vpop.f32.mrb[0].mxu0
    %v6571 = vadd.f32 %v4168, %v6570
    %v6572 = vpop.f32.mrb[0].mxu0
    %6573 = vmatprep.mubr.bf16.mxu0 %v2689
    %6574 = vmatmul.mubr.bf16.gmra.mrb[0].mxu0 %v2688
    %v6575 = vpop.f32.mrb[0].mxu0
    %v6576 = vadd.f32 %v4173, %v6575
    %v6577 = vpop.f32.mrb[0].mxu0
    %v6578 = vpop.f32.mrb[0].mxu0
    %v6579 = vadd.f32 %v4176, %v6578
    %v6580 = vpop.f32.mrb[0].mxu0
    %6581 = vmatprep.mubr.bf16.mxu0 %v2693
    %6582 = vmatmul.mubr.bf16.gmra.mrb[0].mxu0 %v2692
    %v6583 = vpop.f32.mrb[0].mxu0
    %v6584 = vadd.f32 %v4181, %v6583
    %v6585 = vpop.f32.mrb[0].mxu0
    %v6586 = vpop.f32.mrb[0].mxu0
    %v6587 = vadd.f32 %v4184, %v6586
    %v6588 = vpop.f32.mrb[0].mxu0
    %6589 = vmatprep.mubr.bf16.mxu0 %v2697
    %6590 = vmatmul.mubr.bf16.gmra.mrb[0].mxu0 %v2696
    %v6591 = vpop.f32.mrb[0].mxu0
    %v6592 = vadd.f32 %v4189, %v6591
    %v6593 = vpop.f32.mrb[0].mxu0
    %v6594 = vpop.f32.mrb[0].mxu0
    %v6595 = vadd.f32 %v4192, %v6594
    %v6596 = vpop.f32.mrb[0].mxu0
    %6597 = vmatprep.mubr.bf16.mxu0 %v2701
    %6598 = vmatmul.mubr.bf16.gmra.mrb[0].mxu0 %v2700
    %v6599 = vpop.f32.mrb[0].mxu0
    %v6600 = vadd.f32 %v4197, %v6599
    %v6601 = vpop.f32.mrb[0].mxu0
    %v6602 = vpop.f32.mrb[0].mxu0
    %v6603 = vadd.f32 %v4200, %v6602
    %v6604 = vpop.f32.mrb[0].mxu0
    %6605 = vmatprep.mubr.bf16.mxu0 %v2705
    %6606 = vmatmul.mubr.bf16.gmra.mrb[0].mxu0 %v2704
    %v6607 = vpop.f32.mrb[0].mxu0
    %v6608 = vadd.f32 %v4205, %v6607
    %v6609 = vpop.f32.mrb[0].mxu0
    %v6610 = vpop.f32.mrb[0].mxu0
    %v6611 = vadd.f32 %v4208, %v6610
    %v6612 = vpop.f32.mrb[0].mxu0
    %6613 = vmatprep.mubr.bf16.mxu0 %v2709
    %6614 = vmatmul.mubr.bf16.gmra.mrb[0].mxu0 %v2708
    %v6615 = vpop.f32.mrb[0].mxu0
    %v6616 = vadd.f32 %v4213, %v6615
    %v6617 = vpop.f32.mrb[0].mxu0
    %v6618 = vpop.f32.mrb[0].mxu0
    %v6619 = vadd.f32 %v4216, %v6618
    %v6620 = vpop.f32.mrb[0].mxu0
    %6621 = vmatprep.mubr.bf16.mxu0 %v2713
    %6622 = vmatmul.mubr.bf16.gmra.mrb[0].mxu0 %v2712
    %v6623 = vpop.f32.mrb[0].mxu0
    %v6624 = vadd.f32 %v4221, %v6623
    %v6625 = vpop.f32.mrb[0].mxu0
    %v6626 = vpop.f32.mrb[0].mxu0
    %v6627 = vadd.f32 %v4224, %v6626
    %v6628 = vpop.f32.mrb[0].mxu0
    %6629 = vmatprep.mubr.bf16.mxu0 %v2717
    %6630 = vmatmul.mubr.bf16.gmra.mrb[0].mxu0 %v2716
    %v6631 = vpop.f32.mrb[0].mxu0
    %v6632 = vadd.f32 %v4229, %v6631
    %v6633 = vpop.f32.mrb[0].mxu0
    %v6634 = vpop.f32.mrb[0].mxu0
    %v6635 = vadd.f32 %v4232, %v6634
    %v6636 = vpop.f32.mrb[0].mxu0
    %6637 = vmatprep.mubr.bf16.mxu0 %v2721
    %6638 = vmatmul.mubr.bf16.gmra.mrb[0].mxu0 %v2720
    %v6639 = vpop.f32.mrb[0].mxu0
    %v6640 = vadd.f32 %v4237, %v6639
    %v6641 = vpop.f32.mrb[0].mxu0
    %v6642 = vpop.f32.mrb[0].mxu0
    %v6643 = vadd.f32 %v4240, %v6642
    %v6644 = vpop.f32.mrb[0].mxu0
    %6645 = vmatprep.mubr.bf16.mxu0 %v2725
    %6646 = vmatmul.mubr.bf16.gmra.mrb[0].mxu0 %v2724
    %v6647 = vpop.f32.mrb[0].mxu0
    %v6648 = vadd.f32 %v4245, %v6647
    %v6649 = vpop.f32.mrb[0].mxu0
    %v6650 = vpop.f32.mrb[0].mxu0
    %v6651 = vadd.f32 %v4248, %v6650
    %v6652 = vpop.f32.mrb[0].mxu0
    %6653 = vmatprep.mubr.bf16.mxu0 %v2729
    %6654 = vmatmul.mubr.bf16.gmra.mrb[0].mxu0 %v2728
    %v6655 = vpop.f32.mrb[0].mxu0
    %v6656 = vadd.f32 %v4253, %v6655
    %v6657 = vpop.f32.mrb[0].mxu0
    %v6658 = vpop.f32.mrb[0].mxu0
    %v6659 = vadd.f32 %v4256, %v6658
    %v6660 = vpop.f32.mrb[0].mxu0
    %6661 = vmatprep.mubr.bf16.mxu0 %v2733
    %6662 = vmatmul.mubr.bf16.gmra.mrb[0].mxu0 %v2732
    %v6663 = vpop.f32.mrb[0].mxu0
    %v6664 = vadd.f32 %v4261, %v6663
    %v6665 = vpop.f32.mrb[0].mxu0
    %v6666 = vpop.f32.mrb[0].mxu0
    %v6667 = vadd.f32 %v4264, %v6666
    %v6668 = vpop.f32.mrb[0].mxu0
    %6669 = vmatprep.mubr.bf16.mxu0 %v2737
    %6670 = vmatmul.mubr.bf16.gmra.mrb[0].mxu0 %v2736
    %v6671 = vpop.f32.mrb[0].mxu0
    %v6672 = vadd.f32 %v4269, %v6671
    %v6673 = vpop.f32.mrb[0].mxu0
    %v6674 = vpop.f32.mrb[0].mxu0
    %v6675 = vadd.f32 %v4272, %v6674
    %v6676 = vpop.f32.mrb[0].mxu0
    %6677 = vmatprep.mubr.bf16.mxu0 %v2741
    %6678 = vmatmul.mubr.bf16.gmra.mrb[0].mxu0 %v2740
    %v6679 = vpop.f32.mrb[0].mxu0
    %v6680 = vadd.f32 %v4277, %v6679
    %v6681 = vpop.f32.mrb[0].mxu0
    %v6682 = vpop.f32.mrb[0].mxu0
    %v6683 = vadd.f32 %v4280, %v6682
    %v6684 = vpop.f32.mrb[0].mxu0
    %6685 = vmatprep.mubr.bf16.mxu0 %v2745
    %6686 = vmatmul.mubr.bf16.gmra.mrb[0].mxu0 %v2744
    %v6687 = vpop.f32.mrb[0].mxu0
    %v6688 = vadd.f32 %v4285, %v6687
    %v6689 = vpop.f32.mrb[0].mxu0
    %v6690 = vpop.f32.mrb[0].mxu0
    %v6691 = vadd.f32 %v4288, %v6690
    %v6692 = vpop.f32.mrb[0].mxu0
    %6693 = vmatprep.mubr.bf16.mxu0 %v2749
    %6694 = vmatmul.mubr.bf16.gmra.mrb[0].mxu0 %v2748
    %v6695 = vpop.f32.mrb[0].mxu0
    %v6696 = vadd.f32 %v4293, %v6695
    %v6697 = vpop.f32.mrb[0].mxu0
    %v6698 = vpop.f32.mrb[0].mxu0
    %v6699 = vadd.f32 %v4296, %v6698
    %v6700 = vpop.f32.mrb[0].mxu0
    %6701 = vmatprep.mubr.bf16.mxu0 %v2753
    %6702 = vmatmul.mubr.bf16.gmra.mrb[0].mxu0 %v2752
    %v6703 = vpop.f32.mrb[0].mxu0
    %v6704 = vadd.f32 %v4301, %v6703
    %v6705 = vpop.f32.mrb[0].mxu0
    %v6706 = vpop.f32.mrb[0].mxu0
    %v6707 = vadd.f32 %v4304, %v6706
    %v6708 = vpop.f32.mrb[0].mxu0
    %6709 = vmatprep.mubr.bf16.mxu0 %v2757
    %6710 = vmatmul.mubr.bf16.gmra.mrb[0].mxu0 %v2756
    %v6711 = vpop.f32.mrb[0].mxu0
    %v6712 = vadd.f32 %v4309, %v6711
    %v6713 = vpop.f32.mrb[0].mxu0
    %v6714 = vpop.f32.mrb[0].mxu0
    %v6715 = vadd.f32 %v4312, %v6714
    %v6716 = vpop.f32.mrb[0].mxu0
    %6717 = vmatprep.mubr.bf16.mxu0 %v2761
    %6718 = vmatmul.mubr.bf16.gmra.mrb[0].mxu0 %v2760
    %v6719 = vpop.f32.mrb[0].mxu0
    %v6720 = vadd.f32 %v4317, %v6719
    %v6721 = vpop.f32.mrb[0].mxu0
    %v6722 = vpop.f32.mrb[0].mxu0
    %v6723 = vadd.f32 %v4320, %v6722
    %v6724 = vpop.f32.mrb[0].mxu0
    %6725 = vmatprep.mubr.bf16.mxu0 %v2765
    %6726 = vmatmul.mubr.bf16.gmra.mrb[0].mxu0 %v2764
    %v6727 = vpop.f32.mrb[0].mxu0
    %v6728 = vadd.f32 %v4325, %v6727
    %v6729 = vpop.f32.mrb[0].mxu0
    %v6730 = vpop.f32.mrb[0].mxu0
    %v6731 = vadd.f32 %v4328, %v6730
    %v6732 = vpop.f32.mrb[0].mxu0
    %6733 = vmatprep.mubr.bf16.mxu0 %v2769
    %6734 = vmatmul.mubr.bf16.gmra.mrb[0].mxu0 %v2768
    %v6735 = vpop.f32.mrb[0].mxu0
    %v6736 = vadd.f32 %v4333, %v6735
    %v6737 = vpop.f32.mrb[0].mxu0
    %v6738 = vpop.f32.mrb[0].mxu0
    %v6739 = vadd.f32 %v4336, %v6738
    %v6740 = vpop.f32.mrb[0].mxu0
    %6741 = vdwg.mxu0
    %6742 = vmatprep.subr.bf16.mxu0 0
    %6743 = vmatpush1.bf16.msra.mxu0 %v4709
    %6744 = vmatprep.subr.bf16.mxu0 0
    %6745 = vmatpush1.bf16.msra.mxu0 %v4712
    %6746 = vmatprep.subr.bf16.mxu0 0
    %6747 = vmatpush1.bf16.msra.mxu0 %v4715
    %6748 = vmatprep.subr.bf16.mxu0 0
    %6749 = vmatpush1.bf16.msra.mxu0 %v4718
    %6750 = vmatprep.subr.bf16.mxu0 0
    %6751 = vmatpush1.bf16.msra.mxu0 %v4721
    %6752 = vmatprep.subr.bf16.mxu0 0
    %6753 = vmatpush1.bf16.msra.mxu0 %v4724
    %6754 = vmatprep.subr.bf16.mxu0 0
    %6755 = vmatpush1.bf16.msra.mxu0 %v4727
    %6756 = vmatprep.subr.bf16.mxu0 0
    %6757 = vmatpush1.bf16.msra.mxu0 %v4730
    %6758 = vmatprep.subr.bf16.mxu0 0
    %6759 = vmatpush1.bf16.msra.mxu0 %v4733
    %6760 = vmatprep.subr.bf16.mxu0 0
    %6761 = vmatpush1.bf16.msra.mxu0 %v4736
    %6762 = vmatprep.subr.bf16.mxu0 0
    %6763 = vmatpush1.bf16.msra.mxu0 %v4739
    %6764 = vmatprep.subr.bf16.mxu0 0
    %6765 = vmatpush1.bf16.msra.mxu0 %v4742
    %6766 = vmatprep.subr.bf16.mxu0 0
    %6767 = vmatpush1.bf16.msra.mxu0 %v4745
    %6768 = vmatprep.subr.bf16.mxu0 0
    %6769 = vmatpush1.bf16.msra.mxu0 %v4748
    %6770 = vmatprep.subr.bf16.mxu0 0
    %6771 = vmatpush1.bf16.msra.mxu0 %v4751
    %6772 = vmatprep.subr.bf16.mxu0 0
    %6773 = vmatpush1.bf16.msra.mxu0 %v4754
    %6774 = vmatprep.mubr.bf16.mxu0 %v2519
    %6775 = vmatmul.mubr.bf16.gmra.mrb[0].mxu0 %v2518
    %v6776 = vpop.f32.mrb[0].mxu0
    %v6777 = vadd.f32 %v6232, %v6776
    %v6778 = vpop.f32.mrb[0].mxu0
    %v6779 = vpop.f32.mrb[0].mxu0
    %v6780 = vadd.f32 %v6235, %v6779
    %v6781 = vpop.f32.mrb[0].mxu0
    %6782 = vmatprep.mubr.bf16.mxu0 %v2523
    %6783 = vmatmul.mubr.bf16.gmra.mrb[0].mxu0 %v2522
    %v6784 = vpop.f32.mrb[0].mxu0
    %v6785 = vadd.f32 %v6240, %v6784
    %v6786 = vpop.f32.mrb[0].mxu0
    %v6787 = vpop.f32.mrb[0].mxu0
    %v6788 = vadd.f32 %v6243, %v6787
    %v6789 = vpop.f32.mrb[0].mxu0
    %6790 = vmatprep.mubr.bf16.mxu0 %v2527
    %6791 = vmatmul.mubr.bf16.gmra.mrb[0].mxu0 %v2526
    %v6792 = vpop.f32.mrb[0].mxu0
    %v6793 = vadd.f32 %v6248, %v6792
    %v6794 = vpop.f32.mrb[0].mxu0
    %v6795 = vpop.f32.mrb[0].mxu0
    %v6796 = vadd.f32 %v6251, %v6795
    %v6797 = vpop.f32.mrb[0].mxu0
    %6798 = vmatprep.mubr.bf16.mxu0 %v2531
    %6799 = vmatmul.mubr.bf16.gmra.mrb[0].mxu0 %v2530
    %v6800 = vpop.f32.mrb[0].mxu0
    %v6801 = vadd.f32 %v6256, %v6800
    %v6802 = vpop.f32.mrb[0].mxu0
    %v6803 = vpop.f32.mrb[0].mxu0
    %v6804 = vadd.f32 %v6259, %v6803
    %v6805 = vpop.f32.mrb[0].mxu0
    %6806 = vmatprep.mubr.bf16.mxu0 %v2535
    %6807 = vmatmul.mubr.bf16.gmra.mrb[0].mxu0 %v2534
    %v6808 = vpop.f32.mrb[0].mxu0
    %v6809 = vadd.f32 %v6264, %v6808
    %v6810 = vpop.f32.mrb[0].mxu0
    %v6811 = vpop.f32.mrb[0].mxu0
    %v6812 = vadd.f32 %v6267, %v6811
    %v6813 = vpop.f32.mrb[0].mxu0
    %6814 = vmatprep.mubr.bf16.mxu0 %v2539
    %6815 = vmatmul.mubr.bf16.gmra.mrb[0].mxu0 %v2538
    %v6816 = vpop.f32.mrb[0].mxu0
    %v6817 = vadd.f32 %v6272, %v6816
    %v6818 = vpop.f32.mrb[0].mxu0
    %v6819 = vpop.f32.mrb[0].mxu0
    %v6820 = vadd.f32 %v6275, %v6819
    %v6821 = vpop.f32.mrb[0].mxu0
    %6822 = vmatprep.mubr.bf16.mxu0 %v2543
    %6823 = vmatmul.mubr.bf16.gmra.mrb[0].mxu0 %v2542
    %v6824 = vpop.f32.mrb[0].mxu0
    %v6825 = vadd.f32 %v6280, %v6824
    %v6826 = vpop.f32.mrb[0].mxu0
    %v6827 = vpop.f32.mrb[0].mxu0
    %v6828 = vadd.f32 %v6283, %v6827
    %v6829 = vpop.f32.mrb[0].mxu0
    %6830 = vmatprep.mubr.bf16.mxu0 %v2547
    %6831 = vmatmul.mubr.bf16.gmra.mrb[0].mxu0 %v2546
    %v6832 = vpop.f32.mrb[0].mxu0
    %v6833 = vadd.f32 %v6288, %v6832
    %v6834 = vpop.f32.mrb[0].mxu0
    %v6835 = vpop.f32.mrb[0].mxu0
    %v6836 = vadd.f32 %v6291, %v6835
    %v6837 = vpop.f32.mrb[0].mxu0
    %6838 = vmatprep.mubr.bf16.mxu0 %v2551
    %6839 = vmatmul.mubr.bf16.gmra.mrb[0].mxu0 %v2550
    %v6840 = vpop.f32.mrb[0].mxu0
    %v6841 = vadd.f32 %v6296, %v6840
    %v6842 = vpop.f32.mrb[0].mxu0
    %v6843 = vpop.f32.mrb[0].mxu0
    %v6844 = vadd.f32 %v6299, %v6843
    %v6845 = vpop.f32.mrb[0].mxu0
    %6846 = vmatprep.mubr.bf16.mxu0 %v2555
    %6847 = vmatmul.mubr.bf16.gmra.mrb[0].mxu0 %v2554
    %v6848 = vpop.f32.mrb[0].mxu0
    %v6849 = vadd.f32 %v6304, %v6848
    %v6850 = vpop.f32.mrb[0].mxu0
    %v6851 = vpop.f32.mrb[0].mxu0
    %v6852 = vadd.f32 %v6307, %v6851
    %v6853 = vpop.f32.mrb[0].mxu0
    %6854 = vmatprep.mubr.bf16.mxu0 %v2559
    %6855 = vmatmul.mubr.bf16.gmra.mrb[0].mxu0 %v2558
    %v6856 = vpop.f32.mrb[0].mxu0
    %v6857 = vadd.f32 %v6312, %v6856
    %v6858 = vpop.f32.mrb[0].mxu0
    %v6859 = vpop.f32.mrb[0].mxu0
    %v6860 = vadd.f32 %v6315, %v6859
    %v6861 = vpop.f32.mrb[0].mxu0
    %6862 = vmatprep.mubr.bf16.mxu0 %v2563
    %6863 = vmatmul.mubr.bf16.gmra.mrb[0].mxu0 %v2562
    %v6864 = vpop.f32.mrb[0].mxu0
    %v6865 = vadd.f32 %v6320, %v6864
    %v6866 = vpop.f32.mrb[0].mxu0
    %v6867 = vpop.f32.mrb[0].mxu0
    %v6868 = vadd.f32 %v6323, %v6867
    %v6869 = vpop.f32.mrb[0].mxu0
    %6870 = vmatprep.mubr.bf16.mxu0 %v2567
    %6871 = vmatmul.mubr.bf16.gmra.mrb[0].mxu0 %v2566
    %v6872 = vpop.f32.mrb[0].mxu0
    %v6873 = vadd.f32 %v6328, %v6872
    %v6874 = vpop.f32.mrb[0].mxu0
    %v6875 = vpop.f32.mrb[0].mxu0
    %v6876 = vadd.f32 %v6331, %v6875
    %v6877 = vpop.f32.mrb[0].mxu0
    %6878 = vmatprep.mubr.bf16.mxu0 %v2571
    %6879 = vmatmul.mubr.bf16.gmra.mrb[0].mxu0 %v2570
    %v6880 = vpop.f32.mrb[0].mxu0
    %v6881 = vadd.f32 %v6336, %v6880
    %v6882 = vpop.f32.mrb[0].mxu0
    %v6883 = vpop.f32.mrb[0].mxu0
    %v6884 = vadd.f32 %v6339, %v6883
    %v6885 = vpop.f32.mrb[0].mxu0
    %6886 = vmatprep.mubr.bf16.mxu0 %v2575
    %6887 = vmatmul.mubr.bf16.gmra.mrb[0].mxu0 %v2574
    %v6888 = vpop.f32.mrb[0].mxu0
    %v6889 = vadd.f32 %v6344, %v6888
    %v6890 = vpop.f32.mrb[0].mxu0
    %v6891 = vpop.f32.mrb[0].mxu0
    %v6892 = vadd.f32 %v6347, %v6891
    %v6893 = vpop.f32.mrb[0].mxu0
    %6894 = vmatprep.mubr.bf16.mxu0 %v2579
    %6895 = vmatmul.mubr.bf16.gmra.mrb[0].mxu0 %v2578
    %v6896 = vpop.f32.mrb[0].mxu0
    %v6897 = vadd.f32 %v6352, %v6896
    %v6898 = vpop.f32.mrb[0].mxu0
    %v6899 = vpop.f32.mrb[0].mxu0
    %v6900 = vadd.f32 %v6355, %v6899
    %v6901 = vpop.f32.mrb[0].mxu0
    %6902 = vmatprep.mubr.bf16.mxu0 %v2583
    %6903 = vmatmul.mubr.bf16.gmra.mrb[0].mxu0 %v2582
    %v6904 = vpop.f32.mrb[0].mxu0
    %v6905 = vadd.f32 %v6360, %v6904
    %v6906 = vpop.f32.mrb[0].mxu0
    %v6907 = vpop.f32.mrb[0].mxu0
    %v6908 = vadd.f32 %v6363, %v6907
    %v6909 = vpop.f32.mrb[0].mxu0
    %6910 = vmatprep.mubr.bf16.mxu0 %v2587
    %6911 = vmatmul.mubr.bf16.gmra.mrb[0].mxu0 %v2586
    %v6912 = vpop.f32.mrb[0].mxu0
    %v6913 = vadd.f32 %v6368, %v6912
    %v6914 = vpop.f32.mrb[0].mxu0
    %v6915 = vpop.f32.mrb[0].mxu0
    %v6916 = vadd.f32 %v6371, %v6915
    %v6917 = vpop.f32.mrb[0].mxu0
    %6918 = vmatprep.mubr.bf16.mxu0 %v2591
    %6919 = vmatmul.mubr.bf16.gmra.mrb[0].mxu0 %v2590
    %v6920 = vpop.f32.mrb[0].mxu0
    %v6921 = vadd.f32 %v6376, %v6920
    %v6922 = vpop.f32.mrb[0].mxu0
    %v6923 = vpop.f32.mrb[0].mxu0
    %v6924 = vadd.f32 %v6379, %v6923
    %v6925 = vpop.f32.mrb[0].mxu0
    %6926 = vmatprep.mubr.bf16.mxu0 %v2595
    %6927 = vmatmul.mubr.bf16.gmra.mrb[0].mxu0 %v2594
    %v6928 = vpop.f32.mrb[0].mxu0
    %v6929 = vadd.f32 %v6384, %v6928
    %v6930 = vpop.f32.mrb[0].mxu0
    %v6931 = vpop.f32.mrb[0].mxu0
    %v6932 = vadd.f32 %v6387, %v6931
    %v6933 = vpop.f32.mrb[0].mxu0
    %6934 = vmatprep.mubr.bf16.mxu0 %v2599
    %6935 = vmatmul.mubr.bf16.gmra.mrb[0].mxu0 %v2598
    %v6936 = vpop.f32.mrb[0].mxu0
    %v6937 = vadd.f32 %v6392, %v6936
    %v6938 = vpop.f32.mrb[0].mxu0
    %v6939 = vpop.f32.mrb[0].mxu0
    %v6940 = vadd.f32 %v6395, %v6939
    %v6941 = vpop.f32.mrb[0].mxu0
    %6942 = vmatprep.mubr.bf16.mxu0 %v2603
    %6943 = vmatmul.mubr.bf16.gmra.mrb[0].mxu0 %v2602
    %v6944 = vpop.f32.mrb[0].mxu0
    %v6945 = vadd.f32 %v6400, %v6944
    %v6946 = vpop.f32.mrb[0].mxu0
    %v6947 = vpop.f32.mrb[0].mxu0
    %v6948 = vadd.f32 %v6403, %v6947
    %v6949 = vpop.f32.mrb[0].mxu0
    %6950 = vmatprep.mubr.bf16.mxu0 %v2607
    %6951 = vmatmul.mubr.bf16.gmra.mrb[0].mxu0 %v2606
    %v6952 = vpop.f32.mrb[0].mxu0
    %v6953 = vadd.f32 %v6408, %v6952
    %v6954 = vpop.f32.mrb[0].mxu0
    %v6955 = vpop.f32.mrb[0].mxu0
    %v6956 = vadd.f32 %v6411, %v6955
    %v6957 = vpop.f32.mrb[0].mxu0
    %6958 = vmatprep.mubr.bf16.mxu0 %v2611
    %6959 = vmatmul.mubr.bf16.gmra.mrb[0].mxu0 %v2610
    %v6960 = vpop.f32.mrb[0].mxu0
    %v6961 = vadd.f32 %v6416, %v6960
    %v6962 = vpop.f32.mrb[0].mxu0
    %v6963 = vpop.f32.mrb[0].mxu0
    %v6964 = vadd.f32 %v6419, %v6963
    %v6965 = vpop.f32.mrb[0].mxu0
    %6966 = vmatprep.mubr.bf16.mxu0 %v2615
    %6967 = vmatmul.mubr.bf16.gmra.mrb[0].mxu0 %v2614
    %v6968 = vpop.f32.mrb[0].mxu0
    %v6969 = vadd.f32 %v6424, %v6968
    %v6970 = vpop.f32.mrb[0].mxu0
    %v6971 = vpop.f32.mrb[0].mxu0
    %v6972 = vadd.f32 %v6427, %v6971
    %v6973 = vpop.f32.mrb[0].mxu0
    %6974 = vmatprep.mubr.bf16.mxu0 %v2619
    %6975 = vmatmul.mubr.bf16.gmra.mrb[0].mxu0 %v2618
    %v6976 = vpop.f32.mrb[0].mxu0
    %v6977 = vadd.f32 %v6432, %v6976
    %v6978 = vpop.f32.mrb[0].mxu0
    %v6979 = vpop.f32.mrb[0].mxu0
    %v6980 = vadd.f32 %v6435, %v6979
    %v6981 = vpop.f32.mrb[0].mxu0
    %6982 = vmatprep.mubr.bf16.mxu0 %v2623
    %6983 = vmatmul.mubr.bf16.gmra.mrb[0].mxu0 %v2622
    %v6984 = vpop.f32.mrb[0].mxu0
    %v6985 = vadd.f32 %v6440, %v6984
    %v6986 = vpop.f32.mrb[0].mxu0
    %v6987 = vpop.f32.mrb[0].mxu0
    %v6988 = vadd.f32 %v6443, %v6987
    %v6989 = vpop.f32.mrb[0].mxu0
    %6990 = vmatprep.mubr.bf16.mxu0 %v2627
    %6991 = vmatmul.mubr.bf16.gmra.mrb[0].mxu0 %v2626
    %v6992 = vpop.f32.mrb[0].mxu0
    %v6993 = vadd.f32 %v6448, %v6992
    %v6994 = vpop.f32.mrb[0].mxu0
    %v6995 = vpop.f32.mrb[0].mxu0
    %v6996 = vadd.f32 %v6451, %v6995
    %v6997 = vpop.f32.mrb[0].mxu0
    %6998 = vmatprep.mubr.bf16.mxu0 %v2631
    %6999 = vmatmul.mubr.bf16.gmra.mrb[0].mxu0 %v2630
    %v7000 = vpop.f32.mrb[0].mxu0
    %v7001 = vadd.f32 %v6456, %v7000
    %v7002 = vpop.f32.mrb[0].mxu0
    %v7003 = vpop.f32.mrb[0].mxu0
    %v7004 = vadd.f32 %v6459, %v7003
    %v7005 = vpop.f32.mrb[0].mxu0
    %7006 = vmatprep.mubr.bf16.mxu0 %v2635
    %7007 = vmatmul.mubr.bf16.gmra.mrb[0].mxu0 %v2634
    %v7008 = vpop.f32.mrb[0].mxu0
    %v7009 = vadd.f32 %v6464, %v7008
    %v7010 = vpop.f32.mrb[0].mxu0
    %v7011 = vpop.f32.mrb[0].mxu0
    %v7012 = vadd.f32 %v6467, %v7011
    %v7013 = vpop.f32.mrb[0].mxu0
    %7014 = vmatprep.mubr.bf16.mxu0 %v2639
    %7015 = vmatmul.mubr.bf16.gmra.mrb[0].mxu0 %v2638
    %v7016 = vpop.f32.mrb[0].mxu0
    %v7017 = vadd.f32 %v6472, %v7016
    %v7018 = vpop.f32.mrb[0].mxu0
    %v7019 = vpop.f32.mrb[0].mxu0
    %v7020 = vadd.f32 %v6475, %v7019
    %v7021 = vpop.f32.mrb[0].mxu0
    %7022 = vmatprep.mubr.bf16.mxu0 %v2643
    %7023 = vmatmul.mubr.bf16.gmra.mrb[0].mxu0 %v2642
    %v7024 = vpop.f32.mrb[0].mxu0
    %v7025 = vadd.f32 %v6480, %v7024
    %v7026 = vpop.f32.mrb[0].mxu0
    %v7027 = vpop.f32.mrb[0].mxu0
    %v7028 = vadd.f32 %v6483, %v7027
    %v7029 = vpop.f32.mrb[0].mxu0
    %7030 = vmatprep.mubr.bf16.mxu0 %v2647
    %7031 = vmatmul.mubr.bf16.gmra.mrb[0].mxu0 %v2646
    %v7032 = vpop.f32.mrb[0].mxu0
    %v7033 = vadd.f32 %v6488, %v7032
    %v7034 = vpop.f32.mrb[0].mxu0
    %v7035 = vpop.f32.mrb[0].mxu0
    %v7036 = vadd.f32 %v6491, %v7035
    %v7037 = vpop.f32.mrb[0].mxu0
    %7038 = vmatprep.mubr.bf16.mxu0 %v2651
    %7039 = vmatmul.mubr.bf16.gmra.mrb[0].mxu0 %v2650
    %v7040 = vpop.f32.mrb[0].mxu0
    %v7041 = vadd.f32 %v6496, %v7040
    %v7042 = vpop.f32.mrb[0].mxu0
    %v7043 = vpop.f32.mrb[0].mxu0
    %v7044 = vadd.f32 %v6499, %v7043
    %v7045 = vpop.f32.mrb[0].mxu0
    %7046 = vmatprep.mubr.bf16.mxu0 %v2655
    %7047 = vmatmul.mubr.bf16.gmra.mrb[0].mxu0 %v2654
    %v7048 = vpop.f32.mrb[0].mxu0
    %v7049 = vadd.f32 %v6504, %v7048
    %v7050 = vpop.f32.mrb[0].mxu0
    %v7051 = vpop.f32.mrb[0].mxu0
    %v7052 = vadd.f32 %v6507, %v7051
    %v7053 = vpop.f32.mrb[0].mxu0
    %7054 = vmatprep.mubr.bf16.mxu0 %v2659
    %7055 = vmatmul.mubr.bf16.gmra.mrb[0].mxu0 %v2658
    %v7056 = vpop.f32.mrb[0].mxu0
    %v7057 = vadd.f32 %v6512, %v7056
    %v7058 = vpop.f32.mrb[0].mxu0
    %v7059 = vpop.f32.mrb[0].mxu0
    %v7060 = vadd.f32 %v6515, %v7059
    %v7061 = vpop.f32.mrb[0].mxu0
    %7062 = vmatprep.mubr.bf16.mxu0 %v2663
    %7063 = vmatmul.mubr.bf16.gmra.mrb[0].mxu0 %v2662
    %v7064 = vpop.f32.mrb[0].mxu0
    %v7065 = vadd.f32 %v6520, %v7064
    %v7066 = vpop.f32.mrb[0].mxu0
    %v7067 = vpop.f32.mrb[0].mxu0
    %v7068 = vadd.f32 %v6523, %v7067
    %v7069 = vpop.f32.mrb[0].mxu0
    %7070 = vmatprep.mubr.bf16.mxu0 %v2667
    %7071 = vmatmul.mubr.bf16.gmra.mrb[0].mxu0 %v2666
    %v7072 = vpop.f32.mrb[0].mxu0
    %v7073 = vadd.f32 %v6528, %v7072
    %v7074 = vpop.f32.mrb[0].mxu0
    %v7075 = vpop.f32.mrb[0].mxu0
    %v7076 = vadd.f32 %v6531, %v7075
    %v7077 = vpop.f32.mrb[0].mxu0
    %7078 = vmatprep.mubr.bf16.mxu0 %v2671
    %7079 = vmatmul.mubr.bf16.gmra.mrb[0].mxu0 %v2670
    %v7080 = vpop.f32.mrb[0].mxu0
    %v7081 = vadd.f32 %v6536, %v7080
    %v7082 = vpop.f32.mrb[0].mxu0
    %v7083 = vpop.f32.mrb[0].mxu0
    %v7084 = vadd.f32 %v6539, %v7083
    %v7085 = vpop.f32.mrb[0].mxu0
    %7086 = vmatprep.mubr.bf16.mxu0 %v2675
    %7087 = vmatmul.mubr.bf16.gmra.mrb[0].mxu0 %v2674
    %v7088 = vpop.f32.mrb[0].mxu0
    %v7089 = vadd.f32 %v6544, %v7088
    %v7090 = vpop.f32.mrb[0].mxu0
    %v7091 = vpop.f32.mrb[0].mxu0
    %v7092 = vadd.f32 %v6547, %v7091
    %v7093 = vpop.f32.mrb[0].mxu0
    %7094 = vmatprep.mubr.bf16.mxu0 %v2679
    %7095 = vmatmul.mubr.bf16.gmra.mrb[0].mxu0 %v2678
    %v7096 = vpop.f32.mrb[0].mxu0
    %v7097 = vadd.f32 %v6552, %v7096
    %v7098 = vpop.f32.mrb[0].mxu0
    %v7099 = vpop.f32.mrb[0].mxu0
    %v7100 = vadd.f32 %v6555, %v7099
    %v7101 = vpop.f32.mrb[0].mxu0
    %7102 = vmatprep.mubr.bf16.mxu0 %v2683
    %7103 = vmatmul.mubr.bf16.gmra.mrb[0].mxu0 %v2682
    %v7104 = vpop.f32.mrb[0].mxu0
    %v7105 = vadd.f32 %v6560, %v7104
    %v7106 = vpop.f32.mrb[0].mxu0
    %v7107 = vpop.f32.mrb[0].mxu0
    %v7108 = vadd.f32 %v6563, %v7107
    %v7109 = vpop.f32.mrb[0].mxu0
    %7110 = vmatprep.mubr.bf16.mxu0 %v2687
    %7111 = vmatmul.mubr.bf16.gmra.mrb[0].mxu0 %v2686
    %v7112 = vpop.f32.mrb[0].mxu0
    %v7113 = vadd.f32 %v6568, %v7112
    %v7114 = vpop.f32.mrb[0].mxu0
    %v7115 = vpop.f32.mrb[0].mxu0
    %v7116 = vadd.f32 %v6571, %v7115
    %v7117 = vpop.f32.mrb[0].mxu0
    %7118 = vmatprep.mubr.bf16.mxu0 %v2691
    %7119 = vmatmul.mubr.bf16.gmra.mrb[0].mxu0 %v2690
    %v7120 = vpop.f32.mrb[0].mxu0
    %v7121 = vadd.f32 %v6576, %v7120
    %v7122 = vpop.f32.mrb[0].mxu0
    %v7123 = vpop.f32.mrb[0].mxu0
    %v7124 = vadd.f32 %v6579, %v7123
    %v7125 = vpop.f32.mrb[0].mxu0
    %7126 = vmatprep.mubr.bf16.mxu0 %v2695
    %7127 = vmatmul.mubr.bf16.gmra.mrb[0].mxu0 %v2694
    %v7128 = vpop.f32.mrb[0].mxu0
    %v7129 = vadd.f32 %v6584, %v7128
    %v7130 = vpop.f32.mrb[0].mxu0
    %v7131 = vpop.f32.mrb[0].mxu0
    %v7132 = vadd.f32 %v6587, %v7131
    %v7133 = vpop.f32.mrb[0].mxu0
    %7134 = vmatprep.mubr.bf16.mxu0 %v2699
    %7135 = vmatmul.mubr.bf16.gmra.mrb[0].mxu0 %v2698
    %v7136 = vpop.f32.mrb[0].mxu0
    %v7137 = vadd.f32 %v6592, %v7136
    %v7138 = vpop.f32.mrb[0].mxu0
    %v7139 = vpop.f32.mrb[0].mxu0
    %v7140 = vadd.f32 %v6595, %v7139
    %v7141 = vpop.f32.mrb[0].mxu0
    %7142 = vmatprep.mubr.bf16.mxu0 %v2703
    %7143 = vmatmul.mubr.bf16.gmra.mrb[0].mxu0 %v2702
    %v7144 = vpop.f32.mrb[0].mxu0
    %v7145 = vadd.f32 %v6600, %v7144
    %v7146 = vpop.f32.mrb[0].mxu0
    %v7147 = vpop.f32.mrb[0].mxu0
    %v7148 = vadd.f32 %v6603, %v7147
    %v7149 = vpop.f32.mrb[0].mxu0
    %7150 = vmatprep.mubr.bf16.mxu0 %v2707
    %7151 = vmatmul.mubr.bf16.gmra.mrb[0].mxu0 %v2706
    %v7152 = vpop.f32.mrb[0].mxu0
    %v7153 = vadd.f32 %v6608, %v7152
    %v7154 = vpop.f32.mrb[0].mxu0
    %v7155 = vpop.f32.mrb[0].mxu0
    %v7156 = vadd.f32 %v6611, %v7155
    %v7157 = vpop.f32.mrb[0].mxu0
    %7158 = vmatprep.mubr.bf16.mxu0 %v2711
    %7159 = vmatmul.mubr.bf16.gmra.mrb[0].mxu0 %v2710
    %v7160 = vpop.f32.mrb[0].mxu0
    %v7161 = vadd.f32 %v6616, %v7160
    %v7162 = vpop.f32.mrb[0].mxu0
    %v7163 = vpop.f32.mrb[0].mxu0
    %v7164 = vadd.f32 %v6619, %v7163
    %v7165 = vpop.f32.mrb[0].mxu0
    %7166 = vmatprep.mubr.bf16.mxu0 %v2715
    %7167 = vmatmul.mubr.bf16.gmra.mrb[0].mxu0 %v2714
    %v7168 = vpop.f32.mrb[0].mxu0
    %v7169 = vadd.f32 %v6624, %v7168
    %v7170 = vpop.f32.mrb[0].mxu0
    %v7171 = vpop.f32.mrb[0].mxu0
    %v7172 = vadd.f32 %v6627, %v7171
    %v7173 = vpop.f32.mrb[0].mxu0
    %7174 = vmatprep.mubr.bf16.mxu0 %v2719
    %7175 = vmatmul.mubr.bf16.gmra.mrb[0].mxu0 %v2718
    %v7176 = vpop.f32.mrb[0].mxu0
    %v7177 = vadd.f32 %v6632, %v7176
    %v7178 = vpop.f32.mrb[0].mxu0
    %v7179 = vpop.f32.mrb[0].mxu0
    %v7180 = vadd.f32 %v6635, %v7179
    %v7181 = vpop.f32.mrb[0].mxu0
    %7182 = vmatprep.mubr.bf16.mxu0 %v2723
    %7183 = vmatmul.mubr.bf16.gmra.mrb[0].mxu0 %v2722
    %v7184 = vpop.f32.mrb[0].mxu0
    %v7185 = vadd.f32 %v6640, %v7184
    %v7186 = vpop.f32.mrb[0].mxu0
    %v7187 = vpop.f32.mrb[0].mxu0
    %v7188 = vadd.f32 %v6643, %v7187
    %v7189 = vpop.f32.mrb[0].mxu0
    %7190 = vmatprep.mubr.bf16.mxu0 %v2727
    %7191 = vmatmul.mubr.bf16.gmra.mrb[0].mxu0 %v2726
    %v7192 = vpop.f32.mrb[0].mxu0
    %v7193 = vadd.f32 %v6648, %v7192
    %v7194 = vpop.f32.mrb[0].mxu0
    %v7195 = vpop.f32.mrb[0].mxu0
    %v7196 = vadd.f32 %v6651, %v7195
    %v7197 = vpop.f32.mrb[0].mxu0
    %7198 = vmatprep.mubr.bf16.mxu0 %v2731
    %7199 = vmatmul.mubr.bf16.gmra.mrb[0].mxu0 %v2730
    %v7200 = vpop.f32.mrb[0].mxu0
    %v7201 = vadd.f32 %v6656, %v7200
    %v7202 = vpop.f32.mrb[0].mxu0
    %v7203 = vpop.f32.mrb[0].mxu0
    %v7204 = vadd.f32 %v6659, %v7203
    %v7205 = vpop.f32.mrb[0].mxu0
    %7206 = vmatprep.mubr.bf16.mxu0 %v2735
    %7207 = vmatmul.mubr.bf16.gmra.mrb[0].mxu0 %v2734
    %v7208 = vpop.f32.mrb[0].mxu0
    %v7209 = vadd.f32 %v6664, %v7208
    %v7210 = vpop.f32.mrb[0].mxu0
    %v7211 = vpop.f32.mrb[0].mxu0
    %v7212 = vadd.f32 %v6667, %v7211
    %v7213 = vpop.f32.mrb[0].mxu0
    %7214 = vmatprep.mubr.bf16.mxu0 %v2739
    %7215 = vmatmul.mubr.bf16.gmra.mrb[0].mxu0 %v2738
    %v7216 = vpop.f32.mrb[0].mxu0
    %v7217 = vadd.f32 %v6672, %v7216
    %v7218 = vpop.f32.mrb[0].mxu0
    %v7219 = vpop.f32.mrb[0].mxu0
    %v7220 = vadd.f32 %v6675, %v7219
    %v7221 = vpop.f32.mrb[0].mxu0
    %7222 = vmatprep.mubr.bf16.mxu0 %v2743
    %7223 = vmatmul.mubr.bf16.gmra.mrb[0].mxu0 %v2742
    %v7224 = vpop.f32.mrb[0].mxu0
    %v7225 = vadd.f32 %v6680, %v7224
    %v7226 = vpop.f32.mrb[0].mxu0
    %v7227 = vpop.f32.mrb[0].mxu0
    %v7228 = vadd.f32 %v6683, %v7227
    %v7229 = vpop.f32.mrb[0].mxu0
    %7230 = vmatprep.mubr.bf16.mxu0 %v2747
    %7231 = vmatmul.mubr.bf16.gmra.mrb[0].mxu0 %v2746
    %v7232 = vpop.f32.mrb[0].mxu0
    %v7233 = vadd.f32 %v6688, %v7232
    %v7234 = vpop.f32.mrb[0].mxu0
    %v7235 = vpop.f32.mrb[0].mxu0
    %v7236 = vadd.f32 %v6691, %v7235
    %v7237 = vpop.f32.mrb[0].mxu0
    %7238 = vmatprep.mubr.bf16.mxu0 %v2751
    %7239 = vmatmul.mubr.bf16.gmra.mrb[0].mxu0 %v2750
    %v7240 = vpop.f32.mrb[0].mxu0
    %v7241 = vadd.f32 %v6696, %v7240
    %v7242 = vpop.f32.mrb[0].mxu0
    %v7243 = vpop.f32.mrb[0].mxu0
    %v7244 = vadd.f32 %v6699, %v7243
    %v7245 = vpop.f32.mrb[0].mxu0
    %7246 = vmatprep.mubr.bf16.mxu0 %v2755
    %7247 = vmatmul.mubr.bf16.gmra.mrb[0].mxu0 %v2754
    %v7248 = vpop.f32.mrb[0].mxu0
    %v7249 = vadd.f32 %v6704, %v7248
    %v7250 = vpop.f32.mrb[0].mxu0
    %v7251 = vpop.f32.mrb[0].mxu0
    %v7252 = vadd.f32 %v6707, %v7251
    %v7253 = vpop.f32.mrb[0].mxu0
    %7254 = vmatprep.mubr.bf16.mxu0 %v2759
    %7255 = vmatmul.mubr.bf16.gmra.mrb[0].mxu0 %v2758
    %v7256 = vpop.f32.mrb[0].mxu0
    %v7257 = vadd.f32 %v6712, %v7256
    %v7258 = vpop.f32.mrb[0].mxu0
    %v7259 = vpop.f32.mrb[0].mxu0
    %v7260 = vadd.f32 %v6715, %v7259
    %v7261 = vpop.f32.mrb[0].mxu0
    %7262 = vmatprep.mubr.bf16.mxu0 %v2763
    %7263 = vmatmul.mubr.bf16.gmra.mrb[0].mxu0 %v2762
    %v7264 = vpop.f32.mrb[0].mxu0
    %v7265 = vadd.f32 %v6720, %v7264
    %v7266 = vpop.f32.mrb[0].mxu0
    %v7267 = vpop.f32.mrb[0].mxu0
    %v7268 = vadd.f32 %v6723, %v7267
    %v7269 = vpop.f32.mrb[0].mxu0
    %7270 = vmatprep.mubr.bf16.mxu0 %v2767
    %7271 = vmatmul.mubr.bf16.gmra.mrb[0].mxu0 %v2766
    %v7272 = vpop.f32.mrb[0].mxu0
    %v7273 = vadd.f32 %v6728, %v7272
    %v7274 = vpop.f32.mrb[0].mxu0
    %v7275 = vpop.f32.mrb[0].mxu0
    %v7276 = vadd.f32 %v6731, %v7275
    %v7277 = vpop.f32.mrb[0].mxu0
    %7278 = vmatprep.mubr.bf16.mxu0 %v2771
    %7279 = vmatmul.mubr.bf16.gmra.mrb[0].mxu0 %v2770
    %v7280 = vpop.f32.mrb[0].mxu0
    %v7281 = vadd.f32 %v6736, %v7280
    %v7282 = vpop.f32.mrb[0].mxu0
    %v7283 = vpop.f32.mrb[0].mxu0
    %v7284 = vadd.f32 %v6739, %v7283
    %v7285 = vpop.f32.mrb[0].mxu0
    %7286 = vdwg.mxu0
    %v7287 = vld [vmem:[%s6] sm:$0x7]
    %v7289 = vlaneseq
    %v7290 = vshrl.u32 %v7289, 7
    %v7291 = vsub.s32 0, %v7290
    %v7292 = vrot.slane %v7287, %v7291
    %v7293 = vlaneseq
    %v7294 = vshrl.u32 %v7293, 7
    %v7295 = vsub.s32 1, %v7294
    %v7296 = vrot.slane %v7287, %v7295
    %v7297 = vlaneseq
    %v7298 = vshrl.u32 %v7297, 7
    %v7299 = vsub.s32 2, %v7298
    %v7300 = vrot.slane %v7287, %v7299
    %v7304 = vadd.f32 %v5559, %v7292
    %v7305 = vadd.f32 %v5561, %v7296
    %v7306 = vadd.f32 %v6777, %v7300
    %v7307 = vadd.f32 %v5563, %v7292
    %v7308 = vadd.f32 %v5565, %v7296
    %v7309 = vadd.f32 %v6780, %v7300
    %v7310 = vadd.f32 %v5569, %v7292
    %v7311 = vadd.f32 %v5571, %v7296
    %v7312 = vadd.f32 %v6785, %v7300
    %v7313 = vadd.f32 %v5573, %v7292
    %v7314 = vadd.f32 %v5575, %v7296
    %v7315 = vadd.f32 %v6788, %v7300
    %v7316 = vadd.f32 %v5579, %v7292
    %v7317 = vadd.f32 %v5581, %v7296
    %v7318 = vadd.f32 %v6793, %v7300
    %v7319 = vadd.f32 %v5583, %v7292
    %v7320 = vadd.f32 %v5585, %v7296
    %v7321 = vadd.f32 %v6796, %v7300
    %v7322 = vadd.f32 %v5589, %v7292
    %v7323 = vadd.f32 %v5591, %v7296
    %v7324 = vadd.f32 %v6801, %v7300
    %v7325 = vadd.f32 %v5593, %v7292
    %v7326 = vadd.f32 %v5595, %v7296
    %v7327 = vadd.f32 %v6804, %v7300
    %v7328 = vadd.f32 %v5599, %v7292
    %v7329 = vadd.f32 %v5601, %v7296
    %v7330 = vadd.f32 %v6809, %v7300
    %v7331 = vadd.f32 %v5603, %v7292
    %v7332 = vadd.f32 %v5605, %v7296
    %v7333 = vadd.f32 %v6812, %v7300
    %v7334 = vadd.f32 %v5609, %v7292
    %v7335 = vadd.f32 %v5611, %v7296
    %v7336 = vadd.f32 %v6817, %v7300
    %v7337 = vadd.f32 %v5613, %v7292
    %v7338 = vadd.f32 %v5615, %v7296
    %v7339 = vadd.f32 %v6820, %v7300
    %v7340 = vadd.f32 %v5619, %v7292
    %v7341 = vadd.f32 %v5621, %v7296
    %v7342 = vadd.f32 %v6825, %v7300
    %v7343 = vadd.f32 %v5623, %v7292
    %v7344 = vadd.f32 %v5625, %v7296
    %v7345 = vadd.f32 %v6828, %v7300
    %v7346 = vadd.f32 %v5629, %v7292
    %v7347 = vadd.f32 %v5631, %v7296
    %v7348 = vadd.f32 %v6833, %v7300
    %v7349 = vadd.f32 %v5633, %v7292
    %v7350 = vadd.f32 %v5635, %v7296
    %v7351 = vadd.f32 %v6836, %v7300
    %v7352 = vadd.f32 %v5639, %v7292
    %v7353 = vadd.f32 %v5641, %v7296
    %v7354 = vadd.f32 %v6841, %v7300
    %v7355 = vadd.f32 %v5643, %v7292
    %v7356 = vadd.f32 %v5645, %v7296
    %v7357 = vadd.f32 %v6844, %v7300
    %v7358 = vadd.f32 %v5649, %v7292
    %v7359 = vadd.f32 %v5651, %v7296
    %v7360 = vadd.f32 %v6849, %v7300
    %v7361 = vadd.f32 %v5653, %v7292
    %v7362 = vadd.f32 %v5655, %v7296
    %v7363 = vadd.f32 %v6852, %v7300
    %v7364 = vadd.f32 %v5659, %v7292
    %v7365 = vadd.f32 %v5661, %v7296
    %v7366 = vadd.f32 %v6857, %v7300
    %v7367 = vadd.f32 %v5663, %v7292
    %v7368 = vadd.f32 %v5665, %v7296
    %v7369 = vadd.f32 %v6860, %v7300
    %v7370 = vadd.f32 %v5669, %v7292
    %v7371 = vadd.f32 %v5671, %v7296
    %v7372 = vadd.f32 %v6865, %v7300
    %v7373 = vadd.f32 %v5673, %v7292
    %v7374 = vadd.f32 %v5675, %v7296
    %v7375 = vadd.f32 %v6868, %v7300
    %v7376 = vadd.f32 %v5679, %v7292
    %v7377 = vadd.f32 %v5681, %v7296
    %v7378 = vadd.f32 %v6873, %v7300
    %v7379 = vadd.f32 %v5683, %v7292
    %v7380 = vadd.f32 %v5685, %v7296
    %v7381 = vadd.f32 %v6876, %v7300
    %v7382 = vadd.f32 %v5689, %v7292
    %v7383 = vadd.f32 %v5691, %v7296
    %v7384 = vadd.f32 %v6881, %v7300
    %v7385 = vadd.f32 %v5693, %v7292
    %v7386 = vadd.f32 %v5695, %v7296
    %v7387 = vadd.f32 %v6884, %v7300
    %v7388 = vadd.f32 %v5699, %v7292
    %v7389 = vadd.f32 %v5701, %v7296
    %v7390 = vadd.f32 %v6889, %v7300
    %v7391 = vadd.f32 %v5703, %v7292
    %v7392 = vadd.f32 %v5705, %v7296
    %v7393 = vadd.f32 %v6892, %v7300
    %v7394 = vadd.f32 %v5709, %v7292
    %v7395 = vadd.f32 %v5711, %v7296
    %v7396 = vadd.f32 %v6897, %v7300
    %v7397 = vadd.f32 %v5713, %v7292
    %v7398 = vadd.f32 %v5715, %v7296
    %v7399 = vadd.f32 %v6900, %v7300
    %v7400 = vadd.f32 %v5719, %v7292
    %v7401 = vadd.f32 %v5721, %v7296
    %v7402 = vadd.f32 %v6905, %v7300
    %v7403 = vadd.f32 %v5723, %v7292
    %v7404 = vadd.f32 %v5725, %v7296
    %v7405 = vadd.f32 %v6908, %v7300
    %v7406 = vadd.f32 %v5729, %v7292
    %v7407 = vadd.f32 %v5731, %v7296
    %v7408 = vadd.f32 %v6913, %v7300
    %v7409 = vadd.f32 %v5733, %v7292
    %v7410 = vadd.f32 %v5735, %v7296
    %v7411 = vadd.f32 %v6916, %v7300
    %v7412 = vadd.f32 %v5739, %v7292
    %v7413 = vadd.f32 %v5741, %v7296
    %v7414 = vadd.f32 %v6921, %v7300
    %v7415 = vadd.f32 %v5743, %v7292
    %v7416 = vadd.f32 %v5745, %v7296
    %v7417 = vadd.f32 %v6924, %v7300
    %v7418 = vadd.f32 %v5749, %v7292
    %v7419 = vadd.f32 %v5751, %v7296
    %v7420 = vadd.f32 %v6929, %v7300
    %v7421 = vadd.f32 %v5753, %v7292
    %v7422 = vadd.f32 %v5755, %v7296
    %v7423 = vadd.f32 %v6932, %v7300
    %v7424 = vadd.f32 %v5759, %v7292
    %v7425 = vadd.f32 %v5761, %v7296
    %v7426 = vadd.f32 %v6937, %v7300
    %v7427 = vadd.f32 %v5763, %v7292
    %v7428 = vadd.f32 %v5765, %v7296
    %v7429 = vadd.f32 %v6940, %v7300
    %v7430 = vadd.f32 %v5769, %v7292
    %v7431 = vadd.f32 %v5771, %v7296
    %v7432 = vadd.f32 %v6945, %v7300
    %v7433 = vadd.f32 %v5773, %v7292
    %v7434 = vadd.f32 %v5775, %v7296
    %v7435 = vadd.f32 %v6948, %v7300
    %v7436 = vadd.f32 %v5779, %v7292
    %v7437 = vadd.f32 %v5781, %v7296
    %v7438 = vadd.f32 %v6953, %v7300
    %v7439 = vadd.f32 %v5783, %v7292
    %v7440 = vadd.f32 %v5785, %v7296
    %v7441 = vadd.f32 %v6956, %v7300
    %v7442 = vadd.f32 %v5789, %v7292
    %v7443 = vadd.f32 %v5791, %v7296
    %v7444 = vadd.f32 %v6961, %v7300
    %v7445 = vadd.f32 %v5793, %v7292
    %v7446 = vadd.f32 %v5795, %v7296
    %v7447 = vadd.f32 %v6964, %v7300
    %v7448 = vadd.f32 %v5799, %v7292
    %v7449 = vadd.f32 %v5801, %v7296
    %v7450 = vadd.f32 %v6969, %v7300
    %v7451 = vadd.f32 %v5803, %v7292
    %v7452 = vadd.f32 %v5805, %v7296
    %v7453 = vadd.f32 %v6972, %v7300
    %v7454 = vadd.f32 %v5809, %v7292
    %v7455 = vadd.f32 %v5811, %v7296
    %v7456 = vadd.f32 %v6977, %v7300
    %v7457 = vadd.f32 %v5813, %v7292
    %v7458 = vadd.f32 %v5815, %v7296
    %v7459 = vadd.f32 %v6980, %v7300
    %v7460 = vadd.f32 %v5819, %v7292
    %v7461 = vadd.f32 %v5821, %v7296
    %v7462 = vadd.f32 %v6985, %v7300
    %v7463 = vadd.f32 %v5823, %v7292
    %v7464 = vadd.f32 %v5825, %v7296
    %v7465 = vadd.f32 %v6988, %v7300
    %v7466 = vadd.f32 %v5829, %v7292
    %v7467 = vadd.f32 %v5831, %v7296
    %v7468 = vadd.f32 %v6993, %v7300
    %v7469 = vadd.f32 %v5833, %v7292
    %v7470 = vadd.f32 %v5835, %v7296
    %v7471 = vadd.f32 %v6996, %v7300
    %v7472 = vadd.f32 %v5839, %v7292
    %v7473 = vadd.f32 %v5841, %v7296
    %v7474 = vadd.f32 %v7001, %v7300
    %v7475 = vadd.f32 %v5843, %v7292
    %v7476 = vadd.f32 %v5845, %v7296
    %v7477 = vadd.f32 %v7004, %v7300
    %v7478 = vadd.f32 %v5849, %v7292
    %v7479 = vadd.f32 %v5851, %v7296
    %v7480 = vadd.f32 %v7009, %v7300
    %v7481 = vadd.f32 %v5853, %v7292
    %v7482 = vadd.f32 %v5855, %v7296
    %v7483 = vadd.f32 %v7012, %v7300
    %v7484 = vadd.f32 %v5859, %v7292
    %v7485 = vadd.f32 %v5861, %v7296
    %v7486 = vadd.f32 %v7017, %v7300
    %v7487 = vadd.f32 %v5863, %v7292
    %v7488 = vadd.f32 %v5865, %v7296
    %v7489 = vadd.f32 %v7020, %v7300
    %v7490 = vadd.f32 %v5869, %v7292
    %v7491 = vadd.f32 %v5871, %v7296
    %v7492 = vadd.f32 %v7025, %v7300
    %v7493 = vadd.f32 %v5873, %v7292
    %v7494 = vadd.f32 %v5875, %v7296
    %v7495 = vadd.f32 %v7028, %v7300
    %v7496 = vadd.f32 %v5879, %v7292
    %v7497 = vadd.f32 %v5881, %v7296
    %v7498 = vadd.f32 %v7033, %v7300
    %v7499 = vadd.f32 %v5883, %v7292
    %v7500 = vadd.f32 %v5885, %v7296
    %v7501 = vadd.f32 %v7036, %v7300
    %v7502 = vadd.f32 %v5889, %v7292
    %v7503 = vadd.f32 %v5891, %v7296
    %v7504 = vadd.f32 %v7041, %v7300
    %v7505 = vadd.f32 %v5893, %v7292
    %v7506 = vadd.f32 %v5895, %v7296
    %v7507 = vadd.f32 %v7044, %v7300
    %v7508 = vadd.f32 %v5899, %v7292
    %v7509 = vadd.f32 %v5901, %v7296
    %v7510 = vadd.f32 %v7049, %v7300
    %v7511 = vadd.f32 %v5903, %v7292
    %v7512 = vadd.f32 %v5905, %v7296
    %v7513 = vadd.f32 %v7052, %v7300
    %v7514 = vadd.f32 %v5909, %v7292
    %v7515 = vadd.f32 %v5911, %v7296
    %v7516 = vadd.f32 %v7057, %v7300
    %v7517 = vadd.f32 %v5913, %v7292
    %v7518 = vadd.f32 %v5915, %v7296
    %v7519 = vadd.f32 %v7060, %v7300
    %v7520 = vadd.f32 %v5919, %v7292
    %v7521 = vadd.f32 %v5921, %v7296
    %v7522 = vadd.f32 %v7065, %v7300
    %v7523 = vadd.f32 %v5923, %v7292
    %v7524 = vadd.f32 %v5925, %v7296
    %v7525 = vadd.f32 %v7068, %v7300
    %v7526 = vadd.f32 %v5929, %v7292
    %v7527 = vadd.f32 %v5931, %v7296
    %v7528 = vadd.f32 %v7073, %v7300
    %v7529 = vadd.f32 %v5933, %v7292
    %v7530 = vadd.f32 %v5935, %v7296
    %v7531 = vadd.f32 %v7076, %v7300
    %v7532 = vadd.f32 %v5939, %v7292
    %v7533 = vadd.f32 %v5941, %v7296
    %v7534 = vadd.f32 %v7081, %v7300
    %v7535 = vadd.f32 %v5943, %v7292
    %v7536 = vadd.f32 %v5945, %v7296
    %v7537 = vadd.f32 %v7084, %v7300
    %v7538 = vadd.f32 %v5949, %v7292
    %v7539 = vadd.f32 %v5951, %v7296
    %v7540 = vadd.f32 %v7089, %v7300
    %v7541 = vadd.f32 %v5953, %v7292
    %v7542 = vadd.f32 %v5955, %v7296
    %v7543 = vadd.f32 %v7092, %v7300
    %v7544 = vadd.f32 %v5959, %v7292
    %v7545 = vadd.f32 %v5961, %v7296
    %v7546 = vadd.f32 %v7097, %v7300
    %v7547 = vadd.f32 %v5963, %v7292
    %v7548 = vadd.f32 %v5965, %v7296
    %v7549 = vadd.f32 %v7100, %v7300
    %v7550 = vadd.f32 %v5969, %v7292
    %v7551 = vadd.f32 %v5971, %v7296
    %v7552 = vadd.f32 %v7105, %v7300
    %v7553 = vadd.f32 %v5973, %v7292
    %v7554 = vadd.f32 %v5975, %v7296
    %v7555 = vadd.f32 %v7108, %v7300
    %v7556 = vadd.f32 %v5979, %v7292
    %v7557 = vadd.f32 %v5981, %v7296
    %v7558 = vadd.f32 %v7113, %v7300
    %v7559 = vadd.f32 %v5983, %v7292
    %v7560 = vadd.f32 %v5985, %v7296
    %v7561 = vadd.f32 %v7116, %v7300
    %v7562 = vadd.f32 %v5989, %v7292
    %v7563 = vadd.f32 %v5991, %v7296
    %v7564 = vadd.f32 %v7121, %v7300
    %v7565 = vadd.f32 %v5993, %v7292
    %v7566 = vadd.f32 %v5995, %v7296
    %v7567 = vadd.f32 %v7124, %v7300
    %v7568 = vadd.f32 %v5999, %v7292
    %v7569 = vadd.f32 %v6001, %v7296
    %v7570 = vadd.f32 %v7129, %v7300
    %v7571 = vadd.f32 %v6003, %v7292
    %v7572 = vadd.f32 %v6005, %v7296
    %v7573 = vadd.f32 %v7132, %v7300
    %v7574 = vadd.f32 %v6009, %v7292
    %v7575 = vadd.f32 %v6011, %v7296
    %v7576 = vadd.f32 %v7137, %v7300
    %v7577 = vadd.f32 %v6013, %v7292
    %v7578 = vadd.f32 %v6015, %v7296
    %v7579 = vadd.f32 %v7140, %v7300
    %v7580 = vadd.f32 %v6019, %v7292
    %v7581 = vadd.f32 %v6021, %v7296
    %v7582 = vadd.f32 %v7145, %v7300
    %v7583 = vadd.f32 %v6023, %v7292
    %v7584 = vadd.f32 %v6025, %v7296
    %v7585 = vadd.f32 %v7148, %v7300
    %v7586 = vadd.f32 %v6029, %v7292
    %v7587 = vadd.f32 %v6031, %v7296
    %v7588 = vadd.f32 %v7153, %v7300
    %v7589 = vadd.f32 %v6033, %v7292
    %v7590 = vadd.f32 %v6035, %v7296
    %v7591 = vadd.f32 %v7156, %v7300
    %v7592 = vadd.f32 %v6039, %v7292
    %v7593 = vadd.f32 %v6041, %v7296
    %v7594 = vadd.f32 %v7161, %v7300
    %v7595 = vadd.f32 %v6043, %v7292
    %v7596 = vadd.f32 %v6045, %v7296
    %v7597 = vadd.f32 %v7164, %v7300
    %v7598 = vadd.f32 %v6049, %v7292
    %v7599 = vadd.f32 %v6051, %v7296
    %v7600 = vadd.f32 %v7169, %v7300
    %v7601 = vadd.f32 %v6053, %v7292
    %v7602 = vadd.f32 %v6055, %v7296
    %v7603 = vadd.f32 %v7172, %v7300
    %v7604 = vadd.f32 %v6059, %v7292
    %v7605 = vadd.f32 %v6061, %v7296
    %v7606 = vadd.f32 %v7177, %v7300
    %v7607 = vadd.f32 %v6063, %v7292
    %v7608 = vadd.f32 %v6065, %v7296
    %v7609 = vadd.f32 %v7180, %v7300
    %v7610 = vadd.f32 %v6069, %v7292
    %v7611 = vadd.f32 %v6071, %v7296
    %v7612 = vadd.f32 %v7185, %v7300
    %v7613 = vadd.f32 %v6073, %v7292
    %v7614 = vadd.f32 %v6075, %v7296
    %v7615 = vadd.f32 %v7188, %v7300
    %v7616 = vadd.f32 %v6079, %v7292
    %v7617 = vadd.f32 %v6081, %v7296
    %v7618 = vadd.f32 %v7193, %v7300
    %v7619 = vadd.f32 %v6083, %v7292
    %v7620 = vadd.f32 %v6085, %v7296
    %v7621 = vadd.f32 %v7196, %v7300
    %v7622 = vadd.f32 %v6089, %v7292
    %v7623 = vadd.f32 %v6091, %v7296
    %v7624 = vadd.f32 %v7201, %v7300
    %v7625 = vadd.f32 %v6093, %v7292
    %v7626 = vadd.f32 %v6095, %v7296
    %v7627 = vadd.f32 %v7204, %v7300
    %v7628 = vadd.f32 %v6099, %v7292
    %v7629 = vadd.f32 %v6101, %v7296
    %v7630 = vadd.f32 %v7209, %v7300
    %v7631 = vadd.f32 %v6103, %v7292
    %v7632 = vadd.f32 %v6105, %v7296
    %v7633 = vadd.f32 %v7212, %v7300
    %v7634 = vadd.f32 %v6109, %v7292
    %v7635 = vadd.f32 %v6111, %v7296
    %v7636 = vadd.f32 %v7217, %v7300
    %v7637 = vadd.f32 %v6113, %v7292
    %v7638 = vadd.f32 %v6115, %v7296
    %v7639 = vadd.f32 %v7220, %v7300
    %v7640 = vadd.f32 %v6119, %v7292
    %v7641 = vadd.f32 %v6121, %v7296
    %v7642 = vadd.f32 %v7225, %v7300
    %v7643 = vadd.f32 %v6123, %v7292
    %v7644 = vadd.f32 %v6125, %v7296
    %v7645 = vadd.f32 %v7228, %v7300
    %v7646 = vadd.f32 %v6129, %v7292
    %v7647 = vadd.f32 %v6131, %v7296
    %v7648 = vadd.f32 %v7233, %v7300
    %v7649 = vadd.f32 %v6133, %v7292
    %v7650 = vadd.f32 %v6135, %v7296
    %v7651 = vadd.f32 %v7236, %v7300
    %v7652 = vadd.f32 %v6139, %v7292
    %v7653 = vadd.f32 %v6141, %v7296
    %v7654 = vadd.f32 %v7241, %v7300
    %v7655 = vadd.f32 %v6143, %v7292
    %v7656 = vadd.f32 %v6145, %v7296
    %v7657 = vadd.f32 %v7244, %v7300
    %v7658 = vadd.f32 %v6149, %v7292
    %v7659 = vadd.f32 %v6151, %v7296
    %v7660 = vadd.f32 %v7249, %v7300
    %v7661 = vadd.f32 %v6153, %v7292
    %v7662 = vadd.f32 %v6155, %v7296
    %v7663 = vadd.f32 %v7252, %v7300
    %v7664 = vadd.f32 %v6159, %v7292
    %v7665 = vadd.f32 %v6161, %v7296
    %v7666 = vadd.f32 %v7257, %v7300
    %v7667 = vadd.f32 %v6163, %v7292
    %v7668 = vadd.f32 %v6165, %v7296
    %v7669 = vadd.f32 %v7260, %v7300
    %v7670 = vadd.f32 %v6169, %v7292
    %v7671 = vadd.f32 %v6171, %v7296
    %v7672 = vadd.f32 %v7265, %v7300
    %v7673 = vadd.f32 %v6173, %v7292
    %v7674 = vadd.f32 %v6175, %v7296
    %v7675 = vadd.f32 %v7268, %v7300
    %v7676 = vadd.f32 %v6179, %v7292
    %v7677 = vadd.f32 %v6181, %v7296
    %v7678 = vadd.f32 %v7273, %v7300
    %v7679 = vadd.f32 %v6183, %v7292
    %v7680 = vadd.f32 %v6185, %v7296
    %v7681 = vadd.f32 %v7276, %v7300
    %v7682 = vadd.f32 %v6189, %v7292
    %v7683 = vadd.f32 %v6191, %v7296
    %v7684 = vadd.f32 %v7281, %v7300
    %v7685 = vadd.f32 %v6193, %v7292
    %v7686 = vadd.f32 %v6195, %v7296
    %v7687 = vadd.f32 %v7284, %v7300
    %v7688 = vmax.f32 %v7304, 0.0
    %v7689 = vmax.f32 %v7305, 0.0
    %v7690 = vmax.f32 %v7306, 0.0
    %v7691 = vmax.f32 %v7307, 0.0
    %v7692 = vmax.f32 %v7308, 0.0
    %v7693 = vmax.f32 %v7309, 0.0
    %v7694 = vmax.f32 %v7310, 0.0
    %v7695 = vmax.f32 %v7311, 0.0
    %v7696 = vmax.f32 %v7312, 0.0
    %v7697 = vmax.f32 %v7313, 0.0
    %v7698 = vmax.f32 %v7314, 0.0
    %v7699 = vmax.f32 %v7315, 0.0
    %v7700 = vmax.f32 %v7316, 0.0
    %v7701 = vmax.f32 %v7317, 0.0
    %v7702 = vmax.f32 %v7318, 0.0
    %v7703 = vmax.f32 %v7319, 0.0
    %v7704 = vmax.f32 %v7320, 0.0
    %v7705 = vmax.f32 %v7321, 0.0
    %v7706 = vmax.f32 %v7322, 0.0
    %v7707 = vmax.f32 %v7323, 0.0
    %v7708 = vmax.f32 %v7324, 0.0
    %v7709 = vmax.f32 %v7325, 0.0
    %v7710 = vmax.f32 %v7326, 0.0
    %v7711 = vmax.f32 %v7327, 0.0
    %v7712 = vmax.f32 %v7328, 0.0
    %v7713 = vmax.f32 %v7329, 0.0
    %v7714 = vmax.f32 %v7330, 0.0
    %v7715 = vmax.f32 %v7331, 0.0
    %v7716 = vmax.f32 %v7332, 0.0
    %v7717 = vmax.f32 %v7333, 0.0
    %v7718 = vmax.f32 %v7334, 0.0
    %v7719 = vmax.f32 %v7335, 0.0
    %v7720 = vmax.f32 %v7336, 0.0
    %v7721 = vmax.f32 %v7337, 0.0
    %v7722 = vmax.f32 %v7338, 0.0
    %v7723 = vmax.f32 %v7339, 0.0
    %v7724 = vmax.f32 %v7340, 0.0
    %v7725 = vmax.f32 %v7341, 0.0
    %v7726 = vmax.f32 %v7342, 0.0
    %v7727 = vmax.f32 %v7343, 0.0
    %v7728 = vmax.f32 %v7344, 0.0
    %v7729 = vmax.f32 %v7345, 0.0
    %v7730 = vmax.f32 %v7346, 0.0
    %v7731 = vmax.f32 %v7347, 0.0
    %v7732 = vmax.f32 %v7348, 0.0
    %v7733 = vmax.f32 %v7349, 0.0
    %v7734 = vmax.f32 %v7350, 0.0
    %v7735 = vmax.f32 %v7351, 0.0
    %v7736 = vmax.f32 %v7352, 0.0
    %v7737 = vmax.f32 %v7353, 0.0
    %v7738 = vmax.f32 %v7354, 0.0
    %v7739 = vmax.f32 %v7355, 0.0
    %v7740 = vmax.f32 %v7356, 0.0
    %v7741 = vmax.f32 %v7357, 0.0
    %v7742 = vmax.f32 %v7358, 0.0
    %v7743 = vmax.f32 %v7359, 0.0
    %v7744 = vmax.f32 %v7360, 0.0
    %v7745 = vmax.f32 %v7361, 0.0
    %v7746 = vmax.f32 %v7362, 0.0
    %v7747 = vmax.f32 %v7363, 0.0
    %v7748 = vmax.f32 %v7364, 0.0
    %v7749 = vmax.f32 %v7365, 0.0
    %v7750 = vmax.f32 %v7366, 0.0
    %v7751 = vmax.f32 %v7367, 0.0
    %v7752 = vmax.f32 %v7368, 0.0
    %v7753 = vmax.f32 %v7369, 0.0
    %v7754 = vmax.f32 %v7370, 0.0
    %v7755 = vmax.f32 %v7371, 0.0
    %v7756 = vmax.f32 %v7372, 0.0
    %v7757 = vmax.f32 %v7373, 0.0
    %v7758 = vmax.f32 %v7374, 0.0
    %v7759 = vmax.f32 %v7375, 0.0
    %v7760 = vmax.f32 %v7376, 0.0
    %v7761 = vmax.f32 %v7377, 0.0
    %v7762 = vmax.f32 %v7378, 0.0
    %v7763 = vmax.f32 %v7379, 0.0
    %v7764 = vmax.f32 %v7380, 0.0
    %v7765 = vmax.f32 %v7381, 0.0
    %v7766 = vmax.f32 %v7382, 0.0
    %v7767 = vmax.f32 %v7383, 0.0
    %v7768 = vmax.f32 %v7384, 0.0
    %v7769 = vmax.f32 %v7385, 0.0
    %v7770 = vmax.f32 %v7386, 0.0
    %v7771 = vmax.f32 %v7387, 0.0
    %v7772 = vmax.f32 %v7388, 0.0
    %v7773 = vmax.f32 %v7389, 0.0
    %v7774 = vmax.f32 %v7390, 0.0
    %v7775 = vmax.f32 %v7391, 0.0
    %v7776 = vmax.f32 %v7392, 0.0
    %v7777 = vmax.f32 %v7393, 0.0
    %v7778 = vmax.f32 %v7394, 0.0
    %v7779 = vmax.f32 %v7395, 0.0
    %v7780 = vmax.f32 %v7396, 0.0
    %v7781 = vmax.f32 %v7397, 0.0
    %v7782 = vmax.f32 %v7398, 0.0
    %v7783 = vmax.f32 %v7399, 0.0
    %v7784 = vmax.f32 %v7400, 0.0
    %v7785 = vmax.f32 %v7401, 0.0
    %v7786 = vmax.f32 %v7402, 0.0
    %v7787 = vmax.f32 %v7403, 0.0
    %v7788 = vmax.f32 %v7404, 0.0
    %v7789 = vmax.f32 %v7405, 0.0
    %v7790 = vmax.f32 %v7406, 0.0
    %v7791 = vmax.f32 %v7407, 0.0
    %v7792 = vmax.f32 %v7408, 0.0
    %v7793 = vmax.f32 %v7409, 0.0
    %v7794 = vmax.f32 %v7410, 0.0
    %v7795 = vmax.f32 %v7411, 0.0
    %v7796 = vmax.f32 %v7412, 0.0
    %v7797 = vmax.f32 %v7413, 0.0
    %v7798 = vmax.f32 %v7414, 0.0
    %v7799 = vmax.f32 %v7415, 0.0
    %v7800 = vmax.f32 %v7416, 0.0
    %v7801 = vmax.f32 %v7417, 0.0
    %v7802 = vmax.f32 %v7418, 0.0
    %v7803 = vmax.f32 %v7419, 0.0
    %v7804 = vmax.f32 %v7420, 0.0
    %v7805 = vmax.f32 %v7421, 0.0
    %v7806 = vmax.f32 %v7422, 0.0
    %v7807 = vmax.f32 %v7423, 0.0
    %v7808 = vmax.f32 %v7424, 0.0
    %v7809 = vmax.f32 %v7425, 0.0
    %v7810 = vmax.f32 %v7426, 0.0
    %v7811 = vmax.f32 %v7427, 0.0
    %v7812 = vmax.f32 %v7428, 0.0
    %v7813 = vmax.f32 %v7429, 0.0
    %v7814 = vmax.f32 %v7430, 0.0
    %v7815 = vmax.f32 %v7431, 0.0
    %v7816 = vmax.f32 %v7432, 0.0
    %v7817 = vmax.f32 %v7433, 0.0
    %v7818 = vmax.f32 %v7434, 0.0
    %v7819 = vmax.f32 %v7435, 0.0
    %v7820 = vmax.f32 %v7436, 0.0
    %v7821 = vmax.f32 %v7437, 0.0
    %v7822 = vmax.f32 %v7438, 0.0
    %v7823 = vmax.f32 %v7439, 0.0
    %v7824 = vmax.f32 %v7440, 0.0
    %v7825 = vmax.f32 %v7441, 0.0
    %v7826 = vmax.f32 %v7442, 0.0
    %v7827 = vmax.f32 %v7443, 0.0
    %v7828 = vmax.f32 %v7444, 0.0
    %v7829 = vmax.f32 %v7445, 0.0
    %v7830 = vmax.f32 %v7446, 0.0
    %v7831 = vmax.f32 %v7447, 0.0
    %v7832 = vmax.f32 %v7448, 0.0
    %v7833 = vmax.f32 %v7449, 0.0
    %v7834 = vmax.f32 %v7450, 0.0
    %v7835 = vmax.f32 %v7451, 0.0
    %v7836 = vmax.f32 %v7452, 0.0
    %v7837 = vmax.f32 %v7453, 0.0
    %v7838 = vmax.f32 %v7454, 0.0
    %v7839 = vmax.f32 %v7455, 0.0
    %v7840 = vmax.f32 %v7456, 0.0
    %v7841 = vmax.f32 %v7457, 0.0
    %v7842 = vmax.f32 %v7458, 0.0
    %v7843 = vmax.f32 %v7459, 0.0
    %v7844 = vmax.f32 %v7460, 0.0
    %v7845 = vmax.f32 %v7461, 0.0
    %v7846 = vmax.f32 %v7462, 0.0
    %v7847 = vmax.f32 %v7463, 0.0
    %v7848 = vmax.f32 %v7464, 0.0
    %v7849 = vmax.f32 %v7465, 0.0
    %v7850 = vmax.f32 %v7466, 0.0
    %v7851 = vmax.f32 %v7467, 0.0
    %v7852 = vmax.f32 %v7468, 0.0
    %v7853 = vmax.f32 %v7469, 0.0
    %v7854 = vmax.f32 %v7470, 0.0
    %v7855 = vmax.f32 %v7471, 0.0
    %v7856 = vmax.f32 %v7472, 0.0
    %v7857 = vmax.f32 %v7473, 0.0
    %v7858 = vmax.f32 %v7474, 0.0
    %v7859 = vmax.f32 %v7475, 0.0
    %v7860 = vmax.f32 %v7476, 0.0
    %v7861 = vmax.f32 %v7477, 0.0
    %v7862 = vmax.f32 %v7478, 0.0
    %v7863 = vmax.f32 %v7479, 0.0
    %v7864 = vmax.f32 %v7480, 0.0
    %v7865 = vmax.f32 %v7481, 0.0
    %v7866 = vmax.f32 %v7482, 0.0
    %v7867 = vmax.f32 %v7483, 0.0
    %v7868 = vmax.f32 %v7484, 0.0
    %v7869 = vmax.f32 %v7485, 0.0
    %v7870 = vmax.f32 %v7486, 0.0
    %v7871 = vmax.f32 %v7487, 0.0
    %v7872 = vmax.f32 %v7488, 0.0
    %v7873 = vmax.f32 %v7489, 0.0
    %v7874 = vmax.f32 %v7490, 0.0
    %v7875 = vmax.f32 %v7491, 0.0
    %v7876 = vmax.f32 %v7492, 0.0
    %v7877 = vmax.f32 %v7493, 0.0
    %v7878 = vmax.f32 %v7494, 0.0
    %v7879 = vmax.f32 %v7495, 0.0
    %v7880 = vmax.f32 %v7496, 0.0
    %v7881 = vmax.f32 %v7497, 0.0
    %v7882 = vmax.f32 %v7498, 0.0
    %v7883 = vmax.f32 %v7499, 0.0
    %v7884 = vmax.f32 %v7500, 0.0
    %v7885 = vmax.f32 %v7501, 0.0
    %v7886 = vmax.f32 %v7502, 0.0
    %v7887 = vmax.f32 %v7503, 0.0
    %v7888 = vmax.f32 %v7504, 0.0
    %v7889 = vmax.f32 %v7505, 0.0
    %v7890 = vmax.f32 %v7506, 0.0
    %v7891 = vmax.f32 %v7507, 0.0
    %v7892 = vmax.f32 %v7508, 0.0
    %v7893 = vmax.f32 %v7509, 0.0
    %v7894 = vmax.f32 %v7510, 0.0
    %v7895 = vmax.f32 %v7511, 0.0
    %v7896 = vmax.f32 %v7512, 0.0
    %v7897 = vmax.f32 %v7513, 0.0
    %v7898 = vmax.f32 %v7514, 0.0
    %v7899 = vmax.f32 %v7515, 0.0
    %v7900 = vmax.f32 %v7516, 0.0
    %v7901 = vmax.f32 %v7517, 0.0
    %v7902 = vmax.f32 %v7518, 0.0
    %v7903 = vmax.f32 %v7519, 0.0
    %v7904 = vmax.f32 %v7520, 0.0
    %v7905 = vmax.f32 %v7521, 0.0
    %v7906 = vmax.f32 %v7522, 0.0
    %v7907 = vmax.f32 %v7523, 0.0
    %v7908 = vmax.f32 %v7524, 0.0
    %v7909 = vmax.f32 %v7525, 0.0
    %v7910 = vmax.f32 %v7526, 0.0
    %v7911 = vmax.f32 %v7527, 0.0
    %v7912 = vmax.f32 %v7528, 0.0
    %v7913 = vmax.f32 %v7529, 0.0
    %v7914 = vmax.f32 %v7530, 0.0
    %v7915 = vmax.f32 %v7531, 0.0
    %v7916 = vmax.f32 %v7532, 0.0
    %v7917 = vmax.f32 %v7533, 0.0
    %v7918 = vmax.f32 %v7534, 0.0
    %v7919 = vmax.f32 %v7535, 0.0
    %v7920 = vmax.f32 %v7536, 0.0
    %v7921 = vmax.f32 %v7537, 0.0
    %v7922 = vmax.f32 %v7538, 0.0
    %v7923 = vmax.f32 %v7539, 0.0
    %v7924 = vmax.f32 %v7540, 0.0
    %v7925 = vmax.f32 %v7541, 0.0
    %v7926 = vmax.f32 %v7542, 0.0
    %v7927 = vmax.f32 %v7543, 0.0
    %v7928 = vmax.f32 %v7544, 0.0
    %v7929 = vmax.f32 %v7545, 0.0
    %v7930 = vmax.f32 %v7546, 0.0
    %v7931 = vmax.f32 %v7547, 0.0
    %v7932 = vmax.f32 %v7548, 0.0
    %v7933 = vmax.f32 %v7549, 0.0
    %v7934 = vmax.f32 %v7550, 0.0
    %v7935 = vmax.f32 %v7551, 0.0
    %v7936 = vmax.f32 %v7552, 0.0
    %v7937 = vmax.f32 %v7553, 0.0
    %v7938 = vmax.f32 %v7554, 0.0
    %v7939 = vmax.f32 %v7555, 0.0
    %v7940 = vmax.f32 %v7556, 0.0
    %v7941 = vmax.f32 %v7557, 0.0
    %v7942 = vmax.f32 %v7558, 0.0
    %v7943 = vmax.f32 %v7559, 0.0
    %v7944 = vmax.f32 %v7560, 0.0
    %v7945 = vmax.f32 %v7561, 0.0
    %v7946 = vmax.f32 %v7562, 0.0
    %v7947 = vmax.f32 %v7563, 0.0
    %v7948 = vmax.f32 %v7564, 0.0
    %v7949 = vmax.f32 %v7565, 0.0
    %v7950 = vmax.f32 %v7566, 0.0
    %v7951 = vmax.f32 %v7567, 0.0
    %v7952 = vmax.f32 %v7568, 0.0
    %v7953 = vmax.f32 %v7569, 0.0
    %v7954 = vmax.f32 %v7570, 0.0
    %v7955 = vmax.f32 %v7571, 0.0
    %v7956 = vmax.f32 %v7572, 0.0
    %v7957 = vmax.f32 %v7573, 0.0
    %v7958 = vmax.f32 %v7574, 0.0
    %v7959 = vmax.f32 %v7575, 0.0
    %v7960 = vmax.f32 %v7576, 0.0
    %v7961 = vmax.f32 %v7577, 0.0
    %v7962 = vmax.f32 %v7578, 0.0
    %v7963 = vmax.f32 %v7579, 0.0
    %v7964 = vmax.f32 %v7580, 0.0
    %v7965 = vmax.f32 %v7581, 0.0
    %v7966 = vmax.f32 %v7582, 0.0
    %v7967 = vmax.f32 %v7583, 0.0
    %v7968 = vmax.f32 %v7584, 0.0
    %v7969 = vmax.f32 %v7585, 0.0
    %v7970 = vmax.f32 %v7586, 0.0
    %v7971 = vmax.f32 %v7587, 0.0
    %v7972 = vmax.f32 %v7588, 0.0
    %v7973 = vmax.f32 %v7589, 0.0
    %v7974 = vmax.f32 %v7590, 0.0
    %v7975 = vmax.f32 %v7591, 0.0
    %v7976 = vmax.f32 %v7592, 0.0
    %v7977 = vmax.f32 %v7593, 0.0
    %v7978 = vmax.f32 %v7594, 0.0
    %v7979 = vmax.f32 %v7595, 0.0
    %v7980 = vmax.f32 %v7596, 0.0
    %v7981 = vmax.f32 %v7597, 0.0
    %v7982 = vmax.f32 %v7598, 0.0
    %v7983 = vmax.f32 %v7599, 0.0
    %v7984 = vmax.f32 %v7600, 0.0
    %v7985 = vmax.f32 %v7601, 0.0
    %v7986 = vmax.f32 %v7602, 0.0
    %v7987 = vmax.f32 %v7603, 0.0
    %v7988 = vmax.f32 %v7604, 0.0
    %v7989 = vmax.f32 %v7605, 0.0
    %v7990 = vmax.f32 %v7606, 0.0
    %v7991 = vmax.f32 %v7607, 0.0
    %v7992 = vmax.f32 %v7608, 0.0
    %v7993 = vmax.f32 %v7609, 0.0
    %v7994 = vmax.f32 %v7610, 0.0
    %v7995 = vmax.f32 %v7611, 0.0
    %v7996 = vmax.f32 %v7612, 0.0
    %v7997 = vmax.f32 %v7613, 0.0
    %v7998 = vmax.f32 %v7614, 0.0
    %v7999 = vmax.f32 %v7615, 0.0
    %v8000 = vmax.f32 %v7616, 0.0
    %v8001 = vmax.f32 %v7617, 0.0
    %v8002 = vmax.f32 %v7618, 0.0
    %v8003 = vmax.f32 %v7619, 0.0
    %v8004 = vmax.f32 %v7620, 0.0
    %v8005 = vmax.f32 %v7621, 0.0
    %v8006 = vmax.f32 %v7622, 0.0
    %v8007 = vmax.f32 %v7623, 0.0
    %v8008 = vmax.f32 %v7624, 0.0
    %v8009 = vmax.f32 %v7625, 0.0
    %v8010 = vmax.f32 %v7626, 0.0
    %v8011 = vmax.f32 %v7627, 0.0
    %v8012 = vmax.f32 %v7628, 0.0
    %v8013 = vmax.f32 %v7629, 0.0
    %v8014 = vmax.f32 %v7630, 0.0
    %v8015 = vmax.f32 %v7631, 0.0
    %v8016 = vmax.f32 %v7632, 0.0
    %v8017 = vmax.f32 %v7633, 0.0
    %v8018 = vmax.f32 %v7634, 0.0
    %v8019 = vmax.f32 %v7635, 0.0
    %v8020 = vmax.f32 %v7636, 0.0
    %v8021 = vmax.f32 %v7637, 0.0
    %v8022 = vmax.f32 %v7638, 0.0
    %v8023 = vmax.f32 %v7639, 0.0
    %v8024 = vmax.f32 %v7640, 0.0
    %v8025 = vmax.f32 %v7641, 0.0
    %v8026 = vmax.f32 %v7642, 0.0
    %v8027 = vmax.f32 %v7643, 0.0
    %v8028 = vmax.f32 %v7644, 0.0
    %v8029 = vmax.f32 %v7645, 0.0
    %v8030 = vmax.f32 %v7646, 0.0
    %v8031 = vmax.f32 %v7647, 0.0
    %v8032 = vmax.f32 %v7648, 0.0
    %v8033 = vmax.f32 %v7649, 0.0
    %v8034 = vmax.f32 %v7650, 0.0
    %v8035 = vmax.f32 %v7651, 0.0
    %v8036 = vmax.f32 %v7652, 0.0
    %v8037 = vmax.f32 %v7653, 0.0
    %v8038 = vmax.f32 %v7654, 0.0
    %v8039 = vmax.f32 %v7655, 0.0
    %v8040 = vmax.f32 %v7656, 0.0
    %v8041 = vmax.f32 %v7657, 0.0
    %v8042 = vmax.f32 %v7658, 0.0
    %v8043 = vmax.f32 %v7659, 0.0
    %v8044 = vmax.f32 %v7660, 0.0
    %v8045 = vmax.f32 %v7661, 0.0
    %v8046 = vmax.f32 %v7662, 0.0
    %v8047 = vmax.f32 %v7663, 0.0
    %v8048 = vmax.f32 %v7664, 0.0
    %v8049 = vmax.f32 %v7665, 0.0
    %v8050 = vmax.f32 %v7666, 0.0
    %v8051 = vmax.f32 %v7667, 0.0
    %v8052 = vmax.f32 %v7668, 0.0
    %v8053 = vmax.f32 %v7669, 0.0
    %v8054 = vmax.f32 %v7670, 0.0
    %v8055 = vmax.f32 %v7671, 0.0
    %v8056 = vmax.f32 %v7672, 0.0
    %v8057 = vmax.f32 %v7673, 0.0
    %v8058 = vmax.f32 %v7674, 0.0
    %v8059 = vmax.f32 %v7675, 0.0
    %v8060 = vmax.f32 %v7676, 0.0
    %v8061 = vmax.f32 %v7677, 0.0
    %v8062 = vmax.f32 %v7678, 0.0
    %v8063 = vmax.f32 %v7679, 0.0
    %v8064 = vmax.f32 %v7680, 0.0
    %v8065 = vmax.f32 %v7681, 0.0
    %v8066 = vmax.f32 %v7682, 0.0
    %v8067 = vmax.f32 %v7683, 0.0
    %v8068 = vmax.f32 %v7684, 0.0
    %v8069 = vmax.f32 %v7685, 0.0
    %v8070 = vmax.f32 %v7686, 0.0
    %v8071 = vmax.f32 %v7687, 0.0
    %v8072 = vld [vmem:[%s7] sm:$0x7]
    %v8074 = vlaneseq
    %v8075 = vshrl.u32 %v8074, 7
    %v8076 = vsub.s32 0, %v8075
    %v8077 = vrot.slane %v8072, %v8076
    %v8078 = vlaneseq
    %v8079 = vshrl.u32 %v8078, 7
    %v8080 = vsub.s32 1, %v8079
    %v8081 = vrot.slane %v8072, %v8080
    %v8082 = vlaneseq
    %v8083 = vshrl.u32 %v8082, 7
    %v8084 = vsub.s32 2, %v8083
    %v8085 = vrot.slane %v8072, %v8084
    %v8089 = vmul.f32 %v7688, %v8077
    %v8090 = vmul.f32 %v7689, %v8081
    %v8091 = vmul.f32 %v7690, %v8085
    %v8092 = vmul.f32 %v7691, %v8077
    %v8093 = vmul.f32 %v7692, %v8081
    %v8094 = vmul.f32 %v7693, %v8085
    %v8095 = vmul.f32 %v7694, %v8077
    %v8096 = vmul.f32 %v7695, %v8081
    %v8097 = vmul.f32 %v7696, %v8085
    %v8098 = vmul.f32 %v7697, %v8077
    %v8099 = vmul.f32 %v7698, %v8081
    %v8100 = vmul.f32 %v7699, %v8085
    %v8101 = vmul.f32 %v7700, %v8077
    %v8102 = vmul.f32 %v7701, %v8081
    %v8103 = vmul.f32 %v7702, %v8085
    %v8104 = vmul.f32 %v7703, %v8077
    %v8105 = vmul.f32 %v7704, %v8081
    %v8106 = vmul.f32 %v7705, %v8085
    %v8107 = vmul.f32 %v7706, %v8077
    %v8108 = vmul.f32 %v7707, %v8081
    %v8109 = vmul.f32 %v7708, %v8085
    %v8110 = vmul.f32 %v7709, %v8077
    %v8111 = vmul.f32 %v7710, %v8081
    %v8112 = vmul.f32 %v7711, %v8085
    %v8113 = vmul.f32 %v7712, %v8077
    %v8114 = vmul.f32 %v7713, %v8081
    %v8115 = vmul.f32 %v7714, %v8085
    %v8116 = vmul.f32 %v7715, %v8077
    %v8117 = vmul.f32 %v7716, %v8081
    %v8118 = vmul.f32 %v7717, %v8085
    %v8119 = vmul.f32 %v7718, %v8077
    %v8120 = vmul.f32 %v7719, %v8081
    %v8121 = vmul.f32 %v7720, %v8085
    %v8122 = vmul.f32 %v7721, %v8077
    %v8123 = vmul.f32 %v7722, %v8081
    %v8124 = vmul.f32 %v7723, %v8085
    %v8125 = vmul.f32 %v7724, %v8077
    %v8126 = vmul.f32 %v7725, %v8081
    %v8127 = vmul.f32 %v7726, %v8085
    %v8128 = vmul.f32 %v7727, %v8077
    %v8129 = vmul.f32 %v7728, %v8081
    %v8130 = vmul.f32 %v7729, %v8085
    %v8131 = vmul.f32 %v7730, %v8077
    %v8132 = vmul.f32 %v7731, %v8081
    %v8133 = vmul.f32 %v7732, %v8085
    %v8134 = vmul.f32 %v7733, %v8077
    %v8135 = vmul.f32 %v7734, %v8081
    %v8136 = vmul.f32 %v7735, %v8085
    %v8137 = vmul.f32 %v7736, %v8077
    %v8138 = vmul.f32 %v7737, %v8081
    %v8139 = vmul.f32 %v7738, %v8085
    %v8140 = vmul.f32 %v7739, %v8077
    %v8141 = vmul.f32 %v7740, %v8081
    %v8142 = vmul.f32 %v7741, %v8085
    %v8143 = vmul.f32 %v7742, %v8077
    %v8144 = vmul.f32 %v7743, %v8081
    %v8145 = vmul.f32 %v7744, %v8085
    %v8146 = vmul.f32 %v7745, %v8077
    %v8147 = vmul.f32 %v7746, %v8081
    %v8148 = vmul.f32 %v7747, %v8085
    %v8149 = vmul.f32 %v7748, %v8077
    %v8150 = vmul.f32 %v7749, %v8081
    %v8151 = vmul.f32 %v7750, %v8085
    %v8152 = vmul.f32 %v7751, %v8077
    %v8153 = vmul.f32 %v7752, %v8081
    %v8154 = vmul.f32 %v7753, %v8085
    %v8155 = vmul.f32 %v7754, %v8077
    %v8156 = vmul.f32 %v7755, %v8081
    %v8157 = vmul.f32 %v7756, %v8085
    %v8158 = vmul.f32 %v7757, %v8077
    %v8159 = vmul.f32 %v7758, %v8081
    %v8160 = vmul.f32 %v7759, %v8085
    %v8161 = vmul.f32 %v7760, %v8077
    %v8162 = vmul.f32 %v7761, %v8081
    %v8163 = vmul.f32 %v7762, %v8085
    %v8164 = vmul.f32 %v7763, %v8077
    %v8165 = vmul.f32 %v7764, %v8081
    %v8166 = vmul.f32 %v7765, %v8085
    %v8167 = vmul.f32 %v7766, %v8077
    %v8168 = vmul.f32 %v7767, %v8081
    %v8169 = vmul.f32 %v7768, %v8085
    %v8170 = vmul.f32 %v7769, %v8077
    %v8171 = vmul.f32 %v7770, %v8081
    %v8172 = vmul.f32 %v7771, %v8085
    %v8173 = vmul.f32 %v7772, %v8077
    %v8174 = vmul.f32 %v7773, %v8081
    %v8175 = vmul.f32 %v7774, %v8085
    %v8176 = vmul.f32 %v7775, %v8077
    %v8177 = vmul.f32 %v7776, %v8081
    %v8178 = vmul.f32 %v7777, %v8085
    %v8179 = vmul.f32 %v7778, %v8077
    %v8180 = vmul.f32 %v7779, %v8081
    %v8181 = vmul.f32 %v7780, %v8085
    %v8182 = vmul.f32 %v7781, %v8077
    %v8183 = vmul.f32 %v7782, %v8081
    %v8184 = vmul.f32 %v7783, %v8085
    %v8185 = vmul.f32 %v7784, %v8077
    %v8186 = vmul.f32 %v7785, %v8081
    %v8187 = vmul.f32 %v7786, %v8085
    %v8188 = vmul.f32 %v7787, %v8077
    %v8189 = vmul.f32 %v7788, %v8081
    %v8190 = vmul.f32 %v7789, %v8085
    %v8191 = vmul.f32 %v7790, %v8077
    %v8192 = vmul.f32 %v7791, %v8081
    %v8193 = vmul.f32 %v7792, %v8085
    %v8194 = vmul.f32 %v7793, %v8077
    %v8195 = vmul.f32 %v7794, %v8081
    %v8196 = vmul.f32 %v7795, %v8085
    %v8197 = vmul.f32 %v7796, %v8077
    %v8198 = vmul.f32 %v7797, %v8081
    %v8199 = vmul.f32 %v7798, %v8085
    %v8200 = vmul.f32 %v7799, %v8077
    %v8201 = vmul.f32 %v7800, %v8081
    %v8202 = vmul.f32 %v7801, %v8085
    %v8203 = vmul.f32 %v7802, %v8077
    %v8204 = vmul.f32 %v7803, %v8081
    %v8205 = vmul.f32 %v7804, %v8085
    %v8206 = vmul.f32 %v7805, %v8077
    %v8207 = vmul.f32 %v7806, %v8081
    %v8208 = vmul.f32 %v7807, %v8085
    %v8209 = vmul.f32 %v7808, %v8077
    %v8210 = vmul.f32 %v7809, %v8081
    %v8211 = vmul.f32 %v7810, %v8085
    %v8212 = vmul.f32 %v7811, %v8077
    %v8213 = vmul.f32 %v7812, %v8081
    %v8214 = vmul.f32 %v7813, %v8085
    %v8215 = vmul.f32 %v7814, %v8077
    %v8216 = vmul.f32 %v7815, %v8081
    %v8217 = vmul.f32 %v7816, %v8085
    %v8218 = vmul.f32 %v7817, %v8077
    %v8219 = vmul.f32 %v7818, %v8081
    %v8220 = vmul.f32 %v7819, %v8085
    %v8221 = vmul.f32 %v7820, %v8077
    %v8222 = vmul.f32 %v7821, %v8081
    %v8223 = vmul.f32 %v7822, %v8085
    %v8224 = vmul.f32 %v7823, %v8077
    %v8225 = vmul.f32 %v7824, %v8081
    %v8226 = vmul.f32 %v7825, %v8085
    %v8227 = vmul.f32 %v7826, %v8077
    %v8228 = vmul.f32 %v7827, %v8081
    %v8229 = vmul.f32 %v7828, %v8085
    %v8230 = vmul.f32 %v7829, %v8077
    %v8231 = vmul.f32 %v7830, %v8081
    %v8232 = vmul.f32 %v7831, %v8085
    %v8233 = vmul.f32 %v7832, %v8077
    %v8234 = vmul.f32 %v7833, %v8081
    %v8235 = vmul.f32 %v7834, %v8085
    %v8236 = vmul.f32 %v7835, %v8077
    %v8237 = vmul.f32 %v7836, %v8081
    %v8238 = vmul.f32 %v7837, %v8085
    %v8239 = vmul.f32 %v7838, %v8077
    %v8240 = vmul.f32 %v7839, %v8081
    %v8241 = vmul.f32 %v7840, %v8085
    %v8242 = vmul.f32 %v7841, %v8077
    %v8243 = vmul.f32 %v7842, %v8081
    %v8244 = vmul.f32 %v7843, %v8085
    %v8245 = vmul.f32 %v7844, %v8077
    %v8246 = vmul.f32 %v7845, %v8081
    %v8247 = vmul.f32 %v7846, %v8085
    %v8248 = vmul.f32 %v7847, %v8077
    %v8249 = vmul.f32 %v7848, %v8081
    %v8250 = vmul.f32 %v7849, %v8085
    %v8251 = vmul.f32 %v7850, %v8077
    %v8252 = vmul.f32 %v7851, %v8081
    %v8253 = vmul.f32 %v7852, %v8085
    %v8254 = vmul.f32 %v7853, %v8077
    %v8255 = vmul.f32 %v7854, %v8081
    %v8256 = vmul.f32 %v7855, %v8085
    %v8257 = vmul.f32 %v7856, %v8077
    %v8258 = vmul.f32 %v7857, %v8081
    %v8259 = vmul.f32 %v7858, %v8085
    %v8260 = vmul.f32 %v7859, %v8077
    %v8261 = vmul.f32 %v7860, %v8081
    %v8262 = vmul.f32 %v7861, %v8085
    %v8263 = vmul.f32 %v7862, %v8077
    %v8264 = vmul.f32 %v7863, %v8081
    %v8265 = vmul.f32 %v7864, %v8085
    %v8266 = vmul.f32 %v7865, %v8077
    %v8267 = vmul.f32 %v7866, %v8081
    %v8268 = vmul.f32 %v7867, %v8085
    %v8269 = vmul.f32 %v7868, %v8077
    %v8270 = vmul.f32 %v7869, %v8081
    %v8271 = vmul.f32 %v7870, %v8085
    %v8272 = vmul.f32 %v7871, %v8077
    %v8273 = vmul.f32 %v7872, %v8081
    %v8274 = vmul.f32 %v7873, %v8085
    %v8275 = vmul.f32 %v7874, %v8077
    %v8276 = vmul.f32 %v7875, %v8081
    %v8277 = vmul.f32 %v7876, %v8085
    %v8278 = vmul.f32 %v7877, %v8077
    %v8279 = vmul.f32 %v7878, %v8081
    %v8280 = vmul.f32 %v7879, %v8085
    %v8281 = vmul.f32 %v7880, %v8077
    %v8282 = vmul.f32 %v7881, %v8081
    %v8283 = vmul.f32 %v7882, %v8085
    %v8284 = vmul.f32 %v7883, %v8077
    %v8285 = vmul.f32 %v7884, %v8081
    %v8286 = vmul.f32 %v7885, %v8085
    %v8287 = vmul.f32 %v7886, %v8077
    %v8288 = vmul.f32 %v7887, %v8081
    %v8289 = vmul.f32 %v7888, %v8085
    %v8290 = vmul.f32 %v7889, %v8077
    %v8291 = vmul.f32 %v7890, %v8081
    %v8292 = vmul.f32 %v7891, %v8085
    %v8293 = vmul.f32 %v7892, %v8077
    %v8294 = vmul.f32 %v7893, %v8081
    %v8295 = vmul.f32 %v7894, %v8085
    %v8296 = vmul.f32 %v7895, %v8077
    %v8297 = vmul.f32 %v7896, %v8081
    %v8298 = vmul.f32 %v7897, %v8085
    %v8299 = vmul.f32 %v7898, %v8077
    %v8300 = vmul.f32 %v7899, %v8081
    %v8301 = vmul.f32 %v7900, %v8085
    %v8302 = vmul.f32 %v7901, %v8077
    %v8303 = vmul.f32 %v7902, %v8081
    %v8304 = vmul.f32 %v7903, %v8085
    %v8305 = vmul.f32 %v7904, %v8077
    %v8306 = vmul.f32 %v7905, %v8081
    %v8307 = vmul.f32 %v7906, %v8085
    %v8308 = vmul.f32 %v7907, %v8077
    %v8309 = vmul.f32 %v7908, %v8081
    %v8310 = vmul.f32 %v7909, %v8085
    %v8311 = vmul.f32 %v7910, %v8077
    %v8312 = vmul.f32 %v7911, %v8081
    %v8313 = vmul.f32 %v7912, %v8085
    %v8314 = vmul.f32 %v7913, %v8077
    %v8315 = vmul.f32 %v7914, %v8081
    %v8316 = vmul.f32 %v7915, %v8085
    %v8317 = vmul.f32 %v7916, %v8077
    %v8318 = vmul.f32 %v7917, %v8081
    %v8319 = vmul.f32 %v7918, %v8085
    %v8320 = vmul.f32 %v7919, %v8077
    %v8321 = vmul.f32 %v7920, %v8081
    %v8322 = vmul.f32 %v7921, %v8085
    %v8323 = vmul.f32 %v7922, %v8077
    %v8324 = vmul.f32 %v7923, %v8081
    %v8325 = vmul.f32 %v7924, %v8085
    %v8326 = vmul.f32 %v7925, %v8077
    %v8327 = vmul.f32 %v7926, %v8081
    %v8328 = vmul.f32 %v7927, %v8085
    %v8329 = vmul.f32 %v7928, %v8077
    %v8330 = vmul.f32 %v7929, %v8081
    %v8331 = vmul.f32 %v7930, %v8085
    %v8332 = vmul.f32 %v7931, %v8077
    %v8333 = vmul.f32 %v7932, %v8081
    %v8334 = vmul.f32 %v7933, %v8085
    %v8335 = vmul.f32 %v7934, %v8077
    %v8336 = vmul.f32 %v7935, %v8081
    %v8337 = vmul.f32 %v7936, %v8085
    %v8338 = vmul.f32 %v7937, %v8077
    %v8339 = vmul.f32 %v7938, %v8081
    %v8340 = vmul.f32 %v7939, %v8085
    %v8341 = vmul.f32 %v7940, %v8077
    %v8342 = vmul.f32 %v7941, %v8081
    %v8343 = vmul.f32 %v7942, %v8085
    %v8344 = vmul.f32 %v7943, %v8077
    %v8345 = vmul.f32 %v7944, %v8081
    %v8346 = vmul.f32 %v7945, %v8085
    %v8347 = vmul.f32 %v7946, %v8077
    %v8348 = vmul.f32 %v7947, %v8081
    %v8349 = vmul.f32 %v7948, %v8085
    %v8350 = vmul.f32 %v7949, %v8077
    %v8351 = vmul.f32 %v7950, %v8081
    %v8352 = vmul.f32 %v7951, %v8085
    %v8353 = vmul.f32 %v7952, %v8077
    %v8354 = vmul.f32 %v7953, %v8081
    %v8355 = vmul.f32 %v7954, %v8085
    %v8356 = vmul.f32 %v7955, %v8077
    %v8357 = vmul.f32 %v7956, %v8081
    %v8358 = vmul.f32 %v7957, %v8085
    %v8359 = vmul.f32 %v7958, %v8077
    %v8360 = vmul.f32 %v7959, %v8081
    %v8361 = vmul.f32 %v7960, %v8085
    %v8362 = vmul.f32 %v7961, %v8077
    %v8363 = vmul.f32 %v7962, %v8081
    %v8364 = vmul.f32 %v7963, %v8085
    %v8365 = vmul.f32 %v7964, %v8077
    %v8366 = vmul.f32 %v7965, %v8081
    %v8367 = vmul.f32 %v7966, %v8085
    %v8368 = vmul.f32 %v7967, %v8077
    %v8369 = vmul.f32 %v7968, %v8081
    %v8370 = vmul.f32 %v7969, %v8085
    %v8371 = vmul.f32 %v7970, %v8077
    %v8372 = vmul.f32 %v7971, %v8081
    %v8373 = vmul.f32 %v7972, %v8085
    %v8374 = vmul.f32 %v7973, %v8077
    %v8375 = vmul.f32 %v7974, %v8081
    %v8376 = vmul.f32 %v7975, %v8085
    %v8377 = vmul.f32 %v7976, %v8077
    %v8378 = vmul.f32 %v7977, %v8081
    %v8379 = vmul.f32 %v7978, %v8085
    %v8380 = vmul.f32 %v7979, %v8077
    %v8381 = vmul.f32 %v7980, %v8081
    %v8382 = vmul.f32 %v7981, %v8085
    %v8383 = vmul.f32 %v7982, %v8077
    %v8384 = vmul.f32 %v7983, %v8081
    %v8385 = vmul.f32 %v7984, %v8085
    %v8386 = vmul.f32 %v7985, %v8077
    %v8387 = vmul.f32 %v7986, %v8081
    %v8388 = vmul.f32 %v7987, %v8085
    %v8389 = vmul.f32 %v7988, %v8077
    %v8390 = vmul.f32 %v7989, %v8081
    %v8391 = vmul.f32 %v7990, %v8085
    %v8392 = vmul.f32 %v7991, %v8077
    %v8393 = vmul.f32 %v7992, %v8081
    %v8394 = vmul.f32 %v7993, %v8085
    %v8395 = vmul.f32 %v7994, %v8077
    %v8396 = vmul.f32 %v7995, %v8081
    %v8397 = vmul.f32 %v7996, %v8085
    %v8398 = vmul.f32 %v7997, %v8077
    %v8399 = vmul.f32 %v7998, %v8081
    %v8400 = vmul.f32 %v7999, %v8085
    %v8401 = vmul.f32 %v8000, %v8077
    %v8402 = vmul.f32 %v8001, %v8081
    %v8403 = vmul.f32 %v8002, %v8085
    %v8404 = vmul.f32 %v8003, %v8077
    %v8405 = vmul.f32 %v8004, %v8081
    %v8406 = vmul.f32 %v8005, %v8085
    %v8407 = vmul.f32 %v8006, %v8077
    %v8408 = vmul.f32 %v8007, %v8081
    %v8409 = vmul.f32 %v8008, %v8085
    %v8410 = vmul.f32 %v8009, %v8077
    %v8411 = vmul.f32 %v8010, %v8081
    %v8412 = vmul.f32 %v8011, %v8085
    %v8413 = vmul.f32 %v8012, %v8077
    %v8414 = vmul.f32 %v8013, %v8081
    %v8415 = vmul.f32 %v8014, %v8085
    %v8416 = vmul.f32 %v8015, %v8077
    %v8417 = vmul.f32 %v8016, %v8081
    %v8418 = vmul.f32 %v8017, %v8085
    %v8419 = vmul.f32 %v8018, %v8077
    %v8420 = vmul.f32 %v8019, %v8081
    %v8421 = vmul.f32 %v8020, %v8085
    %v8422 = vmul.f32 %v8021, %v8077
    %v8423 = vmul.f32 %v8022, %v8081
    %v8424 = vmul.f32 %v8023, %v8085
    %v8425 = vmul.f32 %v8024, %v8077
    %v8426 = vmul.f32 %v8025, %v8081
    %v8427 = vmul.f32 %v8026, %v8085
    %v8428 = vmul.f32 %v8027, %v8077
    %v8429 = vmul.f32 %v8028, %v8081
    %v8430 = vmul.f32 %v8029, %v8085
    %v8431 = vmul.f32 %v8030, %v8077
    %v8432 = vmul.f32 %v8031, %v8081
    %v8433 = vmul.f32 %v8032, %v8085
    %v8434 = vmul.f32 %v8033, %v8077
    %v8435 = vmul.f32 %v8034, %v8081
    %v8436 = vmul.f32 %v8035, %v8085
    %v8437 = vmul.f32 %v8036, %v8077
    %v8438 = vmul.f32 %v8037, %v8081
    %v8439 = vmul.f32 %v8038, %v8085
    %v8440 = vmul.f32 %v8039, %v8077
    %v8441 = vmul.f32 %v8040, %v8081
    %v8442 = vmul.f32 %v8041, %v8085
    %v8443 = vmul.f32 %v8042, %v8077
    %v8444 = vmul.f32 %v8043, %v8081
    %v8445 = vmul.f32 %v8044, %v8085
    %v8446 = vmul.f32 %v8045, %v8077
    %v8447 = vmul.f32 %v8046, %v8081
    %v8448 = vmul.f32 %v8047, %v8085
    %v8449 = vmul.f32 %v8048, %v8077
    %v8450 = vmul.f32 %v8049, %v8081
    %v8451 = vmul.f32 %v8050, %v8085
    %v8452 = vmul.f32 %v8051, %v8077
    %v8453 = vmul.f32 %v8052, %v8081
    %v8454 = vmul.f32 %v8053, %v8085
    %v8455 = vmul.f32 %v8054, %v8077
    %v8456 = vmul.f32 %v8055, %v8081
    %v8457 = vmul.f32 %v8056, %v8085
    %v8458 = vmul.f32 %v8057, %v8077
    %v8459 = vmul.f32 %v8058, %v8081
    %v8460 = vmul.f32 %v8059, %v8085
    %v8461 = vmul.f32 %v8060, %v8077
    %v8462 = vmul.f32 %v8061, %v8081
    %v8463 = vmul.f32 %v8062, %v8085
    %v8464 = vmul.f32 %v8063, %v8077
    %v8465 = vmul.f32 %v8064, %v8081
    %v8466 = vmul.f32 %v8065, %v8085
    %v8467 = vmul.f32 %v8066, %v8077
    %v8468 = vmul.f32 %v8067, %v8081
    %v8469 = vmul.f32 %v8068, %v8085
    %v8470 = vmul.f32 %v8069, %v8077
    %v8471 = vmul.f32 %v8070, %v8081
    %v8472 = vmul.f32 %v8071, %v8085
    %v8473 = vadd.f32 %v8089, %v8090
    %v8474 = vadd.f32 %v8473, %v8091
    %8475 = vadd.xlane.f32.xlu0 %v8474
    %v8476 = vpop.xlane.xlu0 %8475
    %v8477 = vadd.f32 %v8092, %v8093
    %v8478 = vadd.f32 %v8477, %v8094
    %8479 = vadd.xlane.f32.xlu0 %v8478
    %v8480 = vpop.xlane.xlu0 %8479
    %v8481 = vadd.f32 %v8095, %v8096
    %v8482 = vadd.f32 %v8481, %v8097
    %8483 = vadd.xlane.f32.xlu0 %v8482
    %v8484 = vpop.xlane.xlu0 %8483
    %v8485 = vadd.f32 %v8098, %v8099
    %v8486 = vadd.f32 %v8485, %v8100
    %8487 = vadd.xlane.f32.xlu0 %v8486
    %v8488 = vpop.xlane.xlu0 %8487
    %v8489 = vadd.f32 %v8101, %v8102
    %v8490 = vadd.f32 %v8489, %v8103
    %8491 = vadd.xlane.f32.xlu0 %v8490
    %v8492 = vpop.xlane.xlu0 %8491
    %v8493 = vadd.f32 %v8104, %v8105
    %v8494 = vadd.f32 %v8493, %v8106
    %8495 = vadd.xlane.f32.xlu0 %v8494
    %v8496 = vpop.xlane.xlu0 %8495
    %v8497 = vadd.f32 %v8107, %v8108
    %v8498 = vadd.f32 %v8497, %v8109
    %8499 = vadd.xlane.f32.xlu0 %v8498
    %v8500 = vpop.xlane.xlu0 %8499
    %v8501 = vadd.f32 %v8110, %v8111
    %v8502 = vadd.f32 %v8501, %v8112
    %8503 = vadd.xlane.f32.xlu0 %v8502
    %v8504 = vpop.xlane.xlu0 %8503
    %v8505 = vadd.f32 %v8113, %v8114
    %v8506 = vadd.f32 %v8505, %v8115
    %8507 = vadd.xlane.f32.xlu0 %v8506
    %v8508 = vpop.xlane.xlu0 %8507
    %v8509 = vadd.f32 %v8116, %v8117
    %v8510 = vadd.f32 %v8509, %v8118
    %8511 = vadd.xlane.f32.xlu0 %v8510
    %v8512 = vpop.xlane.xlu0 %8511
    %v8513 = vadd.f32 %v8119, %v8120
    %v8514 = vadd.f32 %v8513, %v8121
    %8515 = vadd.xlane.f32.xlu0 %v8514
    %v8516 = vpop.xlane.xlu0 %8515
    %v8517 = vadd.f32 %v8122, %v8123
    %v8518 = vadd.f32 %v8517, %v8124
    %8519 = vadd.xlane.f32.xlu0 %v8518
    %v8520 = vpop.xlane.xlu0 %8519
    %v8521 = vadd.f32 %v8125, %v8126
    %v8522 = vadd.f32 %v8521, %v8127
    %8523 = vadd.xlane.f32.xlu0 %v8522
    %v8524 = vpop.xlane.xlu0 %8523
    %v8525 = vadd.f32 %v8128, %v8129
    %v8526 = vadd.f32 %v8525, %v8130
    %8527 = vadd.xlane.f32.xlu0 %v8526
    %v8528 = vpop.xlane.xlu0 %8527
    %v8529 = vadd.f32 %v8131, %v8132
    %v8530 = vadd.f32 %v8529, %v8133
    %8531 = vadd.xlane.f32.xlu0 %v8530
    %v8532 = vpop.xlane.xlu0 %8531
    %v8533 = vadd.f32 %v8134, %v8135
    %v8534 = vadd.f32 %v8533, %v8136
    %8535 = vadd.xlane.f32.xlu0 %v8534
    %v8536 = vpop.xlane.xlu0 %8535
    %v8537 = vadd.f32 %v8137, %v8138
    %v8538 = vadd.f32 %v8537, %v8139
    %8539 = vadd.xlane.f32.xlu0 %v8538
    %v8540 = vpop.xlane.xlu0 %8539
    %v8541 = vadd.f32 %v8140, %v8141
    %v8542 = vadd.f32 %v8541, %v8142
    %8543 = vadd.xlane.f32.xlu0 %v8542
    %v8544 = vpop.xlane.xlu0 %8543
    %v8545 = vadd.f32 %v8143, %v8144
    %v8546 = vadd.f32 %v8545, %v8145
    %8547 = vadd.xlane.f32.xlu0 %v8546
    %v8548 = vpop.xlane.xlu0 %8547
    %v8549 = vadd.f32 %v8146, %v8147
    %v8550 = vadd.f32 %v8549, %v8148
    %8551 = vadd.xlane.f32.xlu0 %v8550
    %v8552 = vpop.xlane.xlu0 %8551
    %v8553 = vadd.f32 %v8149, %v8150
    %v8554 = vadd.f32 %v8553, %v8151
    %8555 = vadd.xlane.f32.xlu0 %v8554
    %v8556 = vpop.xlane.xlu0 %8555
    %v8557 = vadd.f32 %v8152, %v8153
    %v8558 = vadd.f32 %v8557, %v8154
    %8559 = vadd.xlane.f32.xlu0 %v8558
    %v8560 = vpop.xlane.xlu0 %8559
    %v8561 = vadd.f32 %v8155, %v8156
    %v8562 = vadd.f32 %v8561, %v8157
    %8563 = vadd.xlane.f32.xlu0 %v8562
    %v8564 = vpop.xlane.xlu0 %8563
    %v8565 = vadd.f32 %v8158, %v8159
    %v8566 = vadd.f32 %v8565, %v8160
    %8567 = vadd.xlane.f32.xlu0 %v8566
    %v8568 = vpop.xlane.xlu0 %8567
    %v8569 = vadd.f32 %v8161, %v8162
    %v8570 = vadd.f32 %v8569, %v8163
    %8571 = vadd.xlane.f32.xlu0 %v8570
    %v8572 = vpop.xlane.xlu0 %8571
    %v8573 = vadd.f32 %v8164, %v8165
    %v8574 = vadd.f32 %v8573, %v8166
    %8575 = vadd.xlane.f32.xlu0 %v8574
    %v8576 = vpop.xlane.xlu0 %8575
    %v8577 = vadd.f32 %v8167, %v8168
    %v8578 = vadd.f32 %v8577, %v8169
    %8579 = vadd.xlane.f32.xlu0 %v8578
    %v8580 = vpop.xlane.xlu0 %8579
    %v8581 = vadd.f32 %v8170, %v8171
    %v8582 = vadd.f32 %v8581, %v8172
    %8583 = vadd.xlane.f32.xlu0 %v8582
    %v8584 = vpop.xlane.xlu0 %8583
    %v8585 = vadd.f32 %v8173, %v8174
    %v8586 = vadd.f32 %v8585, %v8175
    %8587 = vadd.xlane.f32.xlu0 %v8586
    %v8588 = vpop.xlane.xlu0 %8587
    %v8589 = vadd.f32 %v8176, %v8177
    %v8590 = vadd.f32 %v8589, %v8178
    %8591 = vadd.xlane.f32.xlu0 %v8590
    %v8592 = vpop.xlane.xlu0 %8591
    %v8593 = vadd.f32 %v8179, %v8180
    %v8594 = vadd.f32 %v8593, %v8181
    %8595 = vadd.xlane.f32.xlu0 %v8594
    %v8596 = vpop.xlane.xlu0 %8595
    %v8597 = vadd.f32 %v8182, %v8183
    %v8598 = vadd.f32 %v8597, %v8184
    %8599 = vadd.xlane.f32.xlu0 %v8598
    %v8600 = vpop.xlane.xlu0 %8599
    %v8601 = vadd.f32 %v8185, %v8186
    %v8602 = vadd.f32 %v8601, %v8187
    %8603 = vadd.xlane.f32.xlu0 %v8602
    %v8604 = vpop.xlane.xlu0 %8603
    %v8605 = vadd.f32 %v8188, %v8189
    %v8606 = vadd.f32 %v8605, %v8190
    %8607 = vadd.xlane.f32.xlu0 %v8606
    %v8608 = vpop.xlane.xlu0 %8607
    %v8609 = vadd.f32 %v8191, %v8192
    %v8610 = vadd.f32 %v8609, %v8193
    %8611 = vadd.xlane.f32.xlu0 %v8610
    %v8612 = vpop.xlane.xlu0 %8611
    %v8613 = vadd.f32 %v8194, %v8195
    %v8614 = vadd.f32 %v8613, %v8196
    %8615 = vadd.xlane.f32.xlu0 %v8614
    %v8616 = vpop.xlane.xlu0 %8615
    %v8617 = vadd.f32 %v8197, %v8198
    %v8618 = vadd.f32 %v8617, %v8199
    %8619 = vadd.xlane.f32.xlu0 %v8618
    %v8620 = vpop.xlane.xlu0 %8619
    %v8621 = vadd.f32 %v8200, %v8201
    %v8622 = vadd.f32 %v8621, %v8202
    %8623 = vadd.xlane.f32.xlu0 %v8622
    %v8624 = vpop.xlane.xlu0 %8623
    %v8625 = vadd.f32 %v8203, %v8204
    %v8626 = vadd.f32 %v8625, %v8205
    %8627 = vadd.xlane.f32.xlu0 %v8626
    %v8628 = vpop.xlane.xlu0 %8627
    %v8629 = vadd.f32 %v8206, %v8207
    %v8630 = vadd.f32 %v8629, %v8208
    %8631 = vadd.xlane.f32.xlu0 %v8630
    %v8632 = vpop.xlane.xlu0 %8631
    %v8633 = vadd.f32 %v8209, %v8210
    %v8634 = vadd.f32 %v8633, %v8211
    %8635 = vadd.xlane.f32.xlu0 %v8634
    %v8636 = vpop.xlane.xlu0 %8635
    %v8637 = vadd.f32 %v8212, %v8213
    %v8638 = vadd.f32 %v8637, %v8214
    %8639 = vadd.xlane.f32.xlu0 %v8638
    %v8640 = vpop.xlane.xlu0 %8639
    %v8641 = vadd.f32 %v8215, %v8216
    %v8642 = vadd.f32 %v8641, %v8217
    %8643 = vadd.xlane.f32.xlu0 %v8642
    %v8644 = vpop.xlane.xlu0 %8643
    %v8645 = vadd.f32 %v8218, %v8219
    %v8646 = vadd.f32 %v8645, %v8220
    %8647 = vadd.xlane.f32.xlu0 %v8646
    %v8648 = vpop.xlane.xlu0 %8647
    %v8649 = vadd.f32 %v8221, %v8222
    %v8650 = vadd.f32 %v8649, %v8223
    %8651 = vadd.xlane.f32.xlu0 %v8650
    %v8652 = vpop.xlane.xlu0 %8651
    %v8653 = vadd.f32 %v8224, %v8225
    %v8654 = vadd.f32 %v8653, %v8226
    %8655 = vadd.xlane.f32.xlu0 %v8654
    %v8656 = vpop.xlane.xlu0 %8655
    %v8657 = vadd.f32 %v8227, %v8228
    %v8658 = vadd.f32 %v8657, %v8229
    %8659 = vadd.xlane.f32.xlu0 %v8658
    %v8660 = vpop.xlane.xlu0 %8659
    %v8661 = vadd.f32 %v8230, %v8231
    %v8662 = vadd.f32 %v8661, %v8232
    %8663 = vadd.xlane.f32.xlu0 %v8662
    %v8664 = vpop.xlane.xlu0 %8663
    %v8665 = vadd.f32 %v8233, %v8234
    %v8666 = vadd.f32 %v8665, %v8235
    %8667 = vadd.xlane.f32.xlu0 %v8666
    %v8668 = vpop.xlane.xlu0 %8667
    %v8669 = vadd.f32 %v8236, %v8237
    %v8670 = vadd.f32 %v8669, %v8238
    %8671 = vadd.xlane.f32.xlu0 %v8670
    %v8672 = vpop.xlane.xlu0 %8671
    %v8673 = vadd.f32 %v8239, %v8240
    %v8674 = vadd.f32 %v8673, %v8241
    %8675 = vadd.xlane.f32.xlu0 %v8674
    %v8676 = vpop.xlane.xlu0 %8675
    %v8677 = vadd.f32 %v8242, %v8243
    %v8678 = vadd.f32 %v8677, %v8244
    %8679 = vadd.xlane.f32.xlu0 %v8678
    %v8680 = vpop.xlane.xlu0 %8679
    %v8681 = vadd.f32 %v8245, %v8246
    %v8682 = vadd.f32 %v8681, %v8247
    %8683 = vadd.xlane.f32.xlu0 %v8682
    %v8684 = vpop.xlane.xlu0 %8683
    %v8685 = vadd.f32 %v8248, %v8249
    %v8686 = vadd.f32 %v8685, %v8250
    %8687 = vadd.xlane.f32.xlu0 %v8686
    %v8688 = vpop.xlane.xlu0 %8687
    %v8689 = vadd.f32 %v8251, %v8252
    %v8690 = vadd.f32 %v8689, %v8253
    %8691 = vadd.xlane.f32.xlu0 %v8690
    %v8692 = vpop.xlane.xlu0 %8691
    %v8693 = vadd.f32 %v8254, %v8255
    %v8694 = vadd.f32 %v8693, %v8256
    %8695 = vadd.xlane.f32.xlu0 %v8694
    %v8696 = vpop.xlane.xlu0 %8695
    %v8697 = vadd.f32 %v8257, %v8258
    %v8698 = vadd.f32 %v8697, %v8259
    %8699 = vadd.xlane.f32.xlu0 %v8698
    %v8700 = vpop.xlane.xlu0 %8699
    %v8701 = vadd.f32 %v8260, %v8261
    %v8702 = vadd.f32 %v8701, %v8262
    %8703 = vadd.xlane.f32.xlu0 %v8702
    %v8704 = vpop.xlane.xlu0 %8703
    %v8705 = vadd.f32 %v8263, %v8264
    %v8706 = vadd.f32 %v8705, %v8265
    %8707 = vadd.xlane.f32.xlu0 %v8706
    %v8708 = vpop.xlane.xlu0 %8707
    %v8709 = vadd.f32 %v8266, %v8267
    %v8710 = vadd.f32 %v8709, %v8268
    %8711 = vadd.xlane.f32.xlu0 %v8710
    %v8712 = vpop.xlane.xlu0 %8711
    %v8713 = vadd.f32 %v8269, %v8270
    %v8714 = vadd.f32 %v8713, %v8271
    %8715 = vadd.xlane.f32.xlu0 %v8714
    %v8716 = vpop.xlane.xlu0 %8715
    %v8717 = vadd.f32 %v8272, %v8273
    %v8718 = vadd.f32 %v8717, %v8274
    %8719 = vadd.xlane.f32.xlu0 %v8718
    %v8720 = vpop.xlane.xlu0 %8719
    %v8721 = vadd.f32 %v8275, %v8276
    %v8722 = vadd.f32 %v8721, %v8277
    %8723 = vadd.xlane.f32.xlu0 %v8722
    %v8724 = vpop.xlane.xlu0 %8723
    %v8725 = vadd.f32 %v8278, %v8279
    %v8726 = vadd.f32 %v8725, %v8280
    %8727 = vadd.xlane.f32.xlu0 %v8726
    %v8728 = vpop.xlane.xlu0 %8727
    %v8729 = vadd.f32 %v8281, %v8282
    %v8730 = vadd.f32 %v8729, %v8283
    %8731 = vadd.xlane.f32.xlu0 %v8730
    %v8732 = vpop.xlane.xlu0 %8731
    %v8733 = vadd.f32 %v8284, %v8285
    %v8734 = vadd.f32 %v8733, %v8286
    %8735 = vadd.xlane.f32.xlu0 %v8734
    %v8736 = vpop.xlane.xlu0 %8735
    %v8737 = vadd.f32 %v8287, %v8288
    %v8738 = vadd.f32 %v8737, %v8289
    %8739 = vadd.xlane.f32.xlu0 %v8738
    %v8740 = vpop.xlane.xlu0 %8739
    %v8741 = vadd.f32 %v8290, %v8291
    %v8742 = vadd.f32 %v8741, %v8292
    %8743 = vadd.xlane.f32.xlu0 %v8742
    %v8744 = vpop.xlane.xlu0 %8743
    %v8745 = vadd.f32 %v8293, %v8294
    %v8746 = vadd.f32 %v8745, %v8295
    %8747 = vadd.xlane.f32.xlu0 %v8746
    %v8748 = vpop.xlane.xlu0 %8747
    %v8749 = vadd.f32 %v8296, %v8297
    %v8750 = vadd.f32 %v8749, %v8298
    %8751 = vadd.xlane.f32.xlu0 %v8750
    %v8752 = vpop.xlane.xlu0 %8751
    %v8753 = vadd.f32 %v8299, %v8300
    %v8754 = vadd.f32 %v8753, %v8301
    %8755 = vadd.xlane.f32.xlu0 %v8754
    %v8756 = vpop.xlane.xlu0 %8755
    %v8757 = vadd.f32 %v8302, %v8303
    %v8758 = vadd.f32 %v8757, %v8304
    %8759 = vadd.xlane.f32.xlu0 %v8758
    %v8760 = vpop.xlane.xlu0 %8759
    %v8761 = vadd.f32 %v8305, %v8306
    %v8762 = vadd.f32 %v8761, %v8307
    %8763 = vadd.xlane.f32.xlu0 %v8762
    %v8764 = vpop.xlane.xlu0 %8763
    %v8765 = vadd.f32 %v8308, %v8309
    %v8766 = vadd.f32 %v8765, %v8310
    %8767 = vadd.xlane.f32.xlu0 %v8766
    %v8768 = vpop.xlane.xlu0 %8767
    %v8769 = vadd.f32 %v8311, %v8312
    %v8770 = vadd.f32 %v8769, %v8313
    %8771 = vadd.xlane.f32.xlu0 %v8770
    %v8772 = vpop.xlane.xlu0 %8771
    %v8773 = vadd.f32 %v8314, %v8315
    %v8774 = vadd.f32 %v8773, %v8316
    %8775 = vadd.xlane.f32.xlu0 %v8774
    %v8776 = vpop.xlane.xlu0 %8775
    %v8777 = vadd.f32 %v8317, %v8318
    %v8778 = vadd.f32 %v8777, %v8319
    %8779 = vadd.xlane.f32.xlu0 %v8778
    %v8780 = vpop.xlane.xlu0 %8779
    %v8781 = vadd.f32 %v8320, %v8321
    %v8782 = vadd.f32 %v8781, %v8322
    %8783 = vadd.xlane.f32.xlu0 %v8782
    %v8784 = vpop.xlane.xlu0 %8783
    %v8785 = vadd.f32 %v8323, %v8324
    %v8786 = vadd.f32 %v8785, %v8325
    %8787 = vadd.xlane.f32.xlu0 %v8786
    %v8788 = vpop.xlane.xlu0 %8787
    %v8789 = vadd.f32 %v8326, %v8327
    %v8790 = vadd.f32 %v8789, %v8328
    %8791 = vadd.xlane.f32.xlu0 %v8790
    %v8792 = vpop.xlane.xlu0 %8791
    %v8793 = vadd.f32 %v8329, %v8330
    %v8794 = vadd.f32 %v8793, %v8331
    %8795 = vadd.xlane.f32.xlu0 %v8794
    %v8796 = vpop.xlane.xlu0 %8795
    %v8797 = vadd.f32 %v8332, %v8333
    %v8798 = vadd.f32 %v8797, %v8334
    %8799 = vadd.xlane.f32.xlu0 %v8798
    %v8800 = vpop.xlane.xlu0 %8799
    %v8801 = vadd.f32 %v8335, %v8336
    %v8802 = vadd.f32 %v8801, %v8337
    %8803 = vadd.xlane.f32.xlu0 %v8802
    %v8804 = vpop.xlane.xlu0 %8803
    %v8805 = vadd.f32 %v8338, %v8339
    %v8806 = vadd.f32 %v8805, %v8340
    %8807 = vadd.xlane.f32.xlu0 %v8806
    %v8808 = vpop.xlane.xlu0 %8807
    %v8809 = vadd.f32 %v8341, %v8342
    %v8810 = vadd.f32 %v8809, %v8343
    %8811 = vadd.xlane.f32.xlu0 %v8810
    %v8812 = vpop.xlane.xlu0 %8811
    %v8813 = vadd.f32 %v8344, %v8345
    %v8814 = vadd.f32 %v8813, %v8346
    %8815 = vadd.xlane.f32.xlu0 %v8814
    %v8816 = vpop.xlane.xlu0 %8815
    %v8817 = vadd.f32 %v8347, %v8348
    %v8818 = vadd.f32 %v8817, %v8349
    %8819 = vadd.xlane.f32.xlu0 %v8818
    %v8820 = vpop.xlane.xlu0 %8819
    %v8821 = vadd.f32 %v8350, %v8351
    %v8822 = vadd.f32 %v8821, %v8352
    %8823 = vadd.xlane.f32.xlu0 %v8822
    %v8824 = vpop.xlane.xlu0 %8823
    %v8825 = vadd.f32 %v8353, %v8354
    %v8826 = vadd.f32 %v8825, %v8355
    %8827 = vadd.xlane.f32.xlu0 %v8826
    %v8828 = vpop.xlane.xlu0 %8827
    %v8829 = vadd.f32 %v8356, %v8357
    %v8830 = vadd.f32 %v8829, %v8358
    %8831 = vadd.xlane.f32.xlu0 %v8830
    %v8832 = vpop.xlane.xlu0 %8831
    %v8833 = vadd.f32 %v8359, %v8360
    %v8834 = vadd.f32 %v8833, %v8361
    %8835 = vadd.xlane.f32.xlu0 %v8834
    %v8836 = vpop.xlane.xlu0 %8835
    %v8837 = vadd.f32 %v8362, %v8363
    %v8838 = vadd.f32 %v8837, %v8364
    %8839 = vadd.xlane.f32.xlu0 %v8838
    %v8840 = vpop.xlane.xlu0 %8839
    %v8841 = vadd.f32 %v8365, %v8366
    %v8842 = vadd.f32 %v8841, %v8367
    %8843 = vadd.xlane.f32.xlu0 %v8842
    %v8844 = vpop.xlane.xlu0 %8843
    %v8845 = vadd.f32 %v8368, %v8369
    %v8846 = vadd.f32 %v8845, %v8370
    %8847 = vadd.xlane.f32.xlu0 %v8846
    %v8848 = vpop.xlane.xlu0 %8847
    %v8849 = vadd.f32 %v8371, %v8372
    %v8850 = vadd.f32 %v8849, %v8373
    %8851 = vadd.xlane.f32.xlu0 %v8850
    %v8852 = vpop.xlane.xlu0 %8851
    %v8853 = vadd.f32 %v8374, %v8375
    %v8854 = vadd.f32 %v8853, %v8376
    %8855 = vadd.xlane.f32.xlu0 %v8854
    %v8856 = vpop.xlane.xlu0 %8855
    %v8857 = vadd.f32 %v8377, %v8378
    %v8858 = vadd.f32 %v8857, %v8379
    %8859 = vadd.xlane.f32.xlu0 %v8858
    %v8860 = vpop.xlane.xlu0 %8859
    %v8861 = vadd.f32 %v8380, %v8381
    %v8862 = vadd.f32 %v8861, %v8382
    %8863 = vadd.xlane.f32.xlu0 %v8862
    %v8864 = vpop.xlane.xlu0 %8863
    %v8865 = vadd.f32 %v8383, %v8384
    %v8866 = vadd.f32 %v8865, %v8385
    %8867 = vadd.xlane.f32.xlu0 %v8866
    %v8868 = vpop.xlane.xlu0 %8867
    %v8869 = vadd.f32 %v8386, %v8387
    %v8870 = vadd.f32 %v8869, %v8388
    %8871 = vadd.xlane.f32.xlu0 %v8870
    %v8872 = vpop.xlane.xlu0 %8871
    %v8873 = vadd.f32 %v8389, %v8390
    %v8874 = vadd.f32 %v8873, %v8391
    %8875 = vadd.xlane.f32.xlu0 %v8874
    %v8876 = vpop.xlane.xlu0 %8875
    %v8877 = vadd.f32 %v8392, %v8393
    %v8878 = vadd.f32 %v8877, %v8394
    %8879 = vadd.xlane.f32.xlu0 %v8878
    %v8880 = vpop.xlane.xlu0 %8879
    %v8881 = vadd.f32 %v8395, %v8396
    %v8882 = vadd.f32 %v8881, %v8397
    %8883 = vadd.xlane.f32.xlu0 %v8882
    %v8884 = vpop.xlane.xlu0 %8883
    %v8885 = vadd.f32 %v8398, %v8399
    %v8886 = vadd.f32 %v8885, %v8400
    %8887 = vadd.xlane.f32.xlu0 %v8886
    %v8888 = vpop.xlane.xlu0 %8887
    %v8889 = vadd.f32 %v8401, %v8402
    %v8890 = vadd.f32 %v8889, %v8403
    %8891 = vadd.xlane.f32.xlu0 %v8890
    %v8892 = vpop.xlane.xlu0 %8891
    %v8893 = vadd.f32 %v8404, %v8405
    %v8894 = vadd.f32 %v8893, %v8406
    %8895 = vadd.xlane.f32.xlu0 %v8894
    %v8896 = vpop.xlane.xlu0 %8895
    %v8897 = vadd.f32 %v8407, %v8408
    %v8898 = vadd.f32 %v8897, %v8409
    %8899 = vadd.xlane.f32.xlu0 %v8898
    %v8900 = vpop.xlane.xlu0 %8899
    %v8901 = vadd.f32 %v8410, %v8411
    %v8902 = vadd.f32 %v8901, %v8412
    %8903 = vadd.xlane.f32.xlu0 %v8902
    %v8904 = vpop.xlane.xlu0 %8903
    %v8905 = vadd.f32 %v8413, %v8414
    %v8906 = vadd.f32 %v8905, %v8415
    %8907 = vadd.xlane.f32.xlu0 %v8906
    %v8908 = vpop.xlane.xlu0 %8907
    %v8909 = vadd.f32 %v8416, %v8417
    %v8910 = vadd.f32 %v8909, %v8418
    %8911 = vadd.xlane.f32.xlu0 %v8910
    %v8912 = vpop.xlane.xlu0 %8911
    %v8913 = vadd.f32 %v8419, %v8420
    %v8914 = vadd.f32 %v8913, %v8421
    %8915 = vadd.xlane.f32.xlu0 %v8914
    %v8916 = vpop.xlane.xlu0 %8915
    %v8917 = vadd.f32 %v8422, %v8423
    %v8918 = vadd.f32 %v8917, %v8424
    %8919 = vadd.xlane.f32.xlu0 %v8918
    %v8920 = vpop.xlane.xlu0 %8919
    %v8921 = vadd.f32 %v8425, %v8426
    %v8922 = vadd.f32 %v8921, %v8427
    %8923 = vadd.xlane.f32.xlu0 %v8922
    %v8924 = vpop.xlane.xlu0 %8923
    %v8925 = vadd.f32 %v8428, %v8429
    %v8926 = vadd.f32 %v8925, %v8430
    %8927 = vadd.xlane.f32.xlu0 %v8926
    %v8928 = vpop.xlane.xlu0 %8927
    %v8929 = vadd.f32 %v8431, %v8432
    %v8930 = vadd.f32 %v8929, %v8433
    %8931 = vadd.xlane.f32.xlu0 %v8930
    %v8932 = vpop.xlane.xlu0 %8931
    %v8933 = vadd.f32 %v8434, %v8435
    %v8934 = vadd.f32 %v8933, %v8436
    %8935 = vadd.xlane.f32.xlu0 %v8934
    %v8936 = vpop.xlane.xlu0 %8935
    %v8937 = vadd.f32 %v8437, %v8438
    %v8938 = vadd.f32 %v8937, %v8439
    %8939 = vadd.xlane.f32.xlu0 %v8938
    %v8940 = vpop.xlane.xlu0 %8939
    %v8941 = vadd.f32 %v8440, %v8441
    %v8942 = vadd.f32 %v8941, %v8442
    %8943 = vadd.xlane.f32.xlu0 %v8942
    %v8944 = vpop.xlane.xlu0 %8943
    %v8945 = vadd.f32 %v8443, %v8444
    %v8946 = vadd.f32 %v8945, %v8445
    %8947 = vadd.xlane.f32.xlu0 %v8946
    %v8948 = vpop.xlane.xlu0 %8947
    %v8949 = vadd.f32 %v8446, %v8447
    %v8950 = vadd.f32 %v8949, %v8448
    %8951 = vadd.xlane.f32.xlu0 %v8950
    %v8952 = vpop.xlane.xlu0 %8951
    %v8953 = vadd.f32 %v8449, %v8450
    %v8954 = vadd.f32 %v8953, %v8451
    %8955 = vadd.xlane.f32.xlu0 %v8954
    %v8956 = vpop.xlane.xlu0 %8955
    %v8957 = vadd.f32 %v8452, %v8453
    %v8958 = vadd.f32 %v8957, %v8454
    %8959 = vadd.xlane.f32.xlu0 %v8958
    %v8960 = vpop.xlane.xlu0 %8959
    %v8961 = vadd.f32 %v8455, %v8456
    %v8962 = vadd.f32 %v8961, %v8457
    %8963 = vadd.xlane.f32.xlu0 %v8962
    %v8964 = vpop.xlane.xlu0 %8963
    %v8965 = vadd.f32 %v8458, %v8459
    %v8966 = vadd.f32 %v8965, %v8460
    %8967 = vadd.xlane.f32.xlu0 %v8966
    %v8968 = vpop.xlane.xlu0 %8967
    %v8969 = vadd.f32 %v8461, %v8462
    %v8970 = vadd.f32 %v8969, %v8463
    %8971 = vadd.xlane.f32.xlu0 %v8970
    %v8972 = vpop.xlane.xlu0 %8971
    %v8973 = vadd.f32 %v8464, %v8465
    %v8974 = vadd.f32 %v8973, %v8466
    %8975 = vadd.xlane.f32.xlu0 %v8974
    %v8976 = vpop.xlane.xlu0 %8975
    %v8977 = vadd.f32 %v8467, %v8468
    %v8978 = vadd.f32 %v8977, %v8469
    %8979 = vadd.xlane.f32.xlu0 %v8978
    %v8980 = vpop.xlane.xlu0 %8979
    %v8981 = vadd.f32 %v8470, %v8471
    %v8982 = vadd.f32 %v8981, %v8472
    %8983 = vadd.xlane.f32.xlu0 %v8982
    %v8984 = vpop.xlane.xlu0 %8983
    %s8985 = sld [smem:[#allocation2]]
    %v8986 = vstv %s8985
    %v8987 = vadd.f32 %v8476, %v8986
    %v8988 = vadd.f32 %v8480, %v8986
    %v8989 = vadd.f32 %v8484, %v8986
    %v8990 = vadd.f32 %v8488, %v8986
    %v8991 = vadd.f32 %v8492, %v8986
    %v8992 = vadd.f32 %v8496, %v8986
    %v8993 = vadd.f32 %v8500, %v8986
    %v8994 = vadd.f32 %v8504, %v8986
    %v8995 = vadd.f32 %v8508, %v8986
    %v8996 = vadd.f32 %v8512, %v8986
    %v8997 = vadd.f32 %v8516, %v8986
    %v8998 = vadd.f32 %v8520, %v8986
    %v8999 = vadd.f32 %v8524, %v8986
    %v9000 = vadd.f32 %v8528, %v8986
    %v9001 = vadd.f32 %v8532, %v8986
    %v9002 = vadd.f32 %v8536, %v8986
    %v9003 = vadd.f32 %v8540, %v8986
    %v9004 = vadd.f32 %v8544, %v8986
    %v9005 = vadd.f32 %v8548, %v8986
    %v9006 = vadd.f32 %v8552, %v8986
    %v9007 = vadd.f32 %v8556, %v8986
    %v9008 = vadd.f32 %v8560, %v8986
    %v9009 = vadd.f32 %v8564, %v8986
    %v9010 = vadd.f32 %v8568, %v8986
    %v9011 = vadd.f32 %v8572, %v8986
    %v9012 = vadd.f32 %v8576, %v8986
    %v9013 = vadd.f32 %v8580, %v8986
    %v9014 = vadd.f32 %v8584, %v8986
    %v9015 = vadd.f32 %v8588, %v8986
    %v9016 = vadd.f32 %v8592, %v8986
    %v9017 = vadd.f32 %v8596, %v8986
    %v9018 = vadd.f32 %v8600, %v8986
    %v9019 = vadd.f32 %v8604, %v8986
    %v9020 = vadd.f32 %v8608, %v8986
    %v9021 = vadd.f32 %v8612, %v8986
    %v9022 = vadd.f32 %v8616, %v8986
    %v9023 = vadd.f32 %v8620, %v8986
    %v9024 = vadd.f32 %v8624, %v8986
    %v9025 = vadd.f32 %v8628, %v8986
    %v9026 = vadd.f32 %v8632, %v8986
    %v9027 = vadd.f32 %v8636, %v8986
    %v9028 = vadd.f32 %v8640, %v8986
    %v9029 = vadd.f32 %v8644, %v8986
    %v9030 = vadd.f32 %v8648, %v8986
    %v9031 = vadd.f32 %v8652, %v8986
    %v9032 = vadd.f32 %v8656, %v8986
    %v9033 = vadd.f32 %v8660, %v8986
    %v9034 = vadd.f32 %v8664, %v8986
    %v9035 = vadd.f32 %v8668, %v8986
    %v9036 = vadd.f32 %v8672, %v8986
    %v9037 = vadd.f32 %v8676, %v8986
    %v9038 = vadd.f32 %v8680, %v8986
    %v9039 = vadd.f32 %v8684, %v8986
    %v9040 = vadd.f32 %v8688, %v8986
    %v9041 = vadd.f32 %v8692, %v8986
    %v9042 = vadd.f32 %v8696, %v8986
    %v9043 = vadd.f32 %v8700, %v8986
    %v9044 = vadd.f32 %v8704, %v8986
    %v9045 = vadd.f32 %v8708, %v8986
    %v9046 = vadd.f32 %v8712, %v8986
    %v9047 = vadd.f32 %v8716, %v8986
    %v9048 = vadd.f32 %v8720, %v8986
    %v9049 = vadd.f32 %v8724, %v8986
    %v9050 = vadd.f32 %v8728, %v8986
    %v9051 = vadd.f32 %v8732, %v8986
    %v9052 = vadd.f32 %v8736, %v8986
    %v9053 = vadd.f32 %v8740, %v8986
    %v9054 = vadd.f32 %v8744, %v8986
    %v9055 = vadd.f32 %v8748, %v8986
    %v9056 = vadd.f32 %v8752, %v8986
    %v9057 = vadd.f32 %v8756, %v8986
    %v9058 = vadd.f32 %v8760, %v8986
    %v9059 = vadd.f32 %v8764, %v8986
    %v9060 = vadd.f32 %v8768, %v8986
    %v9061 = vadd.f32 %v8772, %v8986
    %v9062 = vadd.f32 %v8776, %v8986
    %v9063 = vadd.f32 %v8780, %v8986
    %v9064 = vadd.f32 %v8784, %v8986
    %v9065 = vadd.f32 %v8788, %v8986
    %v9066 = vadd.f32 %v8792, %v8986
    %v9067 = vadd.f32 %v8796, %v8986
    %v9068 = vadd.f32 %v8800, %v8986
    %v9069 = vadd.f32 %v8804, %v8986
    %v9070 = vadd.f32 %v8808, %v8986
    %v9071 = vadd.f32 %v8812, %v8986
    %v9072 = vadd.f32 %v8816, %v8986
    %v9073 = vadd.f32 %v8820, %v8986
    %v9074 = vadd.f32 %v8824, %v8986
    %v9075 = vadd.f32 %v8828, %v8986
    %v9076 = vadd.f32 %v8832, %v8986
    %v9077 = vadd.f32 %v8836, %v8986
    %v9078 = vadd.f32 %v8840, %v8986
    %v9079 = vadd.f32 %v8844, %v8986
    %v9080 = vadd.f32 %v8848, %v8986
    %v9081 = vadd.f32 %v8852, %v8986
    %v9082 = vadd.f32 %v8856, %v8986
    %v9083 = vadd.f32 %v8860, %v8986
    %v9084 = vadd.f32 %v8864, %v8986
    %v9085 = vadd.f32 %v8868, %v8986
    %v9086 = vadd.f32 %v8872, %v8986
    %v9087 = vadd.f32 %v8876, %v8986
    %v9088 = vadd.f32 %v8880, %v8986
    %v9089 = vadd.f32 %v8884, %v8986
    %v9090 = vadd.f32 %v8888, %v8986
    %v9091 = vadd.f32 %v8892, %v8986
    %v9092 = vadd.f32 %v8896, %v8986
    %v9093 = vadd.f32 %v8900, %v8986
    %v9094 = vadd.f32 %v8904, %v8986
    %v9095 = vadd.f32 %v8908, %v8986
    %v9096 = vadd.f32 %v8912, %v8986
    %v9097 = vadd.f32 %v8916, %v8986
    %v9098 = vadd.f32 %v8920, %v8986
    %v9099 = vadd.f32 %v8924, %v8986
    %v9100 = vadd.f32 %v8928, %v8986
    %v9101 = vadd.f32 %v8932, %v8986
    %v9102 = vadd.f32 %v8936, %v8986
    %v9103 = vadd.f32 %v8940, %v8986
    %v9104 = vadd.f32 %v8944, %v8986
    %v9105 = vadd.f32 %v8948, %v8986
    %v9106 = vadd.f32 %v8952, %v8986
    %v9107 = vadd.f32 %v8956, %v8986
    %v9108 = vadd.f32 %v8960, %v8986
    %v9109 = vadd.f32 %v8964, %v8986
    %v9110 = vadd.f32 %v8968, %v8986
    %v9111 = vadd.f32 %v8972, %v8986
    %v9112 = vadd.f32 %v8976, %v8986
    %v9113 = vadd.f32 %v8980, %v8986
    %v9114 = vadd.f32 %v8984, %v8986
    %v9243 = vlaneseq
    %v9244 = vand.u32 %v9243, 127
    %v9245 = vlaneseq
    %v9246 = vshrl.u32 %v9245, 7
    %v9247 = vsub.s32 %v9244, %v9246
    %v9248 = vrot.slane %v8987, %v9247
    %v9249 = vadd.s32 %v9244, 4294967288
    %v9250 = vlaneseq
    %v9251 = vshrl.u32 %v9250, 7
    %v9252 = vsub.s32 %v9249, %v9251
    %v9253 = vrot.slane %v8988, %v9252
    %vm9254 = vcmask 130112
    %v9255 = vsel %vm9254, %v9253, %v9248
    %v9256 = vadd.s32 %v9244, 4294967280
    %v9257 = vlaneseq
    %v9258 = vshrl.u32 %v9257, 7
    %v9259 = vsub.s32 %v9256, %v9258
    %v9260 = vrot.slane %v8989, %v9259
    %vm9261 = vcmask 195712
    %v9262 = vsel %vm9261, %v9260, %v9255
    %v9263 = vadd.s32 %v9244, 4294967272
    %v9264 = vlaneseq
    %v9265 = vshrl.u32 %v9264, 7
    %v9266 = vsub.s32 %v9263, %v9265
    %v9267 = vrot.slane %v8990, %v9266
    %vm9268 = vcmask 261312
    %v9269 = vsel %vm9268, %v9267, %v9262
    %v9270 = vadd.s32 %v9244, 4294967264
    %v9271 = vlaneseq
    %v9272 = vshrl.u32 %v9271, 7
    %v9273 = vsub.s32 %v9270, %v9272
    %v9274 = vrot.slane %v8991, %v9273
    %vm9275 = vcmask 326912
    %v9276 = vsel %vm9275, %v9274, %v9269
    %v9277 = vadd.s32 %v9244, 4294967256
    %v9278 = vlaneseq
    %v9279 = vshrl.u32 %v9278, 7
    %v9280 = vsub.s32 %v9277, %v9279
    %v9281 = vrot.slane %v8992, %v9280
    %vm9282 = vcmask 392512
    %v9283 = vsel %vm9282, %v9281, %v9276
    %v9284 = vadd.s32 %v9244, 4294967248
    %v9285 = vlaneseq
    %v9286 = vshrl.u32 %v9285, 7
    %v9287 = vsub.s32 %v9284, %v9286
    %v9288 = vrot.slane %v8993, %v9287
    %vm9289 = vcmask 458112
    %v9290 = vsel %vm9289, %v9288, %v9283
    %v9291 = vadd.s32 %v9244, 4294967240
    %v9292 = vlaneseq
    %v9293 = vshrl.u32 %v9292, 7
    %v9294 = vsub.s32 %v9291, %v9293
    %v9295 = vrot.slane %v8994, %v9294
    %vm9296 = vcmask 523712
    %v9297 = vsel %vm9296, %v9295, %v9290
    %v9298 = vadd.s32 %v9244, 4294967232
    %v9299 = vlaneseq
    %v9300 = vshrl.u32 %v9299, 7
    %v9301 = vsub.s32 %v9298, %v9300
    %v9302 = vrot.slane %v8995, %v9301
    %vm9303 = vcmask 589312
    %v9304 = vsel %vm9303, %v9302, %v9297
    %v9305 = vadd.s32 %v9244, 4294967224
    %v9306 = vlaneseq
    %v9307 = vshrl.u32 %v9306, 7
    %v9308 = vsub.s32 %v9305, %v9307
    %v9309 = vrot.slane %v8996, %v9308
    %vm9310 = vcmask 654912
    %v9311 = vsel %vm9310, %v9309, %v9304
    %v9312 = vadd.s32 %v9244, 4294967216
    %v9313 = vlaneseq
    %v9314 = vshrl.u32 %v9313, 7
    %v9315 = vsub.s32 %v9312, %v9314
    %v9316 = vrot.slane %v8997, %v9315
    %vm9317 = vcmask 720512
    %v9318 = vsel %vm9317, %v9316, %v9311
    %v9319 = vadd.s32 %v9244, 4294967208
    %v9320 = vlaneseq
    %v9321 = vshrl.u32 %v9320, 7
    %v9322 = vsub.s32 %v9319, %v9321
    %v9323 = vrot.slane %v8998, %v9322
    %vm9324 = vcmask 786112
    %v9325 = vsel %vm9324, %v9323, %v9318
    %v9326 = vadd.s32 %v9244, 4294967200
    %v9327 = vlaneseq
    %v9328 = vshrl.u32 %v9327, 7
    %v9329 = vsub.s32 %v9326, %v9328
    %v9330 = vrot.slane %v8999, %v9329
    %vm9331 = vcmask 851712
    %v9332 = vsel %vm9331, %v9330, %v9325
    %v9333 = vadd.s32 %v9244, 4294967192
    %v9334 = vlaneseq
    %v9335 = vshrl.u32 %v9334, 7
    %v9336 = vsub.s32 %v9333, %v9335
    %v9337 = vrot.slane %v9000, %v9336
    %vm9338 = vcmask 917312
    %v9339 = vsel %vm9338, %v9337, %v9332
    %v9340 = vadd.s32 %v9244, 4294967184
    %v9341 = vlaneseq
    %v9342 = vshrl.u32 %v9341, 7
    %v9343 = vsub.s32 %v9340, %v9342
    %v9344 = vrot.slane %v9001, %v9343
    %vm9345 = vcmask 982912
    %v9346 = vsel %vm9345, %v9344, %v9339
    %v9347 = vadd.s32 %v9244, 4294967176
    %v9348 = vlaneseq
    %v9349 = vshrl.u32 %v9348, 7
    %v9350 = vsub.s32 %v9347, %v9349
    %v9351 = vrot.slane %v9002, %v9350
    %vm9352 = vcmask 1048512
    %v9353 = vsel %vm9352, %v9351, %v9346
    %v9354 = vlaneseq
    %v9355 = vshrl.u32 %v9354, 7
    %v9356 = vsub.s32 %v9244, %v9355
    %v9357 = vrot.slane %v9003, %v9356
    %v9358 = vlaneseq
    %v9359 = vshrl.u32 %v9358, 7
    %v9360 = vsub.s32 %v9249, %v9359
    %v9361 = vrot.slane %v9004, %v9360
    %v9362 = vsel %vm9254, %v9361, %v9357
    %v9363 = vlaneseq
    %v9364 = vshrl.u32 %v9363, 7
    %v9365 = vsub.s32 %v9256, %v9364
    %v9366 = vrot.slane %v9005, %v9365
    %v9367 = vsel %vm9261, %v9366, %v9362
    %v9368 = vlaneseq
    %v9369 = vshrl.u32 %v9368, 7
    %v9370 = vsub.s32 %v9263, %v9369
    %v9371 = vrot.slane %v9006, %v9370
    %v9372 = vsel %vm9268, %v9371, %v9367
    %v9373 = vlaneseq
    %v9374 = vshrl.u32 %v9373, 7
    %v9375 = vsub.s32 %v9270, %v9374
    %v9376 = vrot.slane %v9007, %v9375
    %v9377 = vsel %vm9275, %v9376, %v9372
    %v9378 = vlaneseq
    %v9379 = vshrl.u32 %v9378, 7
    %v9380 = vsub.s32 %v9277, %v9379
    %v9381 = vrot.slane %v9008, %v9380
    %v9382 = vsel %vm9282, %v9381, %v9377
    %v9383 = vlaneseq
    %v9384 = vshrl.u32 %v9383, 7
    %v9385 = vsub.s32 %v9284, %v9384
    %v9386 = vrot.slane %v9009, %v9385
    %v9387 = vsel %vm9289, %v9386, %v9382
    %v9388 = vlaneseq
    %v9389 = vshrl.u32 %v9388, 7
    %v9390 = vsub.s32 %v9291, %v9389
    %v9391 = vrot.slane %v9010, %v9390
    %v9392 = vsel %vm9296, %v9391, %v9387
    %v9393 = vlaneseq
    %v9394 = vshrl.u32 %v9393, 7
    %v9395 = vsub.s32 %v9298, %v9394
    %v9396 = vrot.slane %v9011, %v9395
    %v9397 = vsel %vm9303, %v9396, %v9392
    %v9398 = vlaneseq
    %v9399 = vshrl.u32 %v9398, 7
    %v9400 = vsub.s32 %v9305, %v9399
    %v9401 = vrot.slane %v9012, %v9400
    %v9402 = vsel %vm9310, %v9401, %v9397
    %v9403 = vlaneseq
    %v9404 = vshrl.u32 %v9403, 7
    %v9405 = vsub.s32 %v9312, %v9404
    %v9406 = vrot.slane %v9013, %v9405
    %v9407 = vsel %vm9317, %v9406, %v9402
    %v9408 = vlaneseq
    %v9409 = vshrl.u32 %v9408, 7
    %v9410 = vsub.s32 %v9319, %v9409
    %v9411 = vrot.slane %v9014, %v9410
    %v9412 = vsel %vm9324, %v9411, %v9407
    %v9413 = vlaneseq
    %v9414 = vshrl.u32 %v9413, 7
    %v9415 = vsub.s32 %v9326, %v9414
    %v9416 = vrot.slane %v9015, %v9415
    %v9417 = vsel %vm9331, %v9416, %v9412
    %v9418 = vlaneseq
    %v9419 = vshrl.u32 %v9418, 7
    %v9420 = vsub.s32 %v9333, %v9419
    %v9421 = vrot.slane %v9016, %v9420
    %v9422 = vsel %vm9338, %v9421, %v9417
    %v9423 = vlaneseq
    %v9424 = vshrl.u32 %v9423, 7
    %v9425 = vsub.s32 %v9340, %v9424
    %v9426 = vrot.slane %v9017, %v9425
    %v9427 = vsel %vm9345, %v9426, %v9422
    %v9428 = vlaneseq
    %v9429 = vshrl.u32 %v9428, 7
    %v9430 = vsub.s32 %v9347, %v9429
    %v9431 = vrot.slane %v9018, %v9430
    %v9432 = vsel %vm9352, %v9431, %v9427
    %v9433 = vlaneseq
    %v9434 = vshrl.u32 %v9433, 7
    %v9435 = vsub.s32 %v9244, %v9434
    %v9436 = vrot.slane %v9019, %v9435
    %v9437 = vlaneseq
    %v9438 = vshrl.u32 %v9437, 7
    %v9439 = vsub.s32 %v9249, %v9438
    %v9440 = vrot.slane %v9020, %v9439
    %v9441 = vsel %vm9254, %v9440, %v9436
    %v9442 = vlaneseq
    %v9443 = vshrl.u32 %v9442, 7
    %v9444 = vsub.s32 %v9256, %v9443
    %v9445 = vrot.slane %v9021, %v9444
    %v9446 = vsel %vm9261, %v9445, %v9441
    %v9447 = vlaneseq
    %v9448 = vshrl.u32 %v9447, 7
    %v9449 = vsub.s32 %v9263, %v9448
    %v9450 = vrot.slane %v9022, %v9449
    %v9451 = vsel %vm9268, %v9450, %v9446
    %v9452 = vlaneseq
    %v9453 = vshrl.u32 %v9452, 7
    %v9454 = vsub.s32 %v9270, %v9453
    %v9455 = vrot.slane %v9023, %v9454
    %v9456 = vsel %vm9275, %v9455, %v9451
    %v9457 = vlaneseq
    %v9458 = vshrl.u32 %v9457, 7
    %v9459 = vsub.s32 %v9277, %v9458
    %v9460 = vrot.slane %v9024, %v9459
    %v9461 = vsel %vm9282, %v9460, %v9456
    %v9462 = vlaneseq
    %v9463 = vshrl.u32 %v9462, 7
    %v9464 = vsub.s32 %v9284, %v9463
    %v9465 = vrot.slane %v9025, %v9464
    %v9466 = vsel %vm9289, %v9465, %v9461
    %v9467 = vlaneseq
    %v9468 = vshrl.u32 %v9467, 7
    %v9469 = vsub.s32 %v9291, %v9468
    %v9470 = vrot.slane %v9026, %v9469
    %v9471 = vsel %vm9296, %v9470, %v9466
    %v9472 = vlaneseq
    %v9473 = vshrl.u32 %v9472, 7
    %v9474 = vsub.s32 %v9298, %v9473
    %v9475 = vrot.slane %v9027, %v9474
    %v9476 = vsel %vm9303, %v9475, %v9471
    %v9477 = vlaneseq
    %v9478 = vshrl.u32 %v9477, 7
    %v9479 = vsub.s32 %v9305, %v9478
    %v9480 = vrot.slane %v9028, %v9479
    %v9481 = vsel %vm9310, %v9480, %v9476
    %v9482 = vlaneseq
    %v9483 = vshrl.u32 %v9482, 7
    %v9484 = vsub.s32 %v9312, %v9483
    %v9485 = vrot.slane %v9029, %v9484
    %v9486 = vsel %vm9317, %v9485, %v9481
    %v9487 = vlaneseq
    %v9488 = vshrl.u32 %v9487, 7
    %v9489 = vsub.s32 %v9319, %v9488
    %v9490 = vrot.slane %v9030, %v9489
    %v9491 = vsel %vm9324, %v9490, %v9486
    %v9492 = vlaneseq
    %v9493 = vshrl.u32 %v9492, 7
    %v9494 = vsub.s32 %v9326, %v9493
    %v9495 = vrot.slane %v9031, %v9494
    %v9496 = vsel %vm9331, %v9495, %v9491
    %v9497 = vlaneseq
    %v9498 = vshrl.u32 %v9497, 7
    %v9499 = vsub.s32 %v9333, %v9498
    %v9500 = vrot.slane %v9032, %v9499
    %v9501 = vsel %vm9338, %v9500, %v9496
    %v9502 = vlaneseq
    %v9503 = vshrl.u32 %v9502, 7
    %v9504 = vsub.s32 %v9340, %v9503
    %v9505 = vrot.slane %v9033, %v9504
    %v9506 = vsel %vm9345, %v9505, %v9501
    %v9507 = vlaneseq
    %v9508 = vshrl.u32 %v9507, 7
    %v9509 = vsub.s32 %v9347, %v9508
    %v9510 = vrot.slane %v9034, %v9509
    %v9511 = vsel %vm9352, %v9510, %v9506
    %v9512 = vlaneseq
    %v9513 = vshrl.u32 %v9512, 7
    %v9514 = vsub.s32 %v9244, %v9513
    %v9515 = vrot.slane %v9035, %v9514
    %v9516 = vlaneseq
    %v9517 = vshrl.u32 %v9516, 7
    %v9518 = vsub.s32 %v9249, %v9517
    %v9519 = vrot.slane %v9036, %v9518
    %v9520 = vsel %vm9254, %v9519, %v9515
    %v9521 = vlaneseq
    %v9522 = vshrl.u32 %v9521, 7
    %v9523 = vsub.s32 %v9256, %v9522
    %v9524 = vrot.slane %v9037, %v9523
    %v9525 = vsel %vm9261, %v9524, %v9520
    %v9526 = vlaneseq
    %v9527 = vshrl.u32 %v9526, 7
    %v9528 = vsub.s32 %v9263, %v9527
    %v9529 = vrot.slane %v9038, %v9528
    %v9530 = vsel %vm9268, %v9529, %v9525
    %v9531 = vlaneseq
    %v9532 = vshrl.u32 %v9531, 7
    %v9533 = vsub.s32 %v9270, %v9532
    %v9534 = vrot.slane %v9039, %v9533
    %v9535 = vsel %vm9275, %v9534, %v9530
    %v9536 = vlaneseq
    %v9537 = vshrl.u32 %v9536, 7
    %v9538 = vsub.s32 %v9277, %v9537
    %v9539 = vrot.slane %v9040, %v9538
    %v9540 = vsel %vm9282, %v9539, %v9535
    %v9541 = vlaneseq
    %v9542 = vshrl.u32 %v9541, 7
    %v9543 = vsub.s32 %v9284, %v9542
    %v9544 = vrot.slane %v9041, %v9543
    %v9545 = vsel %vm9289, %v9544, %v9540
    %v9546 = vlaneseq
    %v9547 = vshrl.u32 %v9546, 7
    %v9548 = vsub.s32 %v9291, %v9547
    %v9549 = vrot.slane %v9042, %v9548
    %v9550 = vsel %vm9296, %v9549, %v9545
    %v9551 = vlaneseq
    %v9552 = vshrl.u32 %v9551, 7
    %v9553 = vsub.s32 %v9298, %v9552
    %v9554 = vrot.slane %v9043, %v9553
    %v9555 = vsel %vm9303, %v9554, %v9550
    %v9556 = vlaneseq
    %v9557 = vshrl.u32 %v9556, 7
    %v9558 = vsub.s32 %v9305, %v9557
    %v9559 = vrot.slane %v9044, %v9558
    %v9560 = vsel %vm9310, %v9559, %v9555
    %v9561 = vlaneseq
    %v9562 = vshrl.u32 %v9561, 7
    %v9563 = vsub.s32 %v9312, %v9562
    %v9564 = vrot.slane %v9045, %v9563
    %v9565 = vsel %vm9317, %v9564, %v9560
    %v9566 = vlaneseq
    %v9567 = vshrl.u32 %v9566, 7
    %v9568 = vsub.s32 %v9319, %v9567
    %v9569 = vrot.slane %v9046, %v9568
    %v9570 = vsel %vm9324, %v9569, %v9565
    %v9571 = vlaneseq
    %v9572 = vshrl.u32 %v9571, 7
    %v9573 = vsub.s32 %v9326, %v9572
    %v9574 = vrot.slane %v9047, %v9573
    %v9575 = vsel %vm9331, %v9574, %v9570
    %v9576 = vlaneseq
    %v9577 = vshrl.u32 %v9576, 7
    %v9578 = vsub.s32 %v9333, %v9577
    %v9579 = vrot.slane %v9048, %v9578
    %v9580 = vsel %vm9338, %v9579, %v9575
    %v9581 = vlaneseq
    %v9582 = vshrl.u32 %v9581, 7
    %v9583 = vsub.s32 %v9340, %v9582
    %v9584 = vrot.slane %v9049, %v9583
    %v9585 = vsel %vm9345, %v9584, %v9580
    %v9586 = vlaneseq
    %v9587 = vshrl.u32 %v9586, 7
    %v9588 = vsub.s32 %v9347, %v9587
    %v9589 = vrot.slane %v9050, %v9588
    %v9590 = vsel %vm9352, %v9589, %v9585
    %v9591 = vlaneseq
    %v9592 = vshrl.u32 %v9591, 7
    %v9593 = vsub.s32 %v9244, %v9592
    %v9594 = vrot.slane %v9051, %v9593
    %v9595 = vlaneseq
    %v9596 = vshrl.u32 %v9595, 7
    %v9597 = vsub.s32 %v9249, %v9596
    %v9598 = vrot.slane %v9052, %v9597
    %v9599 = vsel %vm9254, %v9598, %v9594
    %v9600 = vlaneseq
    %v9601 = vshrl.u32 %v9600, 7
    %v9602 = vsub.s32 %v9256, %v9601
    %v9603 = vrot.slane %v9053, %v9602
    %v9604 = vsel %vm9261, %v9603, %v9599
    %v9605 = vlaneseq
    %v9606 = vshrl.u32 %v9605, 7
    %v9607 = vsub.s32 %v9263, %v9606
    %v9608 = vrot.slane %v9054, %v9607
    %v9609 = vsel %vm9268, %v9608, %v9604
    %v9610 = vlaneseq
    %v9611 = vshrl.u32 %v9610, 7
    %v9612 = vsub.s32 %v9270, %v9611
    %v9613 = vrot.slane %v9055, %v9612
    %v9614 = vsel %vm9275, %v9613, %v9609
    %v9615 = vlaneseq
    %v9616 = vshrl.u32 %v9615, 7
    %v9617 = vsub.s32 %v9277, %v9616
    %v9618 = vrot.slane %v9056, %v9617
    %v9619 = vsel %vm9282, %v9618, %v9614
    %v9620 = vlaneseq
    %v9621 = vshrl.u32 %v9620, 7
    %v9622 = vsub.s32 %v9284, %v9621
    %v9623 = vrot.slane %v9057, %v9622
    %v9624 = vsel %vm9289, %v9623, %v9619
    %v9625 = vlaneseq
    %v9626 = vshrl.u32 %v9625, 7
    %v9627 = vsub.s32 %v9291, %v9626
    %v9628 = vrot.slane %v9058, %v9627
    %v9629 = vsel %vm9296, %v9628, %v9624
    %v9630 = vlaneseq
    %v9631 = vshrl.u32 %v9630, 7
    %v9632 = vsub.s32 %v9298, %v9631
    %v9633 = vrot.slane %v9059, %v9632
    %v9634 = vsel %vm9303, %v9633, %v9629
    %v9635 = vlaneseq
    %v9636 = vshrl.u32 %v9635, 7
    %v9637 = vsub.s32 %v9305, %v9636
    %v9638 = vrot.slane %v9060, %v9637
    %v9639 = vsel %vm9310, %v9638, %v9634
    %v9640 = vlaneseq
    %v9641 = vshrl.u32 %v9640, 7
    %v9642 = vsub.s32 %v9312, %v9641
    %v9643 = vrot.slane %v9061, %v9642
    %v9644 = vsel %vm9317, %v9643, %v9639
    %v9645 = vlaneseq
    %v9646 = vshrl.u32 %v9645, 7
    %v9647 = vsub.s32 %v9319, %v9646
    %v9648 = vrot.slane %v9062, %v9647
    %v9649 = vsel %vm9324, %v9648, %v9644
    %v9650 = vlaneseq
    %v9651 = vshrl.u32 %v9650, 7
    %v9652 = vsub.s32 %v9326, %v9651
    %v9653 = vrot.slane %v9063, %v9652
    %v9654 = vsel %vm9331, %v9653, %v9649
    %v9655 = vlaneseq
    %v9656 = vshrl.u32 %v9655, 7
    %v9657 = vsub.s32 %v9333, %v9656
    %v9658 = vrot.slane %v9064, %v9657
    %v9659 = vsel %vm9338, %v9658, %v9654
    %v9660 = vlaneseq
    %v9661 = vshrl.u32 %v9660, 7
    %v9662 = vsub.s32 %v9340, %v9661
    %v9663 = vrot.slane %v9065, %v9662
    %v9664 = vsel %vm9345, %v9663, %v9659
    %v9665 = vlaneseq
    %v9666 = vshrl.u32 %v9665, 7
    %v9667 = vsub.s32 %v9347, %v9666
    %v9668 = vrot.slane %v9066, %v9667
    %v9669 = vsel %vm9352, %v9668, %v9664
    %v9670 = vlaneseq
    %v9671 = vshrl.u32 %v9670, 7
    %v9672 = vsub.s32 %v9244, %v9671
    %v9673 = vrot.slane %v9067, %v9672
    %v9674 = vlaneseq
    %v9675 = vshrl.u32 %v9674, 7
    %v9676 = vsub.s32 %v9249, %v9675
    %v9677 = vrot.slane %v9068, %v9676
    %v9678 = vsel %vm9254, %v9677, %v9673
    %v9679 = vlaneseq
    %v9680 = vshrl.u32 %v9679, 7
    %v9681 = vsub.s32 %v9256, %v9680
    %v9682 = vrot.slane %v9069, %v9681
    %v9683 = vsel %vm9261, %v9682, %v9678
    %v9684 = vlaneseq
    %v9685 = vshrl.u32 %v9684, 7
    %v9686 = vsub.s32 %v9263, %v9685
    %v9687 = vrot.slane %v9070, %v9686
    %v9688 = vsel %vm9268, %v9687, %v9683
    %v9689 = vlaneseq
    %v9690 = vshrl.u32 %v9689, 7
    %v9691 = vsub.s32 %v9270, %v9690
    %v9692 = vrot.slane %v9071, %v9691
    %v9693 = vsel %vm9275, %v9692, %v9688
    %v9694 = vlaneseq
    %v9695 = vshrl.u32 %v9694, 7
    %v9696 = vsub.s32 %v9277, %v9695
    %v9697 = vrot.slane %v9072, %v9696
    %v9698 = vsel %vm9282, %v9697, %v9693
    %v9699 = vlaneseq
    %v9700 = vshrl.u32 %v9699, 7
    %v9701 = vsub.s32 %v9284, %v9700
    %v9702 = vrot.slane %v9073, %v9701
    %v9703 = vsel %vm9289, %v9702, %v9698
    %v9704 = vlaneseq
    %v9705 = vshrl.u32 %v9704, 7
    %v9706 = vsub.s32 %v9291, %v9705
    %v9707 = vrot.slane %v9074, %v9706
    %v9708 = vsel %vm9296, %v9707, %v9703
    %v9709 = vlaneseq
    %v9710 = vshrl.u32 %v9709, 7
    %v9711 = vsub.s32 %v9298, %v9710
    %v9712 = vrot.slane %v9075, %v9711
    %v9713 = vsel %vm9303, %v9712, %v9708
    %v9714 = vlaneseq
    %v9715 = vshrl.u32 %v9714, 7
    %v9716 = vsub.s32 %v9305, %v9715
    %v9717 = vrot.slane %v9076, %v9716
    %v9718 = vsel %vm9310, %v9717, %v9713
    %v9719 = vlaneseq
    %v9720 = vshrl.u32 %v9719, 7
    %v9721 = vsub.s32 %v9312, %v9720
    %v9722 = vrot.slane %v9077, %v9721
    %v9723 = vsel %vm9317, %v9722, %v9718
    %v9724 = vlaneseq
    %v9725 = vshrl.u32 %v9724, 7
    %v9726 = vsub.s32 %v9319, %v9725
    %v9727 = vrot.slane %v9078, %v9726
    %v9728 = vsel %vm9324, %v9727, %v9723
    %v9729 = vlaneseq
    %v9730 = vshrl.u32 %v9729, 7
    %v9731 = vsub.s32 %v9326, %v9730
    %v9732 = vrot.slane %v9079, %v9731
    %v9733 = vsel %vm9331, %v9732, %v9728
    %v9734 = vlaneseq
    %v9735 = vshrl.u32 %v9734, 7
    %v9736 = vsub.s32 %v9333, %v9735
    %v9737 = vrot.slane %v9080, %v9736
    %v9738 = vsel %vm9338, %v9737, %v9733
    %v9739 = vlaneseq
    %v9740 = vshrl.u32 %v9739, 7
    %v9741 = vsub.s32 %v9340, %v9740
    %v9742 = vrot.slane %v9081, %v9741
    %v9743 = vsel %vm9345, %v9742, %v9738
    %v9744 = vlaneseq
    %v9745 = vshrl.u32 %v9744, 7
    %v9746 = vsub.s32 %v9347, %v9745
    %v9747 = vrot.slane %v9082, %v9746
    %v9748 = vsel %vm9352, %v9747, %v9743
    %v9749 = vlaneseq
    %v9750 = vshrl.u32 %v9749, 7
    %v9751 = vsub.s32 %v9244, %v9750
    %v9752 = vrot.slane %v9083, %v9751
    %v9753 = vlaneseq
    %v9754 = vshrl.u32 %v9753, 7
    %v9755 = vsub.s32 %v9249, %v9754
    %v9756 = vrot.slane %v9084, %v9755
    %v9757 = vsel %vm9254, %v9756, %v9752
    %v9758 = vlaneseq
    %v9759 = vshrl.u32 %v9758, 7
    %v9760 = vsub.s32 %v9256, %v9759
    %v9761 = vrot.slane %v9085, %v9760
    %v9762 = vsel %vm9261, %v9761, %v9757
    %v9763 = vlaneseq
    %v9764 = vshrl.u32 %v9763, 7
    %v9765 = vsub.s32 %v9263, %v9764
    %v9766 = vrot.slane %v9086, %v9765
    %v9767 = vsel %vm9268, %v9766, %v9762
    %v9768 = vlaneseq
    %v9769 = vshrl.u32 %v9768, 7
    %v9770 = vsub.s32 %v9270, %v9769
    %v9771 = vrot.slane %v9087, %v9770
    %v9772 = vsel %vm9275, %v9771, %v9767
    %v9773 = vlaneseq
    %v9774 = vshrl.u32 %v9773, 7
    %v9775 = vsub.s32 %v9277, %v9774
    %v9776 = vrot.slane %v9088, %v9775
    %v9777 = vsel %vm9282, %v9776, %v9772
    %v9778 = vlaneseq
    %v9779 = vshrl.u32 %v9778, 7
    %v9780 = vsub.s32 %v9284, %v9779
    %v9781 = vrot.slane %v9089, %v9780
    %v9782 = vsel %vm9289, %v9781, %v9777
    %v9783 = vlaneseq
    %v9784 = vshrl.u32 %v9783, 7
    %v9785 = vsub.s32 %v9291, %v9784
    %v9786 = vrot.slane %v9090, %v9785
    %v9787 = vsel %vm9296, %v9786, %v9782
    %v9788 = vlaneseq
    %v9789 = vshrl.u32 %v9788, 7
    %v9790 = vsub.s32 %v9298, %v9789
    %v9791 = vrot.slane %v9091, %v9790
    %v9792 = vsel %vm9303, %v9791, %v9787
    %v9793 = vlaneseq
    %v9794 = vshrl.u32 %v9793, 7
    %v9795 = vsub.s32 %v9305, %v9794
    %v9796 = vrot.slane %v9092, %v9795
    %v9797 = vsel %vm9310, %v9796, %v9792
    %v9798 = vlaneseq
    %v9799 = vshrl.u32 %v9798, 7
    %v9800 = vsub.s32 %v9312, %v9799
    %v9801 = vrot.slane %v9093, %v9800
    %v9802 = vsel %vm9317, %v9801, %v9797
    %v9803 = vlaneseq
    %v9804 = vshrl.u32 %v9803, 7
    %v9805 = vsub.s32 %v9319, %v9804
    %v9806 = vrot.slane %v9094, %v9805
    %v9807 = vsel %vm9324, %v9806, %v9802
    %v9808 = vlaneseq
    %v9809 = vshrl.u32 %v9808, 7
    %v9810 = vsub.s32 %v9326, %v9809
    %v9811 = vrot.slane %v9095, %v9810
    %v9812 = vsel %vm9331, %v9811, %v9807
    %v9813 = vlaneseq
    %v9814 = vshrl.u32 %v9813, 7
    %v9815 = vsub.s32 %v9333, %v9814
    %v9816 = vrot.slane %v9096, %v9815
    %v9817 = vsel %vm9338, %v9816, %v9812
    %v9818 = vlaneseq
    %v9819 = vshrl.u32 %v9818, 7
    %v9820 = vsub.s32 %v9340, %v9819
    %v9821 = vrot.slane %v9097, %v9820
    %v9822 = vsel %vm9345, %v9821, %v9817
    %v9823 = vlaneseq
    %v9824 = vshrl.u32 %v9823, 7
    %v9825 = vsub.s32 %v9347, %v9824
    %v9826 = vrot.slane %v9098, %v9825
    %v9827 = vsel %vm9352, %v9826, %v9822
    %v9828 = vlaneseq
    %v9829 = vshrl.u32 %v9828, 7
    %v9830 = vsub.s32 %v9244, %v9829
    %v9831 = vrot.slane %v9099, %v9830
    %v9832 = vlaneseq
    %v9833 = vshrl.u32 %v9832, 7
    %v9834 = vsub.s32 %v9249, %v9833
    %v9835 = vrot.slane %v9100, %v9834
    %v9836 = vsel %vm9254, %v9835, %v9831
    %v9837 = vlaneseq
    %v9838 = vshrl.u32 %v9837, 7
    %v9839 = vsub.s32 %v9256, %v9838
    %v9840 = vrot.slane %v9101, %v9839
    %v9841 = vsel %vm9261, %v9840, %v9836
    %v9842 = vlaneseq
    %v9843 = vshrl.u32 %v9842, 7
    %v9844 = vsub.s32 %v9263, %v9843
    %v9845 = vrot.slane %v9102, %v9844
    %v9846 = vsel %vm9268, %v9845, %v9841
    %v9847 = vlaneseq
    %v9848 = vshrl.u32 %v9847, 7
    %v9849 = vsub.s32 %v9270, %v9848
    %v9850 = vrot.slane %v9103, %v9849
    %v9851 = vsel %vm9275, %v9850, %v9846
    %v9852 = vlaneseq
    %v9853 = vshrl.u32 %v9852, 7
    %v9854 = vsub.s32 %v9277, %v9853
    %v9855 = vrot.slane %v9104, %v9854
    %v9856 = vsel %vm9282, %v9855, %v9851
    %v9857 = vlaneseq
    %v9858 = vshrl.u32 %v9857, 7
    %v9859 = vsub.s32 %v9284, %v9858
    %v9860 = vrot.slane %v9105, %v9859
    %v9861 = vsel %vm9289, %v9860, %v9856
    %v9862 = vlaneseq
    %v9863 = vshrl.u32 %v9862, 7
    %v9864 = vsub.s32 %v9291, %v9863
    %v9865 = vrot.slane %v9106, %v9864
    %v9866 = vsel %vm9296, %v9865, %v9861
    %v9867 = vlaneseq
    %v9868 = vshrl.u32 %v9867, 7
    %v9869 = vsub.s32 %v9298, %v9868
    %v9870 = vrot.slane %v9107, %v9869
    %v9871 = vsel %vm9303, %v9870, %v9866
    %v9872 = vlaneseq
    %v9873 = vshrl.u32 %v9872, 7
    %v9874 = vsub.s32 %v9305, %v9873
    %v9875 = vrot.slane %v9108, %v9874
    %v9876 = vsel %vm9310, %v9875, %v9871
    %v9877 = vlaneseq
    %v9878 = vshrl.u32 %v9877, 7
    %v9879 = vsub.s32 %v9312, %v9878
    %v9880 = vrot.slane %v9109, %v9879
    %v9881 = vsel %vm9317, %v9880, %v9876
    %v9882 = vlaneseq
    %v9883 = vshrl.u32 %v9882, 7
    %v9884 = vsub.s32 %v9319, %v9883
    %v9885 = vrot.slane %v9110, %v9884
    %v9886 = vsel %vm9324, %v9885, %v9881
    %v9887 = vlaneseq
    %v9888 = vshrl.u32 %v9887, 7
    %v9889 = vsub.s32 %v9326, %v9888
    %v9890 = vrot.slane %v9111, %v9889
    %v9891 = vsel %vm9331, %v9890, %v9886
    %v9892 = vlaneseq
    %v9893 = vshrl.u32 %v9892, 7
    %v9894 = vsub.s32 %v9333, %v9893
    %v9895 = vrot.slane %v9112, %v9894
    %v9896 = vsel %vm9338, %v9895, %v9891
    %v9897 = vlaneseq
    %v9898 = vshrl.u32 %v9897, 7
    %v9899 = vsub.s32 %v9340, %v9898
    %v9900 = vrot.slane %v9113, %v9899
    %v9901 = vsel %vm9345, %v9900, %v9896
    %v9902 = vlaneseq
    %v9903 = vshrl.u32 %v9902, 7
    %v9904 = vsub.s32 %v9347, %v9903
    %v9905 = vrot.slane %v9114, %v9904
    %v9906 = vsel %vm9352, %v9905, %v9901
    %vm9907 = vcmask 1041409
    %v9908 = vsel %vm9907, %v9432, %v9353
    %vm9909 = vcmask 1042434
    %v9910 = vsel %vm9909, %v9511, %v9908
    %vm9911 = vcmask 1043459
    %v9912 = vsel %vm9911, %v9590, %v9910
    %vm9913 = vcmask 1044484
    %v9914 = vsel %vm9913, %v9669, %v9912
    %vm9915 = vcmask 1045509
    %v9916 = vsel %vm9915, %v9748, %v9914
    %vm9917 = vcmask 1046534
    %v9918 = vsel %vm9917, %v9827, %v9916
    %vm9919 = vcmask 1047559
    %v9920 = vsel %vm9919, %v9906, %v9918
    %9922 = vst [vmem:[#allocation3] sm:$0xff] %v9920
    // Predicated region
    $region38: #{tpu_custom_call.1} parent=1 // pred_check
      _
    $region39: #{tpu_custom_call.1} parent=1 // pred_check_branch
      %9924 = sbr.rel (0) target = $region41
    $region40: #{tpu_custom_call.1} parent=1 // pred_region
      %s9926 = ssub.s32 128, 128
      %9927 = vsyncadd [#allocation4], %s9926
      %s9929 = sshll.u32 [#allocation3], 4
      %s9930 = int_to_ptr.vmem [resolvable:$true] %s9929
      %9932 = dma.vmem_to_hbm [thread:$0]  %s9930, 128, %s9, [#allocation4]
    $region41: #{tpu_custom_call.1} parent=1 // pred_fallthru
      _
    // Predicated region
    $region42: #{tpu_custom_call.1} parent=1 // pred_check
      _
    $region43: #{tpu_custom_call.1} parent=1 // pred_check_branch
      %9934 = sbr.rel (0) target = $region45
    $region44: #{tpu_custom_call.1} parent=1 // pred_region
      %9935 = dma.done [#allocation4], 128
    $region45: #{tpu_custom_call.1} parent=1 // pred_fallthru
      _
    %9936 = vsyncpa [#allocation4], 1

</llo_original>
